<compile_context>
chip_gen: v6e
topology: v6e:2x2x1
jax: 0.10.0
libtpu: 0.0.40
codegen_flags: <defaults>
</compile_context>

<pallas_src>
import functools
import math

import jax
import jax.numpy as jnp
import numpy as np
from jax import lax
from jax.experimental import pallas as pl
from jax.experimental.pallas import tpu as pltpu

# ----- synthetic "tiny BERT" config (BERT-base is 768/12/12; scaled down) ---
HIDDEN = 128
N_HEADS = 2
HEAD_DIM = HIDDEN // N_HEADS
FFN = 4 * HIDDEN
N_LAYERS = 2
VOCAB = 100
MAX_POS = 64
LN_EPS = 1e-12
NEG_INF_SCORE = -10000.0


def _gelu(x):
    # tanh approximation (lowers to the EUP tanh unit inside the kernel)
    return 0.5 * x * (1.0 + jnp.tanh(0.7978845608028654 * (x + 0.044715 * x * x * x)))


def _layernorm(x, g, b):
    mu = jnp.mean(x, axis=-1, keepdims=True)
    var = jnp.mean((x - mu) ** 2, axis=-1, keepdims=True)
    return (x - mu) * lax.rsqrt(var + LN_EPS) * g + b


def _softmax_lastdim(s, approx=False):
    m = jnp.max(s, axis=-1, keepdims=True)
    e = jnp.exp(s - m)
    d = jnp.sum(e, axis=-1, keepdims=True)
    if approx:
        # kernel-only: approx reciprocal runs on the EUP, freeing VALU slots
        return e * pl.reciprocal(d, approx=True)
    return e / d


def _embed(params, input_id, seq):
    # embeddings (gather + add + layernorm) — host-side glue, shared with reference
    x = (params["word_emb"][input_id]
         + params["pos_emb"][:seq][None, :, :]
         + params["type_emb"][0][None, None, :])
    return _layernorm(x, params["emb_ln_g"], params["emb_ln_b"]).astype(jnp.float32)


# ============================================================================
# Fused Pallas kernel: full encoder (all layers) + rescoring head
# ============================================================================
def fused_rescore_kernel(x_ref, bias_ref,
                         wqkv_ref, bqkv_ref, wo_ref, bo_ref,
                         ln1g_ref, ln1b_ref, w1_ref, b1_ref, w2_ref, b2_ref,
                         ln2g_ref, ln2b_ref,
                         fcsel_ref, fcb_ref, pll_ref, first_ref, wer_ref,
                         loss_ref, score_ref, wsum_ref,
                         qkv_scr,
                         *, bn, seq, batch, nbest, weight, use_mwer, use_mwed):
    bf = jnp.bfloat16
    x = x_ref[...]                       # (M, H) f32 residual stream, M = BN*S
    bias = bias_ref[...]                 # (M, M) block-diag + key-mask additive bias

    # ---------------- encoder: static unroll over layers, weights VMEM-resident
    for l in range(N_LAYERS):
        # fused QKV projection at M = BN*S, bf16 operands, f32 accumulation.
        # 1/sqrt(HEAD_DIM) is pre-folded into the Q columns of wqkv.
        qkv = jnp.dot(x.astype(bf), wqkv_ref[l],
                      preferred_element_type=jnp.float32) + bqkv_ref[l]       # (M, 3H) f32
        # stage as bf16 in VMEM scratch: bounds the (M,3H) live range and gives
        # the per-head slices as cheap ref loads.
        qkv_scr[...] = qkv.astype(bf)

        ctx_heads = []
        for h in range(N_HEADS):                                              # static head loop
            q = qkv_scr[:, h * HEAD_DIM:(h + 1) * HEAD_DIM]                   # (M, HD) bf16
            k = qkv_scr[:, HIDDEN + h * HEAD_DIM: HIDDEN + (h + 1) * HEAD_DIM]
            v = qkv_scr[:, 2 * HIDDEN + h * HEAD_DIM: 2 * HIDDEN + (h + 1) * HEAD_DIM]

            # block-diagonal attention: one (M,HD)x(HD,M) matmul per head,
            # cross-sequence / masked keys killed by the precomputed additive bias.
            s = lax.dot_general(q, k, (((1,), (1,)), ((), ())),
                                preferred_element_type=jnp.float32) + bias    # (M, M) f32
            p = _softmax_lastdim(s, approx=True)
            ctx = jnp.dot(p.astype(bf), v,
                          preferred_element_type=jnp.float32)                 # (M, HD) f32
            ctx_heads.append(ctx.astype(bf))

        # fused head output projection: one K=128 matmul instead of two K=64.
        ctx_full = jnp.concatenate(ctx_heads, axis=-1)                        # (M, H) bf16
        attn = jnp.dot(ctx_full, wo_ref[l],
                       preferred_element_type=jnp.float32) + bo_ref[l]

        h1 = _layernorm(x + attn, ln1g_ref[l], ln1b_ref[l])
        f = _gelu(jnp.dot(h1.astype(bf), w1_ref[l],
                          preferred_element_type=jnp.float32) + b1_ref[l])
        f = jnp.dot(f.astype(bf), w2_ref[l],
                    preferred_element_type=jnp.float32) + b2_ref[l]
        x = _layernorm(h1 + f, ln2g_ref[l], ln2b_ref[l])

    # ---------------- rescoring head: fc(CLS) via CLS-selection weight --------
    # fcsel[t, :] = fc_w if t == 0 else 0, so sum over (S, H) == fc(last_hidden[:,0,:]).
    x4 = x.reshape(batch, nbest, seq, HIDDEN)                  # leading-dim split only
    fcsel = fcsel_ref[...]                                     # (S, H)
    t = jnp.sum(x4 * fcsel[None, None, :, :], axis=-1)         # (B, N, S)
    s_score = jnp.sum(t, axis=-1) + fcb_ref[...]               # (B, N)

    pll = pll_ref[...]                                         # (B, N)
    first = first_ref[...]                                     # (B, N)

    ignore = pll == NEG_INF_SCORE
    distill = jnp.where(ignore, NEG_INF_SCORE, s_score)
    mse = jnp.mean((distill - pll) ** 2)                       # nn.MSELoss (mean)

    wsum = first + weight * s_score                            # weight_sum

    # loss-head softmaxes/divisions are tiny (B x N) -> exact math, no approx recip
    if use_mwer:
        wer = wer_ref[...]
        p_hyp = _softmax_lastdim(wsum)
        avg_err = jnp.mean(wer, axis=-1, keepdims=True)
        total = jnp.sum(p_hyp * (wer - avg_err)) + 1e-4 * mse
    elif use_mwed:
        wer = wer_ref[...]
        T = jnp.sum(wsum, axis=-1, keepdims=True) / jnp.sum(wer, axis=-1, keepdims=True)
        d_error = _softmax_lastdim(wer)
        d_score = _softmax_lastdim(wsum / T)
        total = -jnp.sum(d_error * jnp.log(d_score)) + 1e-4 * mse
    else:
        total = mse

    loss_ref[...] = jnp.reshape(total, (1, 1))
    score_ref[...] = s_score
    wsum_ref[...] = wsum


# ============================================================================
# Parameter init (deterministic, stacked-per-layer layout) and forward wrapper
# ============================================================================
def init_params(key):
    keys = jax.random.split(key, 4 + N_LAYERS)

    def nrm(k, shape, scale=0.02):
        return (scale * jax.random.normal(k, shape)).astype(jnp.float32)

    params = {
        "word_emb": nrm(keys[0], (VOCAB, HIDDEN)),
        "pos_emb": nrm(keys[1], (MAX_POS, HIDDEN)),
        "type_emb": nrm(keys[2], (2, HIDDEN)),
        "emb_ln_g": jnp.ones((HIDDEN,), jnp.float32),
        "emb_ln_b": jnp.zeros((HIDDEN,), jnp.float32),
        "fc_w": nrm(keys[3], (1, HIDDEN)),          # torch.nn.Linear(768, 1) analogue
        "fc_b": jnp.zeros((1, 1), jnp.float32),
    }

    inv_sqrt_d = 1.0 / math.sqrt(HEAD_DIM)
    wqkv, wo, w1, w2 = [], [], [], []
    for l in range(N_LAYERS):
        ks = jax.random.split(keys[4 + l], 6)
        # 1/sqrt(HEAD_DIM) folded into the Q block (q-bias is zero so no bias fold needed)
        wq = nrm(ks[0], (HIDDEN, HIDDEN)) * inv_sqrt_d
        wk = nrm(ks[1], (HIDDEN, HIDDEN))
        wv = nrm(ks[2], (HIDDEN, HIDDEN))
        wqkv.append(jnp.concatenate([wq, wk, wv], axis=1))      # (H, 3H) fused QKV
        wo.append(nrm(ks[3], (HIDDEN, HIDDEN)))
        w1.append(nrm(ks[4], (HIDDEN, FFN)))
        w2.append(nrm(ks[5], (FFN, HIDDEN)))

    params.update({
        # matmul weights in bf16 (MXU-native); biases/LN params stay f32
        "wqkv": jnp.stack(wqkv).astype(jnp.bfloat16),                   # (L, H, 3H)
        "bqkv": jnp.zeros((N_LAYERS, 1, 3 * HIDDEN), jnp.float32),
        "wo": jnp.stack(wo).astype(jnp.bfloat16),
        "bo": jnp.zeros((N_LAYERS, 1, HIDDEN), jnp.float32),
        "ln1g": jnp.ones((N_LAYERS, 1, HIDDEN), jnp.float32),
        "ln1b": jnp.zeros((N_LAYERS, 1, HIDDEN), jnp.float32),
        "w1": jnp.stack(w1).astype(jnp.bfloat16),
        "b1": jnp.zeros((N_LAYERS, 1, FFN), jnp.float32),
        "w2": jnp.stack(w2).astype(jnp.bfloat16),
        "b2": jnp.zeros((N_LAYERS, 1, HIDDEN), jnp.float32),
        "ln2g": jnp.ones((N_LAYERS, 1, HIDDEN), jnp.float32),
        "ln2b": jnp.zeros((N_LAYERS, 1, HIDDEN), jnp.float32),
    })
    return params


def rescore_bert_forward(params, input_id, attention_mask, first_scores, cers,
                         pll_score, *, nbest, weight=1.0,
                         use_mwer=False, use_mwed=False):
    """MD-mode training forward of RescoreBert. input_id: (B*nBest, S)."""
    BN, S = input_id.shape
    B = BN // nbest
    M = BN * S

    # ---- embeddings (glue), then flatten to the (BN*S, H) activation slab ----
    x = _embed(params, input_id, S).reshape(M, HIDDEN)

    # block-diagonal additive attention bias (M, M): query row i may attend key
    # row j iff same hypothesis AND key j unmasked; else -1e4 (exp underflows to 0).
    seq_id = jnp.arange(M, dtype=jnp.int32) // S
    same = seq_id[:, None] == seq_id[None, :]
    key_valid = attention_mask.reshape(M) > 0
    attn_bias = jnp.where(same & key_valid[None, :], 0.0,
                          NEG_INF_SCORE).astype(jnp.float32)

    # CLS-selection fc weight: row 0 = fc_w, other rows zero -> fc(last_hidden[:,0,:])
    fc_sel = jnp.zeros((S, HIDDEN), jnp.float32).at[0, :].set(params["fc_w"][0])

    # wer = (sub + ins + del) / (correct + sub + ins), cers = (c, s, i, d)
    wer = ((cers[:, 1] + cers[:, 2] + cers[:, 3])
           / (cers[:, 0] + cers[:, 1] + cers[:, 2])).reshape(B, nbest).astype(jnp.float32)
    pll = pll_score.reshape(B, nbest).astype(jnp.float32)
    first = first_scores.reshape(B, nbest).astype(jnp.float32)

    kern = functools.partial(fused_rescore_kernel,
                             bn=BN, seq=S, batch=B, nbest=nbest, weight=weight,
                             use_mwer=use_mwer, use_mwed=use_mwed)

    inputs = (x, attn_bias,
              params["wqkv"], params["bqkv"], params["wo"], params["bo"],
              params["ln1g"], params["ln1b"], params["w1"], params["b1"],
              params["w2"], params["b2"], params["ln2g"], params["ln2b"],
              fc_sel, params["fc_b"], pll, first, wer)

    def full_spec(a):
        return pl.BlockSpec(a.shape, lambda i, nd=a.ndim: (0,) * nd)

    # TODO(synk): on v7x, split BN over a parallel grid axis (2 TensorCores) and
    # at real BERT-base scale stream per-layer bf16 weights with Buffered(2) +
    # vmem_limit_bytes; at this toy size a single grid step is already optimal.
    loss, score, wsum = pl.pallas_call(
        kern,
        out_shape=(jax.ShapeDtypeStruct((1, 1), jnp.float32),
                   jax.ShapeDtypeStruct((B, nbest), jnp.float32),
                   jax.ShapeDtypeStruct((B, nbest), jnp.float32)),
        grid_spec=pltpu.PrefetchScalarGridSpec(
            num_scalar_prefetch=0,
            grid=(1,),                       # everything fits one step at this size
            in_specs=[full_spec(a) for a in inputs],
            out_specs=(pl.BlockSpec((1, 1), lambda i: (0, 0)),
                       pl.BlockSpec((B, nbest), lambda i: (0, 0)),
                       pl.BlockSpec((B, nbest), lambda i: (0, 0))),
            scratch_shapes=[pltpu.VMEM((M, 3 * HIDDEN), jnp.bfloat16)],
        ),
        compiler_params=pltpu.CompilerParams(dimension_semantics=("arbitrary",)),
    )(*inputs)

    # TODO(synk): eval branch (argmax over weight_sum -> cers[0][best_hyp]), the
    # SimCSE / tokenizer paths, and the AdamW update are host-side glue, not kernels.
    return loss[0, 0], score, wsum


# ============================================================================
# Pure-JAX reference (same bf16-operand / f32-accumulate math) for sanity check
# ============================================================================
def reference_forward(params, input_id, attention_mask, first_scores, cers,
                      pll_score, *, nbest, weight, use_mwer, use_mwed):
    BN, S = input_id.shape
    B = BN // nbest
    bf = jnp.bfloat16
    x = _embed(params, input_id, S)                                # (BN, S, H) f32
    bias = (1.0 - attention_mask.astype(jnp.float32))[:, None, :] * NEG_INF_SCORE
    for l in range(N_LAYERS):
        qkv = (jnp.dot(x.astype(bf), params["wqkv"][l],
                       preferred_element_type=jnp.float32) + params["bqkv"][l]).astype(bf)
        q, k, v = (qkv[..., :HIDDEN], qkv[..., HIDDEN:2 * HIDDEN], qkv[..., 2 * HIDDEN:])
        heads = []
        for h in range(N_HEADS):
            sl = slice(h * HEAD_DIM, (h + 1) * HEAD_DIM)
            s = jnp.einsum("bqd,bkd->bqk", q[..., sl], k[..., sl],
                           preferred_element_type=jnp.float32) + bias
            p = jax.nn.softmax(s, axis=-1)
            heads.append(jnp.einsum("bqk,bkd->bqd", p.astype(bf), v[..., sl],
                                    preferred_element_type=jnp.float32).astype(bf))
        ctx = jnp.concatenate(heads, axis=-1)
        attn = jnp.dot(ctx, params["wo"][l],
                       preferred_element_type=jnp.float32) + params["bo"][l]
        h1 = _layernorm(x + attn, params["ln1g"][l], params["ln1b"][l])
        f = _gelu(jnp.dot(h1.astype(bf), params["w1"][l],
                          preferred_element_type=jnp.float32) + params["b1"][l])
        f = jnp.dot(f.astype(bf), params["w2"][l],
                    preferred_element_type=jnp.float32) + params["b2"][l]
        x = _layernorm(h1 + f, params["ln2g"][l], params["ln2b"][l])
    cls = x[:, 0, :].reshape(B, nbest, HIDDEN)
    s_score = jnp.sum(cls * params["fc_w"][0], axis=-1) + params["fc_b"]
    pll = pll_score.reshape(B, nbest)
    first = first_scores.reshape(B, nbest)
    distill = jnp.where(pll == NEG_INF_SCORE, NEG_INF_SCORE, s_score)
    mse = jnp.mean((distill - pll) ** 2)
    wsum = first + weight * s_score
    wer = ((cers[:, 1] + cers[:, 2] + cers[:, 3])
           / (cers[:, 0] + cers[:, 1] + cers[:, 2])).reshape(B, nbest)
    if use_mwer:
        p_hyp = jax.nn.softmax(wsum, axis=-1)
        avg = jnp.mean(wer, axis=-1, keepdims=True)
        total = jnp.sum(p_hyp * (wer - avg)) + 1e-4 * mse
    elif use_mwed:
        T = jnp.sum(wsum, -1, keepdims=True) / jnp.sum(wer, -1, keepdims=True)
        d_error = jax.nn.softmax(wer, -1)
        d_score = jax.nn.softmax(wsum / T, -1)
        total = -jnp.sum(d_error * jnp.log(d_score)) + 1e-4 * mse
    else:
        total = mse
    return total, s_score, wsum


# ============================================================================
if __name__ == "__main__":
    key = jax.random.PRNGKey(0)
    B, NBEST, S = 2, 4, 16
    BN = B * NBEST

    pk, ik, mk, fk, ck, plk = jax.random.split(key, 6)
    params = init_params(pk)

    input_id = jax.random.randint(ik, (BN, S), 3, VOCAB, dtype=jnp.int32)
    input_id = input_id.at[:, 0].set(1)                       # [CLS]-like token
    lengths = jax.random.randint(mk, (BN,), S - 4, S + 1)
    attention_mask = (jnp.arange(S)[None, :] < lengths[:, None]).astype(jnp.int32)
    first_scores = (-jnp.abs(jax.random.normal(fk, (BN,))) * 5.0).astype(jnp.float32)
    cers = (jax.random.randint(ck, (BN, 4), 0, 6).astype(jnp.float32) + 1.0)
    pll_score = (-jnp.abs(jax.random.normal(plk, (BN,))) * 3.0).astype(jnp.float32)
    pll_score = pll_score.at[3].set(NEG_INF_SCORE)            # exercise ignore_index

    for flags in (dict(nbest=NBEST, weight=1.0, use_mwer=True, use_mwed=False),
                  dict(nbest=NBEST, weight=1.0, use_mwer=False, use_mwed=True)):
        total_loss, s_score, weight_sum = rescore_bert_forward(
            params, input_id, attention_mask, first_scores, cers, pll_score, **flags)
        jax.block_until_ready(total_loss)

        ref_loss, ref_score, ref_wsum = reference_forward(
            params, input_id, attention_mask, first_scores, cers, pll_score, **flags)

        np.testing.assert_allclose(np.asarray(total_loss), np.asarray(ref_loss),
                                   rtol=2e-2, atol=2e-2)
        np.testing.assert_allclose(np.asarray(s_score), np.asarray(ref_score),
                                   rtol=2e-2, atol=2e-2)
        np.testing.assert_allclose(np.asarray(weight_sum), np.asarray(ref_wsum),
                                   rtol=2e-2, atol=2e-2)

    print("KERNEL_OK")
</pallas_src>

<mosaic_0001>
module attributes {stable_mosaic.version = 11 : i64} {
  func.func @fused_rescore_kernel(%arg0: i32, %arg1: memref<128x128xf32, #tpu.memory_space<vmem>>, %arg2: memref<128x128xf32, #tpu.memory_space<vmem>>, %arg3: memref<2x128x384xbf16, #tpu.memory_space<vmem>>, %arg4: memref<2x1x384xf32, #tpu.memory_space<vmem>>, %arg5: memref<2x128x128xbf16, #tpu.memory_space<vmem>>, %arg6: memref<2x1x128xf32, #tpu.memory_space<vmem>>, %arg7: memref<2x1x128xf32, #tpu.memory_space<vmem>>, %arg8: memref<2x1x128xf32, #tpu.memory_space<vmem>>, %arg9: memref<2x128x512xbf16, #tpu.memory_space<vmem>>, %arg10: memref<2x1x512xf32, #tpu.memory_space<vmem>>, %arg11: memref<2x512x128xbf16, #tpu.memory_space<vmem>>, %arg12: memref<2x1x128xf32, #tpu.memory_space<vmem>>, %arg13: memref<2x1x128xf32, #tpu.memory_space<vmem>>, %arg14: memref<2x1x128xf32, #tpu.memory_space<vmem>>, %arg15: memref<16x128xf32, #tpu.memory_space<vmem>>, %arg16: memref<1x1xf32, #tpu.memory_space<vmem>>, %arg17: memref<2x4xf32, #tpu.memory_space<vmem>>, %arg18: memref<2x4xf32, #tpu.memory_space<vmem>>, %arg19: memref<2x4xf32, #tpu.memory_space<vmem>>, %arg20: memref<1x1xf32, #tpu.memory_space<vmem>>, %arg21: memref<2x4xf32, #tpu.memory_space<vmem>>, %arg22: memref<2x4xf32, #tpu.memory_space<vmem>>, %arg23: memref<128x384xbf16, #tpu.memory_space<vmem>>) attributes {dimension_semantics = [#tpu.dimension_semantics<arbitrary>], iteration_bounds = array<i64: 1>, scalar_prefetch = 0 : i64, scratch_operands = 1 : i64, tpu.core_type = #tpu.core_type<tc>, window_params = [{pipeline_mode = #tpu.pipeline_mode<synchronous>, transform_indices = @transform_0, window_bounds = array<i64: 128, 128>}, {pipeline_mode = #tpu.pipeline_mode<synchronous>, transform_indices = @transform_1, window_bounds = array<i64: 128, 128>}, {pipeline_mode = #tpu.pipeline_mode<synchronous>, transform_indices = @transform_2, window_bounds = array<i64: 2, 128, 384>}, {pipeline_mode = #tpu.pipeline_mode<synchronous>, transform_indices = @transform_3, window_bounds = array<i64: 2, 1, 384>}, {pipeline_mode = #tpu.pipeline_mode<synchronous>, transform_indices = @transform_4, window_bounds = array<i64: 2, 128, 128>}, {pipeline_mode = #tpu.pipeline_mode<synchronous>, transform_indices = @transform_5, window_bounds = array<i64: 2, 1, 128>}, {pipeline_mode = #tpu.pipeline_mode<synchronous>, transform_indices = @transform_6, window_bounds = array<i64: 2, 1, 128>}, {pipeline_mode = #tpu.pipeline_mode<synchronous>, transform_indices = @transform_7, window_bounds = array<i64: 2, 1, 128>}, {pipeline_mode = #tpu.pipeline_mode<synchronous>, transform_indices = @transform_8, window_bounds = array<i64: 2, 128, 512>}, {pipeline_mode = #tpu.pipeline_mode<synchronous>, transform_indices = @transform_9, window_bounds = array<i64: 2, 1, 512>}, {pipeline_mode = #tpu.pipeline_mode<synchronous>, transform_indices = @transform_10, window_bounds = array<i64: 2, 512, 128>}, {pipeline_mode = #tpu.pipeline_mode<synchronous>, transform_indices = @transform_11, window_bounds = array<i64: 2, 1, 128>}, {pipeline_mode = #tpu.pipeline_mode<synchronous>, transform_indices = @transform_12, window_bounds = array<i64: 2, 1, 128>}, {pipeline_mode = #tpu.pipeline_mode<synchronous>, transform_indices = @transform_13, window_bounds = array<i64: 2, 1, 128>}, {pipeline_mode = #tpu.pipeline_mode<synchronous>, transform_indices = @transform_14, window_bounds = array<i64: 16, 128>}, {pipeline_mode = #tpu.pipeline_mode<synchronous>, transform_indices = @transform_15, window_bounds = array<i64: 1, 1>}, {pipeline_mode = #tpu.pipeline_mode<synchronous>, transform_indices = @transform_16, window_bounds = array<i64: 2, 4>}, {pipeline_mode = #tpu.pipeline_mode<synchronous>, transform_indices = @transform_17, window_bounds = array<i64: 2, 4>}, {pipeline_mode = #tpu.pipeline_mode<synchronous>, transform_indices = @transform_18, window_bounds = array<i64: 2, 4>}, {pipeline_mode = #tpu.pipeline_mode<synchronous>, transform_indices = @transform_19, window_bounds = array<i64: 1, 1>}, {pipeline_mode = #tpu.pipeline_mode<synchronous>, transform_indices = @transform_20, window_bounds = array<i64: 2, 4>}, {pipeline_mode = #tpu.pipeline_mode<synchronous>, transform_indices = @transform_21, window_bounds = array<i64: 2, 4>}]} {
    %c0 = arith.constant 0 : index
    %c0_0 = arith.constant 0 : index
    %0 = vector.load %arg1[%c0, %c0_0] : memref<128x128xf32, #tpu.memory_space<vmem>>, vector<128x128xf32>
    %c0_1 = arith.constant 0 : index
    %c0_2 = arith.constant 0 : index
    %1 = vector.load %arg2[%c0_1, %c0_2] : memref<128x128xf32, #tpu.memory_space<vmem>>, vector<128x128xf32>
    %2 = arith.truncf %0 : vector<128x128xf32> to vector<128x128xbf16>
    %c0_3 = arith.constant 0 : index
    %c0_4 = arith.constant 0 : index
    %c0_5 = arith.constant 0 : index
    %3 = vector.load %arg3[%c0_3, %c0_4, %c0_5] : memref<2x128x384xbf16, #tpu.memory_space<vmem>>, vector<1x128x384xbf16>
    %4 = vector.shape_cast %3 : vector<1x128x384xbf16> to vector<128x384xbf16>
    %cst = arith.constant dense<0.000000e+00> : vector<128x384xf32>
    %5 = tpu.matmul %2, %4, %cst {dimension_numbers = #tpu.dot_dimension_numbers<[1], [0], [0], [1], [0, 0, 1, 1], [], []>} : vector<128x128xbf16>, vector<128x384xbf16>, vector<128x384xf32> -> vector<128x384xf32>
    %c0_6 = arith.constant 0 : index
    %c0_7 = arith.constant 0 : index
    %c0_8 = arith.constant 0 : index
    %6 = vector.load %arg4[%c0_6, %c0_7, %c0_8] : memref<2x1x384xf32, #tpu.memory_space<vmem>>, vector<1x1x384xf32>
    %7 = vector.shape_cast %6 : vector<1x1x384xf32> to vector<1x384xf32>
    %8 = vector.broadcast %7 : vector<1x384xf32> to vector<128x384xf32>
    %9 = arith.addf %5, %8 : vector<128x384xf32>
    %10 = arith.truncf %9 : vector<128x384xf32> to vector<128x384xbf16>
    %c0_9 = arith.constant 0 : index
    %c0_10 = arith.constant 0 : index
    %11 = vector.load %arg23[%c0_9, %c0_10] : memref<128x384xbf16, #tpu.memory_space<vmem>>, vector<128x384xbf16>
    tpu.vector_store %arg23[%c0_9, %c0_10], %10 {strides = array<i32>} : memref<128x384xbf16, #tpu.memory_space<vmem>>, vector<128x384xbf16>,
    %c0_11 = arith.constant 0 : index
    %c0_12 = arith.constant 0 : index
    %12 = vector.load %arg23[%c0_11, %c0_12] : memref<128x384xbf16, #tpu.memory_space<vmem>>, vector<128x64xbf16>
    %c0_13 = arith.constant 0 : index
    %c128 = arith.constant 128 : index
    %13 = vector.load %arg23[%c0_13, %c128] : memref<128x384xbf16, #tpu.memory_space<vmem>>, vector<128x64xbf16>
    %c0_14 = arith.constant 0 : index
    %c256 = arith.constant 256 : index
    %14 = vector.load %arg23[%c0_14, %c256] : memref<128x384xbf16, #tpu.memory_space<vmem>>, vector<128x64xbf16>
    %cst_15 = arith.constant dense<0.000000e+00> : vector<128x128xf32>
    %15 = tpu.matmul %12, %13, %cst_15 {dimension_numbers = #tpu.dot_dimension_numbers<[1], [1], [0], [0], [0, 0, 1, 0], [], []>} : vector<128x64xbf16>, vector<128x64xbf16>, vector<128x128xf32> -> vector<128x128xf32>
    %16 = arith.addf %15, %1 : vector<128x128xf32>
    %cst_16 = arith.constant dense<0xFF800000> : vector<128xf32>
    %17 = vector.multi_reduction <maximumf>, %16, %cst_16 [1] : vector<128x128xf32> to vector<128xf32>
    %18 = vector.shape_cast %17 : vector<128xf32> to vector<128x1xf32>
    %19 = vector.broadcast %18 : vector<128x1xf32> to vector<128x128xf32>
    %20 = arith.subf %16, %19 : vector<128x128xf32>
    %21 = math.exp %20 : vector<128x128xf32>
    %cst_17 = arith.constant dense<0.000000e+00> : vector<128xf32>
    %22 = vector.multi_reduction <add>, %21, %cst_17 [1] : vector<128x128xf32> to vector<128xf32>
    %23 = vector.shape_cast %22 : vector<128xf32> to vector<128x1xf32>
    %24 = tpu.reciprocal %23 {approx = true} : vector<128x1xf32> -> vector<128x1xf32>
    %25 = vector.broadcast %24 : vector<128x1xf32> to vector<128x128xf32>
    %26 = arith.mulf %21, %25 : vector<128x128xf32>
    %27 = arith.truncf %26 : vector<128x128xf32> to vector<128x128xbf16>
    %cst_18 = arith.constant dense<0.000000e+00> : vector<128x64xf32>
    %28 = tpu.matmul %27, %14, %cst_18 {dimension_numbers = #tpu.dot_dimension_numbers<[1], [0], [0], [1], [0, 0, 1, 1], [], []>} : vector<128x128xbf16>, vector<128x64xbf16>, vector<128x64xf32> -> vector<128x64xf32>
    %29 = arith.truncf %28 : vector<128x64xf32> to vector<128x64xbf16>
    %c0_19 = arith.constant 0 : index
    %c64 = arith.constant 64 : index
    %30 = vector.load %arg23[%c0_19, %c64] : memref<128x384xbf16, #tpu.memory_space<vmem>>, vector<128x64xbf16>
    %c0_20 = arith.constant 0 : index
    %c192 = arith.constant 192 : index
    %31 = vector.load %arg23[%c0_20, %c192] : memref<128x384xbf16, #tpu.memory_space<vmem>>, vector<128x64xbf16>
    %c0_21 = arith.constant 0 : index
    %c320 = arith.constant 320 : index
    %32 = vector.load %arg23[%c0_21, %c320] : memref<128x384xbf16, #tpu.memory_space<vmem>>, vector<128x64xbf16>
    %cst_22 = arith.constant dense<0.000000e+00> : vector<128x128xf32>
    %33 = tpu.matmul %30, %31, %cst_22 {dimension_numbers = #tpu.dot_dimension_numbers<[1], [1], [0], [0], [0, 0, 1, 0], [], []>} : vector<128x64xbf16>, vector<128x64xbf16>, vector<128x128xf32> -> vector<128x128xf32>
    %34 = arith.addf %33, %1 : vector<128x128xf32>
    %cst_23 = arith.constant dense<0xFF800000> : vector<128xf32>
    %35 = vector.multi_reduction <maximumf>, %34, %cst_23 [1] : vector<128x128xf32> to vector<128xf32>
    %36 = vector.shape_cast %35 : vector<128xf32> to vector<128x1xf32>
    %37 = vector.broadcast %36 : vector<128x1xf32> to vector<128x128xf32>
    %38 = arith.subf %34, %37 : vector<128x128xf32>
    %39 = math.exp %38 : vector<128x128xf32>
    %cst_24 = arith.constant dense<0.000000e+00> : vector<128xf32>
    %40 = vector.multi_reduction <add>, %39, %cst_24 [1] : vector<128x128xf32> to vector<128xf32>
    %41 = vector.shape_cast %40 : vector<128xf32> to vector<128x1xf32>
    %42 = tpu.reciprocal %41 {approx = true} : vector<128x1xf32> -> vector<128x1xf32>
    %43 = vector.broadcast %42 : vector<128x1xf32> to vector<128x128xf32>
    %44 = arith.mulf %39, %43 : vector<128x128xf32>
    %45 = arith.truncf %44 : vector<128x128xf32> to vector<128x128xbf16>
    %cst_25 = arith.constant dense<0.000000e+00> : vector<128x64xf32>
    %46 = tpu.matmul %45, %32, %cst_25 {dimension_numbers = #tpu.dot_dimension_numbers<[1], [0], [0], [1], [0, 0, 1, 1], [], []>} : vector<128x128xbf16>, vector<128x64xbf16>, vector<128x64xf32> -> vector<128x64xf32>
    %47 = arith.truncf %46 : vector<128x64xf32> to vector<128x64xbf16>
    %48 = tpu.concatenate %29, %47 in 1 : vector<128x64xbf16>, vector<128x64xbf16> -> vector<128x128xbf16>
    %c0_26 = arith.constant 0 : index
    %c0_27 = arith.constant 0 : index
    %c0_28 = arith.constant 0 : index
    %49 = vector.load %arg5[%c0_26, %c0_27, %c0_28] : memref<2x128x128xbf16, #tpu.memory_space<vmem>>, vector<1x128x128xbf16>
    %50 = vector.shape_cast %49 : vector<1x128x128xbf16> to vector<128x128xbf16>
    %cst_29 = arith.constant dense<0.000000e+00> : vector<128x128xf32>
    %51 = tpu.matmul %48, %50, %cst_29 {dimension_numbers = #tpu.dot_dimension_numbers<[1], [0], [0], [1], [0, 0, 1, 1], [], []>} : vector<128x128xbf16>, vector<128x128xbf16>, vector<128x128xf32> -> vector<128x128xf32>
    %c0_30 = arith.constant 0 : index
    %c0_31 = arith.constant 0 : index
    %c0_32 = arith.constant 0 : index
    %52 = vector.load %arg6[%c0_30, %c0_31, %c0_32] : memref<2x1x128xf32, #tpu.memory_space<vmem>>, vector<1x1x128xf32>
    %53 = vector.shape_cast %52 : vector<1x1x128xf32> to vector<1x128xf32>
    %54 = vector.broadcast %53 : vector<1x128xf32> to vector<128x128xf32>
    %55 = arith.addf %51, %54 : vector<128x128xf32>
    %56 = arith.addf %0, %55 : vector<128x128xf32>
    %c0_33 = arith.constant 0 : index
    %c0_34 = arith.constant 0 : index
    %c0_35 = arith.constant 0 : index
    %57 = vector.load %arg7[%c0_33, %c0_34, %c0_35] : memref<2x1x128xf32, #tpu.memory_space<vmem>>, vector<1x1x128xf32>
    %58 = vector.shape_cast %57 : vector<1x1x128xf32> to vector<1x128xf32>
    %c0_36 = arith.constant 0 : index
    %c0_37 = arith.constant 0 : index
    %c0_38 = arith.constant 0 : index
    %59 = vector.load %arg8[%c0_36, %c0_37, %c0_38] : memref<2x1x128xf32, #tpu.memory_space<vmem>>, vector<1x1x128xf32>
    %60 = vector.shape_cast %59 : vector<1x1x128xf32> to vector<1x128xf32>
    %cst_39 = arith.constant dense<0.000000e+00> : vector<128xf32>
    %61 = vector.multi_reduction <add>, %56, %cst_39 [1] : vector<128x128xf32> to vector<128xf32>
    %62 = vector.shape_cast %61 : vector<128xf32> to vector<128x1xf32>
    %cst_40 = arith.constant 1.280000e+02 : f32
    %63 = vector.broadcast %cst_40 : f32 to vector<128x1xf32>
    %64 = arith.divf %62, %63 : vector<128x1xf32>
    %65 = vector.broadcast %64 : vector<128x1xf32> to vector<128x128xf32>
    %66 = arith.subf %56, %65 : vector<128x128xf32>
    %67 = arith.mulf %66, %66 : vector<128x128xf32>
    %cst_41 = arith.constant dense<0.000000e+00> : vector<128xf32>
    %68 = vector.multi_reduction <add>, %67, %cst_41 [1] : vector<128x128xf32> to vector<128xf32>
    %69 = vector.shape_cast %68 : vector<128xf32> to vector<128x1xf32>
    %cst_42 = arith.constant 1.280000e+02 : f32
    %70 = vector.broadcast %cst_42 : f32 to vector<128x1xf32>
    %71 = arith.divf %69, %70 : vector<128x1xf32>
    %72 = vector.broadcast %64 : vector<128x1xf32> to vector<128x128xf32>
    %73 = arith.subf %56, %72 : vector<128x128xf32>
    %cst_43 = arith.constant 9.99999996E-13 : f32
    %74 = vector.broadcast %cst_43 : f32 to vector<128x1xf32>
    %75 = arith.addf %71, %74 : vector<128x1xf32>
    %76 = math.rsqrt %75 : vector<128x1xf32>
    %77 = vector.broadcast %76 : vector<128x1xf32> to vector<128x128xf32>
    %78 = arith.mulf %73, %77 : vector<128x128xf32>
    %79 = vector.broadcast %58 : vector<1x128xf32> to vector<128x128xf32>
    %80 = arith.mulf %78, %79 : vector<128x128xf32>
    %81 = vector.broadcast %60 : vector<1x128xf32> to vector<128x128xf32>
    %82 = arith.addf %80, %81 : vector<128x128xf32>
    %83 = arith.truncf %82 : vector<128x128xf32> to vector<128x128xbf16>
    %c0_44 = arith.constant 0 : index
    %c0_45 = arith.constant 0 : index
    %c0_46 = arith.constant 0 : index
    %84 = vector.load %arg9[%c0_44, %c0_45, %c0_46] : memref<2x128x512xbf16, #tpu.memory_space<vmem>>, vector<1x128x512xbf16>
    %85 = vector.shape_cast %84 : vector<1x128x512xbf16> to vector<128x512xbf16>
    %cst_47 = arith.constant dense<0.000000e+00> : vector<128x512xf32>
    %86 = tpu.matmul %83, %85, %cst_47 {dimension_numbers = #tpu.dot_dimension_numbers<[1], [0], [0], [1], [0, 0, 1, 1], [], []>} : vector<128x128xbf16>, vector<128x512xbf16>, vector<128x512xf32> -> vector<128x512xf32>
    %c0_48 = arith.constant 0 : index
    %c0_49 = arith.constant 0 : index
    %c0_50 = arith.constant 0 : index
    %87 = vector.load %arg10[%c0_48, %c0_49, %c0_50] : memref<2x1x512xf32, #tpu.memory_space<vmem>>, vector<1x1x512xf32>
    %88 = vector.shape_cast %87 : vector<1x1x512xf32> to vector<1x512xf32>
    %89 = vector.broadcast %88 : vector<1x512xf32> to vector<128x512xf32>
    %90 = arith.addf %86, %89 : vector<128x512xf32>
    %cst_51 = arith.constant 5.000000e-01 : f32
    %91 = vector.broadcast %cst_51 : f32 to vector<128x512xf32>
    %92 = arith.mulf %91, %90 : vector<128x512xf32>
    %cst_52 = arith.constant 4.471500e-02 : f32
    %93 = vector.broadcast %cst_52 : f32 to vector<128x512xf32>
    %94 = arith.mulf %93, %90 : vector<128x512xf32>
    %95 = arith.mulf %94, %90 : vector<128x512xf32>
    %96 = arith.mulf %95, %90 : vector<128x512xf32>
    %97 = arith.addf %90, %96 : vector<128x512xf32>
    %cst_53 = arith.constant 0.797884583 : f32
    %98 = vector.broadcast %cst_53 : f32 to vector<128x512xf32>
    %99 = arith.mulf %98, %97 : vector<128x512xf32>
    %100 = math.tanh %99 : vector<128x512xf32>
    %cst_54 = arith.constant 1.000000e+00 : f32
    %101 = vector.broadcast %cst_54 : f32 to vector<128x512xf32>
    %102 = arith.addf %101, %100 : vector<128x512xf32>
    %103 = arith.mulf %92, %102 : vector<128x512xf32>
    %104 = arith.truncf %103 : vector<128x512xf32> to vector<128x512xbf16>
    %c0_55 = arith.constant 0 : index
    %c0_56 = arith.constant 0 : index
    %c0_57 = arith.constant 0 : index
    %105 = vector.load %arg11[%c0_55, %c0_56, %c0_57] : memref<2x512x128xbf16, #tpu.memory_space<vmem>>, vector<1x512x128xbf16>
    %106 = vector.shape_cast %105 : vector<1x512x128xbf16> to vector<512x128xbf16>
    %cst_58 = arith.constant dense<0.000000e+00> : vector<128x128xf32>
    %107 = tpu.matmul %104, %106, %cst_58 {dimension_numbers = #tpu.dot_dimension_numbers<[1], [0], [0], [1], [0, 0, 1, 1], [], []>} : vector<128x512xbf16>, vector<512x128xbf16>, vector<128x128xf32> -> vector<128x128xf32>
    %c0_59 = arith.constant 0 : index
    %c0_60 = arith.constant 0 : index
    %c0_61 = arith.constant 0 : index
    %108 = vector.load %arg12[%c0_59, %c0_60, %c0_61] : memref<2x1x128xf32, #tpu.memory_space<vmem>>, vector<1x1x128xf32>
    %109 = vector.shape_cast %108 : vector<1x1x128xf32> to vector<1x128xf32>
    %110 = vector.broadcast %109 : vector<1x128xf32> to vector<128x128xf32>
    %111 = arith.addf %107, %110 : vector<128x128xf32>
    %112 = arith.addf %82, %111 : vector<128x128xf32>
    %c0_62 = arith.constant 0 : index
    %c0_63 = arith.constant 0 : index
    %c0_64 = arith.constant 0 : index
    %113 = vector.load %arg13[%c0_62, %c0_63, %c0_64] : memref<2x1x128xf32, #tpu.memory_space<vmem>>, vector<1x1x128xf32>
    %114 = vector.shape_cast %113 : vector<1x1x128xf32> to vector<1x128xf32>
    %c0_65 = arith.constant 0 : index
    %c0_66 = arith.constant 0 : index
    %c0_67 = arith.constant 0 : index
    %115 = vector.load %arg14[%c0_65, %c0_66, %c0_67] : memref<2x1x128xf32, #tpu.memory_space<vmem>>, vector<1x1x128xf32>
    %116 = vector.shape_cast %115 : vector<1x1x128xf32> to vector<1x128xf32>
    %cst_68 = arith.constant dense<0.000000e+00> : vector<128xf32>
    %117 = vector.multi_reduction <add>, %112, %cst_68 [1] : vector<128x128xf32> to vector<128xf32>
    %118 = vector.shape_cast %117 : vector<128xf32> to vector<128x1xf32>
    %cst_69 = arith.constant 1.280000e+02 : f32
    %119 = vector.broadcast %cst_69 : f32 to vector<128x1xf32>
    %120 = arith.divf %118, %119 : vector<128x1xf32>
    %121 = vector.broadcast %120 : vector<128x1xf32> to vector<128x128xf32>
    %122 = arith.subf %112, %121 : vector<128x128xf32>
    %123 = arith.mulf %122, %122 : vector<128x128xf32>
    %cst_70 = arith.constant dense<0.000000e+00> : vector<128xf32>
    %124 = vector.multi_reduction <add>, %123, %cst_70 [1] : vector<128x128xf32> to vector<128xf32>
    %125 = vector.shape_cast %124 : vector<128xf32> to vector<128x1xf32>
    %cst_71 = arith.constant 1.280000e+02 : f32
    %126 = vector.broadcast %cst_71 : f32 to vector<128x1xf32>
    %127 = arith.divf %125, %126 : vector<128x1xf32>
    %128 = vector.broadcast %120 : vector<128x1xf32> to vector<128x128xf32>
    %129 = arith.subf %112, %128 : vector<128x128xf32>
    %cst_72 = arith.constant 9.99999996E-13 : f32
    %130 = vector.broadcast %cst_72 : f32 to vector<128x1xf32>
    %131 = arith.addf %127, %130 : vector<128x1xf32>
    %132 = math.rsqrt %131 : vector<128x1xf32>
    %133 = vector.broadcast %132 : vector<128x1xf32> to vector<128x128xf32>
    %134 = arith.mulf %129, %133 : vector<128x128xf32>
    %135 = vector.broadcast %114 : vector<1x128xf32> to vector<128x128xf32>
    %136 = arith.mulf %134, %135 : vector<128x128xf32>
    %137 = vector.broadcast %116 : vector<1x128xf32> to vector<128x128xf32>
    %138 = arith.addf %136, %137 : vector<128x128xf32>
    %139 = arith.truncf %138 : vector<128x128xf32> to vector<128x128xbf16>
    %c1 = arith.constant 1 : index
    %c0_73 = arith.constant 0 : index
    %c0_74 = arith.constant 0 : index
    %140 = vector.load %arg3[%c1, %c0_73, %c0_74] : memref<2x128x384xbf16, #tpu.memory_space<vmem>>, vector<1x128x384xbf16>
    %141 = vector.shape_cast %140 : vector<1x128x384xbf16> to vector<128x384xbf16>
    %cst_75 = arith.constant dense<0.000000e+00> : vector<128x384xf32>
    %142 = tpu.matmul %139, %141, %cst_75 {dimension_numbers = #tpu.dot_dimension_numbers<[1], [0], [0], [1], [0, 0, 1, 1], [], []>} : vector<128x128xbf16>, vector<128x384xbf16>, vector<128x384xf32> -> vector<128x384xf32>
    %c1_76 = arith.constant 1 : index
    %c0_77 = arith.constant 0 : index
    %c0_78 = arith.constant 0 : index
    %143 = vector.load %arg4[%c1_76, %c0_77, %c0_78] : memref<2x1x384xf32, #tpu.memory_space<vmem>>, vector<1x1x384xf32>
    %144 = vector.shape_cast %143 : vector<1x1x384xf32> to vector<1x384xf32>
    %145 = vector.broadcast %144 : vector<1x384xf32> to vector<128x384xf32>
    %146 = arith.addf %142, %145 : vector<128x384xf32>
    %147 = arith.truncf %146 : vector<128x384xf32> to vector<128x384xbf16>
    %c0_79 = arith.constant 0 : index
    %c0_80 = arith.constant 0 : index
    %148 = vector.load %arg23[%c0_79, %c0_80] : memref<128x384xbf16, #tpu.memory_space<vmem>>, vector<128x384xbf16>
    tpu.vector_store %arg23[%c0_79, %c0_80], %147 {strides = array<i32>} : memref<128x384xbf16, #tpu.memory_space<vmem>>, vector<128x384xbf16>,
    %c0_81 = arith.constant 0 : index
    %c0_82 = arith.constant 0 : index
    %149 = vector.load %arg23[%c0_81, %c0_82] : memref<128x384xbf16, #tpu.memory_space<vmem>>, vector<128x64xbf16>
    %c0_83 = arith.constant 0 : index
    %c128_84 = arith.constant 128 : index
    %150 = vector.load %arg23[%c0_83, %c128_84] : memref<128x384xbf16, #tpu.memory_space<vmem>>, vector<128x64xbf16>
    %c0_85 = arith.constant 0 : index
    %c256_86 = arith.constant 256 : index
    %151 = vector.load %arg23[%c0_85, %c256_86] : memref<128x384xbf16, #tpu.memory_space<vmem>>, vector<128x64xbf16>
    %cst_87 = arith.constant dense<0.000000e+00> : vector<128x128xf32>
    %152 = tpu.matmul %149, %150, %cst_87 {dimension_numbers = #tpu.dot_dimension_numbers<[1], [1], [0], [0], [0, 0, 1, 0], [], []>} : vector<128x64xbf16>, vector<128x64xbf16>, vector<128x128xf32> -> vector<128x128xf32>
    %153 = arith.addf %152, %1 : vector<128x128xf32>
    %cst_88 = arith.constant dense<0xFF800000> : vector<128xf32>
    %154 = vector.multi_reduction <maximumf>, %153, %cst_88 [1] : vector<128x128xf32> to vector<128xf32>
    %155 = vector.shape_cast %154 : vector<128xf32> to vector<128x1xf32>
    %156 = vector.broadcast %155 : vector<128x1xf32> to vector<128x128xf32>
    %157 = arith.subf %153, %156 : vector<128x128xf32>
    %158 = math.exp %157 : vector<128x128xf32>
    %cst_89 = arith.constant dense<0.000000e+00> : vector<128xf32>
    %159 = vector.multi_reduction <add>, %158, %cst_89 [1] : vector<128x128xf32> to vector<128xf32>
    %160 = vector.shape_cast %159 : vector<128xf32> to vector<128x1xf32>
    %161 = tpu.reciprocal %160 {approx = true} : vector<128x1xf32> -> vector<128x1xf32>
    %162 = vector.broadcast %161 : vector<128x1xf32> to vector<128x128xf32>
    %163 = arith.mulf %158, %162 : vector<128x128xf32>
    %164 = arith.truncf %163 : vector<128x128xf32> to vector<128x128xbf16>
    %cst_90 = arith.constant dense<0.000000e+00> : vector<128x64xf32>
    %165 = tpu.matmul %164, %151, %cst_90 {dimension_numbers = #tpu.dot_dimension_numbers<[1], [0], [0], [1], [0, 0, 1, 1], [], []>} : vector<128x128xbf16>, vector<128x64xbf16>, vector<128x64xf32> -> vector<128x64xf32>
    %166 = arith.truncf %165 : vector<128x64xf32> to vector<128x64xbf16>
    %c0_91 = arith.constant 0 : index
    %c64_92 = arith.constant 64 : index
    %167 = vector.load %arg23[%c0_91, %c64_92] : memref<128x384xbf16, #tpu.memory_space<vmem>>, vector<128x64xbf16>
    %c0_93 = arith.constant 0 : index
    %c192_94 = arith.constant 192 : index
    %168 = vector.load %arg23[%c0_93, %c192_94] : memref<128x384xbf16, #tpu.memory_space<vmem>>, vector<128x64xbf16>
    %c0_95 = arith.constant 0 : index
    %c320_96 = arith.constant 320 : index
    %169 = vector.load %arg23[%c0_95, %c320_96] : memref<128x384xbf16, #tpu.memory_space<vmem>>, vector<128x64xbf16>
    %cst_97 = arith.constant dense<0.000000e+00> : vector<128x128xf32>
    %170 = tpu.matmul %167, %168, %cst_97 {dimension_numbers = #tpu.dot_dimension_numbers<[1], [1], [0], [0], [0, 0, 1, 0], [], []>} : vector<128x64xbf16>, vector<128x64xbf16>, vector<128x128xf32> -> vector<128x128xf32>
    %171 = arith.addf %170, %1 : vector<128x128xf32>
    %cst_98 = arith.constant dense<0xFF800000> : vector<128xf32>
    %172 = vector.multi_reduction <maximumf>, %171, %cst_98 [1] : vector<128x128xf32> to vector<128xf32>
    %173 = vector.shape_cast %172 : vector<128xf32> to vector<128x1xf32>
    %174 = vector.broadcast %173 : vector<128x1xf32> to vector<128x128xf32>
    %175 = arith.subf %171, %174 : vector<128x128xf32>
    %176 = math.exp %175 : vector<128x128xf32>
    %cst_99 = arith.constant dense<0.000000e+00> : vector<128xf32>
    %177 = vector.multi_reduction <add>, %176, %cst_99 [1] : vector<128x128xf32> to vector<128xf32>
    %178 = vector.shape_cast %177 : vector<128xf32> to vector<128x1xf32>
    %179 = tpu.reciprocal %178 {approx = true} : vector<128x1xf32> -> vector<128x1xf32>
    %180 = vector.broadcast %179 : vector<128x1xf32> to vector<128x128xf32>
    %181 = arith.mulf %176, %180 : vector<128x128xf32>
    %182 = arith.truncf %181 : vector<128x128xf32> to vector<128x128xbf16>
    %cst_100 = arith.constant dense<0.000000e+00> : vector<128x64xf32>
    %183 = tpu.matmul %182, %169, %cst_100 {dimension_numbers = #tpu.dot_dimension_numbers<[1], [0], [0], [1], [0, 0, 1, 1], [], []>} : vector<128x128xbf16>, vector<128x64xbf16>, vector<128x64xf32> -> vector<128x64xf32>
    %184 = arith.truncf %183 : vector<128x64xf32> to vector<128x64xbf16>
    %185 = tpu.concatenate %166, %184 in 1 : vector<128x64xbf16>, vector<128x64xbf16> -> vector<128x128xbf16>
    %c1_101 = arith.constant 1 : index
    %c0_102 = arith.constant 0 : index
    %c0_103 = arith.constant 0 : index
    %186 = vector.load %arg5[%c1_101, %c0_102, %c0_103] : memref<2x128x128xbf16, #tpu.memory_space<vmem>>, vector<1x128x128xbf16>
    %187 = vector.shape_cast %186 : vector<1x128x128xbf16> to vector<128x128xbf16>
    %cst_104 = arith.constant dense<0.000000e+00> : vector<128x128xf32>
    %188 = tpu.matmul %185, %187, %cst_104 {dimension_numbers = #tpu.dot_dimension_numbers<[1], [0], [0], [1], [0, 0, 1, 1], [], []>} : vector<128x128xbf16>, vector<128x128xbf16>, vector<128x128xf32> -> vector<128x128xf32>
    %c1_105 = arith.constant 1 : index
    %c0_106 = arith.constant 0 : index
    %c0_107 = arith.constant 0 : index
    %189 = vector.load %arg6[%c1_105, %c0_106, %c0_107] : memref<2x1x128xf32, #tpu.memory_space<vmem>>, vector<1x1x128xf32>
    %190 = vector.shape_cast %189 : vector<1x1x128xf32> to vector<1x128xf32>
    %191 = vector.broadcast %190 : vector<1x128xf32> to vector<128x128xf32>
    %192 = arith.addf %188, %191 : vector<128x128xf32>
    %193 = arith.addf %138, %192 : vector<128x128xf32>
    %c1_108 = arith.constant 1 : index
    %c0_109 = arith.constant 0 : index
    %c0_110 = arith.constant 0 : index
    %194 = vector.load %arg7[%c1_108, %c0_109, %c0_110] : memref<2x1x128xf32, #tpu.memory_space<vmem>>, vector<1x1x128xf32>
    %195 = vector.shape_cast %194 : vector<1x1x128xf32> to vector<1x128xf32>
    %c1_111 = arith.constant 1 : index
    %c0_112 = arith.constant 0 : index
    %c0_113 = arith.constant 0 : index
    %196 = vector.load %arg8[%c1_111, %c0_112, %c0_113] : memref<2x1x128xf32, #tpu.memory_space<vmem>>, vector<1x1x128xf32>
    %197 = vector.shape_cast %196 : vector<1x1x128xf32> to vector<1x128xf32>
    %cst_114 = arith.constant dense<0.000000e+00> : vector<128xf32>
    %198 = vector.multi_reduction <add>, %193, %cst_114 [1] : vector<128x128xf32> to vector<128xf32>
    %199 = vector.shape_cast %198 : vector<128xf32> to vector<128x1xf32>
    %cst_115 = arith.constant 1.280000e+02 : f32
    %200 = vector.broadcast %cst_115 : f32 to vector<128x1xf32>
    %201 = arith.divf %199, %200 : vector<128x1xf32>
    %202 = vector.broadcast %201 : vector<128x1xf32> to vector<128x128xf32>
    %203 = arith.subf %193, %202 : vector<128x128xf32>
    %204 = arith.mulf %203, %203 : vector<128x128xf32>
    %cst_116 = arith.constant dense<0.000000e+00> : vector<128xf32>
    %205 = vector.multi_reduction <add>, %204, %cst_116 [1] : vector<128x128xf32> to vector<128xf32>
    %206 = vector.shape_cast %205 : vector<128xf32> to vector<128x1xf32>
    %cst_117 = arith.constant 1.280000e+02 : f32
    %207 = vector.broadcast %cst_117 : f32 to vector<128x1xf32>
    %208 = arith.divf %206, %207 : vector<128x1xf32>
    %209 = vector.broadcast %201 : vector<128x1xf32> to vector<128x128xf32>
    %210 = arith.subf %193, %209 : vector<128x128xf32>
    %cst_118 = arith.constant 9.99999996E-13 : f32
    %211 = vector.broadcast %cst_118 : f32 to vector<128x1xf32>
    %212 = arith.addf %208, %211 : vector<128x1xf32>
    %213 = math.rsqrt %212 : vector<128x1xf32>
    %214 = vector.broadcast %213 : vector<128x1xf32> to vector<128x128xf32>
    %215 = arith.mulf %210, %214 : vector<128x128xf32>
    %216 = vector.broadcast %195 : vector<1x128xf32> to vector<128x128xf32>
    %217 = arith.mulf %215, %216 : vector<128x128xf32>
    %218 = vector.broadcast %197 : vector<1x128xf32> to vector<128x128xf32>
    %219 = arith.addf %217, %218 : vector<128x128xf32>
    %220 = arith.truncf %219 : vector<128x128xf32> to vector<128x128xbf16>
    %c1_119 = arith.constant 1 : index
    %c0_120 = arith.constant 0 : index
    %c0_121 = arith.constant 0 : index
    %221 = vector.load %arg9[%c1_119, %c0_120, %c0_121] : memref<2x128x512xbf16, #tpu.memory_space<vmem>>, vector<1x128x512xbf16>
    %222 = vector.shape_cast %221 : vector<1x128x512xbf16> to vector<128x512xbf16>
    %cst_122 = arith.constant dense<0.000000e+00> : vector<128x512xf32>
    %223 = tpu.matmul %220, %222, %cst_122 {dimension_numbers = #tpu.dot_dimension_numbers<[1], [0], [0], [1], [0, 0, 1, 1], [], []>} : vector<128x128xbf16>, vector<128x512xbf16>, vector<128x512xf32> -> vector<128x512xf32>
    %c1_123 = arith.constant 1 : index
    %c0_124 = arith.constant 0 : index
    %c0_125 = arith.constant 0 : index
    %224 = vector.load %arg10[%c1_123, %c0_124, %c0_125] : memref<2x1x512xf32, #tpu.memory_space<vmem>>, vector<1x1x512xf32>
    %225 = vector.shape_cast %224 : vector<1x1x512xf32> to vector<1x512xf32>
    %226 = vector.broadcast %225 : vector<1x512xf32> to vector<128x512xf32>
    %227 = arith.addf %223, %226 : vector<128x512xf32>
    %cst_126 = arith.constant 5.000000e-01 : f32
    %228 = vector.broadcast %cst_126 : f32 to vector<128x512xf32>
    %229 = arith.mulf %228, %227 : vector<128x512xf32>
    %cst_127 = arith.constant 4.471500e-02 : f32
    %230 = vector.broadcast %cst_127 : f32 to vector<128x512xf32>
    %231 = arith.mulf %230, %227 : vector<128x512xf32>
    %232 = arith.mulf %231, %227 : vector<128x512xf32>
    %233 = arith.mulf %232, %227 : vector<128x512xf32>
    %234 = arith.addf %227, %233 : vector<128x512xf32>
    %cst_128 = arith.constant 0.797884583 : f32
    %235 = vector.broadcast %cst_128 : f32 to vector<128x512xf32>
    %236 = arith.mulf %235, %234 : vector<128x512xf32>
    %237 = math.tanh %236 : vector<128x512xf32>
    %cst_129 = arith.constant 1.000000e+00 : f32
    %238 = vector.broadcast %cst_129 : f32 to vector<128x512xf32>
    %239 = arith.addf %238, %237 : vector<128x512xf32>
    %240 = arith.mulf %229, %239 : vector<128x512xf32>
    %241 = arith.truncf %240 : vector<128x512xf32> to vector<128x512xbf16>
    %c1_130 = arith.constant 1 : index
    %c0_131 = arith.constant 0 : index
    %c0_132 = arith.constant 0 : index
    %242 = vector.load %arg11[%c1_130, %c0_131, %c0_132] : memref<2x512x128xbf16, #tpu.memory_space<vmem>>, vector<1x512x128xbf16>
    %243 = vector.shape_cast %242 : vector<1x512x128xbf16> to vector<512x128xbf16>
    %cst_133 = arith.constant dense<0.000000e+00> : vector<128x128xf32>
    %244 = tpu.matmul %241, %243, %cst_133 {dimension_numbers = #tpu.dot_dimension_numbers<[1], [0], [0], [1], [0, 0, 1, 1], [], []>} : vector<128x512xbf16>, vector<512x128xbf16>, vector<128x128xf32> -> vector<128x128xf32>
    %c1_134 = arith.constant 1 : index
    %c0_135 = arith.constant 0 : index
    %c0_136 = arith.constant 0 : index
    %245 = vector.load %arg12[%c1_134, %c0_135, %c0_136] : memref<2x1x128xf32, #tpu.memory_space<vmem>>, vector<1x1x128xf32>
    %246 = vector.shape_cast %245 : vector<1x1x128xf32> to vector<1x128xf32>
    %247 = vector.broadcast %246 : vector<1x128xf32> to vector<128x128xf32>
    %248 = arith.addf %244, %247 : vector<128x128xf32>
    %249 = arith.addf %219, %248 : vector<128x128xf32>
    %c1_137 = arith.constant 1 : index
    %c0_138 = arith.constant 0 : index
    %c0_139 = arith.constant 0 : index
    %250 = vector.load %arg13[%c1_137, %c0_138, %c0_139] : memref<2x1x128xf32, #tpu.memory_space<vmem>>, vector<1x1x128xf32>
    %251 = vector.shape_cast %250 : vector<1x1x128xf32> to vector<1x128xf32>
    %c1_140 = arith.constant 1 : index
    %c0_141 = arith.constant 0 : index
    %c0_142 = arith.constant 0 : index
    %252 = vector.load %arg14[%c1_140, %c0_141, %c0_142] : memref<2x1x128xf32, #tpu.memory_space<vmem>>, vector<1x1x128xf32>
    %253 = vector.shape_cast %252 : vector<1x1x128xf32> to vector<1x128xf32>
    %cst_143 = arith.constant dense<0.000000e+00> : vector<128xf32>
    %254 = vector.multi_reduction <add>, %249, %cst_143 [1] : vector<128x128xf32> to vector<128xf32>
    %255 = vector.shape_cast %254 : vector<128xf32> to vector<128x1xf32>
    %cst_144 = arith.constant 1.280000e+02 : f32
    %256 = vector.broadcast %cst_144 : f32 to vector<128x1xf32>
    %257 = arith.divf %255, %256 : vector<128x1xf32>
    %258 = vector.broadcast %257 : vector<128x1xf32> to vector<128x128xf32>
    %259 = arith.subf %249, %258 : vector<128x128xf32>
    %260 = arith.mulf %259, %259 : vector<128x128xf32>
    %cst_145 = arith.constant dense<0.000000e+00> : vector<128xf32>
    %261 = vector.multi_reduction <add>, %260, %cst_145 [1] : vector<128x128xf32> to vector<128xf32>
    %262 = vector.shape_cast %261 : vector<128xf32> to vector<128x1xf32>
    %cst_146 = arith.constant 1.280000e+02 : f32
    %263 = vector.broadcast %cst_146 : f32 to vector<128x1xf32>
    %264 = arith.divf %262, %263 : vector<128x1xf32>
    %265 = vector.broadcast %257 : vector<128x1xf32> to vector<128x128xf32>
    %266 = arith.subf %249, %265 : vector<128x128xf32>
    %cst_147 = arith.constant 9.99999996E-13 : f32
    %267 = vector.broadcast %cst_147 : f32 to vector<128x1xf32>
    %268 = arith.addf %264, %267 : vector<128x1xf32>
    %269 = math.rsqrt %268 : vector<128x1xf32>
    %270 = vector.broadcast %269 : vector<128x1xf32> to vector<128x128xf32>
    %271 = arith.mulf %266, %270 : vector<128x128xf32>
    %272 = vector.broadcast %251 : vector<1x128xf32> to vector<128x128xf32>
    %273 = arith.mulf %271, %272 : vector<128x128xf32>
    %274 = vector.broadcast %253 : vector<1x128xf32> to vector<128x128xf32>
    %275 = arith.addf %273, %274 : vector<128x128xf32>
    %276 = vector.shape_cast %275 : vector<128x128xf32> to vector<2x4x16x128xf32>
    %c0_148 = arith.constant 0 : index
    %c0_149 = arith.constant 0 : index
    %277 = vector.load %arg15[%c0_148, %c0_149] : memref<16x128xf32, #tpu.memory_space<vmem>>, vector<16x128xf32>
    %278 = vector.shape_cast %277 : vector<16x128xf32> to vector<1x1x16x128xf32>
    %279 = vector.broadcast %278 : vector<1x1x16x128xf32> to vector<2x4x16x128xf32>
    %280 = arith.mulf %276, %279 : vector<2x4x16x128xf32>
    %cst_150 = arith.constant dense<0.000000e+00> : vector<2x4x16xf32>
    %281 = vector.multi_reduction <add>, %280, %cst_150 [3] : vector<2x4x16x128xf32> to vector<2x4x16xf32>
    %cst_151 = arith.constant dense<0.000000e+00> : vector<2x4xf32>
    %282 = vector.multi_reduction <add>, %281, %cst_151 [2] : vector<2x4x16xf32> to vector<2x4xf32>
    %c0_152 = arith.constant 0 : index
    %c0_153 = arith.constant 0 : index
    %283 = vector.load %arg16[%c0_152, %c0_153] : memref<1x1xf32, #tpu.memory_space<vmem>>, vector<1x1xf32>
    %284 = vector.broadcast %283 : vector<1x1xf32> to vector<2x4xf32>
    %285 = arith.addf %282, %284 : vector<2x4xf32>
    %c0_154 = arith.constant 0 : index
    %c0_155 = arith.constant 0 : index
    %286 = vector.load %arg17[%c0_154, %c0_155] : memref<2x4xf32, #tpu.memory_space<vmem>>, vector<2x4xf32>
    %c0_156 = arith.constant 0 : index
    %c0_157 = arith.constant 0 : index
    %287 = vector.load %arg18[%c0_156, %c0_157] : memref<2x4xf32, #tpu.memory_space<vmem>>, vector<2x4xf32>
    %cst_158 = arith.constant -1.000000e+04 : f32
    %288 = vector.broadcast %cst_158 : f32 to vector<2x4xf32>
    %289 = arith.cmpf oeq, %286, %288 : vector<2x4xf32>
    %cst_159 = arith.constant -1.000000e+04 : f32
    %290 = vector.broadcast %cst_159 : f32 to vector<2x4xf32>
    %291 = arith.select %289, %290, %285 : vector<2x4xi1>, vector<2x4xf32>
    %292 = arith.subf %291, %286 : vector<2x4xf32>
    %293 = arith.mulf %292, %292 : vector<2x4xf32>
    %294 = vector.shape_cast %293 : vector<2x4xf32> to vector<1x2x4xf32>
    %cst_160 = arith.constant dense<0.000000e+00> : vector<1xf32>
    %295 = vector.multi_reduction <add>, %294, %cst_160 [1, 2] : vector<1x2x4xf32> to vector<1xf32>
    %296 = vector.shape_cast %295 : vector<1xf32> to vector<1x1x1xf32>
    %297 = vector.extract %296[0, 0, 0] : f32 from vector<1x1x1xf32>
    %cst_161 = arith.constant 8.000000e+00 : f32
    %298 = arith.divf %297, %cst_161 : f32
    %cst_162 = arith.constant 1.000000e+00 : f32
    %299 = vector.broadcast %cst_162 : f32 to vector<2x4xf32>
    %300 = arith.mulf %299, %285 : vector<2x4xf32>
    %301 = arith.addf %287, %300 : vector<2x4xf32>
    %c0_163 = arith.constant 0 : index
    %c0_164 = arith.constant 0 : index
    %302 = vector.load %arg19[%c0_163, %c0_164] : memref<2x4xf32, #tpu.memory_space<vmem>>, vector<2x4xf32>
    %cst_165 = arith.constant dense<0xFF800000> : vector<2xf32>
    %303 = vector.multi_reduction <maximumf>, %301, %cst_165 [1] : vector<2x4xf32> to vector<2xf32>
    %304 = vector.shape_cast %303 : vector<2xf32> to vector<2x1xf32>
    %305 = vector.broadcast %304 : vector<2x1xf32> to vector<2x4xf32>
    %306 = arith.subf %301, %305 : vector<2x4xf32>
    %307 = math.exp %306 : vector<2x4xf32>
    %cst_166 = arith.constant dense<0.000000e+00> : vector<2xf32>
    %308 = vector.multi_reduction <add>, %307, %cst_166 [1] : vector<2x4xf32> to vector<2xf32>
    %309 = vector.shape_cast %308 : vector<2xf32> to vector<2x1xf32>
    %310 = vector.broadcast %309 : vector<2x1xf32> to vector<2x4xf32>
    %311 = arith.divf %307, %310 : vector<2x4xf32>
    %cst_167 = arith.constant dense<0.000000e+00> : vector<2xf32>
    %312 = vector.multi_reduction <add>, %302, %cst_167 [1] : vector<2x4xf32> to vector<2xf32>
    %313 = vector.shape_cast %312 : vector<2xf32> to vector<2x1xf32>
    %cst_168 = arith.constant 4.000000e+00 : f32
    %314 = vector.broadcast %cst_168 : f32 to vector<2x1xf32>
    %315 = arith.divf %313, %314 : vector<2x1xf32>
    %316 = vector.broadcast %315 : vector<2x1xf32> to vector<2x4xf32>
    %317 = arith.subf %302, %316 : vector<2x4xf32>
    %318 = arith.mulf %311, %317 : vector<2x4xf32>
    %319 = vector.shape_cast %318 : vector<2x4xf32> to vector<1x2x4xf32>
    %cst_169 = arith.constant dense<0.000000e+00> : vector<1xf32>
    %320 = vector.multi_reduction <add>, %319, %cst_169 [1, 2] : vector<1x2x4xf32> to vector<1xf32>
    %321 = vector.shape_cast %320 : vector<1xf32> to vector<1x1x1xf32>
    %322 = vector.extract %321[0, 0, 0] : f32 from vector<1x1x1xf32>
    %cst_170 = arith.constant 9.99999974E-5 : f32
    %323 = arith.mulf %cst_170, %298 : f32
    %324 = arith.addf %322, %323 : f32
    %325 = vector.broadcast %324 : f32 to vector<1x1xf32>
    %c0_171 = arith.constant 0 : index
    %c0_172 = arith.constant 0 : index
    %326 = vector.load %arg20[%c0_171, %c0_172] : memref<1x1xf32, #tpu.memory_space<vmem>>, vector<1x1xf32>
    tpu.vector_store %arg20[%c0_171, %c0_172], %325 {strides = array<i32>} : memref<1x1xf32, #tpu.memory_space<vmem>>, vector<1x1xf32>,
    %c0_173 = arith.constant 0 : index
    %c0_174 = arith.constant 0 : index
    %327 = vector.load %arg21[%c0_173, %c0_174] : memref<2x4xf32, #tpu.memory_space<vmem>>, vector<2x4xf32>
    tpu.vector_store %arg21[%c0_173, %c0_174], %285 {strides = array<i32>} : memref<2x4xf32, #tpu.memory_space<vmem>>, vector<2x4xf32>,
    %c0_175 = arith.constant 0 : index
    %c0_176 = arith.constant 0 : index
    %328 = vector.load %arg22[%c0_175, %c0_176] : memref<2x4xf32, #tpu.memory_space<vmem>>, vector<2x4xf32>
    tpu.vector_store %arg22[%c0_175, %c0_176], %301 {strides = array<i32>} : memref<2x4xf32, #tpu.memory_space<vmem>>, vector<2x4xf32>,
    return
  }
  func.func @transform_0(%arg0: i32) -> (i32, i32) {
    %c0_i32 = arith.constant 0 : i32
    %c0_i32_0 = arith.constant 0 : i32
    %c0_i32_1 = arith.constant 0 : i32
    return %c0_i32, %c0_i32_0 : i32, i32
  }
  func.func @transform_1(%arg0: i32) -> (i32, i32) {
    %c0_i32 = arith.constant 0 : i32
    %c0_i32_0 = arith.constant 0 : i32
    %c0_i32_1 = arith.constant 0 : i32
    return %c0_i32, %c0_i32_0 : i32, i32
  }
  func.func @transform_2(%arg0: i32) -> (i32, i32, i32) {
    %c0_i32 = arith.constant 0 : i32
    %c0_i32_0 = arith.constant 0 : i32
    %c0_i32_1 = arith.constant 0 : i32
    %c0_i32_2 = arith.constant 0 : i32
    return %c0_i32, %c0_i32_0, %c0_i32_1 : i32, i32, i32
  }
  func.func @transform_3(%arg0: i32) -> (i32, i32, i32) {
    %c0_i32 = arith.constant 0 : i32
    %c0_i32_0 = arith.constant 0 : i32
    %c0_i32_1 = arith.constant 0 : i32
    %c0_i32_2 = arith.constant 0 : i32
    return %c0_i32, %c0_i32_0, %c0_i32_1 : i32, i32, i32
  }
  func.func @transform_4(%arg0: i32) -> (i32, i32, i32) {
    %c0_i32 = arith.constant 0 : i32
    %c0_i32_0 = arith.constant 0 : i32
    %c0_i32_1 = arith.constant 0 : i32
    %c0_i32_2 = arith.constant 0 : i32
    return %c0_i32, %c0_i32_0, %c0_i32_1 : i32, i32, i32
  }
  func.func @transform_5(%arg0: i32) -> (i32, i32, i32) {
    %c0_i32 = arith.constant 0 : i32
    %c0_i32_0 = arith.constant 0 : i32
    %c0_i32_1 = arith.constant 0 : i32
    %c0_i32_2 = arith.constant 0 : i32
    return %c0_i32, %c0_i32_0, %c0_i32_1 : i32, i32, i32
  }
  func.func @transform_6(%arg0: i32) -> (i32, i32, i32) {
    %c0_i32 = arith.constant 0 : i32
    %c0_i32_0 = arith.constant 0 : i32
    %c0_i32_1 = arith.constant 0 : i32
    %c0_i32_2 = arith.constant 0 : i32
    return %c0_i32, %c0_i32_0, %c0_i32_1 : i32, i32, i32
  }
  func.func @transform_7(%arg0: i32) -> (i32, i32, i32) {
    %c0_i32 = arith.constant 0 : i32
    %c0_i32_0 = arith.constant 0 : i32
    %c0_i32_1 = arith.constant 0 : i32
    %c0_i32_2 = arith.constant 0 : i32
    return %c0_i32, %c0_i32_0, %c0_i32_1 : i32, i32, i32
  }
  func.func @transform_8(%arg0: i32) -> (i32, i32, i32) {
    %c0_i32 = arith.constant 0 : i32
    %c0_i32_0 = arith.constant 0 : i32
    %c0_i32_1 = arith.constant 0 : i32
    %c0_i32_2 = arith.constant 0 : i32
    return %c0_i32, %c0_i32_0, %c0_i32_1 : i32, i32, i32
  }
  func.func @transform_9(%arg0: i32) -> (i32, i32, i32) {
    %c0_i32 = arith.constant 0 : i32
    %c0_i32_0 = arith.constant 0 : i32
    %c0_i32_1 = arith.constant 0 : i32
    %c0_i32_2 = arith.constant 0 : i32
    return %c0_i32, %c0_i32_0, %c0_i32_1 : i32, i32, i32
  }
  func.func @transform_10(%arg0: i32) -> (i32, i32, i32) {
    %c0_i32 = arith.constant 0 : i32
    %c0_i32_0 = arith.constant 0 : i32
    %c0_i32_1 = arith.constant 0 : i32
    %c0_i32_2 = arith.constant 0 : i32
    return %c0_i32, %c0_i32_0, %c0_i32_1 : i32, i32, i32
  }
  func.func @transform_11(%arg0: i32) -> (i32, i32, i32) {
    %c0_i32 = arith.constant 0 : i32
    %c0_i32_0 = arith.constant 0 : i32
    %c0_i32_1 = arith.constant 0 : i32
    %c0_i32_2 = arith.constant 0 : i32
    return %c0_i32, %c0_i32_0, %c0_i32_1 : i32, i32, i32
  }
  func.func @transform_12(%arg0: i32) -> (i32, i32, i32) {
    %c0_i32 = arith.constant 0 : i32
    %c0_i32_0 = arith.constant 0 : i32
    %c0_i32_1 = arith.constant 0 : i32
    %c0_i32_2 = arith.constant 0 : i32
    return %c0_i32, %c0_i32_0, %c0_i32_1 : i32, i32, i32
  }
  func.func @transform_13(%arg0: i32) -> (i32, i32, i32) {
    %c0_i32 = arith.constant 0 : i32
    %c0_i32_0 = arith.constant 0 : i32
    %c0_i32_1 = arith.constant 0 : i32
    %c0_i32_2 = arith.constant 0 : i32
    return %c0_i32, %c0_i32_0, %c0_i32_1 : i32, i32, i32
  }
  func.func @transform_14(%arg0: i32) -> (i32, i32) {
    %c0_i32 = arith.constant 0 : i32
    %c0_i32_0 = arith.constant 0 : i32
    %c0_i32_1 = arith.constant 0 : i32
    return %c0_i32, %c0_i32_0 : i32, i32
  }
  func.func @transform_15(%arg0: i32) -> (i32, i32) {
    %c0_i32 = arith.constant 0 : i32
    %c0_i32_0 = arith.constant 0 : i32
    %c0_i32_1 = arith.constant 0 : i32
    return %c0_i32, %c0_i32_0 : i32, i32
  }
  func.func @transform_16(%arg0: i32) -> (i32, i32) {
    %c0_i32 = arith.constant 0 : i32
    %c0_i32_0 = arith.constant 0 : i32
    %c0_i32_1 = arith.constant 0 : i32
    return %c0_i32, %c0_i32_0 : i32, i32
  }
  func.func @transform_17(%arg0: i32) -> (i32, i32) {
    %c0_i32 = arith.constant 0 : i32
    %c0_i32_0 = arith.constant 0 : i32
    %c0_i32_1 = arith.constant 0 : i32
    return %c0_i32, %c0_i32_0 : i32, i32
  }
  func.func @transform_18(%arg0: i32) -> (i32, i32) {
    %c0_i32 = arith.constant 0 : i32
    %c0_i32_0 = arith.constant 0 : i32
    %c0_i32_1 = arith.constant 0 : i32
    return %c0_i32, %c0_i32_0 : i32, i32
  }
  func.func @transform_19(%arg0: i32) -> (i32, i32) {
    %c0_i32 = arith.constant 0 : i32
    %c0_i32_0 = arith.constant 0 : i32
    %c0_i32_1 = arith.constant 0 : i32
    return %c0_i32, %c0_i32_0 : i32, i32
  }
  func.func @transform_20(%arg0: i32) -> (i32, i32) {
    %c0_i32 = arith.constant 0 : i32
    %c0_i32_0 = arith.constant 0 : i32
    %c0_i32_1 = arith.constant 0 : i32
    return %c0_i32, %c0_i32_0 : i32, i32
  }
  func.func @transform_21(%arg0: i32) -> (i32, i32) {
    %c0_i32 = arith.constant 0 : i32
    %c0_i32_0 = arith.constant 0 : i32
    %c0_i32_1 = arith.constant 0 : i32
    return %c0_i32, %c0_i32_0 : i32, i32
  }
}

</mosaic_0001>

<llo_original>
// kernel: tpu_custom_call.1
$region0: #{tpu_custom_call.1}
  #allocation0 [shape = 'u32[]', space=smem, size = 0x4, offset = 0x4, fixed_abs, tag = 'smem constant byte address 0x4 - core index']
  #allocation1 [shape = 'u32[144,128]{1,0:T(1,128)}', space=vmem, size = 0x12000, scoped, tag = 'internal scratch']
  #allocation2 [shape = 'bf16[128,384]{1,0:T(8,128)(2,1)}', space=vmem, size = 0x18000, scoped, tag = 'scratch operand']
  #allocation3 [shape = 'f32[1,1]{1,0:T(1,128)S(1)}', space=vmem, size = 0x200, scoped, tag = 'scoped memory for tpu_custom_call.1']
  %s0 = inlined_call_operand.hbm [shape: f32[128,128], index: 0, kind: input, shape index: {}]
  %s1 = inlined_call_operand.hbm [shape: f32[128,128], index: 1, kind: input, shape index: {}]
  %s2 = inlined_call_operand.hbm [shape: bf16[2,128,384], index: 2, kind: input, shape index: {}]
  %s3 = inlined_call_operand.hbm [shape: f32[2,1,384], index: 3, kind: input, shape index: {}]
  %s4 = inlined_call_operand.hbm [shape: bf16[2,128,128], index: 4, kind: input, shape index: {}]
  %s5 = inlined_call_operand.vmem [shape: f32[2,1,128], index: 5, kind: input, shape index: {}]
  %s6 = inlined_call_operand.hbm [shape: f32[2,1,128], index: 6, kind: input, shape index: {}]
  %s7 = inlined_call_operand.hbm [shape: f32[2,1,128], index: 7, kind: input, shape index: {}]
  %s8 = inlined_call_operand.hbm [shape: bf16[2,128,512], index: 8, kind: input, shape index: {}]
  %s9 = inlined_call_operand.vmem [shape: f32[2,1,512], index: 9, kind: input, shape index: {}]
  %s10 = inlined_call_operand.hbm [shape: bf16[2,512,128], index: 10, kind: input, shape index: {}]
  %s11 = inlined_call_operand.hbm [shape: f32[2,1,128], index: 11, kind: input, shape index: {}]
  %s12 = inlined_call_operand.hbm [shape: f32[2,1,128], index: 12, kind: input, shape index: {}]
  %s13 = inlined_call_operand.hbm [shape: f32[2,1,128], index: 13, kind: input, shape index: {}]
  %s14 = inlined_call_operand.vmem [shape: f32[16,128], index: 14, kind: input, shape index: {}]
  %s15 = inlined_call_operand.<no memory space> [shape: f32[1,1], index: 15, kind: input, shape index: {}]
  %s16 = inlined_call_operand.vmem [shape: f32[2,4], index: 16, kind: input, shape index: {}]
  %s17 = inlined_call_operand.vmem [shape: f32[2,4], index: 17, kind: input, shape index: {}]
  %s18 = inlined_call_operand.vmem [shape: f32[2,4], index: 18, kind: input, shape index: {}]
  %s19 = inlined_call_operand.hbm [shape: f32[1,1], index: 19, kind: output, shape index: {0}]
  %s20 = inlined_call_operand.hbm [shape: f32[2,4], index: 20, kind: output, shape index: {1}]
  %s21 = inlined_call_operand.hbm [shape: f32[2,4], index: 21, kind: output, shape index: {2}]
  %22 = xla_tuple %s19, %s20, %s21
  %s23 = sld [smem:[#allocation0]]
  $region150: #{tpu_custom_call.1} parent=0
    _
  %s25 = ssub.s32 1, %s23
  %s26 = scalar_select 0, %s25, %s23
  %v27 = vstv %s15
  %28 = vst [vmem:[#allocation3] sm:$0x1] %v27
  $region1: #{tpu_custom_call.1} parent=0
    #allocation4 [shape = 'u8[65536]{0}', space=vmem, size = 0x10000, scoped, tag = 'input window, operand 0, single buffered']
    #allocation5 [shape = 's32[1]{0}', space=sflag, size = 0x4, scoped, tag = 'scoped memory for tpu_custom_call.1']
    #allocation6 [shape = 's32[1]{0}', space=sflag, size = 0x4, scoped, tag = 'scoped memory for tpu_custom_call.1']
    #allocation7 [shape = 'u8[65536]{0}', space=vmem, size = 0x10000, scoped, tag = 'input window, operand 1, single buffered']
    #allocation8 [shape = 's32[1]{0}', space=sflag, size = 0x4, scoped, tag = 'scoped memory for tpu_custom_call.1']
    #allocation9 [shape = 'u8[196608]{0}', space=vmem, size = 0x30000, scoped, tag = 'input window, operand 2, single buffered']
    #allocation10 [shape = 'u8[3072]{0}', space=vmem, size = 0xc00, scoped, tag = 'input window, operand 3, single buffered']
    #allocation11 [shape = 's32[1]{0}', space=sflag, size = 0x4, scoped, tag = 'scoped memory for tpu_custom_call.1']
    #allocation12 [shape = 'u8[65536]{0}', space=vmem, size = 0x10000, scoped, tag = 'input window, operand 4, single buffered']
    #allocation13 [shape = 'u8[1024]{0}', space=vmem, size = 0x400, scoped, tag = 'input window, operand 6, single buffered']
    #allocation14 [shape = 's32[1]{0}', space=sflag, size = 0x4, scoped, tag = 'scoped memory for tpu_custom_call.1']
    #allocation15 [shape = 'u8[1024]{0}', space=vmem, size = 0x400, scoped, tag = 'input window, operand 7, single buffered']
    #allocation16 [shape = 'u8[262144]{0}', space=vmem, size = 0x40000, scoped, tag = 'input window, operand 8, single buffered']
    #allocation17 [shape = 's32[1]{0}', space=sflag, size = 0x4, scoped, tag = 'scoped memory for tpu_custom_call.1']
    #allocation18 [shape = 'u8[262144]{0}', space=vmem, size = 0x40000, scoped, tag = 'input window, operand 10, single buffered']
    #allocation19 [shape = 'u8[1024]{0}', space=vmem, size = 0x400, scoped, tag = 'input window, operand 11, single buffered']
    #allocation20 [shape = 's32[1]{0}', space=sflag, size = 0x4, scoped, tag = 'scoped memory for tpu_custom_call.1']
    #allocation21 [shape = 'u8[1024]{0}', space=vmem, size = 0x400, scoped, tag = 'input window, operand 12, single buffered']
    #allocation22 [shape = 'u8[1024]{0}', space=vmem, size = 0x400, scoped, tag = 'input window, operand 13, single buffered']
    #allocation23 [shape = 's32[1]{0}', space=sflag, size = 0x4, scoped, tag = 'scoped memory for tpu_custom_call.1']
    #allocation24 [shape = 'u8[512]{0}', space=vmem, size = 0x400, scoped, tag = 'output window, operand 0, single buffered']
    #allocation25 [shape = 'u8[1024]{0}', space=vmem, size = 0x400, scoped, tag = 'output window, operand 1, single buffered']
    #allocation26 [shape = 's32[1]{0}', space=sflag, size = 0x4, scoped, tag = 'scoped memory for tpu_custom_call.1']
    #allocation27 [shape = 'u8[1024]{0}', space=vmem, size = 0x400, scoped, tag = 'output window, operand 2, single buffered']
    %29 = vsyncpa [#allocation5], 0
    %30 = vsyncpa [#allocation8], 0
    %31 = vsyncpa [#allocation11], 0
    %32 = vsyncpa [#allocation14], 0
    %33 = vsyncpa [#allocation17], 0
    %34 = vsyncpa [#allocation20], 0
    %35 = vsyncpa [#allocation23], 0
    %36 = vsyncpa [#allocation6], 0
    %37 = vsyncpa [#allocation26], 0
    // Predicated region
    $region2: #{tpu_custom_call.1} parent=1 // pred_check
      _
    $region3: #{tpu_custom_call.1} parent=1 // pred_check_branch
      %39 = sbr.rel (0) target = $region5
    $region4: #{tpu_custom_call.1} parent=1 // pred_region
      %s41 = ssub.s32 2048, 2048
      %42 = vsyncadd [#allocation5], %s41
      %s43 = sshll.u32 [#allocation4], 4
      %s44 = int_to_ptr.vmem [resolvable:$true] %s43
      %49 = dma.hbm_to_vmem [thread:$0]  %s0, 2048, %s44, [#allocation5], 128, 128, 8
    $region5: #{tpu_custom_call.1} parent=1 // pred_fallthru
      _
    // Predicated region
    $region6: #{tpu_custom_call.1} parent=1 // pred_check
      _
    $region7: #{tpu_custom_call.1} parent=1 // pred_check_branch
      %51 = sbr.rel (0) target = $region9
    $region8: #{tpu_custom_call.1} parent=1 // pred_region
      %s53 = ssub.s32 2048, 2048
      %54 = vsyncadd [#allocation8], %s53
      %s55 = sshll.u32 [#allocation7], 4
      %s56 = int_to_ptr.vmem [resolvable:$true] %s55
      %61 = dma.hbm_to_vmem [thread:$0]  %s1, 2048, %s56, [#allocation8], 128, 128, 8
    $region9: #{tpu_custom_call.1} parent=1 // pred_fallthru
      _
    // Predicated region
    $region10: #{tpu_custom_call.1} parent=1 // pred_check
      _
    $region11: #{tpu_custom_call.1} parent=1 // pred_check_branch
      %63 = sbr.rel (0) target = $region13
    $region12: #{tpu_custom_call.1} parent=1 // pred_region
      %s65 = ssub.s32 6144, 6144
      %66 = vsyncadd [#allocation8], %s65
      %s67 = sshll.u32 [#allocation9], 4
      %s68 = int_to_ptr.vmem [resolvable:$true] %s67
      %73 = dma.hbm_to_vmem [thread:$0]  %s2, 6144, %s68, [#allocation8], 192, 192, 12
    $region13: #{tpu_custom_call.1} parent=1 // pred_fallthru
      _
    // Predicated region
    $region14: #{tpu_custom_call.1} parent=1 // pred_check
      _
    $region15: #{tpu_custom_call.1} parent=1 // pred_check_branch
      %75 = sbr.rel (0) target = $region17
    $region16: #{tpu_custom_call.1} parent=1 // pred_region
      %s77 = ssub.s32 96, 96
      %78 = vsyncadd [#allocation11], %s77
      %s79 = sshll.u32 [#allocation10], 4
      %s80 = int_to_ptr.vmem [resolvable:$true] %s79
      %85 = dma.hbm_to_vmem [thread:$0]  %s3, 96, %s80, [#allocation11], 48, 48, 3
    $region17: #{tpu_custom_call.1} parent=1 // pred_fallthru
      _
    // Predicated region
    $region18: #{tpu_custom_call.1} parent=1 // pred_check
      _
    $region19: #{tpu_custom_call.1} parent=1 // pred_check_branch
      %87 = sbr.rel (0) target = $region21
    $region20: #{tpu_custom_call.1} parent=1 // pred_region
      %s89 = ssub.s32 2048, 2048
      %90 = vsyncadd [#allocation11], %s89
      %s91 = sshll.u32 [#allocation12], 4
      %s92 = int_to_ptr.vmem [resolvable:$true] %s91
      %97 = dma.hbm_to_vmem [thread:$0]  %s4, 2048, %s92, [#allocation11], 64, 64, 4
    $region21: #{tpu_custom_call.1} parent=1 // pred_fallthru
      _
    // Predicated region
    $region22: #{tpu_custom_call.1} parent=1 // pred_check
      _
    $region23: #{tpu_custom_call.1} parent=1 // pred_check_branch
      %99 = sbr.rel (0) target = $region25
    $region24: #{tpu_custom_call.1} parent=1 // pred_region
      _
    $region25: #{tpu_custom_call.1} parent=1 // pred_fallthru
      _
    // Predicated region
    $region26: #{tpu_custom_call.1} parent=1 // pred_check
      _
    $region27: #{tpu_custom_call.1} parent=1 // pred_check_branch
      %101 = sbr.rel (0) target = $region29
    $region28: #{tpu_custom_call.1} parent=1 // pred_region
      %s103 = ssub.s32 32, 32
      %104 = vsyncadd [#allocation14], %s103
      %s105 = sshll.u32 [#allocation13], 4
      %s106 = int_to_ptr.vmem [resolvable:$true] %s105
      %111 = dma.hbm_to_vmem [thread:$0]  %s6, 32, %s106, [#allocation14], 16, 16, 1
    $region29: #{tpu_custom_call.1} parent=1 // pred_fallthru
      _
    // Predicated region
    $region30: #{tpu_custom_call.1} parent=1 // pred_check
      _
    $region31: #{tpu_custom_call.1} parent=1 // pred_check_branch
      %113 = sbr.rel (0) target = $region33
    $region32: #{tpu_custom_call.1} parent=1 // pred_region
      %s115 = ssub.s32 32, 32
      %116 = vsyncadd [#allocation14], %s115
      %s117 = sshll.u32 [#allocation15], 4
      %s118 = int_to_ptr.vmem [resolvable:$true] %s117
      %123 = dma.hbm_to_vmem [thread:$0]  %s7, 32, %s118, [#allocation14], 16, 16, 1
    $region33: #{tpu_custom_call.1} parent=1 // pred_fallthru
      _
    // Predicated region
    $region34: #{tpu_custom_call.1} parent=1 // pred_check
      _
    $region35: #{tpu_custom_call.1} parent=1 // pred_check_branch
      %125 = sbr.rel (0) target = $region37
    $region36: #{tpu_custom_call.1} parent=1 // pred_region
      %s127 = ssub.s32 8192, 8192
      %128 = vsyncadd [#allocation17], %s127
      %s129 = sshll.u32 [#allocation16], 4
      %s130 = int_to_ptr.vmem [resolvable:$true] %s129
      %135 = dma.hbm_to_vmem [thread:$0]  %s8, 8192, %s130, [#allocation17], 256, 256, 16
    $region37: #{tpu_custom_call.1} parent=1 // pred_fallthru
      _
    // Predicated region
    $region38: #{tpu_custom_call.1} parent=1 // pred_check
      _
    $region39: #{tpu_custom_call.1} parent=1 // pred_check_branch
      %137 = sbr.rel (0) target = $region41
    $region40: #{tpu_custom_call.1} parent=1 // pred_region
      _
    $region41: #{tpu_custom_call.1} parent=1 // pred_fallthru
      _
    // Predicated region
    $region42: #{tpu_custom_call.1} parent=1 // pred_check
      _
    $region43: #{tpu_custom_call.1} parent=1 // pred_check_branch
      %139 = sbr.rel (0) target = $region45
    $region44: #{tpu_custom_call.1} parent=1 // pred_region
      %s141 = ssub.s32 8192, 8192
      %142 = vsyncadd [#allocation17], %s141
      %s143 = sshll.u32 [#allocation18], 4
      %s144 = int_to_ptr.vmem [resolvable:$true] %s143
      %149 = dma.hbm_to_vmem [thread:$0]  %s10, 8192, %s144, [#allocation17], 64, 64, 4
    $region45: #{tpu_custom_call.1} parent=1 // pred_fallthru
      _
    // Predicated region
    $region46: #{tpu_custom_call.1} parent=1 // pred_check
      _
    $region47: #{tpu_custom_call.1} parent=1 // pred_check_branch
      %151 = sbr.rel (0) target = $region49
    $region48: #{tpu_custom_call.1} parent=1 // pred_region
      %s153 = ssub.s32 32, 32
      %154 = vsyncadd [#allocation20], %s153
      %s155 = sshll.u32 [#allocation19], 4
      %s156 = int_to_ptr.vmem [resolvable:$true] %s155
      %161 = dma.hbm_to_vmem [thread:$0]  %s11, 32, %s156, [#allocation20], 16, 16, 1
    $region49: #{tpu_custom_call.1} parent=1 // pred_fallthru
      _
    // Predicated region
    $region50: #{tpu_custom_call.1} parent=1 // pred_check
      _
    $region51: #{tpu_custom_call.1} parent=1 // pred_check_branch
      %163 = sbr.rel (0) target = $region53
    $region52: #{tpu_custom_call.1} parent=1 // pred_region
      %s165 = ssub.s32 32, 32
      %166 = vsyncadd [#allocation20], %s165
      %s167 = sshll.u32 [#allocation21], 4
      %s168 = int_to_ptr.vmem [resolvable:$true] %s167
      %173 = dma.hbm_to_vmem [thread:$0]  %s12, 32, %s168, [#allocation20], 16, 16, 1
    $region53: #{tpu_custom_call.1} parent=1 // pred_fallthru
      _
    // Predicated region
    $region54: #{tpu_custom_call.1} parent=1 // pred_check
      _
    $region55: #{tpu_custom_call.1} parent=1 // pred_check_branch
      %175 = sbr.rel (0) target = $region57
    $region56: #{tpu_custom_call.1} parent=1 // pred_region
      %s177 = ssub.s32 32, 32
      %178 = vsyncadd [#allocation23], %s177
      %s179 = sshll.u32 [#allocation22], 4
      %s180 = int_to_ptr.vmem [resolvable:$true] %s179
      %185 = dma.hbm_to_vmem [thread:$0]  %s13, 32, %s180, [#allocation23], 16, 16, 1
    $region57: #{tpu_custom_call.1} parent=1 // pred_fallthru
      _
    // Predicated region
    $region58: #{tpu_custom_call.1} parent=1 // pred_check
      _
    $region59: #{tpu_custom_call.1} parent=1 // pred_check_branch
      %187 = sbr.rel (0) target = $region61
    $region60: #{tpu_custom_call.1} parent=1 // pred_region
      _
    $region61: #{tpu_custom_call.1} parent=1 // pred_fallthru
      _
    // Predicated region
    $region62: #{tpu_custom_call.1} parent=1 // pred_check
      _
    $region63: #{tpu_custom_call.1} parent=1 // pred_check_branch
      %189 = sbr.rel (0) target = $region65
    $region64: #{tpu_custom_call.1} parent=1 // pred_region
      _
    $region65: #{tpu_custom_call.1} parent=1 // pred_fallthru
      _
    // Predicated region
    $region66: #{tpu_custom_call.1} parent=1 // pred_check
      _
    $region67: #{tpu_custom_call.1} parent=1 // pred_check_branch
      %191 = sbr.rel (0) target = $region69
    $region68: #{tpu_custom_call.1} parent=1 // pred_region
      _
    $region69: #{tpu_custom_call.1} parent=1 // pred_fallthru
      _
    // Predicated region
    $region70: #{tpu_custom_call.1} parent=1 // pred_check
      _
    $region71: #{tpu_custom_call.1} parent=1 // pred_check_branch
      %193 = sbr.rel (0) target = $region73
    $region72: #{tpu_custom_call.1} parent=1 // pred_region
      _
    $region73: #{tpu_custom_call.1} parent=1 // pred_fallthru
      _
    // Predicated region
    $region74: #{tpu_custom_call.1} parent=1 // pred_check
      _
    $region75: #{tpu_custom_call.1} parent=1 // pred_check_branch
      %195 = sbr.rel (0) target = $region77
    $region76: #{tpu_custom_call.1} parent=1 // pred_region
      _
    $region77: #{tpu_custom_call.1} parent=1 // pred_fallthru
      _
    // Predicated region
    $region78: #{tpu_custom_call.1} parent=1 // pred_check
      _
    $region79: #{tpu_custom_call.1} parent=1 // pred_check_branch
      %197 = sbr.rel (0) target = $region81
    $region80: #{tpu_custom_call.1} parent=1 // pred_region
      %198 = dma.done [#allocation5], 2048
    $region81: #{tpu_custom_call.1} parent=1 // pred_fallthru
      _
    // Predicated region
    $region82: #{tpu_custom_call.1} parent=1 // pred_check
      _
    $region83: #{tpu_custom_call.1} parent=1 // pred_check_branch
      %200 = sbr.rel (0) target = $region85
    $region84: #{tpu_custom_call.1} parent=1 // pred_region
      %201 = dma.done [#allocation8], 2048
    $region85: #{tpu_custom_call.1} parent=1 // pred_fallthru
      _
    // Predicated region
    $region86: #{tpu_custom_call.1} parent=1 // pred_check
      _
    $region87: #{tpu_custom_call.1} parent=1 // pred_check_branch
      %203 = sbr.rel (0) target = $region89
    $region88: #{tpu_custom_call.1} parent=1 // pred_region
      %204 = dma.done [#allocation8], 6144
    $region89: #{tpu_custom_call.1} parent=1 // pred_fallthru
      _
    // Predicated region
    $region90: #{tpu_custom_call.1} parent=1 // pred_check
      _
    $region91: #{tpu_custom_call.1} parent=1 // pred_check_branch
      %206 = sbr.rel (0) target = $region93
    $region92: #{tpu_custom_call.1} parent=1 // pred_region
      %207 = dma.done [#allocation11], 96
    $region93: #{tpu_custom_call.1} parent=1 // pred_fallthru
      _
    // Predicated region
    $region94: #{tpu_custom_call.1} parent=1 // pred_check
      _
    $region95: #{tpu_custom_call.1} parent=1 // pred_check_branch
      %209 = sbr.rel (0) target = $region97
    $region96: #{tpu_custom_call.1} parent=1 // pred_region
      %210 = dma.done [#allocation11], 2048
    $region97: #{tpu_custom_call.1} parent=1 // pred_fallthru
      _
    // Predicated region
    $region98: #{tpu_custom_call.1} parent=1 // pred_check
      _
    $region99: #{tpu_custom_call.1} parent=1 // pred_check_branch
      %212 = sbr.rel (0) target = $region101
    $region100: #{tpu_custom_call.1} parent=1 // pred_region
      %213 = dma.done [#allocation14], 32
    $region101: #{tpu_custom_call.1} parent=1 // pred_fallthru
      _
    // Predicated region
    $region102: #{tpu_custom_call.1} parent=1 // pred_check
      _
    $region103: #{tpu_custom_call.1} parent=1 // pred_check_branch
      %215 = sbr.rel (0) target = $region105
    $region104: #{tpu_custom_call.1} parent=1 // pred_region
      %216 = dma.done [#allocation14], 32
    $region105: #{tpu_custom_call.1} parent=1 // pred_fallthru
      _
    // Predicated region
    $region106: #{tpu_custom_call.1} parent=1 // pred_check
      _
    $region107: #{tpu_custom_call.1} parent=1 // pred_check_branch
      %218 = sbr.rel (0) target = $region109
    $region108: #{tpu_custom_call.1} parent=1 // pred_region
      %219 = dma.done [#allocation17], 8192
    $region109: #{tpu_custom_call.1} parent=1 // pred_fallthru
      _
    // Predicated region
    $region110: #{tpu_custom_call.1} parent=1 // pred_check
      _
    $region111: #{tpu_custom_call.1} parent=1 // pred_check_branch
      %221 = sbr.rel (0) target = $region113
    $region112: #{tpu_custom_call.1} parent=1 // pred_region
      %222 = dma.done [#allocation17], 8192
    $region113: #{tpu_custom_call.1} parent=1 // pred_fallthru
      _
    // Predicated region
    $region114: #{tpu_custom_call.1} parent=1 // pred_check
      _
    $region115: #{tpu_custom_call.1} parent=1 // pred_check_branch
      %224 = sbr.rel (0) target = $region117
    $region116: #{tpu_custom_call.1} parent=1 // pred_region
      %225 = dma.done [#allocation20], 32
    $region117: #{tpu_custom_call.1} parent=1 // pred_fallthru
      _
    // Predicated region
    $region118: #{tpu_custom_call.1} parent=1 // pred_check
      _
    $region119: #{tpu_custom_call.1} parent=1 // pred_check_branch
      %227 = sbr.rel (0) target = $region121
    $region120: #{tpu_custom_call.1} parent=1 // pred_region
      %228 = dma.done [#allocation20], 32
    $region121: #{tpu_custom_call.1} parent=1 // pred_fallthru
      _
    // Predicated region
    $region122: #{tpu_custom_call.1} parent=1 // pred_check
      _
    $region123: #{tpu_custom_call.1} parent=1 // pred_check_branch
      %230 = sbr.rel (0) target = $region125
    $region124: #{tpu_custom_call.1} parent=1 // pred_region
      %231 = dma.done [#allocation23], 32
    $region125: #{tpu_custom_call.1} parent=1 // pred_fallthru
      _
    %v233 = vld [vmem:[#allocation4] sm:$0xff]
    %v234 = vld [vmem:[#allocation4 + $0x8] sm:$0xff]
    %v235 = vld [vmem:[#allocation4 + $0x10] sm:$0xff]
    %v236 = vld [vmem:[#allocation4 + $0x18] sm:$0xff]
    %v237 = vld [vmem:[#allocation4 + $0x20] sm:$0xff]
    %v238 = vld [vmem:[#allocation4 + $0x28] sm:$0xff]
    %v239 = vld [vmem:[#allocation4 + $0x30] sm:$0xff]
    %v240 = vld [vmem:[#allocation4 + $0x38] sm:$0xff]
    %v241 = vld [vmem:[#allocation4 + $0x40] sm:$0xff]
    %v242 = vld [vmem:[#allocation4 + $0x48] sm:$0xff]
    %v243 = vld [vmem:[#allocation4 + $0x50] sm:$0xff]
    %v244 = vld [vmem:[#allocation4 + $0x58] sm:$0xff]
    %v245 = vld [vmem:[#allocation4 + $0x60] sm:$0xff]
    %v246 = vld [vmem:[#allocation4 + $0x68] sm:$0xff]
    %v247 = vld [vmem:[#allocation4 + $0x70] sm:$0xff]
    %v248 = vld [vmem:[#allocation4 + $0x78] sm:$0xff]
    %v249 = vld [vmem:[#allocation7] sm:$0xff]
    %v250 = vld [vmem:[#allocation7 + $0x8] sm:$0xff]
    %v251 = vld [vmem:[#allocation7 + $0x10] sm:$0xff]
    %v252 = vld [vmem:[#allocation7 + $0x18] sm:$0xff]
    %v253 = vld [vmem:[#allocation7 + $0x20] sm:$0xff]
    %v254 = vld [vmem:[#allocation7 + $0x28] sm:$0xff]
    %v255 = vld [vmem:[#allocation7 + $0x30] sm:$0xff]
    %v256 = vld [vmem:[#allocation7 + $0x38] sm:$0xff]
    %v257 = vld [vmem:[#allocation7 + $0x40] sm:$0xff]
    %v258 = vld [vmem:[#allocation7 + $0x48] sm:$0xff]
    %v259 = vld [vmem:[#allocation7 + $0x50] sm:$0xff]
    %v260 = vld [vmem:[#allocation7 + $0x58] sm:$0xff]
    %v261 = vld [vmem:[#allocation7 + $0x60] sm:$0xff]
    %v262 = vld [vmem:[#allocation7 + $0x68] sm:$0xff]
    %v263 = vld [vmem:[#allocation7 + $0x70] sm:$0xff]
    %v264 = vld [vmem:[#allocation7 + $0x78] sm:$0xff]
    %v265 = vpack.c.bf16 %v234, %v233
    %v266 = vpack.c.bf16 %v236, %v235
    %v267 = vpack.c.bf16 %v238, %v237
    %v268 = vpack.c.bf16 %v240, %v239
    %v269 = vpack.c.bf16 %v242, %v241
    %v270 = vpack.c.bf16 %v244, %v243
    %v271 = vpack.c.bf16 %v246, %v245
    %v272 = vpack.c.bf16 %v248, %v247
    %v273 = vld [vmem:[#allocation9] sm:$0xff]
    %v274 = vld [vmem:[#allocation9 + $0x8] sm:$0xf]
    %v275 = vld [vmem:[#allocation9 + $0xc] sm:$0xff]
    %v276 = vld [vmem:[#allocation9 + $0x14] sm:$0xf]
    %v277 = vld [vmem:[#allocation9 + $0x18] sm:$0xff]
    %v278 = vld [vmem:[#allocation9 + $0x20] sm:$0xf]
    %v279 = vld [vmem:[#allocation9 + $0x24] sm:$0xff]
    %v280 = vld [vmem:[#allocation9 + $0x2c] sm:$0xf]
    %v281 = vld [vmem:[#allocation9 + $0x30] sm:$0xff]
    %v282 = vld [vmem:[#allocation9 + $0x38] sm:$0xf]
    %v283 = vld [vmem:[#allocation9 + $0x3c] sm:$0xff]
    %v284 = vld [vmem:[#allocation9 + $0x44] sm:$0xf]
    %v285 = vld [vmem:[#allocation9 + $0x48] sm:$0xff]
    %v286 = vld [vmem:[#allocation9 + $0x50] sm:$0xf]
    %v287 = vld [vmem:[#allocation9 + $0x54] sm:$0xff]
    %v288 = vld [vmem:[#allocation9 + $0x5c] sm:$0xf]
    %v289 = vld [vmem:[#allocation9 + $0x60] sm:$0xff]
    %v290 = vld [vmem:[#allocation9 + $0x68] sm:$0xf]
    %v291 = vld [vmem:[#allocation9 + $0x6c] sm:$0xff]
    %v292 = vld [vmem:[#allocation9 + $0x74] sm:$0xf]
    %v293 = vld [vmem:[#allocation9 + $0x78] sm:$0xff]
    %v294 = vld [vmem:[#allocation9 + $0x80] sm:$0xf]
    %v295 = vld [vmem:[#allocation9 + $0x84] sm:$0xff]
    %v296 = vld [vmem:[#allocation9 + $0x8c] sm:$0xf]
    %v297 = vld [vmem:[#allocation9 + $0x90] sm:$0xff]
    %v298 = vld [vmem:[#allocation9 + $0x98] sm:$0xf]
    %v299 = vld [vmem:[#allocation9 + $0x9c] sm:$0xff]
    %v300 = vld [vmem:[#allocation9 + $0xa4] sm:$0xf]
    %v301 = vld [vmem:[#allocation9 + $0xa8] sm:$0xff]
    %v302 = vld [vmem:[#allocation9 + $0xb0] sm:$0xf]
    %v303 = vld [vmem:[#allocation9 + $0xb4] sm:$0xff]
    %v304 = vld [vmem:[#allocation9 + $0xbc] sm:$0xf]
    %v305 = vld [vmem:[#allocation10] sm:$0x7]
    %v307 = vlaneseq
    %v308 = vshrl.u32 %v307, 7
    %v309 = vsub.s32 0, %v308
    %v310 = vrot.slane %v305, %v309
    %v311 = vlaneseq
    %v312 = vshrl.u32 %v311, 7
    %v313 = vsub.s32 1, %v312
    %v314 = vrot.slane %v305, %v313
    %v315 = vlaneseq
    %v316 = vshrl.u32 %v315, 7
    %v317 = vsub.s32 2, %v316
    %v318 = vrot.slane %v305, %v317
    %v354 = vunpack.c.l.b16 %v273
    %v355 = vunpack.c.h.b16 %v273
    %v356 = vunpack.c.l.b16 %v274
    %v357 = vunpack.c.l.b16 %v275
    %v358 = vunpack.c.h.b16 %v275
    %v359 = vunpack.c.l.b16 %v276
    %v360 = vunpack.c.l.b16 %v277
    %v361 = vunpack.c.h.b16 %v277
    %v362 = vunpack.c.l.b16 %v278
    %v363 = vunpack.c.l.b16 %v279
    %v364 = vunpack.c.h.b16 %v279
    %v365 = vunpack.c.l.b16 %v280
    %v366 = vunpack.c.l.b16 %v281
    %v367 = vunpack.c.h.b16 %v281
    %v368 = vunpack.c.l.b16 %v282
    %v369 = vunpack.c.l.b16 %v283
    %v370 = vunpack.c.h.b16 %v283
    %v371 = vunpack.c.l.b16 %v284
    %v372 = vunpack.c.l.b16 %v285
    %v373 = vunpack.c.h.b16 %v285
    %v374 = vunpack.c.l.b16 %v286
    %v375 = vunpack.c.l.b16 %v287
    %v376 = vunpack.c.h.b16 %v287
    %v377 = vunpack.c.l.b16 %v288
    %v378 = vunpack.c.l.b16 %v289
    %v379 = vunpack.c.h.b16 %v289
    %v380 = vunpack.c.l.b16 %v290
    %v381 = vunpack.c.l.b16 %v291
    %v382 = vunpack.c.h.b16 %v291
    %v383 = vunpack.c.l.b16 %v292
    %v384 = vunpack.c.l.b16 %v293
    %v385 = vunpack.c.h.b16 %v293
    %v386 = vunpack.c.l.b16 %v294
    %v387 = vunpack.c.l.b16 %v295
    %v388 = vunpack.c.h.b16 %v295
    %v389 = vunpack.c.l.b16 %v296
    %v390 = vunpack.c.l.b16 %v297
    %v391 = vunpack.c.h.b16 %v297
    %v392 = vunpack.c.l.b16 %v298
    %v393 = vunpack.c.l.b16 %v299
    %v394 = vunpack.c.h.b16 %v299
    %v395 = vunpack.c.l.b16 %v300
    %v396 = vunpack.c.l.b16 %v301
    %v397 = vunpack.c.h.b16 %v301
    %v398 = vunpack.c.l.b16 %v302
    %v399 = vunpack.c.l.b16 %v303
    %v400 = vunpack.c.h.b16 %v303
    %v401 = vunpack.c.l.b16 %v304
    %v402 = vpack.c.b16 %v357, %v354
    %v403 = vpack.c.b16 %v358, %v355
    %v404 = vpack.c.b16 %v359, %v356
    %v405 = vpack.c.b16 %v363, %v360
    %v406 = vpack.c.b16 %v364, %v361
    %v407 = vpack.c.b16 %v365, %v362
    %v408 = vpack.c.b16 %v369, %v366
    %v409 = vpack.c.b16 %v370, %v367
    %v410 = vpack.c.b16 %v371, %v368
    %v411 = vpack.c.b16 %v375, %v372
    %v412 = vpack.c.b16 %v376, %v373
    %v413 = vpack.c.b16 %v377, %v374
    %v414 = vpack.c.b16 %v381, %v378
    %v415 = vpack.c.b16 %v382, %v379
    %v416 = vpack.c.b16 %v383, %v380
    %v417 = vpack.c.b16 %v387, %v384
    %v418 = vpack.c.b16 %v388, %v385
    %v419 = vpack.c.b16 %v389, %v386
    %v420 = vpack.c.b16 %v393, %v390
    %v421 = vpack.c.b16 %v394, %v391
    %v422 = vpack.c.b16 %v395, %v392
    %v423 = vpack.c.b16 %v399, %v396
    %v424 = vpack.c.b16 %v400, %v397
    %v425 = vpack.c.b16 %v401, %v398
    %450 = vmatprep.subr.bf16.mxu0 %v424
    %451 = vmatpush1.bf16.msra.mxu0 %v423
    %452 = vmatprep.subr.bf16.mxu0 %v421
    %453 = vmatpush1.bf16.msra.mxu0 %v420
    %454 = vmatprep.subr.bf16.mxu0 %v418
    %455 = vmatpush1.bf16.msra.mxu0 %v417
    %456 = vmatprep.subr.bf16.mxu0 %v415
    %457 = vmatpush1.bf16.msra.mxu0 %v414
    %458 = vmatprep.subr.bf16.mxu0 %v412
    %459 = vmatpush1.bf16.msra.mxu0 %v411
    %460 = vmatprep.subr.bf16.mxu0 %v409
    %461 = vmatpush1.bf16.msra.mxu0 %v408
    %462 = vmatprep.subr.bf16.mxu0 %v406
    %463 = vmatpush1.bf16.msra.mxu0 %v405
    %464 = vmatprep.subr.bf16.mxu0 %v403
    %465 = vmatpush1.bf16.msra.mxu0 %v402
    %466 = vmatprep.subr.bf16.mxu0 0
    %467 = vmatpush2.bf16.msra.mxu0 0
    %468 = vmatprep.subr.bf16.mxu0 0
    %469 = vmatpush2.bf16.msra.mxu0 0
    %470 = vmatprep.subr.bf16.mxu0 0
    %471 = vmatpush2.bf16.msra.mxu0 0
    %472 = vmatprep.subr.bf16.mxu0 0
    %473 = vmatpush2.bf16.msra.mxu0 0
    %474 = vmatprep.subr.bf16.mxu0 0
    %475 = vmatpush2.bf16.msra.mxu0 0
    %476 = vmatprep.subr.bf16.mxu0 0
    %477 = vmatpush2.bf16.msra.mxu0 0
    %478 = vmatprep.subr.bf16.mxu0 0
    %479 = vmatpush2.bf16.msra.mxu0 0
    %480 = vmatprep.subr.bf16.mxu0 0
    %481 = vmatpush2.bf16.msra.mxu0 0
    %482 = vmatprep.mubr.bf16.mxu0 0
    %483 = vmatmul.mubr.bf16.gmra.mxu0 %v265
    %v484 = vpop.f32.mrf.mxu0
    %v485 = vadd.f32 %v310, %v484
    %v486 = vpop.f32.mrf.mxu0
    %v487 = vadd.f32 %v314, %v486
    %v488 = vpop.f32.mrf.mxu0
    %v489 = vadd.f32 %v310, %v488
    %v490 = vpop.f32.mrf.mxu0
    %v491 = vadd.f32 %v314, %v490
    %492 = vmatprep.mubr.bf16.mxu0 0
    %493 = vmatmul.mubr.bf16.gmra.mxu0 %v266
    %v494 = vpop.f32.mrf.mxu0
    %v495 = vadd.f32 %v310, %v494
    %v496 = vpop.f32.mrf.mxu0
    %v497 = vadd.f32 %v314, %v496
    %v498 = vpop.f32.mrf.mxu0
    %v499 = vadd.f32 %v310, %v498
    %v500 = vpop.f32.mrf.mxu0
    %v501 = vadd.f32 %v314, %v500
    %502 = vmatprep.mubr.bf16.mxu0 0
    %503 = vmatmul.mubr.bf16.gmra.mxu0 %v267
    %v504 = vpop.f32.mrf.mxu0
    %v505 = vadd.f32 %v310, %v504
    %v506 = vpop.f32.mrf.mxu0
    %v507 = vadd.f32 %v314, %v506
    %v508 = vpop.f32.mrf.mxu0
    %v509 = vadd.f32 %v310, %v508
    %v510 = vpop.f32.mrf.mxu0
    %v511 = vadd.f32 %v314, %v510
    %512 = vmatprep.mubr.bf16.mxu0 0
    %513 = vmatmul.mubr.bf16.gmra.mxu0 %v268
    %v514 = vpop.f32.mrf.mxu0
    %v515 = vadd.f32 %v310, %v514
    %v516 = vpop.f32.mrf.mxu0
    %v517 = vadd.f32 %v314, %v516
    %v518 = vpop.f32.mrf.mxu0
    %v519 = vadd.f32 %v310, %v518
    %v520 = vpop.f32.mrf.mxu0
    %v521 = vadd.f32 %v314, %v520
    %522 = vmatprep.mubr.bf16.mxu0 0
    %523 = vmatmul.mubr.bf16.gmra.mxu0 %v269
    %v524 = vpop.f32.mrf.mxu0
    %v525 = vadd.f32 %v310, %v524
    %v526 = vpop.f32.mrf.mxu0
    %v527 = vadd.f32 %v314, %v526
    %v528 = vpop.f32.mrf.mxu0
    %v529 = vadd.f32 %v310, %v528
    %v530 = vpop.f32.mrf.mxu0
    %v531 = vadd.f32 %v314, %v530
    %532 = vmatprep.mubr.bf16.mxu0 0
    %533 = vmatmul.mubr.bf16.gmra.mxu0 %v270
    %v534 = vpop.f32.mrf.mxu0
    %v535 = vadd.f32 %v310, %v534
    %v536 = vpop.f32.mrf.mxu0
    %v537 = vadd.f32 %v314, %v536
    %v538 = vpop.f32.mrf.mxu0
    %v539 = vadd.f32 %v310, %v538
    %v540 = vpop.f32.mrf.mxu0
    %v541 = vadd.f32 %v314, %v540
    %542 = vmatprep.mubr.bf16.mxu0 0
    %543 = vmatmul.mubr.bf16.gmra.mxu0 %v271
    %v544 = vpop.f32.mrf.mxu0
    %v545 = vadd.f32 %v310, %v544
    %v546 = vpop.f32.mrf.mxu0
    %v547 = vadd.f32 %v314, %v546
    %v548 = vpop.f32.mrf.mxu0
    %v549 = vadd.f32 %v310, %v548
    %v550 = vpop.f32.mrf.mxu0
    %v551 = vadd.f32 %v314, %v550
    %552 = vmatprep.mubr.bf16.mxu0 0
    %553 = vmatmul.mubr.bf16.gmra.mxu0 %v272
    %v554 = vpop.f32.mrf.mxu0
    %v555 = vadd.f32 %v310, %v554
    %v556 = vpop.f32.mrf.mxu0
    %v557 = vadd.f32 %v314, %v556
    %v558 = vpop.f32.mrf.mxu0
    %v559 = vadd.f32 %v310, %v558
    %v560 = vpop.f32.mrf.mxu0
    %v561 = vadd.f32 %v314, %v560
    %562 = vdwg.mxu0
    %563 = vmatprep.subr.bf16.mxu0 0
    %564 = vmatpush1.bf16.msra.mxu0 %v425
    %565 = vmatprep.subr.bf16.mxu0 0
    %566 = vmatpush1.bf16.msra.mxu0 %v422
    %567 = vmatprep.subr.bf16.mxu0 0
    %568 = vmatpush1.bf16.msra.mxu0 %v419
    %569 = vmatprep.subr.bf16.mxu0 0
    %570 = vmatpush1.bf16.msra.mxu0 %v416
    %571 = vmatprep.subr.bf16.mxu0 0
    %572 = vmatpush1.bf16.msra.mxu0 %v413
    %573 = vmatprep.subr.bf16.mxu0 0
    %574 = vmatpush1.bf16.msra.mxu0 %v410
    %575 = vmatprep.subr.bf16.mxu0 0
    %576 = vmatpush1.bf16.msra.mxu0 %v407
    %577 = vmatprep.subr.bf16.mxu0 0
    %578 = vmatpush1.bf16.msra.mxu0 %v404
    %579 = vmatprep.subr.bf16.mxu0 0
    %580 = vmatpush2.bf16.msra.mxu0 0
    %581 = vmatprep.subr.bf16.mxu0 0
    %582 = vmatpush2.bf16.msra.mxu0 0
    %583 = vmatprep.subr.bf16.mxu0 0
    %584 = vmatpush2.bf16.msra.mxu0 0
    %585 = vmatprep.subr.bf16.mxu0 0
    %586 = vmatpush2.bf16.msra.mxu0 0
    %587 = vmatprep.subr.bf16.mxu0 0
    %588 = vmatpush2.bf16.msra.mxu0 0
    %589 = vmatprep.subr.bf16.mxu0 0
    %590 = vmatpush2.bf16.msra.mxu0 0
    %591 = vmatprep.subr.bf16.mxu0 0
    %592 = vmatpush2.bf16.msra.mxu0 0
    %593 = vmatprep.subr.bf16.mxu0 0
    %594 = vmatpush2.bf16.msra.mxu0 0
    %595 = vmatprep.mubr.bf16.mxu0 0
    %596 = vmatmul.mubr.bf16.gmra.mxu0 %v265
    %v597 = vpop.f32.mrf.mxu0
    %v598 = vadd.f32 %v318, %v597
    %v599 = vpop.f32.mrf.mxu0
    %v600 = vpop.f32.mrf.mxu0
    %v601 = vadd.f32 %v318, %v600
    %v602 = vpop.f32.mrf.mxu0
    %603 = vmatprep.mubr.bf16.mxu0 0
    %604 = vmatmul.mubr.bf16.gmra.mxu0 %v266
    %v605 = vpop.f32.mrf.mxu0
    %v606 = vadd.f32 %v318, %v605
    %v607 = vpop.f32.mrf.mxu0
    %v608 = vpop.f32.mrf.mxu0
    %v609 = vadd.f32 %v318, %v608
    %v610 = vpop.f32.mrf.mxu0
    %611 = vmatprep.mubr.bf16.mxu0 0
    %612 = vmatmul.mubr.bf16.gmra.mxu0 %v267
    %v613 = vpop.f32.mrf.mxu0
    %v614 = vadd.f32 %v318, %v613
    %v615 = vpop.f32.mrf.mxu0
    %v616 = vpop.f32.mrf.mxu0
    %v617 = vadd.f32 %v318, %v616
    %v618 = vpop.f32.mrf.mxu0
    %619 = vmatprep.mubr.bf16.mxu0 0
    %620 = vmatmul.mubr.bf16.gmra.mxu0 %v268
    %v621 = vpop.f32.mrf.mxu0
    %v622 = vadd.f32 %v318, %v621
    %v623 = vpop.f32.mrf.mxu0
    %v624 = vpop.f32.mrf.mxu0
    %v625 = vadd.f32 %v318, %v624
    %v626 = vpop.f32.mrf.mxu0
    %627 = vmatprep.mubr.bf16.mxu0 0
    %628 = vmatmul.mubr.bf16.gmra.mxu0 %v269
    %v629 = vpop.f32.mrf.mxu0
    %v630 = vadd.f32 %v318, %v629
    %v631 = vpop.f32.mrf.mxu0
    %v632 = vpop.f32.mrf.mxu0
    %v633 = vadd.f32 %v318, %v632
    %v634 = vpop.f32.mrf.mxu0
    %635 = vmatprep.mubr.bf16.mxu0 0
    %636 = vmatmul.mubr.bf16.gmra.mxu0 %v270
    %v637 = vpop.f32.mrf.mxu0
    %v638 = vadd.f32 %v318, %v637
    %v639 = vpop.f32.mrf.mxu0
    %v640 = vpop.f32.mrf.mxu0
    %v641 = vadd.f32 %v318, %v640
    %v642 = vpop.f32.mrf.mxu0
    %643 = vmatprep.mubr.bf16.mxu0 0
    %644 = vmatmul.mubr.bf16.gmra.mxu0 %v271
    %v645 = vpop.f32.mrf.mxu0
    %v646 = vadd.f32 %v318, %v645
    %v647 = vpop.f32.mrf.mxu0
    %v648 = vpop.f32.mrf.mxu0
    %v649 = vadd.f32 %v318, %v648
    %v650 = vpop.f32.mrf.mxu0
    %651 = vmatprep.mubr.bf16.mxu0 0
    %652 = vmatmul.mubr.bf16.gmra.mxu0 %v272
    %v653 = vpop.f32.mrf.mxu0
    %v654 = vadd.f32 %v318, %v653
    %v655 = vpop.f32.mrf.mxu0
    %v656 = vpop.f32.mrf.mxu0
    %v657 = vadd.f32 %v318, %v656
    %v658 = vpop.f32.mrf.mxu0
    %659 = vdwg.mxu0
    %v660 = vpack.c.bf16 %v489, %v485
    %v661 = vpack.c.bf16 %v491, %v487
    %v662 = vpack.c.bf16 %v601, %v598
    %v663 = vpack.c.bf16 %v499, %v495
    %v664 = vpack.c.bf16 %v501, %v497
    %v665 = vpack.c.bf16 %v609, %v606
    %v666 = vpack.c.bf16 %v509, %v505
    %v667 = vpack.c.bf16 %v511, %v507
    %v668 = vpack.c.bf16 %v617, %v614
    %v669 = vpack.c.bf16 %v519, %v515
    %v670 = vpack.c.bf16 %v521, %v517
    %v671 = vpack.c.bf16 %v625, %v622
    %v672 = vpack.c.bf16 %v529, %v525
    %v673 = vpack.c.bf16 %v531, %v527
    %v674 = vpack.c.bf16 %v633, %v630
    %v675 = vpack.c.bf16 %v539, %v535
    %v676 = vpack.c.bf16 %v541, %v537
    %v677 = vpack.c.bf16 %v641, %v638
    %v678 = vpack.c.bf16 %v549, %v545
    %v679 = vpack.c.bf16 %v551, %v547
    %v680 = vpack.c.bf16 %v649, %v646
    %v681 = vpack.c.bf16 %v559, %v555
    %v682 = vpack.c.bf16 %v561, %v557
    %v683 = vpack.c.bf16 %v657, %v654
    %v708 = vunpack.c.l.b16 %v660
    %v709 = vunpack.c.l.b16 %v661
    %v710 = vunpack.c.l.b16 %v662
    %v711 = vunpack.c.h.b16 %v660
    %v712 = vunpack.c.h.b16 %v661
    %v713 = vunpack.c.h.b16 %v662
    %v714 = vunpack.c.l.b16 %v663
    %v715 = vunpack.c.l.b16 %v664
    %v716 = vunpack.c.l.b16 %v665
    %v717 = vunpack.c.h.b16 %v663
    %v718 = vunpack.c.h.b16 %v664
    %v719 = vunpack.c.h.b16 %v665
    %v720 = vunpack.c.l.b16 %v666
    %v721 = vunpack.c.l.b16 %v667
    %v722 = vunpack.c.l.b16 %v668
    %v723 = vunpack.c.h.b16 %v666
    %v724 = vunpack.c.h.b16 %v667
    %v725 = vunpack.c.h.b16 %v668
    %v726 = vunpack.c.l.b16 %v669
    %v727 = vunpack.c.l.b16 %v670
    %v728 = vunpack.c.l.b16 %v671
    %v729 = vunpack.c.h.b16 %v669
    %v730 = vunpack.c.h.b16 %v670
    %v731 = vunpack.c.h.b16 %v671
    %v732 = vunpack.c.l.b16 %v672
    %v733 = vunpack.c.l.b16 %v673
    %v734 = vunpack.c.l.b16 %v674
    %v735 = vunpack.c.h.b16 %v672
    %v736 = vunpack.c.h.b16 %v673
    %v737 = vunpack.c.h.b16 %v674
    %v738 = vunpack.c.l.b16 %v675
    %v739 = vunpack.c.l.b16 %v676
    %v740 = vunpack.c.l.b16 %v677
    %v741 = vunpack.c.h.b16 %v675
    %v742 = vunpack.c.h.b16 %v676
    %v743 = vunpack.c.h.b16 %v677
    %v744 = vunpack.c.l.b16 %v678
    %v745 = vunpack.c.l.b16 %v679
    %v746 = vunpack.c.l.b16 %v680
    %v747 = vunpack.c.h.b16 %v678
    %v748 = vunpack.c.h.b16 %v679
    %v749 = vunpack.c.h.b16 %v680
    %v750 = vunpack.c.l.b16 %v681
    %v751 = vunpack.c.l.b16 %v682
    %v752 = vunpack.c.l.b16 %v683
    %v753 = vunpack.c.h.b16 %v681
    %v754 = vunpack.c.h.b16 %v682
    %v755 = vunpack.c.h.b16 %v683
    %v756 = vpack.c.b16 %v709, %v708
    %v757 = vpack.c.b16 %v710, %v710
    %v758 = vpack.c.b16 %v712, %v711
    %v759 = vpack.c.b16 %v713, %v713
    %v760 = vpack.c.b16 %v715, %v714
    %v761 = vpack.c.b16 %v716, %v716
    %v762 = vpack.c.b16 %v718, %v717
    %v763 = vpack.c.b16 %v719, %v719
    %v764 = vpack.c.b16 %v721, %v720
    %v765 = vpack.c.b16 %v722, %v722
    %v766 = vpack.c.b16 %v724, %v723
    %v767 = vpack.c.b16 %v725, %v725
    %v768 = vpack.c.b16 %v727, %v726
    %v769 = vpack.c.b16 %v728, %v728
    %v770 = vpack.c.b16 %v730, %v729
    %v771 = vpack.c.b16 %v731, %v731
    %v772 = vpack.c.b16 %v733, %v732
    %v773 = vpack.c.b16 %v734, %v734
    %v774 = vpack.c.b16 %v736, %v735
    %v775 = vpack.c.b16 %v737, %v737
    %v776 = vpack.c.b16 %v739, %v738
    %v777 = vpack.c.b16 %v740, %v740
    %v778 = vpack.c.b16 %v742, %v741
    %v779 = vpack.c.b16 %v743, %v743
    %v780 = vpack.c.b16 %v745, %v744
    %v781 = vpack.c.b16 %v746, %v746
    %v782 = vpack.c.b16 %v748, %v747
    %v783 = vpack.c.b16 %v749, %v749
    %v784 = vpack.c.b16 %v751, %v750
    %v785 = vpack.c.b16 %v752, %v752
    %v786 = vpack.c.b16 %v754, %v753
    %v787 = vpack.c.b16 %v755, %v755
    %820 = vst [vmem:[#allocation2] sm:$0xff] %v756
    %821 = vst [vmem:[#allocation2 + $0x8] sm:$0xf] %v757
    %822 = vst [vmem:[#allocation2 + $0xc] sm:$0xff] %v758
    %823 = vst [vmem:[#allocation2 + $0x14] sm:$0xf] %v759
    %824 = vst [vmem:[#allocation2 + $0x18] sm:$0xff] %v760
    %825 = vst [vmem:[#allocation2 + $0x20] sm:$0xf] %v761
    %826 = vst [vmem:[#allocation2 + $0x24] sm:$0xff] %v762
    %827 = vst [vmem:[#allocation2 + $0x2c] sm:$0xf] %v763
    %828 = vst [vmem:[#allocation2 + $0x30] sm:$0xff] %v764
    %829 = vst [vmem:[#allocation2 + $0x38] sm:$0xf] %v765
    %830 = vst [vmem:[#allocation2 + $0x3c] sm:$0xff] %v766
    %831 = vst [vmem:[#allocation2 + $0x44] sm:$0xf] %v767
    %832 = vst [vmem:[#allocation2 + $0x48] sm:$0xff] %v768
    %833 = vst [vmem:[#allocation2 + $0x50] sm:$0xf] %v769
    %834 = vst [vmem:[#allocation2 + $0x54] sm:$0xff] %v770
    %835 = vst [vmem:[#allocation2 + $0x5c] sm:$0xf] %v771
    %836 = vst [vmem:[#allocation2 + $0x60] sm:$0xff] %v772
    %837 = vst [vmem:[#allocation2 + $0x68] sm:$0xf] %v773
    %838 = vst [vmem:[#allocation2 + $0x6c] sm:$0xff] %v774
    %839 = vst [vmem:[#allocation2 + $0x74] sm:$0xf] %v775
    %840 = vst [vmem:[#allocation2 + $0x78] sm:$0xff] %v776
    %841 = vst [vmem:[#allocation2 + $0x80] sm:$0xf] %v777
    %842 = vst [vmem:[#allocation2 + $0x84] sm:$0xff] %v778
    %843 = vst [vmem:[#allocation2 + $0x8c] sm:$0xf] %v779
    %844 = vst [vmem:[#allocation2 + $0x90] sm:$0xff] %v780
    %845 = vst [vmem:[#allocation2 + $0x98] sm:$0xf] %v781
    %846 = vst [vmem:[#allocation2 + $0x9c] sm:$0xff] %v782
    %847 = vst [vmem:[#allocation2 + $0xa4] sm:$0xf] %v783
    %848 = vst [vmem:[#allocation2 + $0xa8] sm:$0xff] %v784
    %849 = vst [vmem:[#allocation2 + $0xb0] sm:$0xf] %v785
    %850 = vst [vmem:[#allocation2 + $0xb4] sm:$0xff] %v786
    %851 = vst [vmem:[#allocation2 + $0xbc] sm:$0xf] %v787
    %v852 = vld [vmem:[#allocation2] sm:$0xf]
    %v853 = vld [vmem:[#allocation2 + $0xc] sm:$0xf]
    %v854 = vld [vmem:[#allocation2 + $0x18] sm:$0xf]
    %v855 = vld [vmem:[#allocation2 + $0x24] sm:$0xf]
    %v856 = vld [vmem:[#allocation2 + $0x30] sm:$0xf]
    %v857 = vld [vmem:[#allocation2 + $0x3c] sm:$0xf]
    %v858 = vld [vmem:[#allocation2 + $0x48] sm:$0xf]
    %v859 = vld [vmem:[#allocation2 + $0x54] sm:$0xf]
    %v860 = vld [vmem:[#allocation2 + $0x60] sm:$0xf]
    %v861 = vld [vmem:[#allocation2 + $0x6c] sm:$0xf]
    %v862 = vld [vmem:[#allocation2 + $0x78] sm:$0xf]
    %v863 = vld [vmem:[#allocation2 + $0x84] sm:$0xf]
    %v864 = vld [vmem:[#allocation2 + $0x90] sm:$0xf]
    %v865 = vld [vmem:[#allocation2 + $0x9c] sm:$0xf]
    %v866 = vld [vmem:[#allocation2 + $0xa8] sm:$0xf]
    %v867 = vld [vmem:[#allocation2 + $0xb4] sm:$0xf]
    %v868 = vld [vmem:[#allocation2 + $0x4] sm:$0xf]
    %v869 = vld [vmem:[#allocation2 + $0x10] sm:$0xf]
    %v870 = vld [vmem:[#allocation2 + $0x1c] sm:$0xf]
    %v871 = vld [vmem:[#allocation2 + $0x28] sm:$0xf]
    %v872 = vld [vmem:[#allocation2 + $0x34] sm:$0xf]
    %v873 = vld [vmem:[#allocation2 + $0x40] sm:$0xf]
    %v874 = vld [vmem:[#allocation2 + $0x4c] sm:$0xf]
    %v875 = vld [vmem:[#allocation2 + $0x58] sm:$0xf]
    %v876 = vld [vmem:[#allocation2 + $0x64] sm:$0xf]
    %v877 = vld [vmem:[#allocation2 + $0x70] sm:$0xf]
    %v878 = vld [vmem:[#allocation2 + $0x7c] sm:$0xf]
    %v879 = vld [vmem:[#allocation2 + $0x88] sm:$0xf]
    %v880 = vld [vmem:[#allocation2 + $0x94] sm:$0xf]
    %v881 = vld [vmem:[#allocation2 + $0xa0] sm:$0xf]
    %v882 = vld [vmem:[#allocation2 + $0xac] sm:$0xf]
    %v883 = vld [vmem:[#allocation2 + $0xb8] sm:$0xf]
    %v884 = vld [vmem:[#allocation2 + $0x8] sm:$0xf]
    %v885 = vld [vmem:[#allocation2 + $0x14] sm:$0xf]
    %v886 = vld [vmem:[#allocation2 + $0x20] sm:$0xf]
    %v887 = vld [vmem:[#allocation2 + $0x2c] sm:$0xf]
    %v888 = vld [vmem:[#allocation2 + $0x38] sm:$0xf]
    %v889 = vld [vmem:[#allocation2 + $0x44] sm:$0xf]
    %v890 = vld [vmem:[#allocation2 + $0x50] sm:$0xf]
    %v891 = vld [vmem:[#allocation2 + $0x5c] sm:$0xf]
    %v892 = vld [vmem:[#allocation2 + $0x68] sm:$0xf]
    %v893 = vld [vmem:[#allocation2 + $0x74] sm:$0xf]
    %v894 = vld [vmem:[#allocation2 + $0x80] sm:$0xf]
    %v895 = vld [vmem:[#allocation2 + $0x8c] sm:$0xf]
    %v896 = vld [vmem:[#allocation2 + $0x98] sm:$0xf]
    %v897 = vld [vmem:[#allocation2 + $0xa4] sm:$0xf]
    %v898 = vld [vmem:[#allocation2 + $0xb0] sm:$0xf]
    %v899 = vld [vmem:[#allocation2 + $0xbc] sm:$0xf]
    %v916 = vunpack.c.l.b16 %v852
    %v917 = vunpack.c.l.b16 %v853
    %v918 = vunpack.c.l.b16 %v854
    %v919 = vunpack.c.l.b16 %v855
    %v920 = vunpack.c.l.b16 %v856
    %v921 = vunpack.c.l.b16 %v857
    %v922 = vunpack.c.l.b16 %v858
    %v923 = vunpack.c.l.b16 %v859
    %v924 = vunpack.c.l.b16 %v860
    %v925 = vunpack.c.l.b16 %v861
    %v926 = vunpack.c.l.b16 %v862
    %v927 = vunpack.c.l.b16 %v863
    %v928 = vunpack.c.l.b16 %v864
    %v929 = vunpack.c.l.b16 %v865
    %v930 = vunpack.c.l.b16 %v866
    %v931 = vunpack.c.l.b16 %v867
    %v932 = vpack.c.b16 %v917, %v916
    %v933 = vpack.c.b16 %v919, %v918
    %v934 = vpack.c.b16 %v921, %v920
    %v935 = vpack.c.b16 %v923, %v922
    %v936 = vpack.c.b16 %v925, %v924
    %v937 = vpack.c.b16 %v927, %v926
    %v938 = vpack.c.b16 %v929, %v928
    %v939 = vpack.c.b16 %v931, %v930
    %v956 = vunpack.c.l.b16 %v868
    %v957 = vunpack.c.l.b16 %v869
    %v958 = vunpack.c.l.b16 %v870
    %v959 = vunpack.c.l.b16 %v871
    %v960 = vunpack.c.l.b16 %v872
    %v961 = vunpack.c.l.b16 %v873
    %v962 = vunpack.c.l.b16 %v874
    %v963 = vunpack.c.l.b16 %v875
    %v964 = vunpack.c.l.b16 %v876
    %v965 = vunpack.c.l.b16 %v877
    %v966 = vunpack.c.l.b16 %v878
    %v967 = vunpack.c.l.b16 %v879
    %v968 = vunpack.c.l.b16 %v880
    %v969 = vunpack.c.l.b16 %v881
    %v970 = vunpack.c.l.b16 %v882
    %v971 = vunpack.c.l.b16 %v883
    %v972 = vpack.c.b16 %v957, %v956
    %v973 = vpack.c.b16 %v959, %v958
    %v974 = vpack.c.b16 %v961, %v960
    %v975 = vpack.c.b16 %v963, %v962
    %v976 = vpack.c.b16 %v965, %v964
    %v977 = vpack.c.b16 %v967, %v966
    %v978 = vpack.c.b16 %v969, %v968
    %v979 = vpack.c.b16 %v971, %v970
    %vm980 = vcmask 523264
    %v982 = vsel %vm980, %v932, 0
    %v985 = vsel %vm980, %v933, 0
    %v988 = vsel %vm980, %v934, 0
    %v991 = vsel %vm980, %v935, 0
    %v994 = vsel %vm980, %v936, 0
    %v997 = vsel %vm980, %v937, 0
    %v1000 = vsel %vm980, %v938, 0
    %v1003 = vsel %vm980, %v939, 0
    %v1006 = vsel %vm980, %v972, 0
    %v1009 = vsel %vm980, %v973, 0
    %v1012 = vsel %vm980, %v974, 0
    %v1015 = vsel %vm980, %v975, 0
    %v1018 = vsel %vm980, %v976, 0
    %v1021 = vsel %vm980, %v977, 0
    %v1024 = vsel %vm980, %v978, 0
    %v1027 = vsel %vm980, %v979, 0
    %1029 = vmatprep.subr.bf16.mxu0 0
    %1030 = vmatpush1.bf16.xpose.msra.mxu0 %v1027
    %1031 = vmatprep.subr.bf16.mxu0 0
    %1032 = vmatpush1.bf16.xpose.msra.mxu0 %v1024
    %1033 = vmatprep.subr.bf16.mxu0 0
    %1034 = vmatpush1.bf16.xpose.msra.mxu0 %v1021
    %1035 = vmatprep.subr.bf16.mxu0 0
    %1036 = vmatpush1.bf16.xpose.msra.mxu0 %v1018
    %1037 = vmatprep.subr.bf16.mxu0 0
    %1038 = vmatpush1.bf16.xpose.msra.mxu0 %v1015
    %1039 = vmatprep.subr.bf16.mxu0 0
    %1040 = vmatpush1.bf16.xpose.msra.mxu0 %v1012
    %1041 = vmatprep.subr.bf16.mxu0 0
    %1042 = vmatpush1.bf16.xpose.msra.mxu0 %v1009
    %1043 = vmatprep.subr.bf16.mxu0 0
    %1044 = vmatpush1.bf16.xpose.msra.mxu0 %v1006
    %1045 = vmatprep.subr.bf16.mxu0 0
    %1046 = vmatpush2.bf16.xpose.msra.mxu0 0
    %1047 = vmatprep.subr.bf16.mxu0 0
    %1048 = vmatpush2.bf16.xpose.msra.mxu0 0
    %1049 = vmatprep.subr.bf16.mxu0 0
    %1050 = vmatpush2.bf16.xpose.msra.mxu0 0
    %1051 = vmatprep.subr.bf16.mxu0 0
    %1052 = vmatpush2.bf16.xpose.msra.mxu0 0
    %1053 = vmatprep.subr.bf16.mxu0 0
    %1054 = vmatpush2.bf16.xpose.msra.mxu0 0
    %1055 = vmatprep.subr.bf16.mxu0 0
    %1056 = vmatpush2.bf16.xpose.msra.mxu0 0
    %1057 = vmatprep.subr.bf16.mxu0 0
    %1058 = vmatpush2.bf16.xpose.msra.mxu0 0
    %1059 = vmatprep.subr.bf16.mxu0 0
    %1060 = vmatpush2.bf16.xpose.msra.mxu0 0
    %1061 = vmatprep.mubr.bf16.mxu0 0
    %1062 = vmatmul.mubr.bf16.gmra.mxu0 %v982
    %v1063 = vpop.f32.mrf.mxu0
    %v1064 = vadd.f32 %v249, %v1063
    %v1065 = vpop.f32.mrf.mxu0
    %v1066 = vpop.f32.mrf.mxu0
    %v1067 = vadd.f32 %v250, %v1066
    %v1068 = vpop.f32.mrf.mxu0
    %1069 = vmatprep.mubr.bf16.mxu0 0
    %1070 = vmatmul.mubr.bf16.gmra.mxu0 %v985
    %v1071 = vpop.f32.mrf.mxu0
    %v1072 = vadd.f32 %v251, %v1071
    %v1073 = vpop.f32.mrf.mxu0
    %v1074 = vpop.f32.mrf.mxu0
    %v1075 = vadd.f32 %v252, %v1074
    %v1076 = vpop.f32.mrf.mxu0
    %1077 = vmatprep.mubr.bf16.mxu0 0
    %1078 = vmatmul.mubr.bf16.gmra.mxu0 %v988
    %v1079 = vpop.f32.mrf.mxu0
    %v1080 = vadd.f32 %v253, %v1079
    %v1081 = vpop.f32.mrf.mxu0
    %v1082 = vpop.f32.mrf.mxu0
    %v1083 = vadd.f32 %v254, %v1082
    %v1084 = vpop.f32.mrf.mxu0
    %1085 = vmatprep.mubr.bf16.mxu0 0
    %1086 = vmatmul.mubr.bf16.gmra.mxu0 %v991
    %v1087 = vpop.f32.mrf.mxu0
    %v1088 = vadd.f32 %v255, %v1087
    %v1089 = vpop.f32.mrf.mxu0
    %v1090 = vpop.f32.mrf.mxu0
    %v1091 = vadd.f32 %v256, %v1090
    %v1092 = vpop.f32.mrf.mxu0
    %1093 = vmatprep.mubr.bf16.mxu0 0
    %1094 = vmatmul.mubr.bf16.gmra.mxu0 %v994
    %v1095 = vpop.f32.mrf.mxu0
    %v1096 = vadd.f32 %v257, %v1095
    %v1097 = vpop.f32.mrf.mxu0
    %v1098 = vpop.f32.mrf.mxu0
    %v1099 = vadd.f32 %v258, %v1098
    %v1100 = vpop.f32.mrf.mxu0
    %1101 = vmatprep.mubr.bf16.mxu0 0
    %1102 = vmatmul.mubr.bf16.gmra.mxu0 %v997
    %v1103 = vpop.f32.mrf.mxu0
    %v1104 = vadd.f32 %v259, %v1103
    %v1105 = vpop.f32.mrf.mxu0
    %v1106 = vpop.f32.mrf.mxu0
    %v1107 = vadd.f32 %v260, %v1106
    %v1108 = vpop.f32.mrf.mxu0
    %1109 = vmatprep.mubr.bf16.mxu0 0
    %1110 = vmatmul.mubr.bf16.gmra.mxu0 %v1000
    %v1111 = vpop.f32.mrf.mxu0
    %v1112 = vadd.f32 %v261, %v1111
    %v1113 = vpop.f32.mrf.mxu0
    %v1114 = vpop.f32.mrf.mxu0
    %v1115 = vadd.f32 %v262, %v1114
    %v1116 = vpop.f32.mrf.mxu0
    %1117 = vmatprep.mubr.bf16.mxu0 0
    %1118 = vmatmul.mubr.bf16.gmra.mxu0 %v1003
    %v1119 = vpop.f32.mrf.mxu0
    %v1120 = vadd.f32 %v263, %v1119
    %v1121 = vpop.f32.mrf.mxu0
    %v1122 = vpop.f32.mrf.mxu0
    %v1123 = vadd.f32 %v264, %v1122
    %v1124 = vpop.f32.mrf.mxu0
    %1125 = vdwg.mxu0
    %1126 = vmax.xlane.f32.xlu0 %v1064
    %v1127 = vpop.xlane.xlu0 %1126
    %1128 = vmax.xlane.f32.xlu0 %v1067
    %v1129 = vpop.xlane.xlu0 %1128
    %1130 = vmax.xlane.f32.xlu0 %v1072
    %v1131 = vpop.xlane.xlu0 %1130
    %1132 = vmax.xlane.f32.xlu0 %v1075
    %v1133 = vpop.xlane.xlu0 %1132
    %1134 = vmax.xlane.f32.xlu0 %v1080
    %v1135 = vpop.xlane.xlu0 %1134
    %1136 = vmax.xlane.f32.xlu0 %v1083
    %v1137 = vpop.xlane.xlu0 %1136
    %1138 = vmax.xlane.f32.xlu0 %v1088
    %v1139 = vpop.xlane.xlu0 %1138
    %1140 = vmax.xlane.f32.xlu0 %v1091
    %v1141 = vpop.xlane.xlu0 %1140
    %1142 = vmax.xlane.f32.xlu0 %v1096
    %v1143 = vpop.xlane.xlu0 %1142
    %1144 = vmax.xlane.f32.xlu0 %v1099
    %v1145 = vpop.xlane.xlu0 %1144
    %1146 = vmax.xlane.f32.xlu0 %v1104
    %v1147 = vpop.xlane.xlu0 %1146
    %1148 = vmax.xlane.f32.xlu0 %v1107
    %v1149 = vpop.xlane.xlu0 %1148
    %1150 = vmax.xlane.f32.xlu0 %v1112
    %v1151 = vpop.xlane.xlu0 %1150
    %1152 = vmax.xlane.f32.xlu0 %v1115
    %v1153 = vpop.xlane.xlu0 %1152
    %1154 = vmax.xlane.f32.xlu0 %v1120
    %v1155 = vpop.xlane.xlu0 %1154
    %1156 = vmax.xlane.f32.xlu0 %v1123
    %v1157 = vpop.xlane.xlu0 %1156
    %v1158 = vsub.f32 %v1064, %v1127
    %v1159 = vsub.f32 %v1067, %v1129
    %v1160 = vsub.f32 %v1072, %v1131
    %v1161 = vsub.f32 %v1075, %v1133
    %v1162 = vsub.f32 %v1080, %v1135
    %v1163 = vsub.f32 %v1083, %v1137
    %v1164 = vsub.f32 %v1088, %v1139
    %v1165 = vsub.f32 %v1091, %v1141
    %v1166 = vsub.f32 %v1096, %v1143
    %v1167 = vsub.f32 %v1099, %v1145
    %v1168 = vsub.f32 %v1104, %v1147
    %v1169 = vsub.f32 %v1107, %v1149
    %v1170 = vsub.f32 %v1112, %v1151
    %v1171 = vsub.f32 %v1115, %v1153
    %v1172 = vsub.f32 %v1120, %v1155
    %v1173 = vsub.f32 %v1123, %v1157
    %v1174 = vmul.f32 %v1158, 1.442695
    %v1175 = vpow.pop %v1174
    %v1176 = vmul.f32 %v1159, 1.442695
    %v1177 = vpow.pop %v1176
    %v1178 = vmul.f32 %v1160, 1.442695
    %v1179 = vpow.pop %v1178
    %v1180 = vmul.f32 %v1161, 1.442695
    %v1181 = vpow.pop %v1180
    %v1182 = vmul.f32 %v1162, 1.442695
    %v1183 = vpow.pop %v1182
    %v1184 = vmul.f32 %v1163, 1.442695
    %v1185 = vpow.pop %v1184
    %v1186 = vmul.f32 %v1164, 1.442695
    %v1187 = vpow.pop %v1186
    %v1188 = vmul.f32 %v1165, 1.442695
    %v1189 = vpow.pop %v1188
    %v1190 = vmul.f32 %v1166, 1.442695
    %v1191 = vpow.pop %v1190
    %v1192 = vmul.f32 %v1167, 1.442695
    %v1193 = vpow.pop %v1192
    %v1194 = vmul.f32 %v1168, 1.442695
    %v1195 = vpow.pop %v1194
    %v1196 = vmul.f32 %v1169, 1.442695
    %v1197 = vpow.pop %v1196
    %v1198 = vmul.f32 %v1170, 1.442695
    %v1199 = vpow.pop %v1198
    %v1200 = vmul.f32 %v1171, 1.442695
    %v1201 = vpow.pop %v1200
    %v1202 = vmul.f32 %v1172, 1.442695
    %v1203 = vpow.pop %v1202
    %v1204 = vmul.f32 %v1173, 1.442695
    %v1205 = vpow.pop %v1204
    %1206 = vadd.xlane.f32.xlu0 %v1175
    %v1207 = vpop.xlane.xlu0 %1206
    %1208 = vadd.xlane.f32.xlu0 %v1177
    %v1209 = vpop.xlane.xlu0 %1208
    %1210 = vadd.xlane.f32.xlu0 %v1179
    %v1211 = vpop.xlane.xlu0 %1210
    %1212 = vadd.xlane.f32.xlu0 %v1181
    %v1213 = vpop.xlane.xlu0 %1212
    %1214 = vadd.xlane.f32.xlu0 %v1183
    %v1215 = vpop.xlane.xlu0 %1214
    %1216 = vadd.xlane.f32.xlu0 %v1185
    %v1217 = vpop.xlane.xlu0 %1216
    %1218 = vadd.xlane.f32.xlu0 %v1187
    %v1219 = vpop.xlane.xlu0 %1218
    %1220 = vadd.xlane.f32.xlu0 %v1189
    %v1221 = vpop.xlane.xlu0 %1220
    %1222 = vadd.xlane.f32.xlu0 %v1191
    %v1223 = vpop.xlane.xlu0 %1222
    %1224 = vadd.xlane.f32.xlu0 %v1193
    %v1225 = vpop.xlane.xlu0 %1224
    %1226 = vadd.xlane.f32.xlu0 %v1195
    %v1227 = vpop.xlane.xlu0 %1226
    %1228 = vadd.xlane.f32.xlu0 %v1197
    %v1229 = vpop.xlane.xlu0 %1228
    %1230 = vadd.xlane.f32.xlu0 %v1199
    %v1231 = vpop.xlane.xlu0 %1230
    %1232 = vadd.xlane.f32.xlu0 %v1201
    %v1233 = vpop.xlane.xlu0 %1232
    %1234 = vadd.xlane.f32.xlu0 %v1203
    %v1235 = vpop.xlane.xlu0 %1234
    %1236 = vadd.xlane.f32.xlu0 %v1205
    %v1237 = vpop.xlane.xlu0 %1236
    %v1238 = vrcp.pop %v1207
    %v1239 = vrcp.pop %v1209
    %v1240 = vrcp.pop %v1211
    %v1241 = vrcp.pop %v1213
    %v1242 = vrcp.pop %v1215
    %v1243 = vrcp.pop %v1217
    %v1244 = vrcp.pop %v1219
    %v1245 = vrcp.pop %v1221
    %v1246 = vrcp.pop %v1223
    %v1247 = vrcp.pop %v1225
    %v1248 = vrcp.pop %v1227
    %v1249 = vrcp.pop %v1229
    %v1250 = vrcp.pop %v1231
    %v1251 = vrcp.pop %v1233
    %v1252 = vrcp.pop %v1235
    %v1253 = vrcp.pop %v1237
    %v1254 = vmul.f32 %v1175, %v1238
    %v1255 = vmul.f32 %v1177, %v1239
    %v1256 = vmul.f32 %v1179, %v1240
    %v1257 = vmul.f32 %v1181, %v1241
    %v1258 = vmul.f32 %v1183, %v1242
    %v1259 = vmul.f32 %v1185, %v1243
    %v1260 = vmul.f32 %v1187, %v1244
    %v1261 = vmul.f32 %v1189, %v1245
    %v1262 = vmul.f32 %v1191, %v1246
    %v1263 = vmul.f32 %v1193, %v1247
    %v1264 = vmul.f32 %v1195, %v1248
    %v1265 = vmul.f32 %v1197, %v1249
    %v1266 = vmul.f32 %v1199, %v1250
    %v1267 = vmul.f32 %v1201, %v1251
    %v1268 = vmul.f32 %v1203, %v1252
    %v1269 = vmul.f32 %v1205, %v1253
    %v1270 = vpack.c.bf16 %v1255, %v1254
    %v1271 = vpack.c.bf16 %v1257, %v1256
    %v1272 = vpack.c.bf16 %v1259, %v1258
    %v1273 = vpack.c.bf16 %v1261, %v1260
    %v1274 = vpack.c.bf16 %v1263, %v1262
    %v1275 = vpack.c.bf16 %v1265, %v1264
    %v1276 = vpack.c.bf16 %v1267, %v1266
    %v1277 = vpack.c.bf16 %v1269, %v1268
    %v1294 = vunpack.c.l.b16 %v884
    %v1295 = vunpack.c.l.b16 %v885
    %v1296 = vunpack.c.l.b16 %v886
    %v1297 = vunpack.c.l.b16 %v887
    %v1298 = vunpack.c.l.b16 %v888
    %v1299 = vunpack.c.l.b16 %v889
    %v1300 = vunpack.c.l.b16 %v890
    %v1301 = vunpack.c.l.b16 %v891
    %v1302 = vunpack.c.l.b16 %v892
    %v1303 = vunpack.c.l.b16 %v893
    %v1304 = vunpack.c.l.b16 %v894
    %v1305 = vunpack.c.l.b16 %v895
    %v1306 = vunpack.c.l.b16 %v896
    %v1307 = vunpack.c.l.b16 %v897
    %v1308 = vunpack.c.l.b16 %v898
    %v1309 = vunpack.c.l.b16 %v899
    %v1310 = vpack.c.b16 %v1295, %v1294
    %v1311 = vpack.c.b16 %v1297, %v1296
    %v1312 = vpack.c.b16 %v1299, %v1298
    %v1313 = vpack.c.b16 %v1301, %v1300
    %v1314 = vpack.c.b16 %v1303, %v1302
    %v1315 = vpack.c.b16 %v1305, %v1304
    %v1316 = vpack.c.b16 %v1307, %v1306
    %v1317 = vpack.c.b16 %v1309, %v1308
    %1326 = vmatprep.subr.bf16.mxu0 0
    %1327 = vmatpush1.bf16.msra.mxu0 %v1317
    %1328 = vmatprep.subr.bf16.mxu0 0
    %1329 = vmatpush1.bf16.msra.mxu0 %v1316
    %1330 = vmatprep.subr.bf16.mxu0 0
    %1331 = vmatpush1.bf16.msra.mxu0 %v1315
    %1332 = vmatprep.subr.bf16.mxu0 0
    %1333 = vmatpush1.bf16.msra.mxu0 %v1314
    %1334 = vmatprep.subr.bf16.mxu0 0
    %1335 = vmatpush1.bf16.msra.mxu0 %v1313
    %1336 = vmatprep.subr.bf16.mxu0 0
    %1337 = vmatpush1.bf16.msra.mxu0 %v1312
    %1338 = vmatprep.subr.bf16.mxu0 0
    %1339 = vmatpush1.bf16.msra.mxu0 %v1311
    %1340 = vmatprep.subr.bf16.mxu0 0
    %1341 = vmatpush1.bf16.msra.mxu0 %v1310
    %1342 = vmatprep.subr.bf16.mxu0 0
    %1343 = vmatpush2.bf16.msra.mxu0 0
    %1344 = vmatprep.subr.bf16.mxu0 0
    %1345 = vmatpush2.bf16.msra.mxu0 0
    %1346 = vmatprep.subr.bf16.mxu0 0
    %1347 = vmatpush2.bf16.msra.mxu0 0
    %1348 = vmatprep.subr.bf16.mxu0 0
    %1349 = vmatpush2.bf16.msra.mxu0 0
    %1350 = vmatprep.subr.bf16.mxu0 0
    %1351 = vmatpush2.bf16.msra.mxu0 0
    %1352 = vmatprep.subr.bf16.mxu0 0
    %1353 = vmatpush2.bf16.msra.mxu0 0
    %1354 = vmatprep.subr.bf16.mxu0 0
    %1355 = vmatpush2.bf16.msra.mxu0 0
    %1356 = vmatprep.subr.bf16.mxu0 0
    %1357 = vmatpush2.bf16.msra.mxu0 0
    %1358 = vmatprep.mubr.bf16.mxu0 0
    %1359 = vmatmul.mubr.bf16.gmra.mxu0 %v1270
    %v1360 = vpop.f32.mrf.mxu0
    %v1361 = vadd.f32 0.0, %v1360
    %v1362 = vpop.f32.mrf.mxu0
    %v1363 = vpop.f32.mrf.mxu0
    %v1364 = vadd.f32 0.0, %v1363
    %v1365 = vpop.f32.mrf.mxu0
    %1366 = vmatprep.mubr.bf16.mxu0 0
    %1367 = vmatmul.mubr.bf16.gmra.mxu0 %v1271
    %v1368 = vpop.f32.mrf.mxu0
    %v1369 = vadd.f32 0.0, %v1368
    %v1370 = vpop.f32.mrf.mxu0
    %v1371 = vpop.f32.mrf.mxu0
    %v1372 = vadd.f32 0.0, %v1371
    %v1373 = vpop.f32.mrf.mxu0
    %1374 = vmatprep.mubr.bf16.mxu0 0
    %1375 = vmatmul.mubr.bf16.gmra.mxu0 %v1272
    %v1376 = vpop.f32.mrf.mxu0
    %v1377 = vadd.f32 0.0, %v1376
    %v1378 = vpop.f32.mrf.mxu0
    %v1379 = vpop.f32.mrf.mxu0
    %v1380 = vadd.f32 0.0, %v1379
    %v1381 = vpop.f32.mrf.mxu0
    %1382 = vmatprep.mubr.bf16.mxu0 0
    %1383 = vmatmul.mubr.bf16.gmra.mxu0 %v1273
    %v1384 = vpop.f32.mrf.mxu0
    %v1385 = vadd.f32 0.0, %v1384
    %v1386 = vpop.f32.mrf.mxu0
    %v1387 = vpop.f32.mrf.mxu0
    %v1388 = vadd.f32 0.0, %v1387
    %v1389 = vpop.f32.mrf.mxu0
    %1390 = vmatprep.mubr.bf16.mxu0 0
    %1391 = vmatmul.mubr.bf16.gmra.mxu0 %v1274
    %v1392 = vpop.f32.mrf.mxu0
    %v1393 = vadd.f32 0.0, %v1392
    %v1394 = vpop.f32.mrf.mxu0
    %v1395 = vpop.f32.mrf.mxu0
    %v1396 = vadd.f32 0.0, %v1395
    %v1397 = vpop.f32.mrf.mxu0
    %1398 = vmatprep.mubr.bf16.mxu0 0
    %1399 = vmatmul.mubr.bf16.gmra.mxu0 %v1275
    %v1400 = vpop.f32.mrf.mxu0
    %v1401 = vadd.f32 0.0, %v1400
    %v1402 = vpop.f32.mrf.mxu0
    %v1403 = vpop.f32.mrf.mxu0
    %v1404 = vadd.f32 0.0, %v1403
    %v1405 = vpop.f32.mrf.mxu0
    %1406 = vmatprep.mubr.bf16.mxu0 0
    %1407 = vmatmul.mubr.bf16.gmra.mxu0 %v1276
    %v1408 = vpop.f32.mrf.mxu0
    %v1409 = vadd.f32 0.0, %v1408
    %v1410 = vpop.f32.mrf.mxu0
    %v1411 = vpop.f32.mrf.mxu0
    %v1412 = vadd.f32 0.0, %v1411
    %v1413 = vpop.f32.mrf.mxu0
    %1414 = vmatprep.mubr.bf16.mxu0 0
    %1415 = vmatmul.mubr.bf16.gmra.mxu0 %v1277
    %v1416 = vpop.f32.mrf.mxu0
    %v1417 = vadd.f32 0.0, %v1416
    %v1418 = vpop.f32.mrf.mxu0
    %v1419 = vpop.f32.mrf.mxu0
    %v1420 = vadd.f32 0.0, %v1419
    %v1421 = vpop.f32.mrf.mxu0
    %1422 = vdwg.mxu0
    %v1423 = vpack.c.bf16 %v1364, %v1361
    %v1424 = vpack.c.bf16 %v1372, %v1369
    %v1425 = vpack.c.bf16 %v1380, %v1377
    %v1426 = vpack.c.bf16 %v1388, %v1385
    %v1427 = vpack.c.bf16 %v1396, %v1393
    %v1428 = vpack.c.bf16 %v1404, %v1401
    %v1429 = vpack.c.bf16 %v1412, %v1409
    %v1430 = vpack.c.bf16 %v1420, %v1417
    %1431 = vrot.lane.b32.xlu0 %v932, 64
    %v1432 = vpop.permute.xlu0 %1431
    %1433 = vrot.lane.b32.xlu0 %v933, 64
    %v1434 = vpop.permute.xlu0 %1433
    %1435 = vrot.lane.b32.xlu0 %v934, 64
    %v1436 = vpop.permute.xlu0 %1435
    %1437 = vrot.lane.b32.xlu0 %v935, 64
    %v1438 = vpop.permute.xlu0 %1437
    %1439 = vrot.lane.b32.xlu0 %v936, 64
    %v1440 = vpop.permute.xlu0 %1439
    %1441 = vrot.lane.b32.xlu0 %v937, 64
    %v1442 = vpop.permute.xlu0 %1441
    %1443 = vrot.lane.b32.xlu0 %v938, 64
    %v1444 = vpop.permute.xlu0 %1443
    %1445 = vrot.lane.b32.xlu0 %v939, 64
    %v1446 = vpop.permute.xlu0 %1445
    %1447 = vrot.lane.b32.xlu0 %v972, 64
    %v1448 = vpop.permute.xlu0 %1447
    %1449 = vrot.lane.b32.xlu0 %v973, 64
    %v1450 = vpop.permute.xlu0 %1449
    %1451 = vrot.lane.b32.xlu0 %v974, 64
    %v1452 = vpop.permute.xlu0 %1451
    %1453 = vrot.lane.b32.xlu0 %v975, 64
    %v1454 = vpop.permute.xlu0 %1453
    %1455 = vrot.lane.b32.xlu0 %v976, 64
    %v1456 = vpop.permute.xlu0 %1455
    %1457 = vrot.lane.b32.xlu0 %v977, 64
    %v1458 = vpop.permute.xlu0 %1457
    %1459 = vrot.lane.b32.xlu0 %v978, 64
    %v1460 = vpop.permute.xlu0 %1459
    %1461 = vrot.lane.b32.xlu0 %v979, 64
    %v1462 = vpop.permute.xlu0 %1461
    %v1464 = vsel %vm980, %v1432, 0
    %v1467 = vsel %vm980, %v1434, 0
    %v1470 = vsel %vm980, %v1436, 0
    %v1473 = vsel %vm980, %v1438, 0
    %v1476 = vsel %vm980, %v1440, 0
    %v1479 = vsel %vm980, %v1442, 0
    %v1482 = vsel %vm980, %v1444, 0
    %v1485 = vsel %vm980, %v1446, 0
    %v1488 = vsel %vm980, %v1448, 0
    %v1491 = vsel %vm980, %v1450, 0
    %v1494 = vsel %vm980, %v1452, 0
    %v1497 = vsel %vm980, %v1454, 0
    %v1500 = vsel %vm980, %v1456, 0
    %v1503 = vsel %vm980, %v1458, 0
    %v1506 = vsel %vm980, %v1460, 0
    %v1509 = vsel %vm980, %v1462, 0
    %1511 = vmatprep.subr.bf16.mxu0 0
    %1512 = vmatpush1.bf16.xpose.msra.mxu0 %v1509
    %1513 = vmatprep.subr.bf16.mxu0 0
    %1514 = vmatpush1.bf16.xpose.msra.mxu0 %v1506
    %1515 = vmatprep.subr.bf16.mxu0 0
    %1516 = vmatpush1.bf16.xpose.msra.mxu0 %v1503
    %1517 = vmatprep.subr.bf16.mxu0 0
    %1518 = vmatpush1.bf16.xpose.msra.mxu0 %v1500
    %1519 = vmatprep.subr.bf16.mxu0 0
    %1520 = vmatpush1.bf16.xpose.msra.mxu0 %v1497
    %1521 = vmatprep.subr.bf16.mxu0 0
    %1522 = vmatpush1.bf16.xpose.msra.mxu0 %v1494
    %1523 = vmatprep.subr.bf16.mxu0 0
    %1524 = vmatpush1.bf16.xpose.msra.mxu0 %v1491
    %1525 = vmatprep.subr.bf16.mxu0 0
    %1526 = vmatpush1.bf16.xpose.msra.mxu0 %v1488
    %1527 = vmatprep.subr.bf16.mxu0 0
    %1528 = vmatpush2.bf16.xpose.msra.mxu0 0
    %1529 = vmatprep.subr.bf16.mxu0 0
    %1530 = vmatpush2.bf16.xpose.msra.mxu0 0
    %1531 = vmatprep.subr.bf16.mxu0 0
    %1532 = vmatpush2.bf16.xpose.msra.mxu0 0
    %1533 = vmatprep.subr.bf16.mxu0 0
    %1534 = vmatpush2.bf16.xpose.msra.mxu0 0
    %1535 = vmatprep.subr.bf16.mxu0 0
    %1536 = vmatpush2.bf16.xpose.msra.mxu0 0
    %1537 = vmatprep.subr.bf16.mxu0 0
    %1538 = vmatpush2.bf16.xpose.msra.mxu0 0
    %1539 = vmatprep.subr.bf16.mxu0 0
    %1540 = vmatpush2.bf16.xpose.msra.mxu0 0
    %1541 = vmatprep.subr.bf16.mxu0 0
    %1542 = vmatpush2.bf16.xpose.msra.mxu0 0
    %1543 = vmatprep.mubr.bf16.mxu0 0
    %1544 = vmatmul.mubr.bf16.gmra.mxu0 %v1464
    %v1545 = vpop.f32.mrf.mxu0
    %v1546 = vadd.f32 %v249, %v1545
    %v1547 = vpop.f32.mrf.mxu0
    %v1548 = vpop.f32.mrf.mxu0
    %v1549 = vadd.f32 %v250, %v1548
    %v1550 = vpop.f32.mrf.mxu0
    %1551 = vmatprep.mubr.bf16.mxu0 0
    %1552 = vmatmul.mubr.bf16.gmra.mxu0 %v1467
    %v1553 = vpop.f32.mrf.mxu0
    %v1554 = vadd.f32 %v251, %v1553
    %v1555 = vpop.f32.mrf.mxu0
    %v1556 = vpop.f32.mrf.mxu0
    %v1557 = vadd.f32 %v252, %v1556
    %v1558 = vpop.f32.mrf.mxu0
    %1559 = vmatprep.mubr.bf16.mxu0 0
    %1560 = vmatmul.mubr.bf16.gmra.mxu0 %v1470
    %v1561 = vpop.f32.mrf.mxu0
    %v1562 = vadd.f32 %v253, %v1561
    %v1563 = vpop.f32.mrf.mxu0
    %v1564 = vpop.f32.mrf.mxu0
    %v1565 = vadd.f32 %v254, %v1564
    %v1566 = vpop.f32.mrf.mxu0
    %1567 = vmatprep.mubr.bf16.mxu0 0
    %1568 = vmatmul.mubr.bf16.gmra.mxu0 %v1473
    %v1569 = vpop.f32.mrf.mxu0
    %v1570 = vadd.f32 %v255, %v1569
    %v1571 = vpop.f32.mrf.mxu0
    %v1572 = vpop.f32.mrf.mxu0
    %v1573 = vadd.f32 %v256, %v1572
    %v1574 = vpop.f32.mrf.mxu0
    %1575 = vmatprep.mubr.bf16.mxu0 0
    %1576 = vmatmul.mubr.bf16.gmra.mxu0 %v1476
    %v1577 = vpop.f32.mrf.mxu0
    %v1578 = vadd.f32 %v257, %v1577
    %v1579 = vpop.f32.mrf.mxu0
    %v1580 = vpop.f32.mrf.mxu0
    %v1581 = vadd.f32 %v258, %v1580
    %v1582 = vpop.f32.mrf.mxu0
    %1583 = vmatprep.mubr.bf16.mxu0 0
    %1584 = vmatmul.mubr.bf16.gmra.mxu0 %v1479
    %v1585 = vpop.f32.mrf.mxu0
    %v1586 = vadd.f32 %v259, %v1585
    %v1587 = vpop.f32.mrf.mxu0
    %v1588 = vpop.f32.mrf.mxu0
    %v1589 = vadd.f32 %v260, %v1588
    %v1590 = vpop.f32.mrf.mxu0
    %1591 = vmatprep.mubr.bf16.mxu0 0
    %1592 = vmatmul.mubr.bf16.gmra.mxu0 %v1482
    %v1593 = vpop.f32.mrf.mxu0
    %v1594 = vadd.f32 %v261, %v1593
    %v1595 = vpop.f32.mrf.mxu0
    %v1596 = vpop.f32.mrf.mxu0
    %v1597 = vadd.f32 %v262, %v1596
    %v1598 = vpop.f32.mrf.mxu0
    %1599 = vmatprep.mubr.bf16.mxu0 0
    %1600 = vmatmul.mubr.bf16.gmra.mxu0 %v1485
    %v1601 = vpop.f32.mrf.mxu0
    %v1602 = vadd.f32 %v263, %v1601
    %v1603 = vpop.f32.mrf.mxu0
    %v1604 = vpop.f32.mrf.mxu0
    %v1605 = vadd.f32 %v264, %v1604
    %v1606 = vpop.f32.mrf.mxu0
    %1607 = vdwg.mxu0
    %1608 = vmax.xlane.f32.xlu0 %v1546
    %v1609 = vpop.xlane.xlu0 %1608
    %1610 = vmax.xlane.f32.xlu0 %v1549
    %v1611 = vpop.xlane.xlu0 %1610
    %1612 = vmax.xlane.f32.xlu0 %v1554
    %v1613 = vpop.xlane.xlu0 %1612
    %1614 = vmax.xlane.f32.xlu0 %v1557
    %v1615 = vpop.xlane.xlu0 %1614
    %1616 = vmax.xlane.f32.xlu0 %v1562
    %v1617 = vpop.xlane.xlu0 %1616
    %1618 = vmax.xlane.f32.xlu0 %v1565
    %v1619 = vpop.xlane.xlu0 %1618
    %1620 = vmax.xlane.f32.xlu0 %v1570
    %v1621 = vpop.xlane.xlu0 %1620
    %1622 = vmax.xlane.f32.xlu0 %v1573
    %v1623 = vpop.xlane.xlu0 %1622
    %1624 = vmax.xlane.f32.xlu0 %v1578
    %v1625 = vpop.xlane.xlu0 %1624
    %1626 = vmax.xlane.f32.xlu0 %v1581
    %v1627 = vpop.xlane.xlu0 %1626
    %1628 = vmax.xlane.f32.xlu0 %v1586
    %v1629 = vpop.xlane.xlu0 %1628
    %1630 = vmax.xlane.f32.xlu0 %v1589
    %v1631 = vpop.xlane.xlu0 %1630
    %1632 = vmax.xlane.f32.xlu0 %v1594
    %v1633 = vpop.xlane.xlu0 %1632
    %1634 = vmax.xlane.f32.xlu0 %v1597
    %v1635 = vpop.xlane.xlu0 %1634
    %1636 = vmax.xlane.f32.xlu0 %v1602
    %v1637 = vpop.xlane.xlu0 %1636
    %1638 = vmax.xlane.f32.xlu0 %v1605
    %v1639 = vpop.xlane.xlu0 %1638
    %v1640 = vsub.f32 %v1546, %v1609
    %v1641 = vsub.f32 %v1549, %v1611
    %v1642 = vsub.f32 %v1554, %v1613
    %v1643 = vsub.f32 %v1557, %v1615
    %v1644 = vsub.f32 %v1562, %v1617
    %v1645 = vsub.f32 %v1565, %v1619
    %v1646 = vsub.f32 %v1570, %v1621
    %v1647 = vsub.f32 %v1573, %v1623
    %v1648 = vsub.f32 %v1578, %v1625
    %v1649 = vsub.f32 %v1581, %v1627
    %v1650 = vsub.f32 %v1586, %v1629
    %v1651 = vsub.f32 %v1589, %v1631
    %v1652 = vsub.f32 %v1594, %v1633
    %v1653 = vsub.f32 %v1597, %v1635
    %v1654 = vsub.f32 %v1602, %v1637
    %v1655 = vsub.f32 %v1605, %v1639
    %v1656 = vmul.f32 %v1640, 1.442695
    %v1657 = vpow.pop %v1656
    %v1658 = vmul.f32 %v1641, 1.442695
    %v1659 = vpow.pop %v1658
    %v1660 = vmul.f32 %v1642, 1.442695
    %v1661 = vpow.pop %v1660
    %v1662 = vmul.f32 %v1643, 1.442695
    %v1663 = vpow.pop %v1662
    %v1664 = vmul.f32 %v1644, 1.442695
    %v1665 = vpow.pop %v1664
    %v1666 = vmul.f32 %v1645, 1.442695
    %v1667 = vpow.pop %v1666
    %v1668 = vmul.f32 %v1646, 1.442695
    %v1669 = vpow.pop %v1668
    %v1670 = vmul.f32 %v1647, 1.442695
    %v1671 = vpow.pop %v1670
    %v1672 = vmul.f32 %v1648, 1.442695
    %v1673 = vpow.pop %v1672
    %v1674 = vmul.f32 %v1649, 1.442695
    %v1675 = vpow.pop %v1674
    %v1676 = vmul.f32 %v1650, 1.442695
    %v1677 = vpow.pop %v1676
    %v1678 = vmul.f32 %v1651, 1.442695
    %v1679 = vpow.pop %v1678
    %v1680 = vmul.f32 %v1652, 1.442695
    %v1681 = vpow.pop %v1680
    %v1682 = vmul.f32 %v1653, 1.442695
    %v1683 = vpow.pop %v1682
    %v1684 = vmul.f32 %v1654, 1.442695
    %v1685 = vpow.pop %v1684
    %v1686 = vmul.f32 %v1655, 1.442695
    %v1687 = vpow.pop %v1686
    %1688 = vadd.xlane.f32.xlu0 %v1657
    %v1689 = vpop.xlane.xlu0 %1688
    %1690 = vadd.xlane.f32.xlu0 %v1659
    %v1691 = vpop.xlane.xlu0 %1690
    %1692 = vadd.xlane.f32.xlu0 %v1661
    %v1693 = vpop.xlane.xlu0 %1692
    %1694 = vadd.xlane.f32.xlu0 %v1663
    %v1695 = vpop.xlane.xlu0 %1694
    %1696 = vadd.xlane.f32.xlu0 %v1665
    %v1697 = vpop.xlane.xlu0 %1696
    %1698 = vadd.xlane.f32.xlu0 %v1667
    %v1699 = vpop.xlane.xlu0 %1698
    %1700 = vadd.xlane.f32.xlu0 %v1669
    %v1701 = vpop.xlane.xlu0 %1700
    %1702 = vadd.xlane.f32.xlu0 %v1671
    %v1703 = vpop.xlane.xlu0 %1702
    %1704 = vadd.xlane.f32.xlu0 %v1673
    %v1705 = vpop.xlane.xlu0 %1704
    %1706 = vadd.xlane.f32.xlu0 %v1675
    %v1707 = vpop.xlane.xlu0 %1706
    %1708 = vadd.xlane.f32.xlu0 %v1677
    %v1709 = vpop.xlane.xlu0 %1708
    %1710 = vadd.xlane.f32.xlu0 %v1679
    %v1711 = vpop.xlane.xlu0 %1710
    %1712 = vadd.xlane.f32.xlu0 %v1681
    %v1713 = vpop.xlane.xlu0 %1712
    %1714 = vadd.xlane.f32.xlu0 %v1683
    %v1715 = vpop.xlane.xlu0 %1714
    %1716 = vadd.xlane.f32.xlu0 %v1685
    %v1717 = vpop.xlane.xlu0 %1716
    %1718 = vadd.xlane.f32.xlu0 %v1687
    %v1719 = vpop.xlane.xlu0 %1718
    %v1720 = vrcp.pop %v1689
    %v1721 = vrcp.pop %v1691
    %v1722 = vrcp.pop %v1693
    %v1723 = vrcp.pop %v1695
    %v1724 = vrcp.pop %v1697
    %v1725 = vrcp.pop %v1699
    %v1726 = vrcp.pop %v1701
    %v1727 = vrcp.pop %v1703
    %v1728 = vrcp.pop %v1705
    %v1729 = vrcp.pop %v1707
    %v1730 = vrcp.pop %v1709
    %v1731 = vrcp.pop %v1711
    %v1732 = vrcp.pop %v1713
    %v1733 = vrcp.pop %v1715
    %v1734 = vrcp.pop %v1717
    %v1735 = vrcp.pop %v1719
    %v1736 = vmul.f32 %v1657, %v1720
    %v1737 = vmul.f32 %v1659, %v1721
    %v1738 = vmul.f32 %v1661, %v1722
    %v1739 = vmul.f32 %v1663, %v1723
    %v1740 = vmul.f32 %v1665, %v1724
    %v1741 = vmul.f32 %v1667, %v1725
    %v1742 = vmul.f32 %v1669, %v1726
    %v1743 = vmul.f32 %v1671, %v1727
    %v1744 = vmul.f32 %v1673, %v1728
    %v1745 = vmul.f32 %v1675, %v1729
    %v1746 = vmul.f32 %v1677, %v1730
    %v1747 = vmul.f32 %v1679, %v1731
    %v1748 = vmul.f32 %v1681, %v1732
    %v1749 = vmul.f32 %v1683, %v1733
    %v1750 = vmul.f32 %v1685, %v1734
    %v1751 = vmul.f32 %v1687, %v1735
    %v1752 = vpack.c.bf16 %v1737, %v1736
    %v1753 = vpack.c.bf16 %v1739, %v1738
    %v1754 = vpack.c.bf16 %v1741, %v1740
    %v1755 = vpack.c.bf16 %v1743, %v1742
    %v1756 = vpack.c.bf16 %v1745, %v1744
    %v1757 = vpack.c.bf16 %v1747, %v1746
    %v1758 = vpack.c.bf16 %v1749, %v1748
    %v1759 = vpack.c.bf16 %v1751, %v1750
    %1760 = vrot.lane.b32.xlu0 %v1310, 64
    %v1761 = vpop.permute.xlu0 %1760
    %1762 = vrot.lane.b32.xlu0 %v1311, 64
    %v1763 = vpop.permute.xlu0 %1762
    %1764 = vrot.lane.b32.xlu0 %v1312, 64
    %v1765 = vpop.permute.xlu0 %1764
    %1766 = vrot.lane.b32.xlu0 %v1313, 64
    %v1767 = vpop.permute.xlu0 %1766
    %1768 = vrot.lane.b32.xlu0 %v1314, 64
    %v1769 = vpop.permute.xlu0 %1768
    %1770 = vrot.lane.b32.xlu0 %v1315, 64
    %v1771 = vpop.permute.xlu0 %1770
    %1772 = vrot.lane.b32.xlu0 %v1316, 64
    %v1773 = vpop.permute.xlu0 %1772
    %1774 = vrot.lane.b32.xlu0 %v1317, 64
    %v1775 = vpop.permute.xlu0 %1774
    %1784 = vmatprep.subr.bf16.mxu0 0
    %1785 = vmatpush1.bf16.msra.mxu0 %v1775
    %1786 = vmatprep.subr.bf16.mxu0 0
    %1787 = vmatpush1.bf16.msra.mxu0 %v1773
    %1788 = vmatprep.subr.bf16.mxu0 0
    %1789 = vmatpush1.bf16.msra.mxu0 %v1771
    %1790 = vmatprep.subr.bf16.mxu0 0
    %1791 = vmatpush1.bf16.msra.mxu0 %v1769
    %1792 = vmatprep.subr.bf16.mxu0 0
    %1793 = vmatpush1.bf16.msra.mxu0 %v1767
    %1794 = vmatprep.subr.bf16.mxu0 0
    %1795 = vmatpush1.bf16.msra.mxu0 %v1765
    %1796 = vmatprep.subr.bf16.mxu0 0
    %1797 = vmatpush1.bf16.msra.mxu0 %v1763
    %1798 = vmatprep.subr.bf16.mxu0 0
    %1799 = vmatpush1.bf16.msra.mxu0 %v1761
    %1800 = vmatprep.subr.bf16.mxu0 0
    %1801 = vmatpush2.bf16.msra.mxu0 0
    %1802 = vmatprep.subr.bf16.mxu0 0
    %1803 = vmatpush2.bf16.msra.mxu0 0
    %1804 = vmatprep.subr.bf16.mxu0 0
    %1805 = vmatpush2.bf16.msra.mxu0 0
    %1806 = vmatprep.subr.bf16.mxu0 0
    %1807 = vmatpush2.bf16.msra.mxu0 0
    %1808 = vmatprep.subr.bf16.mxu0 0
    %1809 = vmatpush2.bf16.msra.mxu0 0
    %1810 = vmatprep.subr.bf16.mxu0 0
    %1811 = vmatpush2.bf16.msra.mxu0 0
    %1812 = vmatprep.subr.bf16.mxu0 0
    %1813 = vmatpush2.bf16.msra.mxu0 0
    %1814 = vmatprep.subr.bf16.mxu0 0
    %1815 = vmatpush2.bf16.msra.mxu0 0
    %1816 = vmatprep.mubr.bf16.mxu0 0
    %1817 = vmatmul.mubr.bf16.gmra.mxu0 %v1752
    %v1818 = vpop.f32.mrf.mxu0
    %v1819 = vadd.f32 0.0, %v1818
    %v1820 = vpop.f32.mrf.mxu0
    %v1821 = vpop.f32.mrf.mxu0
    %v1822 = vadd.f32 0.0, %v1821
    %v1823 = vpop.f32.mrf.mxu0
    %1824 = vmatprep.mubr.bf16.mxu0 0
    %1825 = vmatmul.mubr.bf16.gmra.mxu0 %v1753
    %v1826 = vpop.f32.mrf.mxu0
    %v1827 = vadd.f32 0.0, %v1826
    %v1828 = vpop.f32.mrf.mxu0
    %v1829 = vpop.f32.mrf.mxu0
    %v1830 = vadd.f32 0.0, %v1829
    %v1831 = vpop.f32.mrf.mxu0
    %1832 = vmatprep.mubr.bf16.mxu0 0
    %1833 = vmatmul.mubr.bf16.gmra.mxu0 %v1754
    %v1834 = vpop.f32.mrf.mxu0
    %v1835 = vadd.f32 0.0, %v1834
    %v1836 = vpop.f32.mrf.mxu0
    %v1837 = vpop.f32.mrf.mxu0
    %v1838 = vadd.f32 0.0, %v1837
    %v1839 = vpop.f32.mrf.mxu0
    %1840 = vmatprep.mubr.bf16.mxu0 0
    %1841 = vmatmul.mubr.bf16.gmra.mxu0 %v1755
    %v1842 = vpop.f32.mrf.mxu0
    %v1843 = vadd.f32 0.0, %v1842
    %v1844 = vpop.f32.mrf.mxu0
    %v1845 = vpop.f32.mrf.mxu0
    %v1846 = vadd.f32 0.0, %v1845
    %v1847 = vpop.f32.mrf.mxu0
    %1848 = vmatprep.mubr.bf16.mxu0 0
    %1849 = vmatmul.mubr.bf16.gmra.mxu0 %v1756
    %v1850 = vpop.f32.mrf.mxu0
    %v1851 = vadd.f32 0.0, %v1850
    %v1852 = vpop.f32.mrf.mxu0
    %v1853 = vpop.f32.mrf.mxu0
    %v1854 = vadd.f32 0.0, %v1853
    %v1855 = vpop.f32.mrf.mxu0
    %1856 = vmatprep.mubr.bf16.mxu0 0
    %1857 = vmatmul.mubr.bf16.gmra.mxu0 %v1757
    %v1858 = vpop.f32.mrf.mxu0
    %v1859 = vadd.f32 0.0, %v1858
    %v1860 = vpop.f32.mrf.mxu0
    %v1861 = vpop.f32.mrf.mxu0
    %v1862 = vadd.f32 0.0, %v1861
    %v1863 = vpop.f32.mrf.mxu0
    %1864 = vmatprep.mubr.bf16.mxu0 0
    %1865 = vmatmul.mubr.bf16.gmra.mxu0 %v1758
    %v1866 = vpop.f32.mrf.mxu0
    %v1867 = vadd.f32 0.0, %v1866
    %v1868 = vpop.f32.mrf.mxu0
    %v1869 = vpop.f32.mrf.mxu0
    %v1870 = vadd.f32 0.0, %v1869
    %v1871 = vpop.f32.mrf.mxu0
    %1872 = vmatprep.mubr.bf16.mxu0 0
    %1873 = vmatmul.mubr.bf16.gmra.mxu0 %v1759
    %v1874 = vpop.f32.mrf.mxu0
    %v1875 = vadd.f32 0.0, %v1874
    %v1876 = vpop.f32.mrf.mxu0
    %v1877 = vpop.f32.mrf.mxu0
    %v1878 = vadd.f32 0.0, %v1877
    %v1879 = vpop.f32.mrf.mxu0
    %1880 = vdwg.mxu0
    %v1881 = vpack.c.bf16 %v1822, %v1819
    %v1882 = vpack.c.bf16 %v1830, %v1827
    %v1883 = vpack.c.bf16 %v1838, %v1835
    %v1884 = vpack.c.bf16 %v1846, %v1843
    %v1885 = vpack.c.bf16 %v1854, %v1851
    %v1886 = vpack.c.bf16 %v1862, %v1859
    %v1887 = vpack.c.bf16 %v1870, %v1867
    %v1888 = vpack.c.bf16 %v1878, %v1875
    %1897 = vrot.lane.b32.xlu0 %v1881, 64
    %v1898 = vpop.permute.xlu0 %1897
    %1899 = vrot.lane.b32.xlu0 %v1882, 64
    %v1900 = vpop.permute.xlu0 %1899
    %1901 = vrot.lane.b32.xlu0 %v1883, 64
    %v1902 = vpop.permute.xlu0 %1901
    %1903 = vrot.lane.b32.xlu0 %v1884, 64
    %v1904 = vpop.permute.xlu0 %1903
    %1905 = vrot.lane.b32.xlu0 %v1885, 64
    %v1906 = vpop.permute.xlu0 %1905
    %1907 = vrot.lane.b32.xlu0 %v1886, 64
    %v1908 = vpop.permute.xlu0 %1907
    %1909 = vrot.lane.b32.xlu0 %v1887, 64
    %v1910 = vpop.permute.xlu0 %1909
    %1911 = vrot.lane.b32.xlu0 %v1888, 64
    %v1912 = vpop.permute.xlu0 %1911
    %v1915 = vsel %vm980, %v1423, %v1898
    %v1919 = vsel %vm980, %v1424, %v1900
    %v1923 = vsel %vm980, %v1425, %v1902
    %v1927 = vsel %vm980, %v1426, %v1904
    %v1931 = vsel %vm980, %v1427, %v1906
    %v1935 = vsel %vm980, %v1428, %v1908
    %v1939 = vsel %vm980, %v1429, %v1910
    %v1943 = vsel %vm980, %v1430, %v1912
    %v1945 = vld [vmem:[#allocation12] sm:$0xf]
    %v1946 = vld [vmem:[#allocation12 + $0x4] sm:$0xf]
    %v1947 = vld [vmem:[#allocation12 + $0x8] sm:$0xf]
    %v1948 = vld [vmem:[#allocation12 + $0xc] sm:$0xf]
    %v1949 = vld [vmem:[#allocation12 + $0x10] sm:$0xf]
    %v1950 = vld [vmem:[#allocation12 + $0x14] sm:$0xf]
    %v1951 = vld [vmem:[#allocation12 + $0x18] sm:$0xf]
    %v1952 = vld [vmem:[#allocation12 + $0x1c] sm:$0xf]
    %v1953 = vld [vmem:[#allocation12 + $0x20] sm:$0xf]
    %v1954 = vld [vmem:[#allocation12 + $0x24] sm:$0xf]
    %v1955 = vld [vmem:[#allocation12 + $0x28] sm:$0xf]
    %v1956 = vld [vmem:[#allocation12 + $0x2c] sm:$0xf]
    %v1957 = vld [vmem:[#allocation12 + $0x30] sm:$0xf]
    %v1958 = vld [vmem:[#allocation12 + $0x34] sm:$0xf]
    %v1959 = vld [vmem:[#allocation12 + $0x38] sm:$0xf]
    %v1960 = vld [vmem:[#allocation12 + $0x3c] sm:$0xf]
    %v1961 = vld [vmem:[%s5] sm:$0x1]
    %v1963 = vlaneseq
    %v1964 = vshrl.u32 %v1963, 7
    %v1965 = vsub.s32 0, %v1964
    %v1966 = vrot.slane %v1961, %v1965
    %v1984 = vunpack.c.l.b16 %v1945
    %v1985 = vunpack.c.l.b16 %v1946
    %v1986 = vunpack.c.l.b16 %v1947
    %v1987 = vunpack.c.l.b16 %v1948
    %v1988 = vunpack.c.l.b16 %v1949
    %v1989 = vunpack.c.l.b16 %v1950
    %v1990 = vunpack.c.l.b16 %v1951
    %v1991 = vunpack.c.l.b16 %v1952
    %v1992 = vunpack.c.l.b16 %v1953
    %v1993 = vunpack.c.l.b16 %v1954
    %v1994 = vunpack.c.l.b16 %v1955
    %v1995 = vunpack.c.l.b16 %v1956
    %v1996 = vunpack.c.l.b16 %v1957
    %v1997 = vunpack.c.l.b16 %v1958
    %v1998 = vunpack.c.l.b16 %v1959
    %v1999 = vunpack.c.l.b16 %v1960
    %v2000 = vpack.c.b16 %v1985, %v1984
    %v2001 = vpack.c.b16 %v1987, %v1986
    %v2002 = vpack.c.b16 %v1989, %v1988
    %v2003 = vpack.c.b16 %v1991, %v1990
    %v2004 = vpack.c.b16 %v1993, %v1992
    %v2005 = vpack.c.b16 %v1995, %v1994
    %v2006 = vpack.c.b16 %v1997, %v1996
    %v2007 = vpack.c.b16 %v1999, %v1998
    %2016 = vmatprep.subr.bf16.mxu0 0
    %2017 = vmatpush1.bf16.msra.mxu0 %v2007
    %2018 = vmatprep.subr.bf16.mxu0 0
    %2019 = vmatpush1.bf16.msra.mxu0 %v2006
    %2020 = vmatprep.subr.bf16.mxu0 0
    %2021 = vmatpush1.bf16.msra.mxu0 %v2005
    %2022 = vmatprep.subr.bf16.mxu0 0
    %2023 = vmatpush1.bf16.msra.mxu0 %v2004
    %2024 = vmatprep.subr.bf16.mxu0 0
    %2025 = vmatpush1.bf16.msra.mxu0 %v2003
    %2026 = vmatprep.subr.bf16.mxu0 0
    %2027 = vmatpush1.bf16.msra.mxu0 %v2002
    %2028 = vmatprep.subr.bf16.mxu0 0
    %2029 = vmatpush1.bf16.msra.mxu0 %v2001
    %2030 = vmatprep.subr.bf16.mxu0 0
    %2031 = vmatpush1.bf16.msra.mxu0 %v2000
    %2032 = vmatprep.subr.bf16.mxu0 0
    %2033 = vmatpush2.bf16.msra.mxu0 0
    %2034 = vmatprep.subr.bf16.mxu0 0
    %2035 = vmatpush2.bf16.msra.mxu0 0
    %2036 = vmatprep.subr.bf16.mxu0 0
    %2037 = vmatpush2.bf16.msra.mxu0 0
    %2038 = vmatprep.subr.bf16.mxu0 0
    %2039 = vmatpush2.bf16.msra.mxu0 0
    %2040 = vmatprep.subr.bf16.mxu0 0
    %2041 = vmatpush2.bf16.msra.mxu0 0
    %2042 = vmatprep.subr.bf16.mxu0 0
    %2043 = vmatpush2.bf16.msra.mxu0 0
    %2044 = vmatprep.subr.bf16.mxu0 0
    %2045 = vmatpush2.bf16.msra.mxu0 0
    %2046 = vmatprep.subr.bf16.mxu0 0
    %2047 = vmatpush2.bf16.msra.mxu0 0
    %2048 = vmatprep.mubr.bf16.mxu0 0
    %2049 = vmatmul.mubr.bf16.gmra.mxu0 %v1915
    %v2050 = vpop.f32.mrf.mxu0
    %v2051 = vadd.f32 %v1966, %v2050
    %v2052 = vpop.f32.mrf.mxu0
    %v2053 = vpop.f32.mrf.mxu0
    %v2054 = vadd.f32 %v1966, %v2053
    %v2055 = vpop.f32.mrf.mxu0
    %2056 = vmatprep.mubr.bf16.mxu0 0
    %2057 = vmatmul.mubr.bf16.gmra.mxu0 %v1919
    %v2058 = vpop.f32.mrf.mxu0
    %v2059 = vadd.f32 %v1966, %v2058
    %v2060 = vpop.f32.mrf.mxu0
    %v2061 = vpop.f32.mrf.mxu0
    %v2062 = vadd.f32 %v1966, %v2061
    %v2063 = vpop.f32.mrf.mxu0
    %2064 = vmatprep.mubr.bf16.mxu0 0
    %2065 = vmatmul.mubr.bf16.gmra.mxu0 %v1923
    %v2066 = vpop.f32.mrf.mxu0
    %v2067 = vadd.f32 %v1966, %v2066
    %v2068 = vpop.f32.mrf.mxu0
    %v2069 = vpop.f32.mrf.mxu0
    %v2070 = vadd.f32 %v1966, %v2069
    %v2071 = vpop.f32.mrf.mxu0
    %2072 = vmatprep.mubr.bf16.mxu0 0
    %2073 = vmatmul.mubr.bf16.gmra.mxu0 %v1927
    %v2074 = vpop.f32.mrf.mxu0
    %v2075 = vadd.f32 %v1966, %v2074
    %v2076 = vpop.f32.mrf.mxu0
    %v2077 = vpop.f32.mrf.mxu0
    %v2078 = vadd.f32 %v1966, %v2077
    %v2079 = vpop.f32.mrf.mxu0
    %2080 = vmatprep.mubr.bf16.mxu0 0
    %2081 = vmatmul.mubr.bf16.gmra.mxu0 %v1931
    %v2082 = vpop.f32.mrf.mxu0
    %v2083 = vadd.f32 %v1966, %v2082
    %v2084 = vpop.f32.mrf.mxu0
    %v2085 = vpop.f32.mrf.mxu0
    %v2086 = vadd.f32 %v1966, %v2085
    %v2087 = vpop.f32.mrf.mxu0
    %2088 = vmatprep.mubr.bf16.mxu0 0
    %2089 = vmatmul.mubr.bf16.gmra.mxu0 %v1935
    %v2090 = vpop.f32.mrf.mxu0
    %v2091 = vadd.f32 %v1966, %v2090
    %v2092 = vpop.f32.mrf.mxu0
    %v2093 = vpop.f32.mrf.mxu0
    %v2094 = vadd.f32 %v1966, %v2093
    %v2095 = vpop.f32.mrf.mxu0
    %2096 = vmatprep.mubr.bf16.mxu0 0
    %2097 = vmatmul.mubr.bf16.gmra.mxu0 %v1939
    %v2098 = vpop.f32.mrf.mxu0
    %v2099 = vadd.f32 %v1966, %v2098
    %v2100 = vpop.f32.mrf.mxu0
    %v2101 = vpop.f32.mrf.mxu0
    %v2102 = vadd.f32 %v1966, %v2101
    %v2103 = vpop.f32.mrf.mxu0
    %2104 = vmatprep.mubr.bf16.mxu0 0
    %2105 = vmatmul.mubr.bf16.gmra.mxu0 %v1943
    %v2106 = vpop.f32.mrf.mxu0
    %v2107 = vadd.f32 %v1966, %v2106
    %v2108 = vpop.f32.mrf.mxu0
    %v2109 = vpop.f32.mrf.mxu0
    %v2110 = vadd.f32 %v1966, %v2109
    %v2111 = vpop.f32.mrf.mxu0
    %2112 = vdwg.mxu0
    %v2113 = vadd.f32 %v233, %v2051
    %v2114 = vadd.f32 %v234, %v2054
    %v2115 = vadd.f32 %v235, %v2059
    %v2116 = vadd.f32 %v236, %v2062
    %v2117 = vadd.f32 %v237, %v2067
    %v2118 = vadd.f32 %v238, %v2070
    %v2119 = vadd.f32 %v239, %v2075
    %v2120 = vadd.f32 %v240, %v2078
    %v2121 = vadd.f32 %v241, %v2083
    %v2122 = vadd.f32 %v242, %v2086
    %v2123 = vadd.f32 %v243, %v2091
    %v2124 = vadd.f32 %v244, %v2094
    %v2125 = vadd.f32 %v245, %v2099
    %v2126 = vadd.f32 %v246, %v2102
    %v2127 = vadd.f32 %v247, %v2107
    %v2128 = vadd.f32 %v248, %v2110
    %v2129 = vld [vmem:[#allocation13] sm:$0x1]
    %v2130 = vld [vmem:[#allocation15] sm:$0x1]
    %2131 = vadd.xlane.f32.xlu0 %v2113
    %v2132 = vpop.xlane.xlu0 %2131
    %2133 = vadd.xlane.f32.xlu0 %v2114
    %v2134 = vpop.xlane.xlu0 %2133
    %2135 = vadd.xlane.f32.xlu0 %v2115
    %v2136 = vpop.xlane.xlu0 %2135
    %2137 = vadd.xlane.f32.xlu0 %v2116
    %v2138 = vpop.xlane.xlu0 %2137
    %2139 = vadd.xlane.f32.xlu0 %v2117
    %v2140 = vpop.xlane.xlu0 %2139
    %2141 = vadd.xlane.f32.xlu0 %v2118
    %v2142 = vpop.xlane.xlu0 %2141
    %2143 = vadd.xlane.f32.xlu0 %v2119
    %v2144 = vpop.xlane.xlu0 %2143
    %2145 = vadd.xlane.f32.xlu0 %v2120
    %v2146 = vpop.xlane.xlu0 %2145
    %2147 = vadd.xlane.f32.xlu0 %v2121
    %v2148 = vpop.xlane.xlu0 %2147
    %2149 = vadd.xlane.f32.xlu0 %v2122
    %v2150 = vpop.xlane.xlu0 %2149
    %2151 = vadd.xlane.f32.xlu0 %v2123
    %v2152 = vpop.xlane.xlu0 %2151
    %2153 = vadd.xlane.f32.xlu0 %v2124
    %v2154 = vpop.xlane.xlu0 %2153
    %2155 = vadd.xlane.f32.xlu0 %v2125
    %v2156 = vpop.xlane.xlu0 %2155
    %2157 = vadd.xlane.f32.xlu0 %v2126
    %v2158 = vpop.xlane.xlu0 %2157
    %2159 = vadd.xlane.f32.xlu0 %v2127
    %v2160 = vpop.xlane.xlu0 %2159
    %2161 = vadd.xlane.f32.xlu0 %v2128
    %v2162 = vpop.xlane.xlu0 %2161
    %v2163 = vrcp.pop 128.0
    %v2164 = vmul.f32 %v2132, %v2163
    %v2165 = vmul.f32 %v2134, %v2163
    %v2166 = vmul.f32 %v2136, %v2163
    %v2167 = vmul.f32 %v2138, %v2163
    %v2168 = vmul.f32 %v2140, %v2163
    %v2169 = vmul.f32 %v2142, %v2163
    %v2170 = vmul.f32 %v2144, %v2163
    %v2171 = vmul.f32 %v2146, %v2163
    %v2172 = vmul.f32 %v2148, %v2163
    %v2173 = vmul.f32 %v2150, %v2163
    %v2174 = vmul.f32 %v2152, %v2163
    %v2175 = vmul.f32 %v2154, %v2163
    %v2176 = vmul.f32 %v2156, %v2163
    %v2177 = vmul.f32 %v2158, %v2163
    %v2178 = vmul.f32 %v2160, %v2163
    %v2179 = vmul.f32 %v2162, %v2163
    %v2180 = vsub.f32 %v2113, %v2164
    %v2181 = vsub.f32 %v2114, %v2165
    %v2182 = vsub.f32 %v2115, %v2166
    %v2183 = vsub.f32 %v2116, %v2167
    %v2184 = vsub.f32 %v2117, %v2168
    %v2185 = vsub.f32 %v2118, %v2169
    %v2186 = vsub.f32 %v2119, %v2170
    %v2187 = vsub.f32 %v2120, %v2171
    %v2188 = vsub.f32 %v2121, %v2172
    %v2189 = vsub.f32 %v2122, %v2173
    %v2190 = vsub.f32 %v2123, %v2174
    %v2191 = vsub.f32 %v2124, %v2175
    %v2192 = vsub.f32 %v2125, %v2176
    %v2193 = vsub.f32 %v2126, %v2177
    %v2194 = vsub.f32 %v2127, %v2178
    %v2195 = vsub.f32 %v2128, %v2179
    %v2196 = vmul.f32 %v2180, %v2180
    %v2197 = vmul.f32 %v2181, %v2181
    %v2198 = vmul.f32 %v2182, %v2182
    %v2199 = vmul.f32 %v2183, %v2183
    %v2200 = vmul.f32 %v2184, %v2184
    %v2201 = vmul.f32 %v2185, %v2185
    %v2202 = vmul.f32 %v2186, %v2186
    %v2203 = vmul.f32 %v2187, %v2187
    %v2204 = vmul.f32 %v2188, %v2188
    %v2205 = vmul.f32 %v2189, %v2189
    %v2206 = vmul.f32 %v2190, %v2190
    %v2207 = vmul.f32 %v2191, %v2191
    %v2208 = vmul.f32 %v2192, %v2192
    %v2209 = vmul.f32 %v2193, %v2193
    %v2210 = vmul.f32 %v2194, %v2194
    %v2211 = vmul.f32 %v2195, %v2195
    %2212 = vadd.xlane.f32.xlu0 %v2196
    %v2213 = vpop.xlane.xlu0 %2212
    %2214 = vadd.xlane.f32.xlu0 %v2197
    %v2215 = vpop.xlane.xlu0 %2214
    %2216 = vadd.xlane.f32.xlu0 %v2198
    %v2217 = vpop.xlane.xlu0 %2216
    %2218 = vadd.xlane.f32.xlu0 %v2199
    %v2219 = vpop.xlane.xlu0 %2218
    %2220 = vadd.xlane.f32.xlu0 %v2200
    %v2221 = vpop.xlane.xlu0 %2220
    %2222 = vadd.xlane.f32.xlu0 %v2201
    %v2223 = vpop.xlane.xlu0 %2222
    %2224 = vadd.xlane.f32.xlu0 %v2202
    %v2225 = vpop.xlane.xlu0 %2224
    %2226 = vadd.xlane.f32.xlu0 %v2203
    %v2227 = vpop.xlane.xlu0 %2226
    %2228 = vadd.xlane.f32.xlu0 %v2204
    %v2229 = vpop.xlane.xlu0 %2228
    %2230 = vadd.xlane.f32.xlu0 %v2205
    %v2231 = vpop.xlane.xlu0 %2230
    %2232 = vadd.xlane.f32.xlu0 %v2206
    %v2233 = vpop.xlane.xlu0 %2232
    %2234 = vadd.xlane.f32.xlu0 %v2207
    %v2235 = vpop.xlane.xlu0 %2234
    %2236 = vadd.xlane.f32.xlu0 %v2208
    %v2237 = vpop.xlane.xlu0 %2236
    %2238 = vadd.xlane.f32.xlu0 %v2209
    %v2239 = vpop.xlane.xlu0 %2238
    %2240 = vadd.xlane.f32.xlu0 %v2210
    %v2241 = vpop.xlane.xlu0 %2240
    %2242 = vadd.xlane.f32.xlu0 %v2211
    %v2243 = vpop.xlane.xlu0 %2242
    %v2244 = vmul.f32 %v2213, %v2163
    %v2245 = vmul.f32 %v2215, %v2163
    %v2246 = vmul.f32 %v2217, %v2163
    %v2247 = vmul.f32 %v2219, %v2163
    %v2248 = vmul.f32 %v2221, %v2163
    %v2249 = vmul.f32 %v2223, %v2163
    %v2250 = vmul.f32 %v2225, %v2163
    %v2251 = vmul.f32 %v2227, %v2163
    %v2252 = vmul.f32 %v2229, %v2163
    %v2253 = vmul.f32 %v2231, %v2163
    %v2254 = vmul.f32 %v2233, %v2163
    %v2255 = vmul.f32 %v2235, %v2163
    %v2256 = vmul.f32 %v2237, %v2163
    %v2257 = vmul.f32 %v2239, %v2163
    %v2258 = vmul.f32 %v2241, %v2163
    %v2259 = vmul.f32 %v2243, %v2163
    %v2260 = vadd.f32 %v2244, 1e-12
    %v2261 = vadd.f32 %v2245, 1e-12
    %v2262 = vadd.f32 %v2246, 1e-12
    %v2263 = vadd.f32 %v2247, 1e-12
    %v2264 = vadd.f32 %v2248, 1e-12
    %v2265 = vadd.f32 %v2249, 1e-12
    %v2266 = vadd.f32 %v2250, 1e-12
    %v2267 = vadd.f32 %v2251, 1e-12
    %v2268 = vadd.f32 %v2252, 1e-12
    %v2269 = vadd.f32 %v2253, 1e-12
    %v2270 = vadd.f32 %v2254, 1e-12
    %v2271 = vadd.f32 %v2255, 1e-12
    %v2272 = vadd.f32 %v2256, 1e-12
    %v2273 = vadd.f32 %v2257, 1e-12
    %v2274 = vadd.f32 %v2258, 1e-12
    %v2275 = vadd.f32 %v2259, 1e-12
    %v2276 = vrsqrt.pop %v2260
    %v2277 = vrsqrt.pop %v2261
    %v2278 = vrsqrt.pop %v2262
    %v2279 = vrsqrt.pop %v2263
    %v2280 = vrsqrt.pop %v2264
    %v2281 = vrsqrt.pop %v2265
    %v2282 = vrsqrt.pop %v2266
    %v2283 = vrsqrt.pop %v2267
    %v2284 = vrsqrt.pop %v2268
    %v2285 = vrsqrt.pop %v2269
    %v2286 = vrsqrt.pop %v2270
    %v2287 = vrsqrt.pop %v2271
    %v2288 = vrsqrt.pop %v2272
    %v2289 = vrsqrt.pop %v2273
    %v2290 = vrsqrt.pop %v2274
    %v2291 = vrsqrt.pop %v2275
    %v2292 = vmul.f32 %v2180, %v2276
    %v2293 = vmul.f32 %v2181, %v2277
    %v2294 = vmul.f32 %v2182, %v2278
    %v2295 = vmul.f32 %v2183, %v2279
    %v2296 = vmul.f32 %v2184, %v2280
    %v2297 = vmul.f32 %v2185, %v2281
    %v2298 = vmul.f32 %v2186, %v2282
    %v2299 = vmul.f32 %v2187, %v2283
    %v2300 = vmul.f32 %v2188, %v2284
    %v2301 = vmul.f32 %v2189, %v2285
    %v2302 = vmul.f32 %v2190, %v2286
    %v2303 = vmul.f32 %v2191, %v2287
    %v2304 = vmul.f32 %v2192, %v2288
    %v2305 = vmul.f32 %v2193, %v2289
    %v2306 = vmul.f32 %v2194, %v2290
    %v2307 = vmul.f32 %v2195, %v2291
    %v2309 = vlaneseq
    %v2310 = vshrl.u32 %v2309, 7
    %v2311 = vsub.s32 0, %v2310
    %v2312 = vrot.slane %v2129, %v2311
    %v2314 = vmul.f32 %v2292, %v2312
    %v2315 = vmul.f32 %v2293, %v2312
    %v2316 = vmul.f32 %v2294, %v2312
    %v2317 = vmul.f32 %v2295, %v2312
    %v2318 = vmul.f32 %v2296, %v2312
    %v2319 = vmul.f32 %v2297, %v2312
    %v2320 = vmul.f32 %v2298, %v2312
    %v2321 = vmul.f32 %v2299, %v2312
    %v2322 = vmul.f32 %v2300, %v2312
    %v2323 = vmul.f32 %v2301, %v2312
    %v2324 = vmul.f32 %v2302, %v2312
    %v2325 = vmul.f32 %v2303, %v2312
    %v2326 = vmul.f32 %v2304, %v2312
    %v2327 = vmul.f32 %v2305, %v2312
    %v2328 = vmul.f32 %v2306, %v2312
    %v2329 = vmul.f32 %v2307, %v2312
    %v2331 = vlaneseq
    %v2332 = vshrl.u32 %v2331, 7
    %v2333 = vsub.s32 0, %v2332
    %v2334 = vrot.slane %v2130, %v2333
    %v2336 = vadd.f32 %v2314, %v2334
    %v2337 = vadd.f32 %v2315, %v2334
    %v2338 = vadd.f32 %v2316, %v2334
    %v2339 = vadd.f32 %v2317, %v2334
    %v2340 = vadd.f32 %v2318, %v2334
    %v2341 = vadd.f32 %v2319, %v2334
    %v2342 = vadd.f32 %v2320, %v2334
    %v2343 = vadd.f32 %v2321, %v2334
    %v2344 = vadd.f32 %v2322, %v2334
    %v2345 = vadd.f32 %v2323, %v2334
    %v2346 = vadd.f32 %v2324, %v2334
    %v2347 = vadd.f32 %v2325, %v2334
    %v2348 = vadd.f32 %v2326, %v2334
    %v2349 = vadd.f32 %v2327, %v2334
    %v2350 = vadd.f32 %v2328, %v2334
    %v2351 = vadd.f32 %v2329, %v2334
    %v2352 = vpack.c.bf16 %v2337, %v2336
    %v2353 = vpack.c.bf16 %v2339, %v2338
    %v2354 = vpack.c.bf16 %v2341, %v2340
    %v2355 = vpack.c.bf16 %v2343, %v2342
    %v2356 = vpack.c.bf16 %v2345, %v2344
    %v2357 = vpack.c.bf16 %v2347, %v2346
    %v2358 = vpack.c.bf16 %v2349, %v2348
    %v2359 = vpack.c.bf16 %v2351, %v2350
    %v2360 = vld [vmem:[#allocation16] sm:$0xff]
    %v2361 = vld [vmem:[#allocation16 + $0x8] sm:$0xff]
    %v2362 = vld [vmem:[#allocation16 + $0x10] sm:$0xff]
    %v2363 = vld [vmem:[#allocation16 + $0x18] sm:$0xff]
    %v2364 = vld [vmem:[#allocation16 + $0x20] sm:$0xff]
    %v2365 = vld [vmem:[#allocation16 + $0x28] sm:$0xff]
    %v2366 = vld [vmem:[#allocation16 + $0x30] sm:$0xff]
    %v2367 = vld [vmem:[#allocation16 + $0x38] sm:$0xff]
    %v2368 = vld [vmem:[#allocation16 + $0x40] sm:$0xff]
    %v2369 = vld [vmem:[#allocation16 + $0x48] sm:$0xff]
    %v2370 = vld [vmem:[#allocation16 + $0x50] sm:$0xff]
    %v2371 = vld [vmem:[#allocation16 + $0x58] sm:$0xff]
    %v2372 = vld [vmem:[#allocation16 + $0x60] sm:$0xff]
    %v2373 = vld [vmem:[#allocation16 + $0x68] sm:$0xff]
    %v2374 = vld [vmem:[#allocation16 + $0x70] sm:$0xff]
    %v2375 = vld [vmem:[#allocation16 + $0x78] sm:$0xff]
    %v2376 = vld [vmem:[#allocation16 + $0x80] sm:$0xff]
    %v2377 = vld [vmem:[#allocation16 + $0x88] sm:$0xff]
    %v2378 = vld [vmem:[#allocation16 + $0x90] sm:$0xff]
    %v2379 = vld [vmem:[#allocation16 + $0x98] sm:$0xff]
    %v2380 = vld [vmem:[#allocation16 + $0xa0] sm:$0xff]
    %v2381 = vld [vmem:[#allocation16 + $0xa8] sm:$0xff]
    %v2382 = vld [vmem:[#allocation16 + $0xb0] sm:$0xff]
    %v2383 = vld [vmem:[#allocation16 + $0xb8] sm:$0xff]
    %v2384 = vld [vmem:[#allocation16 + $0xc0] sm:$0xff]
    %v2385 = vld [vmem:[#allocation16 + $0xc8] sm:$0xff]
    %v2386 = vld [vmem:[#allocation16 + $0xd0] sm:$0xff]
    %v2387 = vld [vmem:[#allocation16 + $0xd8] sm:$0xff]
    %v2388 = vld [vmem:[#allocation16 + $0xe0] sm:$0xff]
    %v2389 = vld [vmem:[#allocation16 + $0xe8] sm:$0xff]
    %v2390 = vld [vmem:[#allocation16 + $0xf0] sm:$0xff]
    %v2391 = vld [vmem:[#allocation16 + $0xf8] sm:$0xff]
    %v2392 = vld [vmem:[%s9] sm:$0xf]
    %v2394 = vlaneseq
    %v2395 = vshrl.u32 %v2394, 7
    %v2396 = vsub.s32 0, %v2395
    %v2397 = vrot.slane %v2392, %v2396
    %v2398 = vlaneseq
    %v2399 = vshrl.u32 %v2398, 7
    %v2400 = vsub.s32 1, %v2399
    %v2401 = vrot.slane %v2392, %v2400
    %v2402 = vlaneseq
    %v2403 = vshrl.u32 %v2402, 7
    %v2404 = vsub.s32 2, %v2403
    %v2405 = vrot.slane %v2392, %v2404
    %v2406 = vlaneseq
    %v2407 = vshrl.u32 %v2406, 7
    %v2408 = vsub.s32 3, %v2407
    %v2409 = vrot.slane %v2392, %v2408
    %v2446 = vunpack.c.l.b16 %v2360
    %v2447 = vunpack.c.h.b16 %v2360
    %v2448 = vunpack.c.l.b16 %v2361
    %v2449 = vunpack.c.h.b16 %v2361
    %v2450 = vunpack.c.l.b16 %v2362
    %v2451 = vunpack.c.h.b16 %v2362
    %v2452 = vunpack.c.l.b16 %v2363
    %v2453 = vunpack.c.h.b16 %v2363
    %v2454 = vunpack.c.l.b16 %v2364
    %v2455 = vunpack.c.h.b16 %v2364
    %v2456 = vunpack.c.l.b16 %v2365
    %v2457 = vunpack.c.h.b16 %v2365
    %v2458 = vunpack.c.l.b16 %v2366
    %v2459 = vunpack.c.h.b16 %v2366
    %v2460 = vunpack.c.l.b16 %v2367
    %v2461 = vunpack.c.h.b16 %v2367
    %v2462 = vunpack.c.l.b16 %v2368
    %v2463 = vunpack.c.h.b16 %v2368
    %v2464 = vunpack.c.l.b16 %v2369
    %v2465 = vunpack.c.h.b16 %v2369
    %v2466 = vunpack.c.l.b16 %v2370
    %v2467 = vunpack.c.h.b16 %v2370
    %v2468 = vunpack.c.l.b16 %v2371
    %v2469 = vunpack.c.h.b16 %v2371
    %v2470 = vunpack.c.l.b16 %v2372
    %v2471 = vunpack.c.h.b16 %v2372
    %v2472 = vunpack.c.l.b16 %v2373
    %v2473 = vunpack.c.h.b16 %v2373
    %v2474 = vunpack.c.l.b16 %v2374
    %v2475 = vunpack.c.h.b16 %v2374
    %v2476 = vunpack.c.l.b16 %v2375
    %v2477 = vunpack.c.h.b16 %v2375
    %v2478 = vunpack.c.l.b16 %v2376
    %v2479 = vunpack.c.h.b16 %v2376
    %v2480 = vunpack.c.l.b16 %v2377
    %v2481 = vunpack.c.h.b16 %v2377
    %v2482 = vunpack.c.l.b16 %v2378
    %v2483 = vunpack.c.h.b16 %v2378
    %v2484 = vunpack.c.l.b16 %v2379
    %v2485 = vunpack.c.h.b16 %v2379
    %v2486 = vunpack.c.l.b16 %v2380
    %v2487 = vunpack.c.h.b16 %v2380
    %v2488 = vunpack.c.l.b16 %v2381
    %v2489 = vunpack.c.h.b16 %v2381
    %v2490 = vunpack.c.l.b16 %v2382
    %v2491 = vunpack.c.h.b16 %v2382
    %v2492 = vunpack.c.l.b16 %v2383
    %v2493 = vunpack.c.h.b16 %v2383
    %v2494 = vunpack.c.l.b16 %v2384
    %v2495 = vunpack.c.h.b16 %v2384
    %v2496 = vunpack.c.l.b16 %v2385
    %v2497 = vunpack.c.h.b16 %v2385
    %v2498 = vunpack.c.l.b16 %v2386
    %v2499 = vunpack.c.h.b16 %v2386
    %v2500 = vunpack.c.l.b16 %v2387
    %v2501 = vunpack.c.h.b16 %v2387
    %v2502 = vunpack.c.l.b16 %v2388
    %v2503 = vunpack.c.h.b16 %v2388
    %v2504 = vunpack.c.l.b16 %v2389
    %v2505 = vunpack.c.h.b16 %v2389
    %v2506 = vunpack.c.l.b16 %v2390
    %v2507 = vunpack.c.h.b16 %v2390
    %v2508 = vunpack.c.l.b16 %v2391
    %v2509 = vunpack.c.h.b16 %v2391
    %v2510 = vpack.c.b16 %v2450, %v2446
    %v2511 = vpack.c.b16 %v2451, %v2447
    %v2512 = vpack.c.b16 %v2452, %v2448
    %v2513 = vpack.c.b16 %v2453, %v2449
    %v2514 = vpack.c.b16 %v2458, %v2454
    %v2515 = vpack.c.b16 %v2459, %v2455
    %v2516 = vpack.c.b16 %v2460, %v2456
    %v2517 = vpack.c.b16 %v2461, %v2457
    %v2518 = vpack.c.b16 %v2466, %v2462
    %v2519 = vpack.c.b16 %v2467, %v2463
    %v2520 = vpack.c.b16 %v2468, %v2464
    %v2521 = vpack.c.b16 %v2469, %v2465
    %v2522 = vpack.c.b16 %v2474, %v2470
    %v2523 = vpack.c.b16 %v2475, %v2471
    %v2524 = vpack.c.b16 %v2476, %v2472
    %v2525 = vpack.c.b16 %v2477, %v2473
    %v2526 = vpack.c.b16 %v2482, %v2478
    %v2527 = vpack.c.b16 %v2483, %v2479
    %v2528 = vpack.c.b16 %v2484, %v2480
    %v2529 = vpack.c.b16 %v2485, %v2481
    %v2530 = vpack.c.b16 %v2490, %v2486
    %v2531 = vpack.c.b16 %v2491, %v2487
    %v2532 = vpack.c.b16 %v2492, %v2488
    %v2533 = vpack.c.b16 %v2493, %v2489
    %v2534 = vpack.c.b16 %v2498, %v2494
    %v2535 = vpack.c.b16 %v2499, %v2495
    %v2536 = vpack.c.b16 %v2500, %v2496
    %v2537 = vpack.c.b16 %v2501, %v2497
    %v2538 = vpack.c.b16 %v2506, %v2502
    %v2539 = vpack.c.b16 %v2507, %v2503
    %v2540 = vpack.c.b16 %v2508, %v2504
    %v2541 = vpack.c.b16 %v2509, %v2505
    %2574 = vmatprep.subr.bf16.mxu0 %v2539
    %2575 = vmatpush1.bf16.msra.mxu0 %v2538
    %2576 = vmatprep.subr.bf16.mxu0 %v2535
    %2577 = vmatpush1.bf16.msra.mxu0 %v2534
    %2578 = vmatprep.subr.bf16.mxu0 %v2531
    %2579 = vmatpush1.bf16.msra.mxu0 %v2530
    %2580 = vmatprep.subr.bf16.mxu0 %v2527
    %2581 = vmatpush1.bf16.msra.mxu0 %v2526
    %2582 = vmatprep.subr.bf16.mxu0 %v2523
    %2583 = vmatpush1.bf16.msra.mxu0 %v2522
    %2584 = vmatprep.subr.bf16.mxu0 %v2519
    %2585 = vmatpush1.bf16.msra.mxu0 %v2518
    %2586 = vmatprep.subr.bf16.mxu0 %v2515
    %2587 = vmatpush1.bf16.msra.mxu0 %v2514
    %2588 = vmatprep.subr.bf16.mxu0 %v2511
    %2589 = vmatpush1.bf16.msra.mxu0 %v2510
    %2590 = vmatprep.subr.bf16.mxu0 0
    %2591 = vmatpush2.bf16.msra.mxu0 0
    %2592 = vmatprep.subr.bf16.mxu0 0
    %2593 = vmatpush2.bf16.msra.mxu0 0
    %2594 = vmatprep.subr.bf16.mxu0 0
    %2595 = vmatpush2.bf16.msra.mxu0 0
    %2596 = vmatprep.subr.bf16.mxu0 0
    %2597 = vmatpush2.bf16.msra.mxu0 0
    %2598 = vmatprep.subr.bf16.mxu0 0
    %2599 = vmatpush2.bf16.msra.mxu0 0
    %2600 = vmatprep.subr.bf16.mxu0 0
    %2601 = vmatpush2.bf16.msra.mxu0 0
    %2602 = vmatprep.subr.bf16.mxu0 0
    %2603 = vmatpush2.bf16.msra.mxu0 0
    %2604 = vmatprep.subr.bf16.mxu0 0
    %2605 = vmatpush2.bf16.msra.mxu0 0
    %2606 = vmatprep.mubr.bf16.mxu0 0
    %2607 = vmatmul.mubr.bf16.gmra.mxu0 %v2352
    %v2608 = vpop.f32.mrf.mxu0
    %v2609 = vadd.f32 %v2397, %v2608
    %v2610 = vpop.f32.mrf.mxu0
    %v2611 = vadd.f32 %v2401, %v2610
    %v2612 = vpop.f32.mrf.mxu0
    %v2613 = vadd.f32 %v2397, %v2612
    %v2614 = vpop.f32.mrf.mxu0
    %v2615 = vadd.f32 %v2401, %v2614
    %2616 = vmatprep.mubr.bf16.mxu0 0
    %2617 = vmatmul.mubr.bf16.gmra.mxu0 %v2353
    %v2618 = vpop.f32.mrf.mxu0
    %v2619 = vadd.f32 %v2397, %v2618
    %v2620 = vpop.f32.mrf.mxu0
    %v2621 = vadd.f32 %v2401, %v2620
    %v2622 = vpop.f32.mrf.mxu0
    %v2623 = vadd.f32 %v2397, %v2622
    %v2624 = vpop.f32.mrf.mxu0
    %v2625 = vadd.f32 %v2401, %v2624
    %2626 = vmatprep.mubr.bf16.mxu0 0
    %2627 = vmatmul.mubr.bf16.gmra.mxu0 %v2354
    %v2628 = vpop.f32.mrf.mxu0
    %v2629 = vadd.f32 %v2397, %v2628
    %v2630 = vpop.f32.mrf.mxu0
    %v2631 = vadd.f32 %v2401, %v2630
    %v2632 = vpop.f32.mrf.mxu0
    %v2633 = vadd.f32 %v2397, %v2632
    %v2634 = vpop.f32.mrf.mxu0
    %v2635 = vadd.f32 %v2401, %v2634
    %2636 = vmatprep.mubr.bf16.mxu0 0
    %2637 = vmatmul.mubr.bf16.gmra.mxu0 %v2355
    %v2638 = vpop.f32.mrf.mxu0
    %v2639 = vadd.f32 %v2397, %v2638
    %v2640 = vpop.f32.mrf.mxu0
    %v2641 = vadd.f32 %v2401, %v2640
    %v2642 = vpop.f32.mrf.mxu0
    %v2643 = vadd.f32 %v2397, %v2642
    %v2644 = vpop.f32.mrf.mxu0
    %v2645 = vadd.f32 %v2401, %v2644
    %2646 = vmatprep.mubr.bf16.mxu0 0
    %2647 = vmatmul.mubr.bf16.gmra.mxu0 %v2356
    %v2648 = vpop.f32.mrf.mxu0
    %v2649 = vadd.f32 %v2397, %v2648
    %v2650 = vpop.f32.mrf.mxu0
    %v2651 = vadd.f32 %v2401, %v2650
    %v2652 = vpop.f32.mrf.mxu0
    %v2653 = vadd.f32 %v2397, %v2652
    %v2654 = vpop.f32.mrf.mxu0
    %v2655 = vadd.f32 %v2401, %v2654
    %2656 = vmatprep.mubr.bf16.mxu0 0
    %2657 = vmatmul.mubr.bf16.gmra.mxu0 %v2357
    %v2658 = vpop.f32.mrf.mxu0
    %v2659 = vadd.f32 %v2397, %v2658
    %v2660 = vpop.f32.mrf.mxu0
    %v2661 = vadd.f32 %v2401, %v2660
    %v2662 = vpop.f32.mrf.mxu0
    %v2663 = vadd.f32 %v2397, %v2662
    %v2664 = vpop.f32.mrf.mxu0
    %v2665 = vadd.f32 %v2401, %v2664
    %2666 = vmatprep.mubr.bf16.mxu0 0
    %2667 = vmatmul.mubr.bf16.gmra.mxu0 %v2358
    %v2668 = vpop.f32.mrf.mxu0
    %v2669 = vadd.f32 %v2397, %v2668
    %v2670 = vpop.f32.mrf.mxu0
    %v2671 = vadd.f32 %v2401, %v2670
    %v2672 = vpop.f32.mrf.mxu0
    %v2673 = vadd.f32 %v2397, %v2672
    %v2674 = vpop.f32.mrf.mxu0
    %v2675 = vadd.f32 %v2401, %v2674
    %2676 = vmatprep.mubr.bf16.mxu0 0
    %2677 = vmatmul.mubr.bf16.gmra.mxu0 %v2359
    %v2678 = vpop.f32.mrf.mxu0
    %v2679 = vadd.f32 %v2397, %v2678
    %v2680 = vpop.f32.mrf.mxu0
    %v2681 = vadd.f32 %v2401, %v2680
    %v2682 = vpop.f32.mrf.mxu0
    %v2683 = vadd.f32 %v2397, %v2682
    %v2684 = vpop.f32.mrf.mxu0
    %v2685 = vadd.f32 %v2401, %v2684
    %2686 = vdwg.mxu0
    %2687 = vmatprep.subr.bf16.mxu0 %v2541
    %2688 = vmatpush1.bf16.msra.mxu0 %v2540
    %2689 = vmatprep.subr.bf16.mxu0 %v2537
    %2690 = vmatpush1.bf16.msra.mxu0 %v2536
    %2691 = vmatprep.subr.bf16.mxu0 %v2533
    %2692 = vmatpush1.bf16.msra.mxu0 %v2532
    %2693 = vmatprep.subr.bf16.mxu0 %v2529
    %2694 = vmatpush1.bf16.msra.mxu0 %v2528
    %2695 = vmatprep.subr.bf16.mxu0 %v2525
    %2696 = vmatpush1.bf16.msra.mxu0 %v2524
    %2697 = vmatprep.subr.bf16.mxu0 %v2521
    %2698 = vmatpush1.bf16.msra.mxu0 %v2520
    %2699 = vmatprep.subr.bf16.mxu0 %v2517
    %2700 = vmatpush1.bf16.msra.mxu0 %v2516
    %2701 = vmatprep.subr.bf16.mxu0 %v2513
    %2702 = vmatpush1.bf16.msra.mxu0 %v2512
    %2703 = vmatprep.subr.bf16.mxu0 0
    %2704 = vmatpush2.bf16.msra.mxu0 0
    %2705 = vmatprep.subr.bf16.mxu0 0
    %2706 = vmatpush2.bf16.msra.mxu0 0
    %2707 = vmatprep.subr.bf16.mxu0 0
    %2708 = vmatpush2.bf16.msra.mxu0 0
    %2709 = vmatprep.subr.bf16.mxu0 0
    %2710 = vmatpush2.bf16.msra.mxu0 0
    %2711 = vmatprep.subr.bf16.mxu0 0
    %2712 = vmatpush2.bf16.msra.mxu0 0
    %2713 = vmatprep.subr.bf16.mxu0 0
    %2714 = vmatpush2.bf16.msra.mxu0 0
    %2715 = vmatprep.subr.bf16.mxu0 0
    %2716 = vmatpush2.bf16.msra.mxu0 0
    %2717 = vmatprep.subr.bf16.mxu0 0
    %2718 = vmatpush2.bf16.msra.mxu0 0
    %2719 = vmatprep.mubr.bf16.mxu0 0
    %2720 = vmatmul.mubr.bf16.gmra.mxu0 %v2352
    %v2721 = vpop.f32.mrf.mxu0
    %v2722 = vadd.f32 %v2405, %v2721
    %v2723 = vpop.f32.mrf.mxu0
    %v2724 = vadd.f32 %v2409, %v2723
    %v2725 = vpop.f32.mrf.mxu0
    %v2726 = vadd.f32 %v2405, %v2725
    %v2727 = vpop.f32.mrf.mxu0
    %v2728 = vadd.f32 %v2409, %v2727
    %2729 = vmatprep.mubr.bf16.mxu0 0
    %2730 = vmatmul.mubr.bf16.gmra.mxu0 %v2353
    %v2731 = vpop.f32.mrf.mxu0
    %v2732 = vadd.f32 %v2405, %v2731
    %v2733 = vpop.f32.mrf.mxu0
    %v2734 = vadd.f32 %v2409, %v2733
    %v2735 = vpop.f32.mrf.mxu0
    %v2736 = vadd.f32 %v2405, %v2735
    %v2737 = vpop.f32.mrf.mxu0
    %v2738 = vadd.f32 %v2409, %v2737
    %2739 = vmatprep.mubr.bf16.mxu0 0
    %2740 = vmatmul.mubr.bf16.gmra.mxu0 %v2354
    %v2741 = vpop.f32.mrf.mxu0
    %v2742 = vadd.f32 %v2405, %v2741
    %v2743 = vpop.f32.mrf.mxu0
    %v2744 = vadd.f32 %v2409, %v2743
    %v2745 = vpop.f32.mrf.mxu0
    %v2746 = vadd.f32 %v2405, %v2745
    %v2747 = vpop.f32.mrf.mxu0
    %v2748 = vadd.f32 %v2409, %v2747
    %2749 = vmatprep.mubr.bf16.mxu0 0
    %2750 = vmatmul.mubr.bf16.gmra.mxu0 %v2355
    %v2751 = vpop.f32.mrf.mxu0
    %v2752 = vadd.f32 %v2405, %v2751
    %v2753 = vpop.f32.mrf.mxu0
    %v2754 = vadd.f32 %v2409, %v2753
    %v2755 = vpop.f32.mrf.mxu0
    %v2756 = vadd.f32 %v2405, %v2755
    %v2757 = vpop.f32.mrf.mxu0
    %v2758 = vadd.f32 %v2409, %v2757
    %2759 = vmatprep.mubr.bf16.mxu0 0
    %2760 = vmatmul.mubr.bf16.gmra.mxu0 %v2356
    %v2761 = vpop.f32.mrf.mxu0
    %v2762 = vadd.f32 %v2405, %v2761
    %v2763 = vpop.f32.mrf.mxu0
    %v2764 = vadd.f32 %v2409, %v2763
    %v2765 = vpop.f32.mrf.mxu0
    %v2766 = vadd.f32 %v2405, %v2765
    %v2767 = vpop.f32.mrf.mxu0
    %v2768 = vadd.f32 %v2409, %v2767
    %2769 = vmatprep.mubr.bf16.mxu0 0
    %2770 = vmatmul.mubr.bf16.gmra.mxu0 %v2357
    %v2771 = vpop.f32.mrf.mxu0
    %v2772 = vadd.f32 %v2405, %v2771
    %v2773 = vpop.f32.mrf.mxu0
    %v2774 = vadd.f32 %v2409, %v2773
    %v2775 = vpop.f32.mrf.mxu0
    %v2776 = vadd.f32 %v2405, %v2775
    %v2777 = vpop.f32.mrf.mxu0
    %v2778 = vadd.f32 %v2409, %v2777
    %2779 = vmatprep.mubr.bf16.mxu0 0
    %2780 = vmatmul.mubr.bf16.gmra.mxu0 %v2358
    %v2781 = vpop.f32.mrf.mxu0
    %v2782 = vadd.f32 %v2405, %v2781
    %v2783 = vpop.f32.mrf.mxu0
    %v2784 = vadd.f32 %v2409, %v2783
    %v2785 = vpop.f32.mrf.mxu0
    %v2786 = vadd.f32 %v2405, %v2785
    %v2787 = vpop.f32.mrf.mxu0
    %v2788 = vadd.f32 %v2409, %v2787
    %2789 = vmatprep.mubr.bf16.mxu0 0
    %2790 = vmatmul.mubr.bf16.gmra.mxu0 %v2359
    %v2791 = vpop.f32.mrf.mxu0
    %v2792 = vadd.f32 %v2405, %v2791
    %v2793 = vpop.f32.mrf.mxu0
    %v2794 = vadd.f32 %v2409, %v2793
    %v2795 = vpop.f32.mrf.mxu0
    %v2796 = vadd.f32 %v2405, %v2795
    %v2797 = vpop.f32.mrf.mxu0
    %v2798 = vadd.f32 %v2409, %v2797
    %2799 = vdwg.mxu0
    %v2800 = vmul.f32 %v2609, 0.5
    %v2801 = vmul.f32 %v2611, 0.5
    %v2802 = vmul.f32 %v2722, 0.5
    %v2803 = vmul.f32 %v2724, 0.5
    %v2804 = vmul.f32 %v2613, 0.5
    %v2805 = vmul.f32 %v2615, 0.5
    %v2806 = vmul.f32 %v2726, 0.5
    %v2807 = vmul.f32 %v2728, 0.5
    %v2808 = vmul.f32 %v2619, 0.5
    %v2809 = vmul.f32 %v2621, 0.5
    %v2810 = vmul.f32 %v2732, 0.5
    %v2811 = vmul.f32 %v2734, 0.5
    %v2812 = vmul.f32 %v2623, 0.5
    %v2813 = vmul.f32 %v2625, 0.5
    %v2814 = vmul.f32 %v2736, 0.5
    %v2815 = vmul.f32 %v2738, 0.5
    %v2816 = vmul.f32 %v2629, 0.5
    %v2817 = vmul.f32 %v2631, 0.5
    %v2818 = vmul.f32 %v2742, 0.5
    %v2819 = vmul.f32 %v2744, 0.5
    %v2820 = vmul.f32 %v2633, 0.5
    %v2821 = vmul.f32 %v2635, 0.5
    %v2822 = vmul.f32 %v2746, 0.5
    %v2823 = vmul.f32 %v2748, 0.5
    %v2824 = vmul.f32 %v2639, 0.5
    %v2825 = vmul.f32 %v2641, 0.5
    %v2826 = vmul.f32 %v2752, 0.5
    %v2827 = vmul.f32 %v2754, 0.5
    %v2828 = vmul.f32 %v2643, 0.5
    %v2829 = vmul.f32 %v2645, 0.5
    %v2830 = vmul.f32 %v2756, 0.5
    %v2831 = vmul.f32 %v2758, 0.5
    %v2832 = vmul.f32 %v2649, 0.5
    %v2833 = vmul.f32 %v2651, 0.5
    %v2834 = vmul.f32 %v2762, 0.5
    %v2835 = vmul.f32 %v2764, 0.5
    %v2836 = vmul.f32 %v2653, 0.5
    %v2837 = vmul.f32 %v2655, 0.5
    %v2838 = vmul.f32 %v2766, 0.5
    %v2839 = vmul.f32 %v2768, 0.5
    %v2840 = vmul.f32 %v2659, 0.5
    %v2841 = vmul.f32 %v2661, 0.5
    %v2842 = vmul.f32 %v2772, 0.5
    %v2843 = vmul.f32 %v2774, 0.5
    %v2844 = vmul.f32 %v2663, 0.5
    %v2845 = vmul.f32 %v2665, 0.5
    %v2846 = vmul.f32 %v2776, 0.5
    %v2847 = vmul.f32 %v2778, 0.5
    %v2848 = vmul.f32 %v2669, 0.5
    %v2849 = vmul.f32 %v2671, 0.5
    %v2850 = vmul.f32 %v2782, 0.5
    %v2851 = vmul.f32 %v2784, 0.5
    %v2852 = vmul.f32 %v2673, 0.5
    %v2853 = vmul.f32 %v2675, 0.5
    %v2854 = vmul.f32 %v2786, 0.5
    %v2855 = vmul.f32 %v2788, 0.5
    %v2856 = vmul.f32 %v2679, 0.5
    %v2857 = vmul.f32 %v2681, 0.5
    %v2858 = vmul.f32 %v2792, 0.5
    %v2859 = vmul.f32 %v2794, 0.5
    %v2860 = vmul.f32 %v2683, 0.5
    %v2861 = vmul.f32 %v2685, 0.5
    %v2862 = vmul.f32 %v2796, 0.5
    %v2863 = vmul.f32 %v2798, 0.5
    %v2864 = vmul.f32 %v2609, 0.044715
    %v2865 = vmul.f32 %v2611, 0.044715
    %v2866 = vmul.f32 %v2722, 0.044715
    %v2867 = vmul.f32 %v2724, 0.044715
    %v2868 = vmul.f32 %v2613, 0.044715
    %v2869 = vmul.f32 %v2615, 0.044715
    %v2870 = vmul.f32 %v2726, 0.044715
    %v2871 = vmul.f32 %v2728, 0.044715
    %v2872 = vmul.f32 %v2619, 0.044715
    %v2873 = vmul.f32 %v2621, 0.044715
    %v2874 = vmul.f32 %v2732, 0.044715
    %v2875 = vmul.f32 %v2734, 0.044715
    %v2876 = vmul.f32 %v2623, 0.044715
    %v2877 = vmul.f32 %v2625, 0.044715
    %v2878 = vmul.f32 %v2736, 0.044715
    %v2879 = vmul.f32 %v2738, 0.044715
    %v2880 = vmul.f32 %v2629, 0.044715
    %v2881 = vmul.f32 %v2631, 0.044715
    %v2882 = vmul.f32 %v2742, 0.044715
    %v2883 = vmul.f32 %v2744, 0.044715
    %v2884 = vmul.f32 %v2633, 0.044715
    %v2885 = vmul.f32 %v2635, 0.044715
    %v2886 = vmul.f32 %v2746, 0.044715
    %v2887 = vmul.f32 %v2748, 0.044715
    %v2888 = vmul.f32 %v2639, 0.044715
    %v2889 = vmul.f32 %v2641, 0.044715
    %v2890 = vmul.f32 %v2752, 0.044715
    %v2891 = vmul.f32 %v2754, 0.044715
    %v2892 = vmul.f32 %v2643, 0.044715
    %v2893 = vmul.f32 %v2645, 0.044715
    %v2894 = vmul.f32 %v2756, 0.044715
    %v2895 = vmul.f32 %v2758, 0.044715
    %v2896 = vmul.f32 %v2649, 0.044715
    %v2897 = vmul.f32 %v2651, 0.044715
    %v2898 = vmul.f32 %v2762, 0.044715
    %v2899 = vmul.f32 %v2764, 0.044715
    %v2900 = vmul.f32 %v2653, 0.044715
    %v2901 = vmul.f32 %v2655, 0.044715
    %v2902 = vmul.f32 %v2766, 0.044715
    %v2903 = vmul.f32 %v2768, 0.044715
    %v2904 = vmul.f32 %v2659, 0.044715
    %v2905 = vmul.f32 %v2661, 0.044715
    %v2906 = vmul.f32 %v2772, 0.044715
    %v2907 = vmul.f32 %v2774, 0.044715
    %v2908 = vmul.f32 %v2663, 0.044715
    %v2909 = vmul.f32 %v2665, 0.044715
    %v2910 = vmul.f32 %v2776, 0.044715
    %v2911 = vmul.f32 %v2778, 0.044715
    %v2912 = vmul.f32 %v2669, 0.044715
    %v2913 = vmul.f32 %v2671, 0.044715
    %v2914 = vmul.f32 %v2782, 0.044715
    %v2915 = vmul.f32 %v2784, 0.044715
    %v2916 = vmul.f32 %v2673, 0.044715
    %v2917 = vmul.f32 %v2675, 0.044715
    %v2918 = vmul.f32 %v2786, 0.044715
    %v2919 = vmul.f32 %v2788, 0.044715
    %v2920 = vmul.f32 %v2679, 0.044715
    %v2921 = vmul.f32 %v2681, 0.044715
    %v2922 = vmul.f32 %v2792, 0.044715
    %v2923 = vmul.f32 %v2794, 0.044715
    %v2924 = vmul.f32 %v2683, 0.044715
    %v2925 = vmul.f32 %v2685, 0.044715
    %v2926 = vmul.f32 %v2796, 0.044715
    %v2927 = vmul.f32 %v2798, 0.044715
    %v2928 = vmul.f32 %v2864, %v2609
    %v2929 = vmul.f32 %v2865, %v2611
    %v2930 = vmul.f32 %v2866, %v2722
    %v2931 = vmul.f32 %v2867, %v2724
    %v2932 = vmul.f32 %v2868, %v2613
    %v2933 = vmul.f32 %v2869, %v2615
    %v2934 = vmul.f32 %v2870, %v2726
    %v2935 = vmul.f32 %v2871, %v2728
    %v2936 = vmul.f32 %v2872, %v2619
    %v2937 = vmul.f32 %v2873, %v2621
    %v2938 = vmul.f32 %v2874, %v2732
    %v2939 = vmul.f32 %v2875, %v2734
    %v2940 = vmul.f32 %v2876, %v2623
    %v2941 = vmul.f32 %v2877, %v2625
    %v2942 = vmul.f32 %v2878, %v2736
    %v2943 = vmul.f32 %v2879, %v2738
    %v2944 = vmul.f32 %v2880, %v2629
    %v2945 = vmul.f32 %v2881, %v2631
    %v2946 = vmul.f32 %v2882, %v2742
    %v2947 = vmul.f32 %v2883, %v2744
    %v2948 = vmul.f32 %v2884, %v2633
    %v2949 = vmul.f32 %v2885, %v2635
    %v2950 = vmul.f32 %v2886, %v2746
    %v2951 = vmul.f32 %v2887, %v2748
    %v2952 = vmul.f32 %v2888, %v2639
    %v2953 = vmul.f32 %v2889, %v2641
    %v2954 = vmul.f32 %v2890, %v2752
    %v2955 = vmul.f32 %v2891, %v2754
    %v2956 = vmul.f32 %v2892, %v2643
    %v2957 = vmul.f32 %v2893, %v2645
    %v2958 = vmul.f32 %v2894, %v2756
    %v2959 = vmul.f32 %v2895, %v2758
    %v2960 = vmul.f32 %v2896, %v2649
    %v2961 = vmul.f32 %v2897, %v2651
    %v2962 = vmul.f32 %v2898, %v2762
    %v2963 = vmul.f32 %v2899, %v2764
    %v2964 = vmul.f32 %v2900, %v2653
    %v2965 = vmul.f32 %v2901, %v2655
    %v2966 = vmul.f32 %v2902, %v2766
    %v2967 = vmul.f32 %v2903, %v2768
    %v2968 = vmul.f32 %v2904, %v2659
    %v2969 = vmul.f32 %v2905, %v2661
    %v2970 = vmul.f32 %v2906, %v2772
    %v2971 = vmul.f32 %v2907, %v2774
    %v2972 = vmul.f32 %v2908, %v2663
    %v2973 = vmul.f32 %v2909, %v2665
    %v2974 = vmul.f32 %v2910, %v2776
    %v2975 = vmul.f32 %v2911, %v2778
    %v2976 = vmul.f32 %v2912, %v2669
    %v2977 = vmul.f32 %v2913, %v2671
    %v2978 = vmul.f32 %v2914, %v2782
    %v2979 = vmul.f32 %v2915, %v2784
    %v2980 = vmul.f32 %v2916, %v2673
    %v2981 = vmul.f32 %v2917, %v2675
    %v2982 = vmul.f32 %v2918, %v2786
    %v2983 = vmul.f32 %v2919, %v2788
    %v2984 = vmul.f32 %v2920, %v2679
    %v2985 = vmul.f32 %v2921, %v2681
    %v2986 = vmul.f32 %v2922, %v2792
    %v2987 = vmul.f32 %v2923, %v2794
    %v2988 = vmul.f32 %v2924, %v2683
    %v2989 = vmul.f32 %v2925, %v2685
    %v2990 = vmul.f32 %v2926, %v2796
    %v2991 = vmul.f32 %v2927, %v2798
    %v2992 = vmul.f32 %v2928, %v2609
    %v2993 = vmul.f32 %v2929, %v2611
    %v2994 = vmul.f32 %v2930, %v2722
    %v2995 = vmul.f32 %v2931, %v2724
    %v2996 = vmul.f32 %v2932, %v2613
    %v2997 = vmul.f32 %v2933, %v2615
    %v2998 = vmul.f32 %v2934, %v2726
    %v2999 = vmul.f32 %v2935, %v2728
    %v3000 = vmul.f32 %v2936, %v2619
    %v3001 = vmul.f32 %v2937, %v2621
    %v3002 = vmul.f32 %v2938, %v2732
    %v3003 = vmul.f32 %v2939, %v2734
    %v3004 = vmul.f32 %v2940, %v2623
    %v3005 = vmul.f32 %v2941, %v2625
    %v3006 = vmul.f32 %v2942, %v2736
    %v3007 = vmul.f32 %v2943, %v2738
    %v3008 = vmul.f32 %v2944, %v2629
    %v3009 = vmul.f32 %v2945, %v2631
    %v3010 = vmul.f32 %v2946, %v2742
    %v3011 = vmul.f32 %v2947, %v2744
    %v3012 = vmul.f32 %v2948, %v2633
    %v3013 = vmul.f32 %v2949, %v2635
    %v3014 = vmul.f32 %v2950, %v2746
    %v3015 = vmul.f32 %v2951, %v2748
    %v3016 = vmul.f32 %v2952, %v2639
    %v3017 = vmul.f32 %v2953, %v2641
    %v3018 = vmul.f32 %v2954, %v2752
    %v3019 = vmul.f32 %v2955, %v2754
    %v3020 = vmul.f32 %v2956, %v2643
    %v3021 = vmul.f32 %v2957, %v2645
    %v3022 = vmul.f32 %v2958, %v2756
    %v3023 = vmul.f32 %v2959, %v2758
    %v3024 = vmul.f32 %v2960, %v2649
    %v3025 = vmul.f32 %v2961, %v2651
    %v3026 = vmul.f32 %v2962, %v2762
    %v3027 = vmul.f32 %v2963, %v2764
    %v3028 = vmul.f32 %v2964, %v2653
    %v3029 = vmul.f32 %v2965, %v2655
    %v3030 = vmul.f32 %v2966, %v2766
    %v3031 = vmul.f32 %v2967, %v2768
    %v3032 = vmul.f32 %v2968, %v2659
    %v3033 = vmul.f32 %v2969, %v2661
    %v3034 = vmul.f32 %v2970, %v2772
    %v3035 = vmul.f32 %v2971, %v2774
    %v3036 = vmul.f32 %v2972, %v2663
    %v3037 = vmul.f32 %v2973, %v2665
    %v3038 = vmul.f32 %v2974, %v2776
    %v3039 = vmul.f32 %v2975, %v2778
    %v3040 = vmul.f32 %v2976, %v2669
    %v3041 = vmul.f32 %v2977, %v2671
    %v3042 = vmul.f32 %v2978, %v2782
    %v3043 = vmul.f32 %v2979, %v2784
    %v3044 = vmul.f32 %v2980, %v2673
    %v3045 = vmul.f32 %v2981, %v2675
    %v3046 = vmul.f32 %v2982, %v2786
    %v3047 = vmul.f32 %v2983, %v2788
    %v3048 = vmul.f32 %v2984, %v2679
    %v3049 = vmul.f32 %v2985, %v2681
    %v3050 = vmul.f32 %v2986, %v2792
    %v3051 = vmul.f32 %v2987, %v2794
    %v3052 = vmul.f32 %v2988, %v2683
    %v3053 = vmul.f32 %v2989, %v2685
    %v3054 = vmul.f32 %v2990, %v2796
    %v3055 = vmul.f32 %v2991, %v2798
    %v3056 = vadd.f32 %v2609, %v2992
    %v3057 = vadd.f32 %v2611, %v2993
    %v3058 = vadd.f32 %v2722, %v2994
    %v3059 = vadd.f32 %v2724, %v2995
    %v3060 = vadd.f32 %v2613, %v2996
    %v3061 = vadd.f32 %v2615, %v2997
    %v3062 = vadd.f32 %v2726, %v2998
    %v3063 = vadd.f32 %v2728, %v2999
    %v3064 = vadd.f32 %v2619, %v3000
    %v3065 = vadd.f32 %v2621, %v3001
    %v3066 = vadd.f32 %v2732, %v3002
    %v3067 = vadd.f32 %v2734, %v3003
    %v3068 = vadd.f32 %v2623, %v3004
    %v3069 = vadd.f32 %v2625, %v3005
    %v3070 = vadd.f32 %v2736, %v3006
    %v3071 = vadd.f32 %v2738, %v3007
    %v3072 = vadd.f32 %v2629, %v3008
    %v3073 = vadd.f32 %v2631, %v3009
    %v3074 = vadd.f32 %v2742, %v3010
    %v3075 = vadd.f32 %v2744, %v3011
    %v3076 = vadd.f32 %v2633, %v3012
    %v3077 = vadd.f32 %v2635, %v3013
    %v3078 = vadd.f32 %v2746, %v3014
    %v3079 = vadd.f32 %v2748, %v3015
    %v3080 = vadd.f32 %v2639, %v3016
    %v3081 = vadd.f32 %v2641, %v3017
    %v3082 = vadd.f32 %v2752, %v3018
    %v3083 = vadd.f32 %v2754, %v3019
    %v3084 = vadd.f32 %v2643, %v3020
    %v3085 = vadd.f32 %v2645, %v3021
    %v3086 = vadd.f32 %v2756, %v3022
    %v3087 = vadd.f32 %v2758, %v3023
    %v3088 = vadd.f32 %v2649, %v3024
    %v3089 = vadd.f32 %v2651, %v3025
    %v3090 = vadd.f32 %v2762, %v3026
    %v3091 = vadd.f32 %v2764, %v3027
    %v3092 = vadd.f32 %v2653, %v3028
    %v3093 = vadd.f32 %v2655, %v3029
    %v3094 = vadd.f32 %v2766, %v3030
    %v3095 = vadd.f32 %v2768, %v3031
    %v3096 = vadd.f32 %v2659, %v3032
    %v3097 = vadd.f32 %v2661, %v3033
    %v3098 = vadd.f32 %v2772, %v3034
    %v3099 = vadd.f32 %v2774, %v3035
    %v3100 = vadd.f32 %v2663, %v3036
    %v3101 = vadd.f32 %v2665, %v3037
    %v3102 = vadd.f32 %v2776, %v3038
    %v3103 = vadd.f32 %v2778, %v3039
    %v3104 = vadd.f32 %v2669, %v3040
    %v3105 = vadd.f32 %v2671, %v3041
    %v3106 = vadd.f32 %v2782, %v3042
    %v3107 = vadd.f32 %v2784, %v3043
    %v3108 = vadd.f32 %v2673, %v3044
    %v3109 = vadd.f32 %v2675, %v3045
    %v3110 = vadd.f32 %v2786, %v3046
    %v3111 = vadd.f32 %v2788, %v3047
    %v3112 = vadd.f32 %v2679, %v3048
    %v3113 = vadd.f32 %v2681, %v3049
    %v3114 = vadd.f32 %v2792, %v3050
    %v3115 = vadd.f32 %v2794, %v3051
    %v3116 = vadd.f32 %v2683, %v3052
    %v3117 = vadd.f32 %v2685, %v3053
    %v3118 = vadd.f32 %v2796, %v3054
    %v3119 = vadd.f32 %v2798, %v3055
    %v3120 = vmul.f32 %v3056, 0.7978846
    %v3121 = vmul.f32 %v3057, 0.7978846
    %v3122 = vmul.f32 %v3058, 0.7978846
    %v3123 = vmul.f32 %v3059, 0.7978846
    %v3124 = vmul.f32 %v3060, 0.7978846
    %v3125 = vmul.f32 %v3061, 0.7978846
    %v3126 = vmul.f32 %v3062, 0.7978846
    %v3127 = vmul.f32 %v3063, 0.7978846
    %v3128 = vmul.f32 %v3064, 0.7978846
    %v3129 = vmul.f32 %v3065, 0.7978846
    %v3130 = vmul.f32 %v3066, 0.7978846
    %v3131 = vmul.f32 %v3067, 0.7978846
    %v3132 = vmul.f32 %v3068, 0.7978846
    %v3133 = vmul.f32 %v3069, 0.7978846
    %v3134 = vmul.f32 %v3070, 0.7978846
    %v3135 = vmul.f32 %v3071, 0.7978846
    %v3136 = vmul.f32 %v3072, 0.7978846
    %v3137 = vmul.f32 %v3073, 0.7978846
    %v3138 = vmul.f32 %v3074, 0.7978846
    %v3139 = vmul.f32 %v3075, 0.7978846
    %v3140 = vmul.f32 %v3076, 0.7978846
    %v3141 = vmul.f32 %v3077, 0.7978846
    %v3142 = vmul.f32 %v3078, 0.7978846
    %v3143 = vmul.f32 %v3079, 0.7978846
    %v3144 = vmul.f32 %v3080, 0.7978846
    %v3145 = vmul.f32 %v3081, 0.7978846
    %v3146 = vmul.f32 %v3082, 0.7978846
    %v3147 = vmul.f32 %v3083, 0.7978846
    %v3148 = vmul.f32 %v3084, 0.7978846
    %v3149 = vmul.f32 %v3085, 0.7978846
    %v3150 = vmul.f32 %v3086, 0.7978846
    %v3151 = vmul.f32 %v3087, 0.7978846
    %v3152 = vmul.f32 %v3088, 0.7978846
    %v3153 = vmul.f32 %v3089, 0.7978846
    %v3154 = vmul.f32 %v3090, 0.7978846
    %v3155 = vmul.f32 %v3091, 0.7978846
    %v3156 = vmul.f32 %v3092, 0.7978846
    %v3157 = vmul.f32 %v3093, 0.7978846
    %v3158 = vmul.f32 %v3094, 0.7978846
    %v3159 = vmul.f32 %v3095, 0.7978846
    %v3160 = vmul.f32 %v3096, 0.7978846
    %v3161 = vmul.f32 %v3097, 0.7978846
    %v3162 = vmul.f32 %v3098, 0.7978846
    %v3163 = vmul.f32 %v3099, 0.7978846
    %v3164 = vmul.f32 %v3100, 0.7978846
    %v3165 = vmul.f32 %v3101, 0.7978846
    %v3166 = vmul.f32 %v3102, 0.7978846
    %v3167 = vmul.f32 %v3103, 0.7978846
    %v3168 = vmul.f32 %v3104, 0.7978846
    %v3169 = vmul.f32 %v3105, 0.7978846
    %v3170 = vmul.f32 %v3106, 0.7978846
    %v3171 = vmul.f32 %v3107, 0.7978846
    %v3172 = vmul.f32 %v3108, 0.7978846
    %v3173 = vmul.f32 %v3109, 0.7978846
    %v3174 = vmul.f32 %v3110, 0.7978846
    %v3175 = vmul.f32 %v3111, 0.7978846
    %v3176 = vmul.f32 %v3112, 0.7978846
    %v3177 = vmul.f32 %v3113, 0.7978846
    %v3178 = vmul.f32 %v3114, 0.7978846
    %v3179 = vmul.f32 %v3115, 0.7978846
    %v3180 = vmul.f32 %v3116, 0.7978846
    %v3181 = vmul.f32 %v3117, 0.7978846
    %v3182 = vmul.f32 %v3118, 0.7978846
    %v3183 = vmul.f32 %v3119, 0.7978846
    %v3184 = vtanh.pop %v3120
    %v3185 = vtanh.pop %v3121
    %v3186 = vtanh.pop %v3122
    %v3187 = vtanh.pop %v3123
    %v3188 = vtanh.pop %v3124
    %v3189 = vtanh.pop %v3125
    %v3190 = vtanh.pop %v3126
    %v3191 = vtanh.pop %v3127
    %v3192 = vtanh.pop %v3128
    %v3193 = vtanh.pop %v3129
    %v3194 = vtanh.pop %v3130
    %v3195 = vtanh.pop %v3131
    %v3196 = vtanh.pop %v3132
    %v3197 = vtanh.pop %v3133
    %v3198 = vtanh.pop %v3134
    %v3199 = vtanh.pop %v3135
    %v3200 = vtanh.pop %v3136
    %v3201 = vtanh.pop %v3137
    %v3202 = vtanh.pop %v3138
    %v3203 = vtanh.pop %v3139
    %v3204 = vtanh.pop %v3140
    %v3205 = vtanh.pop %v3141
    %v3206 = vtanh.pop %v3142
    %v3207 = vtanh.pop %v3143
    %v3208 = vtanh.pop %v3144
    %v3209 = vtanh.pop %v3145
    %v3210 = vtanh.pop %v3146
    %v3211 = vtanh.pop %v3147
    %v3212 = vtanh.pop %v3148
    %v3213 = vtanh.pop %v3149
    %v3214 = vtanh.pop %v3150
    %v3215 = vtanh.pop %v3151
    %v3216 = vtanh.pop %v3152
    %v3217 = vtanh.pop %v3153
    %v3218 = vtanh.pop %v3154
    %v3219 = vtanh.pop %v3155
    %v3220 = vtanh.pop %v3156
    %v3221 = vtanh.pop %v3157
    %v3222 = vtanh.pop %v3158
    %v3223 = vtanh.pop %v3159
    %v3224 = vtanh.pop %v3160
    %v3225 = vtanh.pop %v3161
    %v3226 = vtanh.pop %v3162
    %v3227 = vtanh.pop %v3163
    %v3228 = vtanh.pop %v3164
    %v3229 = vtanh.pop %v3165
    %v3230 = vtanh.pop %v3166
    %v3231 = vtanh.pop %v3167
    %v3232 = vtanh.pop %v3168
    %v3233 = vtanh.pop %v3169
    %v3234 = vtanh.pop %v3170
    %v3235 = vtanh.pop %v3171
    %v3236 = vtanh.pop %v3172
    %v3237 = vtanh.pop %v3173
    %v3238 = vtanh.pop %v3174
    %v3239 = vtanh.pop %v3175
    %v3240 = vtanh.pop %v3176
    %v3241 = vtanh.pop %v3177
    %v3242 = vtanh.pop %v3178
    %v3243 = vtanh.pop %v3179
    %v3244 = vtanh.pop %v3180
    %v3245 = vtanh.pop %v3181
    %v3246 = vtanh.pop %v3182
    %v3247 = vtanh.pop %v3183
    %v3248 = vadd.f32 %v3184, 1.0
    %v3249 = vadd.f32 %v3185, 1.0
    %v3250 = vadd.f32 %v3186, 1.0
    %v3251 = vadd.f32 %v3187, 1.0
    %v3252 = vadd.f32 %v3188, 1.0
    %v3253 = vadd.f32 %v3189, 1.0
    %v3254 = vadd.f32 %v3190, 1.0
    %v3255 = vadd.f32 %v3191, 1.0
    %v3256 = vadd.f32 %v3192, 1.0
    %v3257 = vadd.f32 %v3193, 1.0
    %v3258 = vadd.f32 %v3194, 1.0
    %v3259 = vadd.f32 %v3195, 1.0
    %v3260 = vadd.f32 %v3196, 1.0
    %v3261 = vadd.f32 %v3197, 1.0
    %v3262 = vadd.f32 %v3198, 1.0
    %v3263 = vadd.f32 %v3199, 1.0
    %v3264 = vadd.f32 %v3200, 1.0
    %v3265 = vadd.f32 %v3201, 1.0
    %v3266 = vadd.f32 %v3202, 1.0
    %v3267 = vadd.f32 %v3203, 1.0
    %v3268 = vadd.f32 %v3204, 1.0
    %v3269 = vadd.f32 %v3205, 1.0
    %v3270 = vadd.f32 %v3206, 1.0
    %v3271 = vadd.f32 %v3207, 1.0
    %v3272 = vadd.f32 %v3208, 1.0
    %v3273 = vadd.f32 %v3209, 1.0
    %v3274 = vadd.f32 %v3210, 1.0
    %v3275 = vadd.f32 %v3211, 1.0
    %v3276 = vadd.f32 %v3212, 1.0
    %v3277 = vadd.f32 %v3213, 1.0
    %v3278 = vadd.f32 %v3214, 1.0
    %v3279 = vadd.f32 %v3215, 1.0
    %v3280 = vadd.f32 %v3216, 1.0
    %v3281 = vadd.f32 %v3217, 1.0
    %v3282 = vadd.f32 %v3218, 1.0
    %v3283 = vadd.f32 %v3219, 1.0
    %v3284 = vadd.f32 %v3220, 1.0
    %v3285 = vadd.f32 %v3221, 1.0
    %v3286 = vadd.f32 %v3222, 1.0
    %v3287 = vadd.f32 %v3223, 1.0
    %v3288 = vadd.f32 %v3224, 1.0
    %v3289 = vadd.f32 %v3225, 1.0
    %v3290 = vadd.f32 %v3226, 1.0
    %v3291 = vadd.f32 %v3227, 1.0
    %v3292 = vadd.f32 %v3228, 1.0
    %v3293 = vadd.f32 %v3229, 1.0
    %v3294 = vadd.f32 %v3230, 1.0
    %v3295 = vadd.f32 %v3231, 1.0
    %v3296 = vadd.f32 %v3232, 1.0
    %v3297 = vadd.f32 %v3233, 1.0
    %v3298 = vadd.f32 %v3234, 1.0
    %v3299 = vadd.f32 %v3235, 1.0
    %v3300 = vadd.f32 %v3236, 1.0
    %v3301 = vadd.f32 %v3237, 1.0
    %v3302 = vadd.f32 %v3238, 1.0
    %v3303 = vadd.f32 %v3239, 1.0
    %v3304 = vadd.f32 %v3240, 1.0
    %v3305 = vadd.f32 %v3241, 1.0
    %v3306 = vadd.f32 %v3242, 1.0
    %v3307 = vadd.f32 %v3243, 1.0
    %v3308 = vadd.f32 %v3244, 1.0
    %v3309 = vadd.f32 %v3245, 1.0
    %v3310 = vadd.f32 %v3246, 1.0
    %v3311 = vadd.f32 %v3247, 1.0
    %v3312 = vmul.f32 %v2800, %v3248
    %v3313 = vmul.f32 %v2801, %v3249
    %v3314 = vmul.f32 %v2802, %v3250
    %v3315 = vmul.f32 %v2803, %v3251
    %v3316 = vmul.f32 %v2804, %v3252
    %v3317 = vmul.f32 %v2805, %v3253
    %v3318 = vmul.f32 %v2806, %v3254
    %v3319 = vmul.f32 %v2807, %v3255
    %v3320 = vmul.f32 %v2808, %v3256
    %v3321 = vmul.f32 %v2809, %v3257
    %v3322 = vmul.f32 %v2810, %v3258
    %v3323 = vmul.f32 %v2811, %v3259
    %v3324 = vmul.f32 %v2812, %v3260
    %v3325 = vmul.f32 %v2813, %v3261
    %v3326 = vmul.f32 %v2814, %v3262
    %v3327 = vmul.f32 %v2815, %v3263
    %v3328 = vmul.f32 %v2816, %v3264
    %v3329 = vmul.f32 %v2817, %v3265
    %v3330 = vmul.f32 %v2818, %v3266
    %v3331 = vmul.f32 %v2819, %v3267
    %v3332 = vmul.f32 %v2820, %v3268
    %v3333 = vmul.f32 %v2821, %v3269
    %v3334 = vmul.f32 %v2822, %v3270
    %v3335 = vmul.f32 %v2823, %v3271
    %v3336 = vmul.f32 %v2824, %v3272
    %v3337 = vmul.f32 %v2825, %v3273
    %v3338 = vmul.f32 %v2826, %v3274
    %v3339 = vmul.f32 %v2827, %v3275
    %v3340 = vmul.f32 %v2828, %v3276
    %v3341 = vmul.f32 %v2829, %v3277
    %v3342 = vmul.f32 %v2830, %v3278
    %v3343 = vmul.f32 %v2831, %v3279
    %v3344 = vmul.f32 %v2832, %v3280
    %v3345 = vmul.f32 %v2833, %v3281
    %v3346 = vmul.f32 %v2834, %v3282
    %v3347 = vmul.f32 %v2835, %v3283
    %v3348 = vmul.f32 %v2836, %v3284
    %v3349 = vmul.f32 %v2837, %v3285
    %v3350 = vmul.f32 %v2838, %v3286
    %v3351 = vmul.f32 %v2839, %v3287
    %v3352 = vmul.f32 %v2840, %v3288
    %v3353 = vmul.f32 %v2841, %v3289
    %v3354 = vmul.f32 %v2842, %v3290
    %v3355 = vmul.f32 %v2843, %v3291
    %v3356 = vmul.f32 %v2844, %v3292
    %v3357 = vmul.f32 %v2845, %v3293
    %v3358 = vmul.f32 %v2846, %v3294
    %v3359 = vmul.f32 %v2847, %v3295
    %v3360 = vmul.f32 %v2848, %v3296
    %v3361 = vmul.f32 %v2849, %v3297
    %v3362 = vmul.f32 %v2850, %v3298
    %v3363 = vmul.f32 %v2851, %v3299
    %v3364 = vmul.f32 %v2852, %v3300
    %v3365 = vmul.f32 %v2853, %v3301
    %v3366 = vmul.f32 %v2854, %v3302
    %v3367 = vmul.f32 %v2855, %v3303
    %v3368 = vmul.f32 %v2856, %v3304
    %v3369 = vmul.f32 %v2857, %v3305
    %v3370 = vmul.f32 %v2858, %v3306
    %v3371 = vmul.f32 %v2859, %v3307
    %v3372 = vmul.f32 %v2860, %v3308
    %v3373 = vmul.f32 %v2861, %v3309
    %v3374 = vmul.f32 %v2862, %v3310
    %v3375 = vmul.f32 %v2863, %v3311
    %v3376 = vpack.c.bf16 %v3316, %v3312
    %v3377 = vpack.c.bf16 %v3317, %v3313
    %v3378 = vpack.c.bf16 %v3318, %v3314
    %v3379 = vpack.c.bf16 %v3319, %v3315
    %v3380 = vpack.c.bf16 %v3324, %v3320
    %v3381 = vpack.c.bf16 %v3325, %v3321
    %v3382 = vpack.c.bf16 %v3326, %v3322
    %v3383 = vpack.c.bf16 %v3327, %v3323
    %v3384 = vpack.c.bf16 %v3332, %v3328
    %v3385 = vpack.c.bf16 %v3333, %v3329
    %v3386 = vpack.c.bf16 %v3334, %v3330
    %v3387 = vpack.c.bf16 %v3335, %v3331
    %v3388 = vpack.c.bf16 %v3340, %v3336
    %v3389 = vpack.c.bf16 %v3341, %v3337
    %v3390 = vpack.c.bf16 %v3342, %v3338
    %v3391 = vpack.c.bf16 %v3343, %v3339
    %v3392 = vpack.c.bf16 %v3348, %v3344
    %v3393 = vpack.c.bf16 %v3349, %v3345
    %v3394 = vpack.c.bf16 %v3350, %v3346
    %v3395 = vpack.c.bf16 %v3351, %v3347
    %v3396 = vpack.c.bf16 %v3356, %v3352
    %v3397 = vpack.c.bf16 %v3357, %v3353
    %v3398 = vpack.c.bf16 %v3358, %v3354
    %v3399 = vpack.c.bf16 %v3359, %v3355
    %v3400 = vpack.c.bf16 %v3364, %v3360
    %v3401 = vpack.c.bf16 %v3365, %v3361
    %v3402 = vpack.c.bf16 %v3366, %v3362
    %v3403 = vpack.c.bf16 %v3367, %v3363
    %v3404 = vpack.c.bf16 %v3372, %v3368
    %v3405 = vpack.c.bf16 %v3373, %v3369
    %v3406 = vpack.c.bf16 %v3374, %v3370
    %v3407 = vpack.c.bf16 %v3375, %v3371
    %v3408 = vld [vmem:[#allocation18] sm:$0xf]
    %v3409 = vld [vmem:[#allocation18 + $0x4] sm:$0xf]
    %v3410 = vld [vmem:[#allocation18 + $0x8] sm:$0xf]
    %v3411 = vld [vmem:[#allocation18 + $0xc] sm:$0xf]
    %v3412 = vld [vmem:[#allocation18 + $0x10] sm:$0xf]
    %v3413 = vld [vmem:[#allocation18 + $0x14] sm:$0xf]
    %v3414 = vld [vmem:[#allocation18 + $0x18] sm:$0xf]
    %v3415 = vld [vmem:[#allocation18 + $0x1c] sm:$0xf]
    %v3416 = vld [vmem:[#allocation18 + $0x20] sm:$0xf]
    %v3417 = vld [vmem:[#allocation18 + $0x24] sm:$0xf]
    %v3418 = vld [vmem:[#allocation18 + $0x28] sm:$0xf]
    %v3419 = vld [vmem:[#allocation18 + $0x2c] sm:$0xf]
    %v3420 = vld [vmem:[#allocation18 + $0x30] sm:$0xf]
    %v3421 = vld [vmem:[#allocation18 + $0x34] sm:$0xf]
    %v3422 = vld [vmem:[#allocation18 + $0x38] sm:$0xf]
    %v3423 = vld [vmem:[#allocation18 + $0x3c] sm:$0xf]
    %v3424 = vld [vmem:[#allocation18 + $0x40] sm:$0xf]
    %v3425 = vld [vmem:[#allocation18 + $0x44] sm:$0xf]
    %v3426 = vld [vmem:[#allocation18 + $0x48] sm:$0xf]
    %v3427 = vld [vmem:[#allocation18 + $0x4c] sm:$0xf]
    %v3428 = vld [vmem:[#allocation18 + $0x50] sm:$0xf]
    %v3429 = vld [vmem:[#allocation18 + $0x54] sm:$0xf]
    %v3430 = vld [vmem:[#allocation18 + $0x58] sm:$0xf]
    %v3431 = vld [vmem:[#allocation18 + $0x5c] sm:$0xf]
    %v3432 = vld [vmem:[#allocation18 + $0x60] sm:$0xf]
    %v3433 = vld [vmem:[#allocation18 + $0x64] sm:$0xf]
    %v3434 = vld [vmem:[#allocation18 + $0x68] sm:$0xf]
    %v3435 = vld [vmem:[#allocation18 + $0x6c] sm:$0xf]
    %v3436 = vld [vmem:[#allocation18 + $0x70] sm:$0xf]
    %v3437 = vld [vmem:[#allocation18 + $0x74] sm:$0xf]
    %v3438 = vld [vmem:[#allocation18 + $0x78] sm:$0xf]
    %v3439 = vld [vmem:[#allocation18 + $0x7c] sm:$0xf]
    %v3440 = vld [vmem:[#allocation18 + $0x80] sm:$0xf]
    %v3441 = vld [vmem:[#allocation18 + $0x84] sm:$0xf]
    %v3442 = vld [vmem:[#allocation18 + $0x88] sm:$0xf]
    %v3443 = vld [vmem:[#allocation18 + $0x8c] sm:$0xf]
    %v3444 = vld [vmem:[#allocation18 + $0x90] sm:$0xf]
    %v3445 = vld [vmem:[#allocation18 + $0x94] sm:$0xf]
    %v3446 = vld [vmem:[#allocation18 + $0x98] sm:$0xf]
    %v3447 = vld [vmem:[#allocation18 + $0x9c] sm:$0xf]
    %v3448 = vld [vmem:[#allocation18 + $0xa0] sm:$0xf]
    %v3449 = vld [vmem:[#allocation18 + $0xa4] sm:$0xf]
    %v3450 = vld [vmem:[#allocation18 + $0xa8] sm:$0xf]
    %v3451 = vld [vmem:[#allocation18 + $0xac] sm:$0xf]
    %v3452 = vld [vmem:[#allocation18 + $0xb0] sm:$0xf]
    %v3453 = vld [vmem:[#allocation18 + $0xb4] sm:$0xf]
    %v3454 = vld [vmem:[#allocation18 + $0xb8] sm:$0xf]
    %v3455 = vld [vmem:[#allocation18 + $0xbc] sm:$0xf]
    %v3456 = vld [vmem:[#allocation18 + $0xc0] sm:$0xf]
    %v3457 = vld [vmem:[#allocation18 + $0xc4] sm:$0xf]
    %v3458 = vld [vmem:[#allocation18 + $0xc8] sm:$0xf]
    %v3459 = vld [vmem:[#allocation18 + $0xcc] sm:$0xf]
    %v3460 = vld [vmem:[#allocation18 + $0xd0] sm:$0xf]
    %v3461 = vld [vmem:[#allocation18 + $0xd4] sm:$0xf]
    %v3462 = vld [vmem:[#allocation18 + $0xd8] sm:$0xf]
    %v3463 = vld [vmem:[#allocation18 + $0xdc] sm:$0xf]
    %v3464 = vld [vmem:[#allocation18 + $0xe0] sm:$0xf]
    %v3465 = vld [vmem:[#allocation18 + $0xe4] sm:$0xf]
    %v3466 = vld [vmem:[#allocation18 + $0xe8] sm:$0xf]
    %v3467 = vld [vmem:[#allocation18 + $0xec] sm:$0xf]
    %v3468 = vld [vmem:[#allocation18 + $0xf0] sm:$0xf]
    %v3469 = vld [vmem:[#allocation18 + $0xf4] sm:$0xf]
    %v3470 = vld [vmem:[#allocation18 + $0xf8] sm:$0xf]
    %v3471 = vld [vmem:[#allocation18 + $0xfc] sm:$0xf]
    %v3472 = vld [vmem:[#allocation19] sm:$0x1]
    %v3474 = vlaneseq
    %v3475 = vshrl.u32 %v3474, 7
    %v3476 = vsub.s32 0, %v3475
    %v3477 = vrot.slane %v3472, %v3476
    %v3543 = vunpack.c.l.b16 %v3408
    %v3544 = vunpack.c.l.b16 %v3409
    %v3545 = vunpack.c.l.b16 %v3410
    %v3546 = vunpack.c.l.b16 %v3411
    %v3547 = vunpack.c.l.b16 %v3412
    %v3548 = vunpack.c.l.b16 %v3413
    %v3549 = vunpack.c.l.b16 %v3414
    %v3550 = vunpack.c.l.b16 %v3415
    %v3551 = vunpack.c.l.b16 %v3416
    %v3552 = vunpack.c.l.b16 %v3417
    %v3553 = vunpack.c.l.b16 %v3418
    %v3554 = vunpack.c.l.b16 %v3419
    %v3555 = vunpack.c.l.b16 %v3420
    %v3556 = vunpack.c.l.b16 %v3421
    %v3557 = vunpack.c.l.b16 %v3422
    %v3558 = vunpack.c.l.b16 %v3423
    %v3559 = vunpack.c.l.b16 %v3424
    %v3560 = vunpack.c.l.b16 %v3425
    %v3561 = vunpack.c.l.b16 %v3426
    %v3562 = vunpack.c.l.b16 %v3427
    %v3563 = vunpack.c.l.b16 %v3428
    %v3564 = vunpack.c.l.b16 %v3429
    %v3565 = vunpack.c.l.b16 %v3430
    %v3566 = vunpack.c.l.b16 %v3431
    %v3567 = vunpack.c.l.b16 %v3432
    %v3568 = vunpack.c.l.b16 %v3433
    %v3569 = vunpack.c.l.b16 %v3434
    %v3570 = vunpack.c.l.b16 %v3435
    %v3571 = vunpack.c.l.b16 %v3436
    %v3572 = vunpack.c.l.b16 %v3437
    %v3573 = vunpack.c.l.b16 %v3438
    %v3574 = vunpack.c.l.b16 %v3439
    %v3575 = vunpack.c.l.b16 %v3440
    %v3576 = vunpack.c.l.b16 %v3441
    %v3577 = vunpack.c.l.b16 %v3442
    %v3578 = vunpack.c.l.b16 %v3443
    %v3579 = vunpack.c.l.b16 %v3444
    %v3580 = vunpack.c.l.b16 %v3445
    %v3581 = vunpack.c.l.b16 %v3446
    %v3582 = vunpack.c.l.b16 %v3447
    %v3583 = vunpack.c.l.b16 %v3448
    %v3584 = vunpack.c.l.b16 %v3449
    %v3585 = vunpack.c.l.b16 %v3450
    %v3586 = vunpack.c.l.b16 %v3451
    %v3587 = vunpack.c.l.b16 %v3452
    %v3588 = vunpack.c.l.b16 %v3453
    %v3589 = vunpack.c.l.b16 %v3454
    %v3590 = vunpack.c.l.b16 %v3455
    %v3591 = vunpack.c.l.b16 %v3456
    %v3592 = vunpack.c.l.b16 %v3457
    %v3593 = vunpack.c.l.b16 %v3458
    %v3594 = vunpack.c.l.b16 %v3459
    %v3595 = vunpack.c.l.b16 %v3460
    %v3596 = vunpack.c.l.b16 %v3461
    %v3597 = vunpack.c.l.b16 %v3462
    %v3598 = vunpack.c.l.b16 %v3463
    %v3599 = vunpack.c.l.b16 %v3464
    %v3600 = vunpack.c.l.b16 %v3465
    %v3601 = vunpack.c.l.b16 %v3466
    %v3602 = vunpack.c.l.b16 %v3467
    %v3603 = vunpack.c.l.b16 %v3468
    %v3604 = vunpack.c.l.b16 %v3469
    %v3605 = vunpack.c.l.b16 %v3470
    %v3606 = vunpack.c.l.b16 %v3471
    %v3607 = vpack.c.b16 %v3544, %v3543
    %v3608 = vpack.c.b16 %v3546, %v3545
    %v3609 = vpack.c.b16 %v3548, %v3547
    %v3610 = vpack.c.b16 %v3550, %v3549
    %v3611 = vpack.c.b16 %v3552, %v3551
    %v3612 = vpack.c.b16 %v3554, %v3553
    %v3613 = vpack.c.b16 %v3556, %v3555
    %v3614 = vpack.c.b16 %v3558, %v3557
    %v3615 = vpack.c.b16 %v3560, %v3559
    %v3616 = vpack.c.b16 %v3562, %v3561
    %v3617 = vpack.c.b16 %v3564, %v3563
    %v3618 = vpack.c.b16 %v3566, %v3565
    %v3619 = vpack.c.b16 %v3568, %v3567
    %v3620 = vpack.c.b16 %v3570, %v3569
    %v3621 = vpack.c.b16 %v3572, %v3571
    %v3622 = vpack.c.b16 %v3574, %v3573
    %v3623 = vpack.c.b16 %v3576, %v3575
    %v3624 = vpack.c.b16 %v3578, %v3577
    %v3625 = vpack.c.b16 %v3580, %v3579
    %v3626 = vpack.c.b16 %v3582, %v3581
    %v3627 = vpack.c.b16 %v3584, %v3583
    %v3628 = vpack.c.b16 %v3586, %v3585
    %v3629 = vpack.c.b16 %v3588, %v3587
    %v3630 = vpack.c.b16 %v3590, %v3589
    %v3631 = vpack.c.b16 %v3592, %v3591
    %v3632 = vpack.c.b16 %v3594, %v3593
    %v3633 = vpack.c.b16 %v3596, %v3595
    %v3634 = vpack.c.b16 %v3598, %v3597
    %v3635 = vpack.c.b16 %v3600, %v3599
    %v3636 = vpack.c.b16 %v3602, %v3601
    %v3637 = vpack.c.b16 %v3604, %v3603
    %v3638 = vpack.c.b16 %v3606, %v3605
    %3671 = vmatprep.subr.bf16.mxu0 0
    %3672 = vmatpush1.bf16.msra.mxu0 %v3614
    %3673 = vmatprep.subr.bf16.mxu0 0
    %3674 = vmatpush1.bf16.msra.mxu0 %v3613
    %3675 = vmatprep.subr.bf16.mxu0 0
    %3676 = vmatpush1.bf16.msra.mxu0 %v3612
    %3677 = vmatprep.subr.bf16.mxu0 0
    %3678 = vmatpush1.bf16.msra.mxu0 %v3611
    %3679 = vmatprep.subr.bf16.mxu0 0
    %3680 = vmatpush1.bf16.msra.mxu0 %v3610
    %3681 = vmatprep.subr.bf16.mxu0 0
    %3682 = vmatpush1.bf16.msra.mxu0 %v3609
    %3683 = vmatprep.subr.bf16.mxu0 0
    %3684 = vmatpush1.bf16.msra.mxu0 %v3608
    %3685 = vmatprep.subr.bf16.mxu0 0
    %3686 = vmatpush1.bf16.msra.mxu0 %v3607
    %3687 = vmatprep.subr.bf16.mxu0 0
    %3688 = vmatpush2.bf16.msra.mxu0 %v3622
    %3689 = vmatprep.subr.bf16.mxu0 0
    %3690 = vmatpush2.bf16.msra.mxu0 %v3621
    %3691 = vmatprep.subr.bf16.mxu0 0
    %3692 = vmatpush2.bf16.msra.mxu0 %v3620
    %3693 = vmatprep.subr.bf16.mxu0 0
    %3694 = vmatpush2.bf16.msra.mxu0 %v3619
    %3695 = vmatprep.subr.bf16.mxu0 0
    %3696 = vmatpush2.bf16.msra.mxu0 %v3618
    %3697 = vmatprep.subr.bf16.mxu0 0
    %3698 = vmatpush2.bf16.msra.mxu0 %v3617
    %3699 = vmatprep.subr.bf16.mxu0 0
    %3700 = vmatpush2.bf16.msra.mxu0 %v3616
    %3701 = vmatprep.subr.bf16.mxu0 0
    %3702 = vmatpush2.bf16.msra.mxu0 %v3615
    %3703 = vmatprep.mubr.bf16.mxu0 %v3377
    %3704 = vmatmul.mubr.bf16.gmra.mxu0 %v3376
    %v3705 = vpop.f32.mrf.mxu0
    %v3706 = vadd.f32 %v3477, %v3705
    %v3707 = vpop.f32.mrf.mxu0
    %v3708 = vpop.f32.mrf.mxu0
    %v3709 = vadd.f32 %v3477, %v3708
    %v3710 = vpop.f32.mrf.mxu0
    %3711 = vmatprep.mubr.bf16.mxu0 %v3381
    %3712 = vmatmul.mubr.bf16.gmra.mxu0 %v3380
    %v3713 = vpop.f32.mrf.mxu0
    %v3714 = vadd.f32 %v3477, %v3713
    %v3715 = vpop.f32.mrf.mxu0
    %v3716 = vpop.f32.mrf.mxu0
    %v3717 = vadd.f32 %v3477, %v3716
    %v3718 = vpop.f32.mrf.mxu0
    %3719 = vmatprep.mubr.bf16.mxu0 %v3385
    %3720 = vmatmul.mubr.bf16.gmra.mxu0 %v3384
    %v3721 = vpop.f32.mrf.mxu0
    %v3722 = vadd.f32 %v3477, %v3721
    %v3723 = vpop.f32.mrf.mxu0
    %v3724 = vpop.f32.mrf.mxu0
    %v3725 = vadd.f32 %v3477, %v3724
    %v3726 = vpop.f32.mrf.mxu0
    %3727 = vmatprep.mubr.bf16.mxu0 %v3389
    %3728 = vmatmul.mubr.bf16.gmra.mxu0 %v3388
    %v3729 = vpop.f32.mrf.mxu0
    %v3730 = vadd.f32 %v3477, %v3729
    %v3731 = vpop.f32.mrf.mxu0
    %v3732 = vpop.f32.mrf.mxu0
    %v3733 = vadd.f32 %v3477, %v3732
    %v3734 = vpop.f32.mrf.mxu0
    %3735 = vmatprep.mubr.bf16.mxu0 %v3393
    %3736 = vmatmul.mubr.bf16.gmra.mxu0 %v3392
    %v3737 = vpop.f32.mrf.mxu0
    %v3738 = vadd.f32 %v3477, %v3737
    %v3739 = vpop.f32.mrf.mxu0
    %v3740 = vpop.f32.mrf.mxu0
    %v3741 = vadd.f32 %v3477, %v3740
    %v3742 = vpop.f32.mrf.mxu0
    %3743 = vmatprep.mubr.bf16.mxu0 %v3397
    %3744 = vmatmul.mubr.bf16.gmra.mxu0 %v3396
    %v3745 = vpop.f32.mrf.mxu0
    %v3746 = vadd.f32 %v3477, %v3745
    %v3747 = vpop.f32.mrf.mxu0
    %v3748 = vpop.f32.mrf.mxu0
    %v3749 = vadd.f32 %v3477, %v3748
    %v3750 = vpop.f32.mrf.mxu0
    %3751 = vmatprep.mubr.bf16.mxu0 %v3401
    %3752 = vmatmul.mubr.bf16.gmra.mxu0 %v3400
    %v3753 = vpop.f32.mrf.mxu0
    %v3754 = vadd.f32 %v3477, %v3753
    %v3755 = vpop.f32.mrf.mxu0
    %v3756 = vpop.f32.mrf.mxu0
    %v3757 = vadd.f32 %v3477, %v3756
    %v3758 = vpop.f32.mrf.mxu0
    %3759 = vmatprep.mubr.bf16.mxu0 %v3405
    %3760 = vmatmul.mubr.bf16.gmra.mxu0 %v3404
    %v3761 = vpop.f32.mrf.mxu0
    %v3762 = vadd.f32 %v3477, %v3761
    %v3763 = vpop.f32.mrf.mxu0
    %v3764 = vpop.f32.mrf.mxu0
    %v3765 = vadd.f32 %v3477, %v3764
    %v3766 = vpop.f32.mrf.mxu0
    %3767 = vdwg.mxu0
    %3768 = vmatprep.subr.bf16.mxu0 0
    %3769 = vmatpush1.bf16.msra.mxu0 %v3630
    %3770 = vmatprep.subr.bf16.mxu0 0
    %3771 = vmatpush1.bf16.msra.mxu0 %v3629
    %3772 = vmatprep.subr.bf16.mxu0 0
    %3773 = vmatpush1.bf16.msra.mxu0 %v3628
    %3774 = vmatprep.subr.bf16.mxu0 0
    %3775 = vmatpush1.bf16.msra.mxu0 %v3627
    %3776 = vmatprep.subr.bf16.mxu0 0
    %3777 = vmatpush1.bf16.msra.mxu0 %v3626
    %3778 = vmatprep.subr.bf16.mxu0 0
    %3779 = vmatpush1.bf16.msra.mxu0 %v3625
    %3780 = vmatprep.subr.bf16.mxu0 0
    %3781 = vmatpush1.bf16.msra.mxu0 %v3624
    %3782 = vmatprep.subr.bf16.mxu0 0
    %3783 = vmatpush1.bf16.msra.mxu0 %v3623
    %3784 = vmatprep.subr.bf16.mxu0 0
    %3785 = vmatpush2.bf16.msra.mxu0 %v3638
    %3786 = vmatprep.subr.bf16.mxu0 0
    %3787 = vmatpush2.bf16.msra.mxu0 %v3637
    %3788 = vmatprep.subr.bf16.mxu0 0
    %3789 = vmatpush2.bf16.msra.mxu0 %v3636
    %3790 = vmatprep.subr.bf16.mxu0 0
    %3791 = vmatpush2.bf16.msra.mxu0 %v3635
    %3792 = vmatprep.subr.bf16.mxu0 0
    %3793 = vmatpush2.bf16.msra.mxu0 %v3634
    %3794 = vmatprep.subr.bf16.mxu0 0
    %3795 = vmatpush2.bf16.msra.mxu0 %v3633
    %3796 = vmatprep.subr.bf16.mxu0 0
    %3797 = vmatpush2.bf16.msra.mxu0 %v3632
    %3798 = vmatprep.subr.bf16.mxu0 0
    %3799 = vmatpush2.bf16.msra.mxu0 %v3631
    %3800 = vmatprep.mubr.bf16.mxu0 %v3379
    %3801 = vmatmul.mubr.bf16.gmra.mxu0 %v3378
    %v3802 = vpop.f32.mrf.mxu0
    %v3803 = vadd.f32 %v3706, %v3802
    %v3804 = vpop.f32.mrf.mxu0
    %v3805 = vpop.f32.mrf.mxu0
    %v3806 = vadd.f32 %v3709, %v3805
    %v3807 = vpop.f32.mrf.mxu0
    %3808 = vmatprep.mubr.bf16.mxu0 %v3383
    %3809 = vmatmul.mubr.bf16.gmra.mxu0 %v3382
    %v3810 = vpop.f32.mrf.mxu0
    %v3811 = vadd.f32 %v3714, %v3810
    %v3812 = vpop.f32.mrf.mxu0
    %v3813 = vpop.f32.mrf.mxu0
    %v3814 = vadd.f32 %v3717, %v3813
    %v3815 = vpop.f32.mrf.mxu0
    %3816 = vmatprep.mubr.bf16.mxu0 %v3387
    %3817 = vmatmul.mubr.bf16.gmra.mxu0 %v3386
    %v3818 = vpop.f32.mrf.mxu0
    %v3819 = vadd.f32 %v3722, %v3818
    %v3820 = vpop.f32.mrf.mxu0
    %v3821 = vpop.f32.mrf.mxu0
    %v3822 = vadd.f32 %v3725, %v3821
    %v3823 = vpop.f32.mrf.mxu0
    %3824 = vmatprep.mubr.bf16.mxu0 %v3391
    %3825 = vmatmul.mubr.bf16.gmra.mxu0 %v3390
    %v3826 = vpop.f32.mrf.mxu0
    %v3827 = vadd.f32 %v3730, %v3826
    %v3828 = vpop.f32.mrf.mxu0
    %v3829 = vpop.f32.mrf.mxu0
    %v3830 = vadd.f32 %v3733, %v3829
    %v3831 = vpop.f32.mrf.mxu0
    %3832 = vmatprep.mubr.bf16.mxu0 %v3395
    %3833 = vmatmul.mubr.bf16.gmra.mxu0 %v3394
    %v3834 = vpop.f32.mrf.mxu0
    %v3835 = vadd.f32 %v3738, %v3834
    %v3836 = vpop.f32.mrf.mxu0
    %v3837 = vpop.f32.mrf.mxu0
    %v3838 = vadd.f32 %v3741, %v3837
    %v3839 = vpop.f32.mrf.mxu0
    %3840 = vmatprep.mubr.bf16.mxu0 %v3399
    %3841 = vmatmul.mubr.bf16.gmra.mxu0 %v3398
    %v3842 = vpop.f32.mrf.mxu0
    %v3843 = vadd.f32 %v3746, %v3842
    %v3844 = vpop.f32.mrf.mxu0
    %v3845 = vpop.f32.mrf.mxu0
    %v3846 = vadd.f32 %v3749, %v3845
    %v3847 = vpop.f32.mrf.mxu0
    %3848 = vmatprep.mubr.bf16.mxu0 %v3403
    %3849 = vmatmul.mubr.bf16.gmra.mxu0 %v3402
    %v3850 = vpop.f32.mrf.mxu0
    %v3851 = vadd.f32 %v3754, %v3850
    %v3852 = vpop.f32.mrf.mxu0
    %v3853 = vpop.f32.mrf.mxu0
    %v3854 = vadd.f32 %v3757, %v3853
    %v3855 = vpop.f32.mrf.mxu0
    %3856 = vmatprep.mubr.bf16.mxu0 %v3407
    %3857 = vmatmul.mubr.bf16.gmra.mxu0 %v3406
    %v3858 = vpop.f32.mrf.mxu0
    %v3859 = vadd.f32 %v3762, %v3858
    %v3860 = vpop.f32.mrf.mxu0
    %v3861 = vpop.f32.mrf.mxu0
    %v3862 = vadd.f32 %v3765, %v3861
    %v3863 = vpop.f32.mrf.mxu0
    %3864 = vdwg.mxu0
    %v3865 = vadd.f32 %v2336, %v3803
    %v3866 = vadd.f32 %v2337, %v3806
    %v3867 = vadd.f32 %v2338, %v3811
    %v3868 = vadd.f32 %v2339, %v3814
    %v3869 = vadd.f32 %v2340, %v3819
    %v3870 = vadd.f32 %v2341, %v3822
    %v3871 = vadd.f32 %v2342, %v3827
    %v3872 = vadd.f32 %v2343, %v3830
    %v3873 = vadd.f32 %v2344, %v3835
    %v3874 = vadd.f32 %v2345, %v3838
    %v3875 = vadd.f32 %v2346, %v3843
    %v3876 = vadd.f32 %v2347, %v3846
    %v3877 = vadd.f32 %v2348, %v3851
    %v3878 = vadd.f32 %v2349, %v3854
    %v3879 = vadd.f32 %v2350, %v3859
    %v3880 = vadd.f32 %v2351, %v3862
    %v3881 = vld [vmem:[#allocation21] sm:$0x1]
    %v3882 = vld [vmem:[#allocation22] sm:$0x1]
    %3883 = vadd.xlane.f32.xlu0 %v3865
    %v3884 = vpop.xlane.xlu0 %3883
    %3885 = vadd.xlane.f32.xlu0 %v3866
    %v3886 = vpop.xlane.xlu0 %3885
    %3887 = vadd.xlane.f32.xlu0 %v3867
    %v3888 = vpop.xlane.xlu0 %3887
    %3889 = vadd.xlane.f32.xlu0 %v3868
    %v3890 = vpop.xlane.xlu0 %3889
    %3891 = vadd.xlane.f32.xlu0 %v3869
    %v3892 = vpop.xlane.xlu0 %3891
    %3893 = vadd.xlane.f32.xlu0 %v3870
    %v3894 = vpop.xlane.xlu0 %3893
    %3895 = vadd.xlane.f32.xlu0 %v3871
    %v3896 = vpop.xlane.xlu0 %3895
    %3897 = vadd.xlane.f32.xlu0 %v3872
    %v3898 = vpop.xlane.xlu0 %3897
    %3899 = vadd.xlane.f32.xlu0 %v3873
    %v3900 = vpop.xlane.xlu0 %3899
    %3901 = vadd.xlane.f32.xlu0 %v3874
    %v3902 = vpop.xlane.xlu0 %3901
    %3903 = vadd.xlane.f32.xlu0 %v3875
    %v3904 = vpop.xlane.xlu0 %3903
    %3905 = vadd.xlane.f32.xlu0 %v3876
    %v3906 = vpop.xlane.xlu0 %3905
    %3907 = vadd.xlane.f32.xlu0 %v3877
    %v3908 = vpop.xlane.xlu0 %3907
    %3909 = vadd.xlane.f32.xlu0 %v3878
    %v3910 = vpop.xlane.xlu0 %3909
    %3911 = vadd.xlane.f32.xlu0 %v3879
    %v3912 = vpop.xlane.xlu0 %3911
    %3913 = vadd.xlane.f32.xlu0 %v3880
    %v3914 = vpop.xlane.xlu0 %3913
    %v3915 = vmul.f32 %v3884, %v2163
    %v3916 = vmul.f32 %v3886, %v2163
    %v3917 = vmul.f32 %v3888, %v2163
    %v3918 = vmul.f32 %v3890, %v2163
    %v3919 = vmul.f32 %v3892, %v2163
    %v3920 = vmul.f32 %v3894, %v2163
    %v3921 = vmul.f32 %v3896, %v2163
    %v3922 = vmul.f32 %v3898, %v2163
    %v3923 = vmul.f32 %v3900, %v2163
    %v3924 = vmul.f32 %v3902, %v2163
    %v3925 = vmul.f32 %v3904, %v2163
    %v3926 = vmul.f32 %v3906, %v2163
    %v3927 = vmul.f32 %v3908, %v2163
    %v3928 = vmul.f32 %v3910, %v2163
    %v3929 = vmul.f32 %v3912, %v2163
    %v3930 = vmul.f32 %v3914, %v2163
    %v3931 = vsub.f32 %v3865, %v3915
    %v3932 = vsub.f32 %v3866, %v3916
    %v3933 = vsub.f32 %v3867, %v3917
    %v3934 = vsub.f32 %v3868, %v3918
    %v3935 = vsub.f32 %v3869, %v3919
    %v3936 = vsub.f32 %v3870, %v3920
    %v3937 = vsub.f32 %v3871, %v3921
    %v3938 = vsub.f32 %v3872, %v3922
    %v3939 = vsub.f32 %v3873, %v3923
    %v3940 = vsub.f32 %v3874, %v3924
    %v3941 = vsub.f32 %v3875, %v3925
    %v3942 = vsub.f32 %v3876, %v3926
    %v3943 = vsub.f32 %v3877, %v3927
    %v3944 = vsub.f32 %v3878, %v3928
    %v3945 = vsub.f32 %v3879, %v3929
    %v3946 = vsub.f32 %v3880, %v3930
    %v3947 = vmul.f32 %v3931, %v3931
    %v3948 = vmul.f32 %v3932, %v3932
    %v3949 = vmul.f32 %v3933, %v3933
    %v3950 = vmul.f32 %v3934, %v3934
    %v3951 = vmul.f32 %v3935, %v3935
    %v3952 = vmul.f32 %v3936, %v3936
    %v3953 = vmul.f32 %v3937, %v3937
    %v3954 = vmul.f32 %v3938, %v3938
    %v3955 = vmul.f32 %v3939, %v3939
    %v3956 = vmul.f32 %v3940, %v3940
    %v3957 = vmul.f32 %v3941, %v3941
    %v3958 = vmul.f32 %v3942, %v3942
    %v3959 = vmul.f32 %v3943, %v3943
    %v3960 = vmul.f32 %v3944, %v3944
    %v3961 = vmul.f32 %v3945, %v3945
    %v3962 = vmul.f32 %v3946, %v3946
    %3963 = vadd.xlane.f32.xlu0 %v3947
    %v3964 = vpop.xlane.xlu0 %3963
    %3965 = vadd.xlane.f32.xlu0 %v3948
    %v3966 = vpop.xlane.xlu0 %3965
    %3967 = vadd.xlane.f32.xlu0 %v3949
    %v3968 = vpop.xlane.xlu0 %3967
    %3969 = vadd.xlane.f32.xlu0 %v3950
    %v3970 = vpop.xlane.xlu0 %3969
    %3971 = vadd.xlane.f32.xlu0 %v3951
    %v3972 = vpop.xlane.xlu0 %3971
    %3973 = vadd.xlane.f32.xlu0 %v3952
    %v3974 = vpop.xlane.xlu0 %3973
    %3975 = vadd.xlane.f32.xlu0 %v3953
    %v3976 = vpop.xlane.xlu0 %3975
    %3977 = vadd.xlane.f32.xlu0 %v3954
    %v3978 = vpop.xlane.xlu0 %3977
    %3979 = vadd.xlane.f32.xlu0 %v3955
    %v3980 = vpop.xlane.xlu0 %3979
    %3981 = vadd.xlane.f32.xlu0 %v3956
    %v3982 = vpop.xlane.xlu0 %3981
    %3983 = vadd.xlane.f32.xlu0 %v3957
    %v3984 = vpop.xlane.xlu0 %3983
    %3985 = vadd.xlane.f32.xlu0 %v3958
    %v3986 = vpop.xlane.xlu0 %3985
    %3987 = vadd.xlane.f32.xlu0 %v3959
    %v3988 = vpop.xlane.xlu0 %3987
    %3989 = vadd.xlane.f32.xlu0 %v3960
    %v3990 = vpop.xlane.xlu0 %3989
    %3991 = vadd.xlane.f32.xlu0 %v3961
    %v3992 = vpop.xlane.xlu0 %3991
    %3993 = vadd.xlane.f32.xlu0 %v3962
    %v3994 = vpop.xlane.xlu0 %3993
    %v3995 = vmul.f32 %v3964, %v2163
    %v3996 = vmul.f32 %v3966, %v2163
    %v3997 = vmul.f32 %v3968, %v2163
    %v3998 = vmul.f32 %v3970, %v2163
    %v3999 = vmul.f32 %v3972, %v2163
    %v4000 = vmul.f32 %v3974, %v2163
    %v4001 = vmul.f32 %v3976, %v2163
    %v4002 = vmul.f32 %v3978, %v2163
    %v4003 = vmul.f32 %v3980, %v2163
    %v4004 = vmul.f32 %v3982, %v2163
    %v4005 = vmul.f32 %v3984, %v2163
    %v4006 = vmul.f32 %v3986, %v2163
    %v4007 = vmul.f32 %v3988, %v2163
    %v4008 = vmul.f32 %v3990, %v2163
    %v4009 = vmul.f32 %v3992, %v2163
    %v4010 = vmul.f32 %v3994, %v2163
    %v4011 = vadd.f32 %v3995, 1e-12
    %v4012 = vadd.f32 %v3996, 1e-12
    %v4013 = vadd.f32 %v3997, 1e-12
    %v4014 = vadd.f32 %v3998, 1e-12
    %v4015 = vadd.f32 %v3999, 1e-12
    %v4016 = vadd.f32 %v4000, 1e-12
    %v4017 = vadd.f32 %v4001, 1e-12
    %v4018 = vadd.f32 %v4002, 1e-12
    %v4019 = vadd.f32 %v4003, 1e-12
    %v4020 = vadd.f32 %v4004, 1e-12
    %v4021 = vadd.f32 %v4005, 1e-12
    %v4022 = vadd.f32 %v4006, 1e-12
    %v4023 = vadd.f32 %v4007, 1e-12
    %v4024 = vadd.f32 %v4008, 1e-12
    %v4025 = vadd.f32 %v4009, 1e-12
    %v4026 = vadd.f32 %v4010, 1e-12
    %v4027 = vrsqrt.pop %v4011
    %v4028 = vrsqrt.pop %v4012
    %v4029 = vrsqrt.pop %v4013
    %v4030 = vrsqrt.pop %v4014
    %v4031 = vrsqrt.pop %v4015
    %v4032 = vrsqrt.pop %v4016
    %v4033 = vrsqrt.pop %v4017
    %v4034 = vrsqrt.pop %v4018
    %v4035 = vrsqrt.pop %v4019
    %v4036 = vrsqrt.pop %v4020
    %v4037 = vrsqrt.pop %v4021
    %v4038 = vrsqrt.pop %v4022
    %v4039 = vrsqrt.pop %v4023
    %v4040 = vrsqrt.pop %v4024
    %v4041 = vrsqrt.pop %v4025
    %v4042 = vrsqrt.pop %v4026
    %v4043 = vmul.f32 %v3931, %v4027
    %v4044 = vmul.f32 %v3932, %v4028
    %v4045 = vmul.f32 %v3933, %v4029
    %v4046 = vmul.f32 %v3934, %v4030
    %v4047 = vmul.f32 %v3935, %v4031
    %v4048 = vmul.f32 %v3936, %v4032
    %v4049 = vmul.f32 %v3937, %v4033
    %v4050 = vmul.f32 %v3938, %v4034
    %v4051 = vmul.f32 %v3939, %v4035
    %v4052 = vmul.f32 %v3940, %v4036
    %v4053 = vmul.f32 %v3941, %v4037
    %v4054 = vmul.f32 %v3942, %v4038
    %v4055 = vmul.f32 %v3943, %v4039
    %v4056 = vmul.f32 %v3944, %v4040
    %v4057 = vmul.f32 %v3945, %v4041
    %v4058 = vmul.f32 %v3946, %v4042
    %v4060 = vlaneseq
    %v4061 = vshrl.u32 %v4060, 7
    %v4062 = vsub.s32 0, %v4061
    %v4063 = vrot.slane %v3881, %v4062
    %v4065 = vmul.f32 %v4043, %v4063
    %v4066 = vmul.f32 %v4044, %v4063
    %v4067 = vmul.f32 %v4045, %v4063
    %v4068 = vmul.f32 %v4046, %v4063
    %v4069 = vmul.f32 %v4047, %v4063
    %v4070 = vmul.f32 %v4048, %v4063
    %v4071 = vmul.f32 %v4049, %v4063
    %v4072 = vmul.f32 %v4050, %v4063
    %v4073 = vmul.f32 %v4051, %v4063
    %v4074 = vmul.f32 %v4052, %v4063
    %v4075 = vmul.f32 %v4053, %v4063
    %v4076 = vmul.f32 %v4054, %v4063
    %v4077 = vmul.f32 %v4055, %v4063
    %v4078 = vmul.f32 %v4056, %v4063
    %v4079 = vmul.f32 %v4057, %v4063
    %v4080 = vmul.f32 %v4058, %v4063
    %v4082 = vlaneseq
    %v4083 = vshrl.u32 %v4082, 7
    %v4084 = vsub.s32 0, %v4083
    %v4085 = vrot.slane %v3882, %v4084
    %v4087 = vadd.f32 %v4065, %v4085
    %v4088 = vadd.f32 %v4066, %v4085
    %v4089 = vadd.f32 %v4067, %v4085
    %v4090 = vadd.f32 %v4068, %v4085
    %v4091 = vadd.f32 %v4069, %v4085
    %v4092 = vadd.f32 %v4070, %v4085
    %v4093 = vadd.f32 %v4071, %v4085
    %v4094 = vadd.f32 %v4072, %v4085
    %v4095 = vadd.f32 %v4073, %v4085
    %v4096 = vadd.f32 %v4074, %v4085
    %v4097 = vadd.f32 %v4075, %v4085
    %v4098 = vadd.f32 %v4076, %v4085
    %v4099 = vadd.f32 %v4077, %v4085
    %v4100 = vadd.f32 %v4078, %v4085
    %v4101 = vadd.f32 %v4079, %v4085
    %v4102 = vadd.f32 %v4080, %v4085
    %v4103 = vpack.c.bf16 %v4088, %v4087
    %v4104 = vpack.c.bf16 %v4090, %v4089
    %v4105 = vpack.c.bf16 %v4092, %v4091
    %v4106 = vpack.c.bf16 %v4094, %v4093
    %v4107 = vpack.c.bf16 %v4096, %v4095
    %v4108 = vpack.c.bf16 %v4098, %v4097
    %v4109 = vpack.c.bf16 %v4100, %v4099
    %v4110 = vpack.c.bf16 %v4102, %v4101
    %s4111 = scalar_lea.vmem [#allocation9], 192
    %v4112 = vld [vmem:[%s4111] sm:$0xff]
    %v4113 = vld [vmem:[%s4111 + $0x8] sm:$0xf]
    %v4114 = vld [vmem:[%s4111 + $0xc] sm:$0xff]
    %v4115 = vld [vmem:[%s4111 + $0x14] sm:$0xf]
    %v4116 = vld [vmem:[%s4111 + $0x18] sm:$0xff]
    %v4117 = vld [vmem:[%s4111 + $0x20] sm:$0xf]
    %v4118 = vld [vmem:[%s4111 + $0x24] sm:$0xff]
    %v4119 = vld [vmem:[%s4111 + $0x2c] sm:$0xf]
    %v4120 = vld [vmem:[%s4111 + $0x30] sm:$0xff]
    %v4121 = vld [vmem:[%s4111 + $0x38] sm:$0xf]
    %v4122 = vld [vmem:[%s4111 + $0x3c] sm:$0xff]
    %v4123 = vld [vmem:[%s4111 + $0x44] sm:$0xf]
    %v4124 = vld [vmem:[%s4111 + $0x48] sm:$0xff]
    %v4125 = vld [vmem:[%s4111 + $0x50] sm:$0xf]
    %v4126 = vld [vmem:[%s4111 + $0x54] sm:$0xff]
    %v4127 = vld [vmem:[%s4111 + $0x5c] sm:$0xf]
    %v4128 = vld [vmem:[%s4111 + $0x60] sm:$0xff]
    %v4129 = vld [vmem:[%s4111 + $0x68] sm:$0xf]
    %v4130 = vld [vmem:[%s4111 + $0x6c] sm:$0xff]
    %v4131 = vld [vmem:[%s4111 + $0x74] sm:$0xf]
    %v4132 = vld [vmem:[%s4111 + $0x78] sm:$0xff]
    %v4133 = vld [vmem:[%s4111 + $0x80] sm:$0xf]
    %v4134 = vld [vmem:[%s4111 + $0x84] sm:$0xff]
    %v4135 = vld [vmem:[%s4111 + $0x8c] sm:$0xf]
    %v4136 = vld [vmem:[%s4111 + $0x90] sm:$0xff]
    %v4137 = vld [vmem:[%s4111 + $0x98] sm:$0xf]
    %v4138 = vld [vmem:[%s4111 + $0x9c] sm:$0xff]
    %v4139 = vld [vmem:[%s4111 + $0xa4] sm:$0xf]
    %v4140 = vld [vmem:[%s4111 + $0xa8] sm:$0xff]
    %v4141 = vld [vmem:[%s4111 + $0xb0] sm:$0xf]
    %v4142 = vld [vmem:[%s4111 + $0xb4] sm:$0xff]
    %v4143 = vld [vmem:[%s4111 + $0xbc] sm:$0xf]
    %s4144 = scalar_lea.vmem [#allocation10], 3
    %v4145 = vld [vmem:[%s4144] sm:$0x7]
    %v4147 = vlaneseq
    %v4148 = vshrl.u32 %v4147, 7
    %v4149 = vsub.s32 0, %v4148
    %v4150 = vrot.slane %v4145, %v4149
    %v4151 = vlaneseq
    %v4152 = vshrl.u32 %v4151, 7
    %v4153 = vsub.s32 1, %v4152
    %v4154 = vrot.slane %v4145, %v4153
    %v4155 = vlaneseq
    %v4156 = vshrl.u32 %v4155, 7
    %v4157 = vsub.s32 2, %v4156
    %v4158 = vrot.slane %v4145, %v4157
    %v4194 = vunpack.c.l.b16 %v4112
    %v4195 = vunpack.c.h.b16 %v4112
    %v4196 = vunpack.c.l.b16 %v4113
    %v4197 = vunpack.c.l.b16 %v4114
    %v4198 = vunpack.c.h.b16 %v4114
    %v4199 = vunpack.c.l.b16 %v4115
    %v4200 = vunpack.c.l.b16 %v4116
    %v4201 = vunpack.c.h.b16 %v4116
    %v4202 = vunpack.c.l.b16 %v4117
    %v4203 = vunpack.c.l.b16 %v4118
    %v4204 = vunpack.c.h.b16 %v4118
    %v4205 = vunpack.c.l.b16 %v4119
    %v4206 = vunpack.c.l.b16 %v4120
    %v4207 = vunpack.c.h.b16 %v4120
    %v4208 = vunpack.c.l.b16 %v4121
    %v4209 = vunpack.c.l.b16 %v4122
    %v4210 = vunpack.c.h.b16 %v4122
    %v4211 = vunpack.c.l.b16 %v4123
    %v4212 = vunpack.c.l.b16 %v4124
    %v4213 = vunpack.c.h.b16 %v4124
    %v4214 = vunpack.c.l.b16 %v4125
    %v4215 = vunpack.c.l.b16 %v4126
    %v4216 = vunpack.c.h.b16 %v4126
    %v4217 = vunpack.c.l.b16 %v4127
    %v4218 = vunpack.c.l.b16 %v4128
    %v4219 = vunpack.c.h.b16 %v4128
    %v4220 = vunpack.c.l.b16 %v4129
    %v4221 = vunpack.c.l.b16 %v4130
    %v4222 = vunpack.c.h.b16 %v4130
    %v4223 = vunpack.c.l.b16 %v4131
    %v4224 = vunpack.c.l.b16 %v4132
    %v4225 = vunpack.c.h.b16 %v4132
    %v4226 = vunpack.c.l.b16 %v4133
    %v4227 = vunpack.c.l.b16 %v4134
    %v4228 = vunpack.c.h.b16 %v4134
    %v4229 = vunpack.c.l.b16 %v4135
    %v4230 = vunpack.c.l.b16 %v4136
    %v4231 = vunpack.c.h.b16 %v4136
    %v4232 = vunpack.c.l.b16 %v4137
    %v4233 = vunpack.c.l.b16 %v4138
    %v4234 = vunpack.c.h.b16 %v4138
    %v4235 = vunpack.c.l.b16 %v4139
    %v4236 = vunpack.c.l.b16 %v4140
    %v4237 = vunpack.c.h.b16 %v4140
    %v4238 = vunpack.c.l.b16 %v4141
    %v4239 = vunpack.c.l.b16 %v4142
    %v4240 = vunpack.c.h.b16 %v4142
    %v4241 = vunpack.c.l.b16 %v4143
    %v4242 = vpack.c.b16 %v4197, %v4194
    %v4243 = vpack.c.b16 %v4198, %v4195
    %v4244 = vpack.c.b16 %v4199, %v4196
    %v4245 = vpack.c.b16 %v4203, %v4200
    %v4246 = vpack.c.b16 %v4204, %v4201
    %v4247 = vpack.c.b16 %v4205, %v4202
    %v4248 = vpack.c.b16 %v4209, %v4206
    %v4249 = vpack.c.b16 %v4210, %v4207
    %v4250 = vpack.c.b16 %v4211, %v4208
    %v4251 = vpack.c.b16 %v4215, %v4212
    %v4252 = vpack.c.b16 %v4216, %v4213
    %v4253 = vpack.c.b16 %v4217, %v4214
    %v4254 = vpack.c.b16 %v4221, %v4218
    %v4255 = vpack.c.b16 %v4222, %v4219
    %v4256 = vpack.c.b16 %v4223, %v4220
    %v4257 = vpack.c.b16 %v4227, %v4224
    %v4258 = vpack.c.b16 %v4228, %v4225
    %v4259 = vpack.c.b16 %v4229, %v4226
    %v4260 = vpack.c.b16 %v4233, %v4230
    %v4261 = vpack.c.b16 %v4234, %v4231
    %v4262 = vpack.c.b16 %v4235, %v4232
    %v4263 = vpack.c.b16 %v4239, %v4236
    %v4264 = vpack.c.b16 %v4240, %v4237
    %v4265 = vpack.c.b16 %v4241, %v4238
    %4290 = vmatprep.subr.bf16.mxu0 %v4264
    %4291 = vmatpush1.bf16.msra.mxu0 %v4263
    %4292 = vmatprep.subr.bf16.mxu0 %v4261
    %4293 = vmatpush1.bf16.msra.mxu0 %v4260
    %4294 = vmatprep.subr.bf16.mxu0 %v4258
    %4295 = vmatpush1.bf16.msra.mxu0 %v4257
    %4296 = vmatprep.subr.bf16.mxu0 %v4255
    %4297 = vmatpush1.bf16.msra.mxu0 %v4254
    %4298 = vmatprep.subr.bf16.mxu0 %v4252
    %4299 = vmatpush1.bf16.msra.mxu0 %v4251
    %4300 = vmatprep.subr.bf16.mxu0 %v4249
    %4301 = vmatpush1.bf16.msra.mxu0 %v4248
    %4302 = vmatprep.subr.bf16.mxu0 %v4246
    %4303 = vmatpush1.bf16.msra.mxu0 %v4245
    %4304 = vmatprep.subr.bf16.mxu0 %v4243
    %4305 = vmatpush1.bf16.msra.mxu0 %v4242
    %4306 = vmatprep.subr.bf16.mxu0 0
    %4307 = vmatpush2.bf16.msra.mxu0 0
    %4308 = vmatprep.subr.bf16.mxu0 0
    %4309 = vmatpush2.bf16.msra.mxu0 0
    %4310 = vmatprep.subr.bf16.mxu0 0
    %4311 = vmatpush2.bf16.msra.mxu0 0
    %4312 = vmatprep.subr.bf16.mxu0 0
    %4313 = vmatpush2.bf16.msra.mxu0 0
    %4314 = vmatprep.subr.bf16.mxu0 0
    %4315 = vmatpush2.bf16.msra.mxu0 0
    %4316 = vmatprep.subr.bf16.mxu0 0
    %4317 = vmatpush2.bf16.msra.mxu0 0
    %4318 = vmatprep.subr.bf16.mxu0 0
    %4319 = vmatpush2.bf16.msra.mxu0 0
    %4320 = vmatprep.subr.bf16.mxu0 0
    %4321 = vmatpush2.bf16.msra.mxu0 0
    %4322 = vmatprep.mubr.bf16.mxu0 0
    %4323 = vmatmul.mubr.bf16.gmra.mxu0 %v4103
    %v4324 = vpop.f32.mrf.mxu0
    %v4325 = vadd.f32 %v4150, %v4324
    %v4326 = vpop.f32.mrf.mxu0
    %v4327 = vadd.f32 %v4154, %v4326
    %v4328 = vpop.f32.mrf.mxu0
    %v4329 = vadd.f32 %v4150, %v4328
    %v4330 = vpop.f32.mrf.mxu0
    %v4331 = vadd.f32 %v4154, %v4330
    %4332 = vmatprep.mubr.bf16.mxu0 0
    %4333 = vmatmul.mubr.bf16.gmra.mxu0 %v4104
    %v4334 = vpop.f32.mrf.mxu0
    %v4335 = vadd.f32 %v4150, %v4334
    %v4336 = vpop.f32.mrf.mxu0
    %v4337 = vadd.f32 %v4154, %v4336
    %v4338 = vpop.f32.mrf.mxu0
    %v4339 = vadd.f32 %v4150, %v4338
    %v4340 = vpop.f32.mrf.mxu0
    %v4341 = vadd.f32 %v4154, %v4340
    %4342 = vmatprep.mubr.bf16.mxu0 0
    %4343 = vmatmul.mubr.bf16.gmra.mxu0 %v4105
    %v4344 = vpop.f32.mrf.mxu0
    %v4345 = vadd.f32 %v4150, %v4344
    %v4346 = vpop.f32.mrf.mxu0
    %v4347 = vadd.f32 %v4154, %v4346
    %v4348 = vpop.f32.mrf.mxu0
    %v4349 = vadd.f32 %v4150, %v4348
    %v4350 = vpop.f32.mrf.mxu0
    %v4351 = vadd.f32 %v4154, %v4350
    %4352 = vmatprep.mubr.bf16.mxu0 0
    %4353 = vmatmul.mubr.bf16.gmra.mxu0 %v4106
    %v4354 = vpop.f32.mrf.mxu0
    %v4355 = vadd.f32 %v4150, %v4354
    %v4356 = vpop.f32.mrf.mxu0
    %v4357 = vadd.f32 %v4154, %v4356
    %v4358 = vpop.f32.mrf.mxu0
    %v4359 = vadd.f32 %v4150, %v4358
    %v4360 = vpop.f32.mrf.mxu0
    %v4361 = vadd.f32 %v4154, %v4360
    %4362 = vmatprep.mubr.bf16.mxu0 0
    %4363 = vmatmul.mubr.bf16.gmra.mxu0 %v4107
    %v4364 = vpop.f32.mrf.mxu0
    %v4365 = vadd.f32 %v4150, %v4364
    %v4366 = vpop.f32.mrf.mxu0
    %v4367 = vadd.f32 %v4154, %v4366
    %v4368 = vpop.f32.mrf.mxu0
    %v4369 = vadd.f32 %v4150, %v4368
    %v4370 = vpop.f32.mrf.mxu0
    %v4371 = vadd.f32 %v4154, %v4370
    %4372 = vmatprep.mubr.bf16.mxu0 0
    %4373 = vmatmul.mubr.bf16.gmra.mxu0 %v4108
    %v4374 = vpop.f32.mrf.mxu0
    %v4375 = vadd.f32 %v4150, %v4374
    %v4376 = vpop.f32.mrf.mxu0
    %v4377 = vadd.f32 %v4154, %v4376
    %v4378 = vpop.f32.mrf.mxu0
    %v4379 = vadd.f32 %v4150, %v4378
    %v4380 = vpop.f32.mrf.mxu0
    %v4381 = vadd.f32 %v4154, %v4380
    %4382 = vmatprep.mubr.bf16.mxu0 0
    %4383 = vmatmul.mubr.bf16.gmra.mxu0 %v4109
    %v4384 = vpop.f32.mrf.mxu0
    %v4385 = vadd.f32 %v4150, %v4384
    %v4386 = vpop.f32.mrf.mxu0
    %v4387 = vadd.f32 %v4154, %v4386
    %v4388 = vpop.f32.mrf.mxu0
    %v4389 = vadd.f32 %v4150, %v4388
    %v4390 = vpop.f32.mrf.mxu0
    %v4391 = vadd.f32 %v4154, %v4390
    %4392 = vmatprep.mubr.bf16.mxu0 0
    %4393 = vmatmul.mubr.bf16.gmra.mxu0 %v4110
    %v4394 = vpop.f32.mrf.mxu0
    %v4395 = vadd.f32 %v4150, %v4394
    %v4396 = vpop.f32.mrf.mxu0
    %v4397 = vadd.f32 %v4154, %v4396
    %v4398 = vpop.f32.mrf.mxu0
    %v4399 = vadd.f32 %v4150, %v4398
    %v4400 = vpop.f32.mrf.mxu0
    %v4401 = vadd.f32 %v4154, %v4400
    %4402 = vdwg.mxu0
    %4403 = vmatprep.subr.bf16.mxu0 0
    %4404 = vmatpush1.bf16.msra.mxu0 %v4265
    %4405 = vmatprep.subr.bf16.mxu0 0
    %4406 = vmatpush1.bf16.msra.mxu0 %v4262
    %4407 = vmatprep.subr.bf16.mxu0 0
    %4408 = vmatpush1.bf16.msra.mxu0 %v4259
    %4409 = vmatprep.subr.bf16.mxu0 0
    %4410 = vmatpush1.bf16.msra.mxu0 %v4256
    %4411 = vmatprep.subr.bf16.mxu0 0
    %4412 = vmatpush1.bf16.msra.mxu0 %v4253
    %4413 = vmatprep.subr.bf16.mxu0 0
    %4414 = vmatpush1.bf16.msra.mxu0 %v4250
    %4415 = vmatprep.subr.bf16.mxu0 0
    %4416 = vmatpush1.bf16.msra.mxu0 %v4247
    %4417 = vmatprep.subr.bf16.mxu0 0
    %4418 = vmatpush1.bf16.msra.mxu0 %v4244
    %4419 = vmatprep.subr.bf16.mxu0 0
    %4420 = vmatpush2.bf16.msra.mxu0 0
    %4421 = vmatprep.subr.bf16.mxu0 0
    %4422 = vmatpush2.bf16.msra.mxu0 0
    %4423 = vmatprep.subr.bf16.mxu0 0
    %4424 = vmatpush2.bf16.msra.mxu0 0
    %4425 = vmatprep.subr.bf16.mxu0 0
    %4426 = vmatpush2.bf16.msra.mxu0 0
    %4427 = vmatprep.subr.bf16.mxu0 0
    %4428 = vmatpush2.bf16.msra.mxu0 0
    %4429 = vmatprep.subr.bf16.mxu0 0
    %4430 = vmatpush2.bf16.msra.mxu0 0
    %4431 = vmatprep.subr.bf16.mxu0 0
    %4432 = vmatpush2.bf16.msra.mxu0 0
    %4433 = vmatprep.subr.bf16.mxu0 0
    %4434 = vmatpush2.bf16.msra.mxu0 0
    %4435 = vmatprep.mubr.bf16.mxu0 0
    %4436 = vmatmul.mubr.bf16.gmra.mxu0 %v4103
    %v4437 = vpop.f32.mrf.mxu0
    %v4438 = vadd.f32 %v4158, %v4437
    %v4439 = vpop.f32.mrf.mxu0
    %v4440 = vpop.f32.mrf.mxu0
    %v4441 = vadd.f32 %v4158, %v4440
    %v4442 = vpop.f32.mrf.mxu0
    %4443 = vmatprep.mubr.bf16.mxu0 0
    %4444 = vmatmul.mubr.bf16.gmra.mxu0 %v4104
    %v4445 = vpop.f32.mrf.mxu0
    %v4446 = vadd.f32 %v4158, %v4445
    %v4447 = vpop.f32.mrf.mxu0
    %v4448 = vpop.f32.mrf.mxu0
    %v4449 = vadd.f32 %v4158, %v4448
    %v4450 = vpop.f32.mrf.mxu0
    %4451 = vmatprep.mubr.bf16.mxu0 0
    %4452 = vmatmul.mubr.bf16.gmra.mxu0 %v4105
    %v4453 = vpop.f32.mrf.mxu0
    %v4454 = vadd.f32 %v4158, %v4453
    %v4455 = vpop.f32.mrf.mxu0
    %v4456 = vpop.f32.mrf.mxu0
    %v4457 = vadd.f32 %v4158, %v4456
    %v4458 = vpop.f32.mrf.mxu0
    %4459 = vmatprep.mubr.bf16.mxu0 0
    %4460 = vmatmul.mubr.bf16.gmra.mxu0 %v4106
    %v4461 = vpop.f32.mrf.mxu0
    %v4462 = vadd.f32 %v4158, %v4461
    %v4463 = vpop.f32.mrf.mxu0
    %v4464 = vpop.f32.mrf.mxu0
    %v4465 = vadd.f32 %v4158, %v4464
    %v4466 = vpop.f32.mrf.mxu0
    %4467 = vmatprep.mubr.bf16.mxu0 0
    %4468 = vmatmul.mubr.bf16.gmra.mxu0 %v4107
    %v4469 = vpop.f32.mrf.mxu0
    %v4470 = vadd.f32 %v4158, %v4469
    %v4471 = vpop.f32.mrf.mxu0
    %v4472 = vpop.f32.mrf.mxu0
    %v4473 = vadd.f32 %v4158, %v4472
    %v4474 = vpop.f32.mrf.mxu0
    %4475 = vmatprep.mubr.bf16.mxu0 0
    %4476 = vmatmul.mubr.bf16.gmra.mxu0 %v4108
    %v4477 = vpop.f32.mrf.mxu0
    %v4478 = vadd.f32 %v4158, %v4477
    %v4479 = vpop.f32.mrf.mxu0
    %v4480 = vpop.f32.mrf.mxu0
    %v4481 = vadd.f32 %v4158, %v4480
    %v4482 = vpop.f32.mrf.mxu0
    %4483 = vmatprep.mubr.bf16.mxu0 0
    %4484 = vmatmul.mubr.bf16.gmra.mxu0 %v4109
    %v4485 = vpop.f32.mrf.mxu0
    %v4486 = vadd.f32 %v4158, %v4485
    %v4487 = vpop.f32.mrf.mxu0
    %v4488 = vpop.f32.mrf.mxu0
    %v4489 = vadd.f32 %v4158, %v4488
    %v4490 = vpop.f32.mrf.mxu0
    %4491 = vmatprep.mubr.bf16.mxu0 0
    %4492 = vmatmul.mubr.bf16.gmra.mxu0 %v4110
    %v4493 = vpop.f32.mrf.mxu0
    %v4494 = vadd.f32 %v4158, %v4493
    %v4495 = vpop.f32.mrf.mxu0
    %v4496 = vpop.f32.mrf.mxu0
    %v4497 = vadd.f32 %v4158, %v4496
    %v4498 = vpop.f32.mrf.mxu0
    %4499 = vdwg.mxu0
    %v4500 = vpack.c.bf16 %v4329, %v4325
    %v4501 = vpack.c.bf16 %v4331, %v4327
    %v4502 = vpack.c.bf16 %v4441, %v4438
    %v4503 = vpack.c.bf16 %v4339, %v4335
    %v4504 = vpack.c.bf16 %v4341, %v4337
    %v4505 = vpack.c.bf16 %v4449, %v4446
    %v4506 = vpack.c.bf16 %v4349, %v4345
    %v4507 = vpack.c.bf16 %v4351, %v4347
    %v4508 = vpack.c.bf16 %v4457, %v4454
    %v4509 = vpack.c.bf16 %v4359, %v4355
    %v4510 = vpack.c.bf16 %v4361, %v4357
    %v4511 = vpack.c.bf16 %v4465, %v4462
    %v4512 = vpack.c.bf16 %v4369, %v4365
    %v4513 = vpack.c.bf16 %v4371, %v4367
    %v4514 = vpack.c.bf16 %v4473, %v4470
    %v4515 = vpack.c.bf16 %v4379, %v4375
    %v4516 = vpack.c.bf16 %v4381, %v4377
    %v4517 = vpack.c.bf16 %v4481, %v4478
    %v4518 = vpack.c.bf16 %v4389, %v4385
    %v4519 = vpack.c.bf16 %v4391, %v4387
    %v4520 = vpack.c.bf16 %v4489, %v4486
    %v4521 = vpack.c.bf16 %v4399, %v4395
    %v4522 = vpack.c.bf16 %v4401, %v4397
    %v4523 = vpack.c.bf16 %v4497, %v4494
    %v4548 = vunpack.c.l.b16 %v4500
    %v4549 = vunpack.c.l.b16 %v4501
    %v4550 = vunpack.c.l.b16 %v4502
    %v4551 = vunpack.c.h.b16 %v4500
    %v4552 = vunpack.c.h.b16 %v4501
    %v4553 = vunpack.c.h.b16 %v4502
    %v4554 = vunpack.c.l.b16 %v4503
    %v4555 = vunpack.c.l.b16 %v4504
    %v4556 = vunpack.c.l.b16 %v4505
    %v4557 = vunpack.c.h.b16 %v4503
    %v4558 = vunpack.c.h.b16 %v4504
    %v4559 = vunpack.c.h.b16 %v4505
    %v4560 = vunpack.c.l.b16 %v4506
    %v4561 = vunpack.c.l.b16 %v4507
    %v4562 = vunpack.c.l.b16 %v4508
    %v4563 = vunpack.c.h.b16 %v4506
    %v4564 = vunpack.c.h.b16 %v4507
    %v4565 = vunpack.c.h.b16 %v4508
    %v4566 = vunpack.c.l.b16 %v4509
    %v4567 = vunpack.c.l.b16 %v4510
    %v4568 = vunpack.c.l.b16 %v4511
    %v4569 = vunpack.c.h.b16 %v4509
    %v4570 = vunpack.c.h.b16 %v4510
    %v4571 = vunpack.c.h.b16 %v4511
    %v4572 = vunpack.c.l.b16 %v4512
    %v4573 = vunpack.c.l.b16 %v4513
    %v4574 = vunpack.c.l.b16 %v4514
    %v4575 = vunpack.c.h.b16 %v4512
    %v4576 = vunpack.c.h.b16 %v4513
    %v4577 = vunpack.c.h.b16 %v4514
    %v4578 = vunpack.c.l.b16 %v4515
    %v4579 = vunpack.c.l.b16 %v4516
    %v4580 = vunpack.c.l.b16 %v4517
    %v4581 = vunpack.c.h.b16 %v4515
    %v4582 = vunpack.c.h.b16 %v4516
    %v4583 = vunpack.c.h.b16 %v4517
    %v4584 = vunpack.c.l.b16 %v4518
    %v4585 = vunpack.c.l.b16 %v4519
    %v4586 = vunpack.c.l.b16 %v4520
    %v4587 = vunpack.c.h.b16 %v4518
    %v4588 = vunpack.c.h.b16 %v4519
    %v4589 = vunpack.c.h.b16 %v4520
    %v4590 = vunpack.c.l.b16 %v4521
    %v4591 = vunpack.c.l.b16 %v4522
    %v4592 = vunpack.c.l.b16 %v4523
    %v4593 = vunpack.c.h.b16 %v4521
    %v4594 = vunpack.c.h.b16 %v4522
    %v4595 = vunpack.c.h.b16 %v4523
    %v4596 = vpack.c.b16 %v4549, %v4548
    %v4597 = vpack.c.b16 %v4550, %v4550
    %v4598 = vpack.c.b16 %v4552, %v4551
    %v4599 = vpack.c.b16 %v4553, %v4553
    %v4600 = vpack.c.b16 %v4555, %v4554
    %v4601 = vpack.c.b16 %v4556, %v4556
    %v4602 = vpack.c.b16 %v4558, %v4557
    %v4603 = vpack.c.b16 %v4559, %v4559
    %v4604 = vpack.c.b16 %v4561, %v4560
    %v4605 = vpack.c.b16 %v4562, %v4562
    %v4606 = vpack.c.b16 %v4564, %v4563
    %v4607 = vpack.c.b16 %v4565, %v4565
    %v4608 = vpack.c.b16 %v4567, %v4566
    %v4609 = vpack.c.b16 %v4568, %v4568
    %v4610 = vpack.c.b16 %v4570, %v4569
    %v4611 = vpack.c.b16 %v4571, %v4571
    %v4612 = vpack.c.b16 %v4573, %v4572
    %v4613 = vpack.c.b16 %v4574, %v4574
    %v4614 = vpack.c.b16 %v4576, %v4575
    %v4615 = vpack.c.b16 %v4577, %v4577
    %v4616 = vpack.c.b16 %v4579, %v4578
    %v4617 = vpack.c.b16 %v4580, %v4580
    %v4618 = vpack.c.b16 %v4582, %v4581
    %v4619 = vpack.c.b16 %v4583, %v4583
    %v4620 = vpack.c.b16 %v4585, %v4584
    %v4621 = vpack.c.b16 %v4586, %v4586
    %v4622 = vpack.c.b16 %v4588, %v4587
    %v4623 = vpack.c.b16 %v4589, %v4589
    %v4624 = vpack.c.b16 %v4591, %v4590
    %v4625 = vpack.c.b16 %v4592, %v4592
    %v4626 = vpack.c.b16 %v4594, %v4593
    %v4627 = vpack.c.b16 %v4595, %v4595
    %4660 = vst [vmem:[#allocation2] sm:$0xff] %v4596
    %4661 = vst [vmem:[#allocation2 + $0x8] sm:$0xf] %v4597
    %4662 = vst [vmem:[#allocation2 + $0xc] sm:$0xff] %v4598
    %4663 = vst [vmem:[#allocation2 + $0x14] sm:$0xf] %v4599
    %4664 = vst [vmem:[#allocation2 + $0x18] sm:$0xff] %v4600
    %4665 = vst [vmem:[#allocation2 + $0x20] sm:$0xf] %v4601
    %4666 = vst [vmem:[#allocation2 + $0x24] sm:$0xff] %v4602
    %4667 = vst [vmem:[#allocation2 + $0x2c] sm:$0xf] %v4603
    %4668 = vst [vmem:[#allocation2 + $0x30] sm:$0xff] %v4604
    %4669 = vst [vmem:[#allocation2 + $0x38] sm:$0xf] %v4605
    %4670 = vst [vmem:[#allocation2 + $0x3c] sm:$0xff] %v4606
    %4671 = vst [vmem:[#allocation2 + $0x44] sm:$0xf] %v4607
    %4672 = vst [vmem:[#allocation2 + $0x48] sm:$0xff] %v4608
    %4673 = vst [vmem:[#allocation2 + $0x50] sm:$0xf] %v4609
    %4674 = vst [vmem:[#allocation2 + $0x54] sm:$0xff] %v4610
    %4675 = vst [vmem:[#allocation2 + $0x5c] sm:$0xf] %v4611
    %4676 = vst [vmem:[#allocation2 + $0x60] sm:$0xff] %v4612
    %4677 = vst [vmem:[#allocation2 + $0x68] sm:$0xf] %v4613
    %4678 = vst [vmem:[#allocation2 + $0x6c] sm:$0xff] %v4614
    %4679 = vst [vmem:[#allocation2 + $0x74] sm:$0xf] %v4615
    %4680 = vst [vmem:[#allocation2 + $0x78] sm:$0xff] %v4616
    %4681 = vst [vmem:[#allocation2 + $0x80] sm:$0xf] %v4617
    %4682 = vst [vmem:[#allocation2 + $0x84] sm:$0xff] %v4618
    %4683 = vst [vmem:[#allocation2 + $0x8c] sm:$0xf] %v4619
    %4684 = vst [vmem:[#allocation2 + $0x90] sm:$0xff] %v4620
    %4685 = vst [vmem:[#allocation2 + $0x98] sm:$0xf] %v4621
    %4686 = vst [vmem:[#allocation2 + $0x9c] sm:$0xff] %v4622
    %4687 = vst [vmem:[#allocation2 + $0xa4] sm:$0xf] %v4623
    %4688 = vst [vmem:[#allocation2 + $0xa8] sm:$0xff] %v4624
    %4689 = vst [vmem:[#allocation2 + $0xb0] sm:$0xf] %v4625
    %4690 = vst [vmem:[#allocation2 + $0xb4] sm:$0xff] %v4626
    %4691 = vst [vmem:[#allocation2 + $0xbc] sm:$0xf] %v4627
    %v4692 = vld [vmem:[#allocation2] sm:$0xf]
    %v4693 = vld [vmem:[#allocation2 + $0xc] sm:$0xf]
    %v4694 = vld [vmem:[#allocation2 + $0x18] sm:$0xf]
    %v4695 = vld [vmem:[#allocation2 + $0x24] sm:$0xf]
    %v4696 = vld [vmem:[#allocation2 + $0x30] sm:$0xf]
    %v4697 = vld [vmem:[#allocation2 + $0x3c] sm:$0xf]
    %v4698 = vld [vmem:[#allocation2 + $0x48] sm:$0xf]
    %v4699 = vld [vmem:[#allocation2 + $0x54] sm:$0xf]
    %v4700 = vld [vmem:[#allocation2 + $0x60] sm:$0xf]
    %v4701 = vld [vmem:[#allocation2 + $0x6c] sm:$0xf]
    %v4702 = vld [vmem:[#allocation2 + $0x78] sm:$0xf]
    %v4703 = vld [vmem:[#allocation2 + $0x84] sm:$0xf]
    %v4704 = vld [vmem:[#allocation2 + $0x90] sm:$0xf]
    %v4705 = vld [vmem:[#allocation2 + $0x9c] sm:$0xf]
    %v4706 = vld [vmem:[#allocation2 + $0xa8] sm:$0xf]
    %v4707 = vld [vmem:[#allocation2 + $0xb4] sm:$0xf]
    %v4708 = vld [vmem:[#allocation2 + $0x4] sm:$0xf]
    %v4709 = vld [vmem:[#allocation2 + $0x10] sm:$0xf]
    %v4710 = vld [vmem:[#allocation2 + $0x1c] sm:$0xf]
    %v4711 = vld [vmem:[#allocation2 + $0x28] sm:$0xf]
    %v4712 = vld [vmem:[#allocation2 + $0x34] sm:$0xf]
    %v4713 = vld [vmem:[#allocation2 + $0x40] sm:$0xf]
    %v4714 = vld [vmem:[#allocation2 + $0x4c] sm:$0xf]
    %v4715 = vld [vmem:[#allocation2 + $0x58] sm:$0xf]
    %v4716 = vld [vmem:[#allocation2 + $0x64] sm:$0xf]
    %v4717 = vld [vmem:[#allocation2 + $0x70] sm:$0xf]
    %v4718 = vld [vmem:[#allocation2 + $0x7c] sm:$0xf]
    %v4719 = vld [vmem:[#allocation2 + $0x88] sm:$0xf]
    %v4720 = vld [vmem:[#allocation2 + $0x94] sm:$0xf]
    %v4721 = vld [vmem:[#allocation2 + $0xa0] sm:$0xf]
    %v4722 = vld [vmem:[#allocation2 + $0xac] sm:$0xf]
    %v4723 = vld [vmem:[#allocation2 + $0xb8] sm:$0xf]
    %v4724 = vld [vmem:[#allocation2 + $0x8] sm:$0xf]
    %v4725 = vld [vmem:[#allocation2 + $0x14] sm:$0xf]
    %v4726 = vld [vmem:[#allocation2 + $0x20] sm:$0xf]
    %v4727 = vld [vmem:[#allocation2 + $0x2c] sm:$0xf]
    %v4728 = vld [vmem:[#allocation2 + $0x38] sm:$0xf]
    %v4729 = vld [vmem:[#allocation2 + $0x44] sm:$0xf]
    %v4730 = vld [vmem:[#allocation2 + $0x50] sm:$0xf]
    %v4731 = vld [vmem:[#allocation2 + $0x5c] sm:$0xf]
    %v4732 = vld [vmem:[#allocation2 + $0x68] sm:$0xf]
    %v4733 = vld [vmem:[#allocation2 + $0x74] sm:$0xf]
    %v4734 = vld [vmem:[#allocation2 + $0x80] sm:$0xf]
    %v4735 = vld [vmem:[#allocation2 + $0x8c] sm:$0xf]
    %v4736 = vld [vmem:[#allocation2 + $0x98] sm:$0xf]
    %v4737 = vld [vmem:[#allocation2 + $0xa4] sm:$0xf]
    %v4738 = vld [vmem:[#allocation2 + $0xb0] sm:$0xf]
    %v4739 = vld [vmem:[#allocation2 + $0xbc] sm:$0xf]
    %v4756 = vunpack.c.l.b16 %v4692
    %v4757 = vunpack.c.l.b16 %v4693
    %v4758 = vunpack.c.l.b16 %v4694
    %v4759 = vunpack.c.l.b16 %v4695
    %v4760 = vunpack.c.l.b16 %v4696
    %v4761 = vunpack.c.l.b16 %v4697
    %v4762 = vunpack.c.l.b16 %v4698
    %v4763 = vunpack.c.l.b16 %v4699
    %v4764 = vunpack.c.l.b16 %v4700
    %v4765 = vunpack.c.l.b16 %v4701
    %v4766 = vunpack.c.l.b16 %v4702
    %v4767 = vunpack.c.l.b16 %v4703
    %v4768 = vunpack.c.l.b16 %v4704
    %v4769 = vunpack.c.l.b16 %v4705
    %v4770 = vunpack.c.l.b16 %v4706
    %v4771 = vunpack.c.l.b16 %v4707
    %v4772 = vpack.c.b16 %v4757, %v4756
    %v4773 = vpack.c.b16 %v4759, %v4758
    %v4774 = vpack.c.b16 %v4761, %v4760
    %v4775 = vpack.c.b16 %v4763, %v4762
    %v4776 = vpack.c.b16 %v4765, %v4764
    %v4777 = vpack.c.b16 %v4767, %v4766
    %v4778 = vpack.c.b16 %v4769, %v4768
    %v4779 = vpack.c.b16 %v4771, %v4770
    %v4796 = vunpack.c.l.b16 %v4708
    %v4797 = vunpack.c.l.b16 %v4709
    %v4798 = vunpack.c.l.b16 %v4710
    %v4799 = vunpack.c.l.b16 %v4711
    %v4800 = vunpack.c.l.b16 %v4712
    %v4801 = vunpack.c.l.b16 %v4713
    %v4802 = vunpack.c.l.b16 %v4714
    %v4803 = vunpack.c.l.b16 %v4715
    %v4804 = vunpack.c.l.b16 %v4716
    %v4805 = vunpack.c.l.b16 %v4717
    %v4806 = vunpack.c.l.b16 %v4718
    %v4807 = vunpack.c.l.b16 %v4719
    %v4808 = vunpack.c.l.b16 %v4720
    %v4809 = vunpack.c.l.b16 %v4721
    %v4810 = vunpack.c.l.b16 %v4722
    %v4811 = vunpack.c.l.b16 %v4723
    %v4812 = vpack.c.b16 %v4797, %v4796
    %v4813 = vpack.c.b16 %v4799, %v4798
    %v4814 = vpack.c.b16 %v4801, %v4800
    %v4815 = vpack.c.b16 %v4803, %v4802
    %v4816 = vpack.c.b16 %v4805, %v4804
    %v4817 = vpack.c.b16 %v4807, %v4806
    %v4818 = vpack.c.b16 %v4809, %v4808
    %v4819 = vpack.c.b16 %v4811, %v4810
    %v4821 = vsel %vm980, %v4772, 0
    %v4824 = vsel %vm980, %v4773, 0
    %v4827 = vsel %vm980, %v4774, 0
    %v4830 = vsel %vm980, %v4775, 0
    %v4833 = vsel %vm980, %v4776, 0
    %v4836 = vsel %vm980, %v4777, 0
    %v4839 = vsel %vm980, %v4778, 0
    %v4842 = vsel %vm980, %v4779, 0
    %v4845 = vsel %vm980, %v4812, 0
    %v4848 = vsel %vm980, %v4813, 0
    %v4851 = vsel %vm980, %v4814, 0
    %v4854 = vsel %vm980, %v4815, 0
    %v4857 = vsel %vm980, %v4816, 0
    %v4860 = vsel %vm980, %v4817, 0
    %v4863 = vsel %vm980, %v4818, 0
    %v4866 = vsel %vm980, %v4819, 0
    %4868 = vmatprep.subr.bf16.mxu0 0
    %4869 = vmatpush1.bf16.xpose.msra.mxu0 %v4866
    %4870 = vmatprep.subr.bf16.mxu0 0
    %4871 = vmatpush1.bf16.xpose.msra.mxu0 %v4863
    %4872 = vmatprep.subr.bf16.mxu0 0
    %4873 = vmatpush1.bf16.xpose.msra.mxu0 %v4860
    %4874 = vmatprep.subr.bf16.mxu0 0
    %4875 = vmatpush1.bf16.xpose.msra.mxu0 %v4857
    %4876 = vmatprep.subr.bf16.mxu0 0
    %4877 = vmatpush1.bf16.xpose.msra.mxu0 %v4854
    %4878 = vmatprep.subr.bf16.mxu0 0
    %4879 = vmatpush1.bf16.xpose.msra.mxu0 %v4851
    %4880 = vmatprep.subr.bf16.mxu0 0
    %4881 = vmatpush1.bf16.xpose.msra.mxu0 %v4848
    %4882 = vmatprep.subr.bf16.mxu0 0
    %4883 = vmatpush1.bf16.xpose.msra.mxu0 %v4845
    %4884 = vmatprep.subr.bf16.mxu0 0
    %4885 = vmatpush2.bf16.xpose.msra.mxu0 0
    %4886 = vmatprep.subr.bf16.mxu0 0
    %4887 = vmatpush2.bf16.xpose.msra.mxu0 0
    %4888 = vmatprep.subr.bf16.mxu0 0
    %4889 = vmatpush2.bf16.xpose.msra.mxu0 0
    %4890 = vmatprep.subr.bf16.mxu0 0
    %4891 = vmatpush2.bf16.xpose.msra.mxu0 0
    %4892 = vmatprep.subr.bf16.mxu0 0
    %4893 = vmatpush2.bf16.xpose.msra.mxu0 0
    %4894 = vmatprep.subr.bf16.mxu0 0
    %4895 = vmatpush2.bf16.xpose.msra.mxu0 0
    %4896 = vmatprep.subr.bf16.mxu0 0
    %4897 = vmatpush2.bf16.xpose.msra.mxu0 0
    %4898 = vmatprep.subr.bf16.mxu0 0
    %4899 = vmatpush2.bf16.xpose.msra.mxu0 0
    %4900 = vmatprep.mubr.bf16.mxu0 0
    %4901 = vmatmul.mubr.bf16.gmra.mxu0 %v4821
    %v4902 = vpop.f32.mrf.mxu0
    %v4903 = vadd.f32 %v249, %v4902
    %v4904 = vpop.f32.mrf.mxu0
    %v4905 = vpop.f32.mrf.mxu0
    %v4906 = vadd.f32 %v250, %v4905
    %v4907 = vpop.f32.mrf.mxu0
    %4908 = vmatprep.mubr.bf16.mxu0 0
    %4909 = vmatmul.mubr.bf16.gmra.mxu0 %v4824
    %v4910 = vpop.f32.mrf.mxu0
    %v4911 = vadd.f32 %v251, %v4910
    %v4912 = vpop.f32.mrf.mxu0
    %v4913 = vpop.f32.mrf.mxu0
    %v4914 = vadd.f32 %v252, %v4913
    %v4915 = vpop.f32.mrf.mxu0
    %4916 = vmatprep.mubr.bf16.mxu0 0
    %4917 = vmatmul.mubr.bf16.gmra.mxu0 %v4827
    %v4918 = vpop.f32.mrf.mxu0
    %v4919 = vadd.f32 %v253, %v4918
    %v4920 = vpop.f32.mrf.mxu0
    %v4921 = vpop.f32.mrf.mxu0
    %v4922 = vadd.f32 %v254, %v4921
    %v4923 = vpop.f32.mrf.mxu0
    %4924 = vmatprep.mubr.bf16.mxu0 0
    %4925 = vmatmul.mubr.bf16.gmra.mxu0 %v4830
    %v4926 = vpop.f32.mrf.mxu0
    %v4927 = vadd.f32 %v255, %v4926
    %v4928 = vpop.f32.mrf.mxu0
    %v4929 = vpop.f32.mrf.mxu0
    %v4930 = vadd.f32 %v256, %v4929
    %v4931 = vpop.f32.mrf.mxu0
    %4932 = vmatprep.mubr.bf16.mxu0 0
    %4933 = vmatmul.mubr.bf16.gmra.mxu0 %v4833
    %v4934 = vpop.f32.mrf.mxu0
    %v4935 = vadd.f32 %v257, %v4934
    %v4936 = vpop.f32.mrf.mxu0
    %v4937 = vpop.f32.mrf.mxu0
    %v4938 = vadd.f32 %v258, %v4937
    %v4939 = vpop.f32.mrf.mxu0
    %4940 = vmatprep.mubr.bf16.mxu0 0
    %4941 = vmatmul.mubr.bf16.gmra.mxu0 %v4836
    %v4942 = vpop.f32.mrf.mxu0
    %v4943 = vadd.f32 %v259, %v4942
    %v4944 = vpop.f32.mrf.mxu0
    %v4945 = vpop.f32.mrf.mxu0
    %v4946 = vadd.f32 %v260, %v4945
    %v4947 = vpop.f32.mrf.mxu0
    %4948 = vmatprep.mubr.bf16.mxu0 0
    %4949 = vmatmul.mubr.bf16.gmra.mxu0 %v4839
    %v4950 = vpop.f32.mrf.mxu0
    %v4951 = vadd.f32 %v261, %v4950
    %v4952 = vpop.f32.mrf.mxu0
    %v4953 = vpop.f32.mrf.mxu0
    %v4954 = vadd.f32 %v262, %v4953
    %v4955 = vpop.f32.mrf.mxu0
    %4956 = vmatprep.mubr.bf16.mxu0 0
    %4957 = vmatmul.mubr.bf16.gmra.mxu0 %v4842
    %v4958 = vpop.f32.mrf.mxu0
    %v4959 = vadd.f32 %v263, %v4958
    %v4960 = vpop.f32.mrf.mxu0
    %v4961 = vpop.f32.mrf.mxu0
    %v4962 = vadd.f32 %v264, %v4961
    %v4963 = vpop.f32.mrf.mxu0
    %4964 = vdwg.mxu0
    %4965 = vmax.xlane.f32.xlu0 %v4903
    %v4966 = vpop.xlane.xlu0 %4965
    %4967 = vmax.xlane.f32.xlu0 %v4906
    %v4968 = vpop.xlane.xlu0 %4967
    %4969 = vmax.xlane.f32.xlu0 %v4911
    %v4970 = vpop.xlane.xlu0 %4969
    %4971 = vmax.xlane.f32.xlu0 %v4914
    %v4972 = vpop.xlane.xlu0 %4971
    %4973 = vmax.xlane.f32.xlu0 %v4919
    %v4974 = vpop.xlane.xlu0 %4973
    %4975 = vmax.xlane.f32.xlu0 %v4922
    %v4976 = vpop.xlane.xlu0 %4975
    %4977 = vmax.xlane.f32.xlu0 %v4927
    %v4978 = vpop.xlane.xlu0 %4977
    %4979 = vmax.xlane.f32.xlu0 %v4930
    %v4980 = vpop.xlane.xlu0 %4979
    %4981 = vmax.xlane.f32.xlu0 %v4935
    %v4982 = vpop.xlane.xlu0 %4981
    %4983 = vmax.xlane.f32.xlu0 %v4938
    %v4984 = vpop.xlane.xlu0 %4983
    %4985 = vmax.xlane.f32.xlu0 %v4943
    %v4986 = vpop.xlane.xlu0 %4985
    %4987 = vmax.xlane.f32.xlu0 %v4946
    %v4988 = vpop.xlane.xlu0 %4987
    %4989 = vmax.xlane.f32.xlu0 %v4951
    %v4990 = vpop.xlane.xlu0 %4989
    %4991 = vmax.xlane.f32.xlu0 %v4954
    %v4992 = vpop.xlane.xlu0 %4991
    %4993 = vmax.xlane.f32.xlu0 %v4959
    %v4994 = vpop.xlane.xlu0 %4993
    %4995 = vmax.xlane.f32.xlu0 %v4962
    %v4996 = vpop.xlane.xlu0 %4995
    %v4997 = vsub.f32 %v4903, %v4966
    %v4998 = vsub.f32 %v4906, %v4968
    %v4999 = vsub.f32 %v4911, %v4970
    %v5000 = vsub.f32 %v4914, %v4972
    %v5001 = vsub.f32 %v4919, %v4974
    %v5002 = vsub.f32 %v4922, %v4976
    %v5003 = vsub.f32 %v4927, %v4978
    %v5004 = vsub.f32 %v4930, %v4980
    %v5005 = vsub.f32 %v4935, %v4982
    %v5006 = vsub.f32 %v4938, %v4984
    %v5007 = vsub.f32 %v4943, %v4986
    %v5008 = vsub.f32 %v4946, %v4988
    %v5009 = vsub.f32 %v4951, %v4990
    %v5010 = vsub.f32 %v4954, %v4992
    %v5011 = vsub.f32 %v4959, %v4994
    %v5012 = vsub.f32 %v4962, %v4996
    %v5013 = vmul.f32 %v4997, 1.442695
    %v5014 = vpow.pop %v5013
    %v5015 = vmul.f32 %v4998, 1.442695
    %v5016 = vpow.pop %v5015
    %v5017 = vmul.f32 %v4999, 1.442695
    %v5018 = vpow.pop %v5017
    %v5019 = vmul.f32 %v5000, 1.442695
    %v5020 = vpow.pop %v5019
    %v5021 = vmul.f32 %v5001, 1.442695
    %v5022 = vpow.pop %v5021
    %v5023 = vmul.f32 %v5002, 1.442695
    %v5024 = vpow.pop %v5023
    %v5025 = vmul.f32 %v5003, 1.442695
    %v5026 = vpow.pop %v5025
    %v5027 = vmul.f32 %v5004, 1.442695
    %v5028 = vpow.pop %v5027
    %v5029 = vmul.f32 %v5005, 1.442695
    %v5030 = vpow.pop %v5029
    %v5031 = vmul.f32 %v5006, 1.442695
    %v5032 = vpow.pop %v5031
    %v5033 = vmul.f32 %v5007, 1.442695
    %v5034 = vpow.pop %v5033
    %v5035 = vmul.f32 %v5008, 1.442695
    %v5036 = vpow.pop %v5035
    %v5037 = vmul.f32 %v5009, 1.442695
    %v5038 = vpow.pop %v5037
    %v5039 = vmul.f32 %v5010, 1.442695
    %v5040 = vpow.pop %v5039
    %v5041 = vmul.f32 %v5011, 1.442695
    %v5042 = vpow.pop %v5041
    %v5043 = vmul.f32 %v5012, 1.442695
    %v5044 = vpow.pop %v5043
    %5045 = vadd.xlane.f32.xlu0 %v5014
    %v5046 = vpop.xlane.xlu0 %5045
    %5047 = vadd.xlane.f32.xlu0 %v5016
    %v5048 = vpop.xlane.xlu0 %5047
    %5049 = vadd.xlane.f32.xlu0 %v5018
    %v5050 = vpop.xlane.xlu0 %5049
    %5051 = vadd.xlane.f32.xlu0 %v5020
    %v5052 = vpop.xlane.xlu0 %5051
    %5053 = vadd.xlane.f32.xlu0 %v5022
    %v5054 = vpop.xlane.xlu0 %5053
    %5055 = vadd.xlane.f32.xlu0 %v5024
    %v5056 = vpop.xlane.xlu0 %5055
    %5057 = vadd.xlane.f32.xlu0 %v5026
    %v5058 = vpop.xlane.xlu0 %5057
    %5059 = vadd.xlane.f32.xlu0 %v5028
    %v5060 = vpop.xlane.xlu0 %5059
    %5061 = vadd.xlane.f32.xlu0 %v5030
    %v5062 = vpop.xlane.xlu0 %5061
    %5063 = vadd.xlane.f32.xlu0 %v5032
    %v5064 = vpop.xlane.xlu0 %5063
    %5065 = vadd.xlane.f32.xlu0 %v5034
    %v5066 = vpop.xlane.xlu0 %5065
    %5067 = vadd.xlane.f32.xlu0 %v5036
    %v5068 = vpop.xlane.xlu0 %5067
    %5069 = vadd.xlane.f32.xlu0 %v5038
    %v5070 = vpop.xlane.xlu0 %5069
    %5071 = vadd.xlane.f32.xlu0 %v5040
    %v5072 = vpop.xlane.xlu0 %5071
    %5073 = vadd.xlane.f32.xlu0 %v5042
    %v5074 = vpop.xlane.xlu0 %5073
    %5075 = vadd.xlane.f32.xlu0 %v5044
    %v5076 = vpop.xlane.xlu0 %5075
    %v5077 = vrcp.pop %v5046
    %v5078 = vrcp.pop %v5048
    %v5079 = vrcp.pop %v5050
    %v5080 = vrcp.pop %v5052
    %v5081 = vrcp.pop %v5054
    %v5082 = vrcp.pop %v5056
    %v5083 = vrcp.pop %v5058
    %v5084 = vrcp.pop %v5060
    %v5085 = vrcp.pop %v5062
    %v5086 = vrcp.pop %v5064
    %v5087 = vrcp.pop %v5066
    %v5088 = vrcp.pop %v5068
    %v5089 = vrcp.pop %v5070
    %v5090 = vrcp.pop %v5072
    %v5091 = vrcp.pop %v5074
    %v5092 = vrcp.pop %v5076
    %v5093 = vmul.f32 %v5014, %v5077
    %v5094 = vmul.f32 %v5016, %v5078
    %v5095 = vmul.f32 %v5018, %v5079
    %v5096 = vmul.f32 %v5020, %v5080
    %v5097 = vmul.f32 %v5022, %v5081
    %v5098 = vmul.f32 %v5024, %v5082
    %v5099 = vmul.f32 %v5026, %v5083
    %v5100 = vmul.f32 %v5028, %v5084
    %v5101 = vmul.f32 %v5030, %v5085
    %v5102 = vmul.f32 %v5032, %v5086
    %v5103 = vmul.f32 %v5034, %v5087
    %v5104 = vmul.f32 %v5036, %v5088
    %v5105 = vmul.f32 %v5038, %v5089
    %v5106 = vmul.f32 %v5040, %v5090
    %v5107 = vmul.f32 %v5042, %v5091
    %v5108 = vmul.f32 %v5044, %v5092
    %v5109 = vpack.c.bf16 %v5094, %v5093
    %v5110 = vpack.c.bf16 %v5096, %v5095
    %v5111 = vpack.c.bf16 %v5098, %v5097
    %v5112 = vpack.c.bf16 %v5100, %v5099
    %v5113 = vpack.c.bf16 %v5102, %v5101
    %v5114 = vpack.c.bf16 %v5104, %v5103
    %v5115 = vpack.c.bf16 %v5106, %v5105
    %v5116 = vpack.c.bf16 %v5108, %v5107
    %v5133 = vunpack.c.l.b16 %v4724
    %v5134 = vunpack.c.l.b16 %v4725
    %v5135 = vunpack.c.l.b16 %v4726
    %v5136 = vunpack.c.l.b16 %v4727
    %v5137 = vunpack.c.l.b16 %v4728
    %v5138 = vunpack.c.l.b16 %v4729
    %v5139 = vunpack.c.l.b16 %v4730
    %v5140 = vunpack.c.l.b16 %v4731
    %v5141 = vunpack.c.l.b16 %v4732
    %v5142 = vunpack.c.l.b16 %v4733
    %v5143 = vunpack.c.l.b16 %v4734
    %v5144 = vunpack.c.l.b16 %v4735
    %v5145 = vunpack.c.l.b16 %v4736
    %v5146 = vunpack.c.l.b16 %v4737
    %v5147 = vunpack.c.l.b16 %v4738
    %v5148 = vunpack.c.l.b16 %v4739
    %v5149 = vpack.c.b16 %v5134, %v5133
    %v5150 = vpack.c.b16 %v5136, %v5135
    %v5151 = vpack.c.b16 %v5138, %v5137
    %v5152 = vpack.c.b16 %v5140, %v5139
    %v5153 = vpack.c.b16 %v5142, %v5141
    %v5154 = vpack.c.b16 %v5144, %v5143
    %v5155 = vpack.c.b16 %v5146, %v5145
    %v5156 = vpack.c.b16 %v5148, %v5147
    %5165 = vmatprep.subr.bf16.mxu0 0
    %5166 = vmatpush1.bf16.msra.mxu0 %v5156
    %5167 = vmatprep.subr.bf16.mxu0 0
    %5168 = vmatpush1.bf16.msra.mxu0 %v5155
    %5169 = vmatprep.subr.bf16.mxu0 0
    %5170 = vmatpush1.bf16.msra.mxu0 %v5154
    %5171 = vmatprep.subr.bf16.mxu0 0
    %5172 = vmatpush1.bf16.msra.mxu0 %v5153
    %5173 = vmatprep.subr.bf16.mxu0 0
    %5174 = vmatpush1.bf16.msra.mxu0 %v5152
    %5175 = vmatprep.subr.bf16.mxu0 0
    %5176 = vmatpush1.bf16.msra.mxu0 %v5151
    %5177 = vmatprep.subr.bf16.mxu0 0
    %5178 = vmatpush1.bf16.msra.mxu0 %v5150
    %5179 = vmatprep.subr.bf16.mxu0 0
    %5180 = vmatpush1.bf16.msra.mxu0 %v5149
    %5181 = vmatprep.subr.bf16.mxu0 0
    %5182 = vmatpush2.bf16.msra.mxu0 0
    %5183 = vmatprep.subr.bf16.mxu0 0
    %5184 = vmatpush2.bf16.msra.mxu0 0
    %5185 = vmatprep.subr.bf16.mxu0 0
    %5186 = vmatpush2.bf16.msra.mxu0 0
    %5187 = vmatprep.subr.bf16.mxu0 0
    %5188 = vmatpush2.bf16.msra.mxu0 0
    %5189 = vmatprep.subr.bf16.mxu0 0
    %5190 = vmatpush2.bf16.msra.mxu0 0
    %5191 = vmatprep.subr.bf16.mxu0 0
    %5192 = vmatpush2.bf16.msra.mxu0 0
    %5193 = vmatprep.subr.bf16.mxu0 0
    %5194 = vmatpush2.bf16.msra.mxu0 0
    %5195 = vmatprep.subr.bf16.mxu0 0
    %5196 = vmatpush2.bf16.msra.mxu0 0
    %5197 = vmatprep.mubr.bf16.mxu0 0
    %5198 = vmatmul.mubr.bf16.gmra.mxu0 %v5109
    %v5199 = vpop.f32.mrf.mxu0
    %v5200 = vadd.f32 0.0, %v5199
    %v5201 = vpop.f32.mrf.mxu0
    %v5202 = vpop.f32.mrf.mxu0
    %v5203 = vadd.f32 0.0, %v5202
    %v5204 = vpop.f32.mrf.mxu0
    %5205 = vmatprep.mubr.bf16.mxu0 0
    %5206 = vmatmul.mubr.bf16.gmra.mxu0 %v5110
    %v5207 = vpop.f32.mrf.mxu0
    %v5208 = vadd.f32 0.0, %v5207
    %v5209 = vpop.f32.mrf.mxu0
    %v5210 = vpop.f32.mrf.mxu0
    %v5211 = vadd.f32 0.0, %v5210
    %v5212 = vpop.f32.mrf.mxu0
    %5213 = vmatprep.mubr.bf16.mxu0 0
    %5214 = vmatmul.mubr.bf16.gmra.mxu0 %v5111
    %v5215 = vpop.f32.mrf.mxu0
    %v5216 = vadd.f32 0.0, %v5215
    %v5217 = vpop.f32.mrf.mxu0
    %v5218 = vpop.f32.mrf.mxu0
    %v5219 = vadd.f32 0.0, %v5218
    %v5220 = vpop.f32.mrf.mxu0
    %5221 = vmatprep.mubr.bf16.mxu0 0
    %5222 = vmatmul.mubr.bf16.gmra.mxu0 %v5112
    %v5223 = vpop.f32.mrf.mxu0
    %v5224 = vadd.f32 0.0, %v5223
    %v5225 = vpop.f32.mrf.mxu0
    %v5226 = vpop.f32.mrf.mxu0
    %v5227 = vadd.f32 0.0, %v5226
    %v5228 = vpop.f32.mrf.mxu0
    %5229 = vmatprep.mubr.bf16.mxu0 0
    %5230 = vmatmul.mubr.bf16.gmra.mxu0 %v5113
    %v5231 = vpop.f32.mrf.mxu0
    %v5232 = vadd.f32 0.0, %v5231
    %v5233 = vpop.f32.mrf.mxu0
    %v5234 = vpop.f32.mrf.mxu0
    %v5235 = vadd.f32 0.0, %v5234
    %v5236 = vpop.f32.mrf.mxu0
    %5237 = vmatprep.mubr.bf16.mxu0 0
    %5238 = vmatmul.mubr.bf16.gmra.mxu0 %v5114
    %v5239 = vpop.f32.mrf.mxu0
    %v5240 = vadd.f32 0.0, %v5239
    %v5241 = vpop.f32.mrf.mxu0
    %v5242 = vpop.f32.mrf.mxu0
    %v5243 = vadd.f32 0.0, %v5242
    %v5244 = vpop.f32.mrf.mxu0
    %5245 = vmatprep.mubr.bf16.mxu0 0
    %5246 = vmatmul.mubr.bf16.gmra.mxu0 %v5115
    %v5247 = vpop.f32.mrf.mxu0
    %v5248 = vadd.f32 0.0, %v5247
    %v5249 = vpop.f32.mrf.mxu0
    %v5250 = vpop.f32.mrf.mxu0
    %v5251 = vadd.f32 0.0, %v5250
    %v5252 = vpop.f32.mrf.mxu0
    %5253 = vmatprep.mubr.bf16.mxu0 0
    %5254 = vmatmul.mubr.bf16.gmra.mxu0 %v5116
    %v5255 = vpop.f32.mrf.mxu0
    %v5256 = vadd.f32 0.0, %v5255
    %v5257 = vpop.f32.mrf.mxu0
    %v5258 = vpop.f32.mrf.mxu0
    %v5259 = vadd.f32 0.0, %v5258
    %v5260 = vpop.f32.mrf.mxu0
    %5261 = vdwg.mxu0
    %v5262 = vpack.c.bf16 %v5203, %v5200
    %v5263 = vpack.c.bf16 %v5211, %v5208
    %v5264 = vpack.c.bf16 %v5219, %v5216
    %v5265 = vpack.c.bf16 %v5227, %v5224
    %v5266 = vpack.c.bf16 %v5235, %v5232
    %v5267 = vpack.c.bf16 %v5243, %v5240
    %v5268 = vpack.c.bf16 %v5251, %v5248
    %v5269 = vpack.c.bf16 %v5259, %v5256
    %5270 = vrot.lane.b32.xlu0 %v4772, 64
    %v5271 = vpop.permute.xlu0 %5270
    %5272 = vrot.lane.b32.xlu0 %v4773, 64
    %v5273 = vpop.permute.xlu0 %5272
    %5274 = vrot.lane.b32.xlu0 %v4774, 64
    %v5275 = vpop.permute.xlu0 %5274
    %5276 = vrot.lane.b32.xlu0 %v4775, 64
    %v5277 = vpop.permute.xlu0 %5276
    %5278 = vrot.lane.b32.xlu0 %v4776, 64
    %v5279 = vpop.permute.xlu0 %5278
    %5280 = vrot.lane.b32.xlu0 %v4777, 64
    %v5281 = vpop.permute.xlu0 %5280
    %5282 = vrot.lane.b32.xlu0 %v4778, 64
    %v5283 = vpop.permute.xlu0 %5282
    %5284 = vrot.lane.b32.xlu0 %v4779, 64
    %v5285 = vpop.permute.xlu0 %5284
    %5286 = vrot.lane.b32.xlu0 %v4812, 64
    %v5287 = vpop.permute.xlu0 %5286
    %5288 = vrot.lane.b32.xlu0 %v4813, 64
    %v5289 = vpop.permute.xlu0 %5288
    %5290 = vrot.lane.b32.xlu0 %v4814, 64
    %v5291 = vpop.permute.xlu0 %5290
    %5292 = vrot.lane.b32.xlu0 %v4815, 64
    %v5293 = vpop.permute.xlu0 %5292
    %5294 = vrot.lane.b32.xlu0 %v4816, 64
    %v5295 = vpop.permute.xlu0 %5294
    %5296 = vrot.lane.b32.xlu0 %v4817, 64
    %v5297 = vpop.permute.xlu0 %5296
    %5298 = vrot.lane.b32.xlu0 %v4818, 64
    %v5299 = vpop.permute.xlu0 %5298
    %5300 = vrot.lane.b32.xlu0 %v4819, 64
    %v5301 = vpop.permute.xlu0 %5300
    %v5303 = vsel %vm980, %v5271, 0
    %v5306 = vsel %vm980, %v5273, 0
    %v5309 = vsel %vm980, %v5275, 0
    %v5312 = vsel %vm980, %v5277, 0
    %v5315 = vsel %vm980, %v5279, 0
    %v5318 = vsel %vm980, %v5281, 0
    %v5321 = vsel %vm980, %v5283, 0
    %v5324 = vsel %vm980, %v5285, 0
    %v5327 = vsel %vm980, %v5287, 0
    %v5330 = vsel %vm980, %v5289, 0
    %v5333 = vsel %vm980, %v5291, 0
    %v5336 = vsel %vm980, %v5293, 0
    %v5339 = vsel %vm980, %v5295, 0
    %v5342 = vsel %vm980, %v5297, 0
    %v5345 = vsel %vm980, %v5299, 0
    %v5348 = vsel %vm980, %v5301, 0
    %5350 = vmatprep.subr.bf16.mxu0 0
    %5351 = vmatpush1.bf16.xpose.msra.mxu0 %v5348
    %5352 = vmatprep.subr.bf16.mxu0 0
    %5353 = vmatpush1.bf16.xpose.msra.mxu0 %v5345
    %5354 = vmatprep.subr.bf16.mxu0 0
    %5355 = vmatpush1.bf16.xpose.msra.mxu0 %v5342
    %5356 = vmatprep.subr.bf16.mxu0 0
    %5357 = vmatpush1.bf16.xpose.msra.mxu0 %v5339
    %5358 = vmatprep.subr.bf16.mxu0 0
    %5359 = vmatpush1.bf16.xpose.msra.mxu0 %v5336
    %5360 = vmatprep.subr.bf16.mxu0 0
    %5361 = vmatpush1.bf16.xpose.msra.mxu0 %v5333
    %5362 = vmatprep.subr.bf16.mxu0 0
    %5363 = vmatpush1.bf16.xpose.msra.mxu0 %v5330
    %5364 = vmatprep.subr.bf16.mxu0 0
    %5365 = vmatpush1.bf16.xpose.msra.mxu0 %v5327
    %5366 = vmatprep.subr.bf16.mxu0 0
    %5367 = vmatpush2.bf16.xpose.msra.mxu0 0
    %5368 = vmatprep.subr.bf16.mxu0 0
    %5369 = vmatpush2.bf16.xpose.msra.mxu0 0
    %5370 = vmatprep.subr.bf16.mxu0 0
    %5371 = vmatpush2.bf16.xpose.msra.mxu0 0
    %5372 = vmatprep.subr.bf16.mxu0 0
    %5373 = vmatpush2.bf16.xpose.msra.mxu0 0
    %5374 = vmatprep.subr.bf16.mxu0 0
    %5375 = vmatpush2.bf16.xpose.msra.mxu0 0
    %5376 = vmatprep.subr.bf16.mxu0 0
    %5377 = vmatpush2.bf16.xpose.msra.mxu0 0
    %5378 = vmatprep.subr.bf16.mxu0 0
    %5379 = vmatpush2.bf16.xpose.msra.mxu0 0
    %5380 = vmatprep.subr.bf16.mxu0 0
    %5381 = vmatpush2.bf16.xpose.msra.mxu0 0
    %5382 = vmatprep.mubr.bf16.mxu0 0
    %5383 = vmatmul.mubr.bf16.gmra.mxu0 %v5303
    %v5384 = vpop.f32.mrf.mxu0
    %v5385 = vadd.f32 %v249, %v5384
    %v5386 = vpop.f32.mrf.mxu0
    %v5387 = vpop.f32.mrf.mxu0
    %v5388 = vadd.f32 %v250, %v5387
    %v5389 = vpop.f32.mrf.mxu0
    %5390 = vmatprep.mubr.bf16.mxu0 0
    %5391 = vmatmul.mubr.bf16.gmra.mxu0 %v5306
    %v5392 = vpop.f32.mrf.mxu0
    %v5393 = vadd.f32 %v251, %v5392
    %v5394 = vpop.f32.mrf.mxu0
    %v5395 = vpop.f32.mrf.mxu0
    %v5396 = vadd.f32 %v252, %v5395
    %v5397 = vpop.f32.mrf.mxu0
    %5398 = vmatprep.mubr.bf16.mxu0 0
    %5399 = vmatmul.mubr.bf16.gmra.mxu0 %v5309
    %v5400 = vpop.f32.mrf.mxu0
    %v5401 = vadd.f32 %v253, %v5400
    %v5402 = vpop.f32.mrf.mxu0
    %v5403 = vpop.f32.mrf.mxu0
    %v5404 = vadd.f32 %v254, %v5403
    %v5405 = vpop.f32.mrf.mxu0
    %5406 = vmatprep.mubr.bf16.mxu0 0
    %5407 = vmatmul.mubr.bf16.gmra.mxu0 %v5312
    %v5408 = vpop.f32.mrf.mxu0
    %v5409 = vadd.f32 %v255, %v5408
    %v5410 = vpop.f32.mrf.mxu0
    %v5411 = vpop.f32.mrf.mxu0
    %v5412 = vadd.f32 %v256, %v5411
    %v5413 = vpop.f32.mrf.mxu0
    %5414 = vmatprep.mubr.bf16.mxu0 0
    %5415 = vmatmul.mubr.bf16.gmra.mxu0 %v5315
    %v5416 = vpop.f32.mrf.mxu0
    %v5417 = vadd.f32 %v257, %v5416
    %v5418 = vpop.f32.mrf.mxu0
    %v5419 = vpop.f32.mrf.mxu0
    %v5420 = vadd.f32 %v258, %v5419
    %v5421 = vpop.f32.mrf.mxu0
    %5422 = vmatprep.mubr.bf16.mxu0 0
    %5423 = vmatmul.mubr.bf16.gmra.mxu0 %v5318
    %v5424 = vpop.f32.mrf.mxu0
    %v5425 = vadd.f32 %v259, %v5424
    %v5426 = vpop.f32.mrf.mxu0
    %v5427 = vpop.f32.mrf.mxu0
    %v5428 = vadd.f32 %v260, %v5427
    %v5429 = vpop.f32.mrf.mxu0
    %5430 = vmatprep.mubr.bf16.mxu0 0
    %5431 = vmatmul.mubr.bf16.gmra.mxu0 %v5321
    %v5432 = vpop.f32.mrf.mxu0
    %v5433 = vadd.f32 %v261, %v5432
    %v5434 = vpop.f32.mrf.mxu0
    %v5435 = vpop.f32.mrf.mxu0
    %v5436 = vadd.f32 %v262, %v5435
    %v5437 = vpop.f32.mrf.mxu0
    %5438 = vmatprep.mubr.bf16.mxu0 0
    %5439 = vmatmul.mubr.bf16.gmra.mxu0 %v5324
    %v5440 = vpop.f32.mrf.mxu0
    %v5441 = vadd.f32 %v263, %v5440
    %v5442 = vpop.f32.mrf.mxu0
    %v5443 = vpop.f32.mrf.mxu0
    %v5444 = vadd.f32 %v264, %v5443
    %v5445 = vpop.f32.mrf.mxu0
    %5446 = vdwg.mxu0
    %5447 = vmax.xlane.f32.xlu0 %v5385
    %v5448 = vpop.xlane.xlu0 %5447
    %5449 = vmax.xlane.f32.xlu0 %v5388
    %v5450 = vpop.xlane.xlu0 %5449
    %5451 = vmax.xlane.f32.xlu0 %v5393
    %v5452 = vpop.xlane.xlu0 %5451
    %5453 = vmax.xlane.f32.xlu0 %v5396
    %v5454 = vpop.xlane.xlu0 %5453
    %5455 = vmax.xlane.f32.xlu0 %v5401
    %v5456 = vpop.xlane.xlu0 %5455
    %5457 = vmax.xlane.f32.xlu0 %v5404
    %v5458 = vpop.xlane.xlu0 %5457
    %5459 = vmax.xlane.f32.xlu0 %v5409
    %v5460 = vpop.xlane.xlu0 %5459
    %5461 = vmax.xlane.f32.xlu0 %v5412
    %v5462 = vpop.xlane.xlu0 %5461
    %5463 = vmax.xlane.f32.xlu0 %v5417
    %v5464 = vpop.xlane.xlu0 %5463
    %5465 = vmax.xlane.f32.xlu0 %v5420
    %v5466 = vpop.xlane.xlu0 %5465
    %5467 = vmax.xlane.f32.xlu0 %v5425
    %v5468 = vpop.xlane.xlu0 %5467
    %5469 = vmax.xlane.f32.xlu0 %v5428
    %v5470 = vpop.xlane.xlu0 %5469
    %5471 = vmax.xlane.f32.xlu0 %v5433
    %v5472 = vpop.xlane.xlu0 %5471
    %5473 = vmax.xlane.f32.xlu0 %v5436
    %v5474 = vpop.xlane.xlu0 %5473
    %5475 = vmax.xlane.f32.xlu0 %v5441
    %v5476 = vpop.xlane.xlu0 %5475
    %5477 = vmax.xlane.f32.xlu0 %v5444
    %v5478 = vpop.xlane.xlu0 %5477
    %v5479 = vsub.f32 %v5385, %v5448
    %v5480 = vsub.f32 %v5388, %v5450
    %v5481 = vsub.f32 %v5393, %v5452
    %v5482 = vsub.f32 %v5396, %v5454
    %v5483 = vsub.f32 %v5401, %v5456
    %v5484 = vsub.f32 %v5404, %v5458
    %v5485 = vsub.f32 %v5409, %v5460
    %v5486 = vsub.f32 %v5412, %v5462
    %v5487 = vsub.f32 %v5417, %v5464
    %v5488 = vsub.f32 %v5420, %v5466
    %v5489 = vsub.f32 %v5425, %v5468
    %v5490 = vsub.f32 %v5428, %v5470
    %v5491 = vsub.f32 %v5433, %v5472
    %v5492 = vsub.f32 %v5436, %v5474
    %v5493 = vsub.f32 %v5441, %v5476
    %v5494 = vsub.f32 %v5444, %v5478
    %v5495 = vmul.f32 %v5479, 1.442695
    %v5496 = vpow.pop %v5495
    %v5497 = vmul.f32 %v5480, 1.442695
    %v5498 = vpow.pop %v5497
    %v5499 = vmul.f32 %v5481, 1.442695
    %v5500 = vpow.pop %v5499
    %v5501 = vmul.f32 %v5482, 1.442695
    %v5502 = vpow.pop %v5501
    %v5503 = vmul.f32 %v5483, 1.442695
    %v5504 = vpow.pop %v5503
    %v5505 = vmul.f32 %v5484, 1.442695
    %v5506 = vpow.pop %v5505
    %v5507 = vmul.f32 %v5485, 1.442695
    %v5508 = vpow.pop %v5507
    %v5509 = vmul.f32 %v5486, 1.442695
    %v5510 = vpow.pop %v5509
    %v5511 = vmul.f32 %v5487, 1.442695
    %v5512 = vpow.pop %v5511
    %v5513 = vmul.f32 %v5488, 1.442695
    %v5514 = vpow.pop %v5513
    %v5515 = vmul.f32 %v5489, 1.442695
    %v5516 = vpow.pop %v5515
    %v5517 = vmul.f32 %v5490, 1.442695
    %v5518 = vpow.pop %v5517
    %v5519 = vmul.f32 %v5491, 1.442695
    %v5520 = vpow.pop %v5519
    %v5521 = vmul.f32 %v5492, 1.442695
    %v5522 = vpow.pop %v5521
    %v5523 = vmul.f32 %v5493, 1.442695
    %v5524 = vpow.pop %v5523
    %v5525 = vmul.f32 %v5494, 1.442695
    %v5526 = vpow.pop %v5525
    %5527 = vadd.xlane.f32.xlu0 %v5496
    %v5528 = vpop.xlane.xlu0 %5527
    %5529 = vadd.xlane.f32.xlu0 %v5498
    %v5530 = vpop.xlane.xlu0 %5529
    %5531 = vadd.xlane.f32.xlu0 %v5500
    %v5532 = vpop.xlane.xlu0 %5531
    %5533 = vadd.xlane.f32.xlu0 %v5502
    %v5534 = vpop.xlane.xlu0 %5533
    %5535 = vadd.xlane.f32.xlu0 %v5504
    %v5536 = vpop.xlane.xlu0 %5535
    %5537 = vadd.xlane.f32.xlu0 %v5506
    %v5538 = vpop.xlane.xlu0 %5537
    %5539 = vadd.xlane.f32.xlu0 %v5508
    %v5540 = vpop.xlane.xlu0 %5539
    %5541 = vadd.xlane.f32.xlu0 %v5510
    %v5542 = vpop.xlane.xlu0 %5541
    %5543 = vadd.xlane.f32.xlu0 %v5512
    %v5544 = vpop.xlane.xlu0 %5543
    %5545 = vadd.xlane.f32.xlu0 %v5514
    %v5546 = vpop.xlane.xlu0 %5545
    %5547 = vadd.xlane.f32.xlu0 %v5516
    %v5548 = vpop.xlane.xlu0 %5547
    %5549 = vadd.xlane.f32.xlu0 %v5518
    %v5550 = vpop.xlane.xlu0 %5549
    %5551 = vadd.xlane.f32.xlu0 %v5520
    %v5552 = vpop.xlane.xlu0 %5551
    %5553 = vadd.xlane.f32.xlu0 %v5522
    %v5554 = vpop.xlane.xlu0 %5553
    %5555 = vadd.xlane.f32.xlu0 %v5524
    %v5556 = vpop.xlane.xlu0 %5555
    %5557 = vadd.xlane.f32.xlu0 %v5526
    %v5558 = vpop.xlane.xlu0 %5557
    %v5559 = vrcp.pop %v5528
    %v5560 = vrcp.pop %v5530
    %v5561 = vrcp.pop %v5532
    %v5562 = vrcp.pop %v5534
    %v5563 = vrcp.pop %v5536
    %v5564 = vrcp.pop %v5538
    %v5565 = vrcp.pop %v5540
    %v5566 = vrcp.pop %v5542
    %v5567 = vrcp.pop %v5544
    %v5568 = vrcp.pop %v5546
    %v5569 = vrcp.pop %v5548
    %v5570 = vrcp.pop %v5550
    %v5571 = vrcp.pop %v5552
    %v5572 = vrcp.pop %v5554
    %v5573 = vrcp.pop %v5556
    %v5574 = vrcp.pop %v5558
    %v5575 = vmul.f32 %v5496, %v5559
    %v5576 = vmul.f32 %v5498, %v5560
    %v5577 = vmul.f32 %v5500, %v5561
    %v5578 = vmul.f32 %v5502, %v5562
    %v5579 = vmul.f32 %v5504, %v5563
    %v5580 = vmul.f32 %v5506, %v5564
    %v5581 = vmul.f32 %v5508, %v5565
    %v5582 = vmul.f32 %v5510, %v5566
    %v5583 = vmul.f32 %v5512, %v5567
    %v5584 = vmul.f32 %v5514, %v5568
    %v5585 = vmul.f32 %v5516, %v5569
    %v5586 = vmul.f32 %v5518, %v5570
    %v5587 = vmul.f32 %v5520, %v5571
    %v5588 = vmul.f32 %v5522, %v5572
    %v5589 = vmul.f32 %v5524, %v5573
    %v5590 = vmul.f32 %v5526, %v5574
    %v5591 = vpack.c.bf16 %v5576, %v5575
    %v5592 = vpack.c.bf16 %v5578, %v5577
    %v5593 = vpack.c.bf16 %v5580, %v5579
    %v5594 = vpack.c.bf16 %v5582, %v5581
    %v5595 = vpack.c.bf16 %v5584, %v5583
    %v5596 = vpack.c.bf16 %v5586, %v5585
    %v5597 = vpack.c.bf16 %v5588, %v5587
    %v5598 = vpack.c.bf16 %v5590, %v5589
    %5599 = vrot.lane.b32.xlu0 %v5149, 64
    %v5600 = vpop.permute.xlu0 %5599
    %5601 = vrot.lane.b32.xlu0 %v5150, 64
    %v5602 = vpop.permute.xlu0 %5601
    %5603 = vrot.lane.b32.xlu0 %v5151, 64
    %v5604 = vpop.permute.xlu0 %5603
    %5605 = vrot.lane.b32.xlu0 %v5152, 64
    %v5606 = vpop.permute.xlu0 %5605
    %5607 = vrot.lane.b32.xlu0 %v5153, 64
    %v5608 = vpop.permute.xlu0 %5607
    %5609 = vrot.lane.b32.xlu0 %v5154, 64
    %v5610 = vpop.permute.xlu0 %5609
    %5611 = vrot.lane.b32.xlu0 %v5155, 64
    %v5612 = vpop.permute.xlu0 %5611
    %5613 = vrot.lane.b32.xlu0 %v5156, 64
    %v5614 = vpop.permute.xlu0 %5613
    %5623 = vmatprep.subr.bf16.mxu0 0
    %5624 = vmatpush1.bf16.msra.mxu0 %v5614
    %5625 = vmatprep.subr.bf16.mxu0 0
    %5626 = vmatpush1.bf16.msra.mxu0 %v5612
    %5627 = vmatprep.subr.bf16.mxu0 0
    %5628 = vmatpush1.bf16.msra.mxu0 %v5610
    %5629 = vmatprep.subr.bf16.mxu0 0
    %5630 = vmatpush1.bf16.msra.mxu0 %v5608
    %5631 = vmatprep.subr.bf16.mxu0 0
    %5632 = vmatpush1.bf16.msra.mxu0 %v5606
    %5633 = vmatprep.subr.bf16.mxu0 0
    %5634 = vmatpush1.bf16.msra.mxu0 %v5604
    %5635 = vmatprep.subr.bf16.mxu0 0
    %5636 = vmatpush1.bf16.msra.mxu0 %v5602
    %5637 = vmatprep.subr.bf16.mxu0 0
    %5638 = vmatpush1.bf16.msra.mxu0 %v5600
    %5639 = vmatprep.subr.bf16.mxu0 0
    %5640 = vmatpush2.bf16.msra.mxu0 0
    %5641 = vmatprep.subr.bf16.mxu0 0
    %5642 = vmatpush2.bf16.msra.mxu0 0
    %5643 = vmatprep.subr.bf16.mxu0 0
    %5644 = vmatpush2.bf16.msra.mxu0 0
    %5645 = vmatprep.subr.bf16.mxu0 0
    %5646 = vmatpush2.bf16.msra.mxu0 0
    %5647 = vmatprep.subr.bf16.mxu0 0
    %5648 = vmatpush2.bf16.msra.mxu0 0
    %5649 = vmatprep.subr.bf16.mxu0 0
    %5650 = vmatpush2.bf16.msra.mxu0 0
    %5651 = vmatprep.subr.bf16.mxu0 0
    %5652 = vmatpush2.bf16.msra.mxu0 0
    %5653 = vmatprep.subr.bf16.mxu0 0
    %5654 = vmatpush2.bf16.msra.mxu0 0
    %5655 = vmatprep.mubr.bf16.mxu0 0
    %5656 = vmatmul.mubr.bf16.gmra.mxu0 %v5591
    %v5657 = vpop.f32.mrf.mxu0
    %v5658 = vadd.f32 0.0, %v5657
    %v5659 = vpop.f32.mrf.mxu0
    %v5660 = vpop.f32.mrf.mxu0
    %v5661 = vadd.f32 0.0, %v5660
    %v5662 = vpop.f32.mrf.mxu0
    %5663 = vmatprep.mubr.bf16.mxu0 0
    %5664 = vmatmul.mubr.bf16.gmra.mxu0 %v5592
    %v5665 = vpop.f32.mrf.mxu0
    %v5666 = vadd.f32 0.0, %v5665
    %v5667 = vpop.f32.mrf.mxu0
    %v5668 = vpop.f32.mrf.mxu0
    %v5669 = vadd.f32 0.0, %v5668
    %v5670 = vpop.f32.mrf.mxu0
    %5671 = vmatprep.mubr.bf16.mxu0 0
    %5672 = vmatmul.mubr.bf16.gmra.mxu0 %v5593
    %v5673 = vpop.f32.mrf.mxu0
    %v5674 = vadd.f32 0.0, %v5673
    %v5675 = vpop.f32.mrf.mxu0
    %v5676 = vpop.f32.mrf.mxu0
    %v5677 = vadd.f32 0.0, %v5676
    %v5678 = vpop.f32.mrf.mxu0
    %5679 = vmatprep.mubr.bf16.mxu0 0
    %5680 = vmatmul.mubr.bf16.gmra.mxu0 %v5594
    %v5681 = vpop.f32.mrf.mxu0
    %v5682 = vadd.f32 0.0, %v5681
    %v5683 = vpop.f32.mrf.mxu0
    %v5684 = vpop.f32.mrf.mxu0
    %v5685 = vadd.f32 0.0, %v5684
    %v5686 = vpop.f32.mrf.mxu0
    %5687 = vmatprep.mubr.bf16.mxu0 0
    %5688 = vmatmul.mubr.bf16.gmra.mxu0 %v5595
    %v5689 = vpop.f32.mrf.mxu0
    %v5690 = vadd.f32 0.0, %v5689
    %v5691 = vpop.f32.mrf.mxu0
    %v5692 = vpop.f32.mrf.mxu0
    %v5693 = vadd.f32 0.0, %v5692
    %v5694 = vpop.f32.mrf.mxu0
    %5695 = vmatprep.mubr.bf16.mxu0 0
    %5696 = vmatmul.mubr.bf16.gmra.mxu0 %v5596
    %v5697 = vpop.f32.mrf.mxu0
    %v5698 = vadd.f32 0.0, %v5697
    %v5699 = vpop.f32.mrf.mxu0
    %v5700 = vpop.f32.mrf.mxu0
    %v5701 = vadd.f32 0.0, %v5700
    %v5702 = vpop.f32.mrf.mxu0
    %5703 = vmatprep.mubr.bf16.mxu0 0
    %5704 = vmatmul.mubr.bf16.gmra.mxu0 %v5597
    %v5705 = vpop.f32.mrf.mxu0
    %v5706 = vadd.f32 0.0, %v5705
    %v5707 = vpop.f32.mrf.mxu0
    %v5708 = vpop.f32.mrf.mxu0
    %v5709 = vadd.f32 0.0, %v5708
    %v5710 = vpop.f32.mrf.mxu0
    %5711 = vmatprep.mubr.bf16.mxu0 0
    %5712 = vmatmul.mubr.bf16.gmra.mxu0 %v5598
    %v5713 = vpop.f32.mrf.mxu0
    %v5714 = vadd.f32 0.0, %v5713
    %v5715 = vpop.f32.mrf.mxu0
    %v5716 = vpop.f32.mrf.mxu0
    %v5717 = vadd.f32 0.0, %v5716
    %v5718 = vpop.f32.mrf.mxu0
    %5719 = vdwg.mxu0
    %v5720 = vpack.c.bf16 %v5661, %v5658
    %v5721 = vpack.c.bf16 %v5669, %v5666
    %v5722 = vpack.c.bf16 %v5677, %v5674
    %v5723 = vpack.c.bf16 %v5685, %v5682
    %v5724 = vpack.c.bf16 %v5693, %v5690
    %v5725 = vpack.c.bf16 %v5701, %v5698
    %v5726 = vpack.c.bf16 %v5709, %v5706
    %v5727 = vpack.c.bf16 %v5717, %v5714
    %5736 = vrot.lane.b32.xlu0 %v5720, 64
    %v5737 = vpop.permute.xlu0 %5736
    %5738 = vrot.lane.b32.xlu0 %v5721, 64
    %v5739 = vpop.permute.xlu0 %5738
    %5740 = vrot.lane.b32.xlu0 %v5722, 64
    %v5741 = vpop.permute.xlu0 %5740
    %5742 = vrot.lane.b32.xlu0 %v5723, 64
    %v5743 = vpop.permute.xlu0 %5742
    %5744 = vrot.lane.b32.xlu0 %v5724, 64
    %v5745 = vpop.permute.xlu0 %5744
    %5746 = vrot.lane.b32.xlu0 %v5725, 64
    %v5747 = vpop.permute.xlu0 %5746
    %5748 = vrot.lane.b32.xlu0 %v5726, 64
    %v5749 = vpop.permute.xlu0 %5748
    %5750 = vrot.lane.b32.xlu0 %v5727, 64
    %v5751 = vpop.permute.xlu0 %5750
    %v5754 = vsel %vm980, %v5262, %v5737
    %v5758 = vsel %vm980, %v5263, %v5739
    %v5762 = vsel %vm980, %v5264, %v5741
    %v5766 = vsel %vm980, %v5265, %v5743
    %v5770 = vsel %vm980, %v5266, %v5745
    %v5774 = vsel %vm980, %v5267, %v5747
    %v5778 = vsel %vm980, %v5268, %v5749
    %v5782 = vsel %vm980, %v5269, %v5751
    %s5784 = scalar_lea.vmem [#allocation12], 64
    %v5785 = vld [vmem:[%s5784] sm:$0xf]
    %v5786 = vld [vmem:[%s5784 + $0x4] sm:$0xf]
    %v5787 = vld [vmem:[%s5784 + $0x8] sm:$0xf]
    %v5788 = vld [vmem:[%s5784 + $0xc] sm:$0xf]
    %v5789 = vld [vmem:[%s5784 + $0x10] sm:$0xf]
    %v5790 = vld [vmem:[%s5784 + $0x14] sm:$0xf]
    %v5791 = vld [vmem:[%s5784 + $0x18] sm:$0xf]
    %v5792 = vld [vmem:[%s5784 + $0x1c] sm:$0xf]
    %v5793 = vld [vmem:[%s5784 + $0x20] sm:$0xf]
    %v5794 = vld [vmem:[%s5784 + $0x24] sm:$0xf]
    %v5795 = vld [vmem:[%s5784 + $0x28] sm:$0xf]
    %v5796 = vld [vmem:[%s5784 + $0x2c] sm:$0xf]
    %v5797 = vld [vmem:[%s5784 + $0x30] sm:$0xf]
    %v5798 = vld [vmem:[%s5784 + $0x34] sm:$0xf]
    %v5799 = vld [vmem:[%s5784 + $0x38] sm:$0xf]
    %v5800 = vld [vmem:[%s5784 + $0x3c] sm:$0xf]
    %s5801 = scalar_lea.vmem %s5, 1
    %v5802 = vld [vmem:[%s5801] sm:$0x1]
    %v5804 = vlaneseq
    %v5805 = vshrl.u32 %v5804, 7
    %v5806 = vsub.s32 0, %v5805
    %v5807 = vrot.slane %v5802, %v5806
    %v5825 = vunpack.c.l.b16 %v5785
    %v5826 = vunpack.c.l.b16 %v5786
    %v5827 = vunpack.c.l.b16 %v5787
    %v5828 = vunpack.c.l.b16 %v5788
    %v5829 = vunpack.c.l.b16 %v5789
    %v5830 = vunpack.c.l.b16 %v5790
    %v5831 = vunpack.c.l.b16 %v5791
    %v5832 = vunpack.c.l.b16 %v5792
    %v5833 = vunpack.c.l.b16 %v5793
    %v5834 = vunpack.c.l.b16 %v5794
    %v5835 = vunpack.c.l.b16 %v5795
    %v5836 = vunpack.c.l.b16 %v5796
    %v5837 = vunpack.c.l.b16 %v5797
    %v5838 = vunpack.c.l.b16 %v5798
    %v5839 = vunpack.c.l.b16 %v5799
    %v5840 = vunpack.c.l.b16 %v5800
    %v5841 = vpack.c.b16 %v5826, %v5825
    %v5842 = vpack.c.b16 %v5828, %v5827
    %v5843 = vpack.c.b16 %v5830, %v5829
    %v5844 = vpack.c.b16 %v5832, %v5831
    %v5845 = vpack.c.b16 %v5834, %v5833
    %v5846 = vpack.c.b16 %v5836, %v5835
    %v5847 = vpack.c.b16 %v5838, %v5837
    %v5848 = vpack.c.b16 %v5840, %v5839
    %5857 = vmatprep.subr.bf16.mxu0 0
    %5858 = vmatpush1.bf16.msra.mxu0 %v5848
    %5859 = vmatprep.subr.bf16.mxu0 0
    %5860 = vmatpush1.bf16.msra.mxu0 %v5847
    %5861 = vmatprep.subr.bf16.mxu0 0
    %5862 = vmatpush1.bf16.msra.mxu0 %v5846
    %5863 = vmatprep.subr.bf16.mxu0 0
    %5864 = vmatpush1.bf16.msra.mxu0 %v5845
    %5865 = vmatprep.subr.bf16.mxu0 0
    %5866 = vmatpush1.bf16.msra.mxu0 %v5844
    %5867 = vmatprep.subr.bf16.mxu0 0
    %5868 = vmatpush1.bf16.msra.mxu0 %v5843
    %5869 = vmatprep.subr.bf16.mxu0 0
    %5870 = vmatpush1.bf16.msra.mxu0 %v5842
    %5871 = vmatprep.subr.bf16.mxu0 0
    %5872 = vmatpush1.bf16.msra.mxu0 %v5841
    %5873 = vmatprep.subr.bf16.mxu0 0
    %5874 = vmatpush2.bf16.msra.mxu0 0
    %5875 = vmatprep.subr.bf16.mxu0 0
    %5876 = vmatpush2.bf16.msra.mxu0 0
    %5877 = vmatprep.subr.bf16.mxu0 0
    %5878 = vmatpush2.bf16.msra.mxu0 0
    %5879 = vmatprep.subr.bf16.mxu0 0
    %5880 = vmatpush2.bf16.msra.mxu0 0
    %5881 = vmatprep.subr.bf16.mxu0 0
    %5882 = vmatpush2.bf16.msra.mxu0 0
    %5883 = vmatprep.subr.bf16.mxu0 0
    %5884 = vmatpush2.bf16.msra.mxu0 0
    %5885 = vmatprep.subr.bf16.mxu0 0
    %5886 = vmatpush2.bf16.msra.mxu0 0
    %5887 = vmatprep.subr.bf16.mxu0 0
    %5888 = vmatpush2.bf16.msra.mxu0 0
    %5889 = vmatprep.mubr.bf16.mxu0 0
    %5890 = vmatmul.mubr.bf16.gmra.mxu0 %v5754
    %v5891 = vpop.f32.mrf.mxu0
    %v5892 = vadd.f32 %v5807, %v5891
    %v5893 = vpop.f32.mrf.mxu0
    %v5894 = vpop.f32.mrf.mxu0
    %v5895 = vadd.f32 %v5807, %v5894
    %v5896 = vpop.f32.mrf.mxu0
    %5897 = vmatprep.mubr.bf16.mxu0 0
    %5898 = vmatmul.mubr.bf16.gmra.mxu0 %v5758
    %v5899 = vpop.f32.mrf.mxu0
    %v5900 = vadd.f32 %v5807, %v5899
    %v5901 = vpop.f32.mrf.mxu0
    %v5902 = vpop.f32.mrf.mxu0
    %v5903 = vadd.f32 %v5807, %v5902
    %v5904 = vpop.f32.mrf.mxu0
    %5905 = vmatprep.mubr.bf16.mxu0 0
    %5906 = vmatmul.mubr.bf16.gmra.mxu0 %v5762
    %v5907 = vpop.f32.mrf.mxu0
    %v5908 = vadd.f32 %v5807, %v5907
    %v5909 = vpop.f32.mrf.mxu0
    %v5910 = vpop.f32.mrf.mxu0
    %v5911 = vadd.f32 %v5807, %v5910
    %v5912 = vpop.f32.mrf.mxu0
    %5913 = vmatprep.mubr.bf16.mxu0 0
    %5914 = vmatmul.mubr.bf16.gmra.mxu0 %v5766
    %v5915 = vpop.f32.mrf.mxu0
    %v5916 = vadd.f32 %v5807, %v5915
    %v5917 = vpop.f32.mrf.mxu0
    %v5918 = vpop.f32.mrf.mxu0
    %v5919 = vadd.f32 %v5807, %v5918
    %v5920 = vpop.f32.mrf.mxu0
    %5921 = vmatprep.mubr.bf16.mxu0 0
    %5922 = vmatmul.mubr.bf16.gmra.mxu0 %v5770
    %v5923 = vpop.f32.mrf.mxu0
    %v5924 = vadd.f32 %v5807, %v5923
    %v5925 = vpop.f32.mrf.mxu0
    %v5926 = vpop.f32.mrf.mxu0
    %v5927 = vadd.f32 %v5807, %v5926
    %v5928 = vpop.f32.mrf.mxu0
    %5929 = vmatprep.mubr.bf16.mxu0 0
    %5930 = vmatmul.mubr.bf16.gmra.mxu0 %v5774
    %v5931 = vpop.f32.mrf.mxu0
    %v5932 = vadd.f32 %v5807, %v5931
    %v5933 = vpop.f32.mrf.mxu0
    %v5934 = vpop.f32.mrf.mxu0
    %v5935 = vadd.f32 %v5807, %v5934
    %v5936 = vpop.f32.mrf.mxu0
    %5937 = vmatprep.mubr.bf16.mxu0 0
    %5938 = vmatmul.mubr.bf16.gmra.mxu0 %v5778
    %v5939 = vpop.f32.mrf.mxu0
    %v5940 = vadd.f32 %v5807, %v5939
    %v5941 = vpop.f32.mrf.mxu0
    %v5942 = vpop.f32.mrf.mxu0
    %v5943 = vadd.f32 %v5807, %v5942
    %v5944 = vpop.f32.mrf.mxu0
    %5945 = vmatprep.mubr.bf16.mxu0 0
    %5946 = vmatmul.mubr.bf16.gmra.mxu0 %v5782
    %v5947 = vpop.f32.mrf.mxu0
    %v5948 = vadd.f32 %v5807, %v5947
    %v5949 = vpop.f32.mrf.mxu0
    %v5950 = vpop.f32.mrf.mxu0
    %v5951 = vadd.f32 %v5807, %v5950
    %v5952 = vpop.f32.mrf.mxu0
    %5953 = vdwg.mxu0
    %v5954 = vadd.f32 %v4087, %v5892
    %v5955 = vadd.f32 %v4088, %v5895
    %v5956 = vadd.f32 %v4089, %v5900
    %v5957 = vadd.f32 %v4090, %v5903
    %v5958 = vadd.f32 %v4091, %v5908
    %v5959 = vadd.f32 %v4092, %v5911
    %v5960 = vadd.f32 %v4093, %v5916
    %v5961 = vadd.f32 %v4094, %v5919
    %v5962 = vadd.f32 %v4095, %v5924
    %v5963 = vadd.f32 %v4096, %v5927
    %v5964 = vadd.f32 %v4097, %v5932
    %v5965 = vadd.f32 %v4098, %v5935
    %v5966 = vadd.f32 %v4099, %v5940
    %v5967 = vadd.f32 %v4100, %v5943
    %v5968 = vadd.f32 %v4101, %v5948
    %v5969 = vadd.f32 %v4102, %v5951
    %s5970 = scalar_lea.vmem [#allocation13], 1
    %v5971 = vld [vmem:[%s5970] sm:$0x1]
    %s5972 = scalar_lea.vmem [#allocation15], 1
    %v5973 = vld [vmem:[%s5972] sm:$0x1]
    %5974 = vadd.xlane.f32.xlu0 %v5954
    %v5975 = vpop.xlane.xlu0 %5974
    %5976 = vadd.xlane.f32.xlu0 %v5955
    %v5977 = vpop.xlane.xlu0 %5976
    %5978 = vadd.xlane.f32.xlu0 %v5956
    %v5979 = vpop.xlane.xlu0 %5978
    %5980 = vadd.xlane.f32.xlu0 %v5957
    %v5981 = vpop.xlane.xlu0 %5980
    %5982 = vadd.xlane.f32.xlu0 %v5958
    %v5983 = vpop.xlane.xlu0 %5982
    %5984 = vadd.xlane.f32.xlu0 %v5959
    %v5985 = vpop.xlane.xlu0 %5984
    %5986 = vadd.xlane.f32.xlu0 %v5960
    %v5987 = vpop.xlane.xlu0 %5986
    %5988 = vadd.xlane.f32.xlu0 %v5961
    %v5989 = vpop.xlane.xlu0 %5988
    %5990 = vadd.xlane.f32.xlu0 %v5962
    %v5991 = vpop.xlane.xlu0 %5990
    %5992 = vadd.xlane.f32.xlu0 %v5963
    %v5993 = vpop.xlane.xlu0 %5992
    %5994 = vadd.xlane.f32.xlu0 %v5964
    %v5995 = vpop.xlane.xlu0 %5994
    %5996 = vadd.xlane.f32.xlu0 %v5965
    %v5997 = vpop.xlane.xlu0 %5996
    %5998 = vadd.xlane.f32.xlu0 %v5966
    %v5999 = vpop.xlane.xlu0 %5998
    %6000 = vadd.xlane.f32.xlu0 %v5967
    %v6001 = vpop.xlane.xlu0 %6000
    %6002 = vadd.xlane.f32.xlu0 %v5968
    %v6003 = vpop.xlane.xlu0 %6002
    %6004 = vadd.xlane.f32.xlu0 %v5969
    %v6005 = vpop.xlane.xlu0 %6004
    %v6006 = vmul.f32 %v5975, %v2163
    %v6007 = vmul.f32 %v5977, %v2163
    %v6008 = vmul.f32 %v5979, %v2163
    %v6009 = vmul.f32 %v5981, %v2163
    %v6010 = vmul.f32 %v5983, %v2163
    %v6011 = vmul.f32 %v5985, %v2163
    %v6012 = vmul.f32 %v5987, %v2163
    %v6013 = vmul.f32 %v5989, %v2163
    %v6014 = vmul.f32 %v5991, %v2163
    %v6015 = vmul.f32 %v5993, %v2163
    %v6016 = vmul.f32 %v5995, %v2163
    %v6017 = vmul.f32 %v5997, %v2163
    %v6018 = vmul.f32 %v5999, %v2163
    %v6019 = vmul.f32 %v6001, %v2163
    %v6020 = vmul.f32 %v6003, %v2163
    %v6021 = vmul.f32 %v6005, %v2163
    %v6022 = vsub.f32 %v5954, %v6006
    %v6023 = vsub.f32 %v5955, %v6007
    %v6024 = vsub.f32 %v5956, %v6008
    %v6025 = vsub.f32 %v5957, %v6009
    %v6026 = vsub.f32 %v5958, %v6010
    %v6027 = vsub.f32 %v5959, %v6011
    %v6028 = vsub.f32 %v5960, %v6012
    %v6029 = vsub.f32 %v5961, %v6013
    %v6030 = vsub.f32 %v5962, %v6014
    %v6031 = vsub.f32 %v5963, %v6015
    %v6032 = vsub.f32 %v5964, %v6016
    %v6033 = vsub.f32 %v5965, %v6017
    %v6034 = vsub.f32 %v5966, %v6018
    %v6035 = vsub.f32 %v5967, %v6019
    %v6036 = vsub.f32 %v5968, %v6020
    %v6037 = vsub.f32 %v5969, %v6021
    %v6038 = vmul.f32 %v6022, %v6022
    %v6039 = vmul.f32 %v6023, %v6023
    %v6040 = vmul.f32 %v6024, %v6024
    %v6041 = vmul.f32 %v6025, %v6025
    %v6042 = vmul.f32 %v6026, %v6026
    %v6043 = vmul.f32 %v6027, %v6027
    %v6044 = vmul.f32 %v6028, %v6028
    %v6045 = vmul.f32 %v6029, %v6029
    %v6046 = vmul.f32 %v6030, %v6030
    %v6047 = vmul.f32 %v6031, %v6031
    %v6048 = vmul.f32 %v6032, %v6032
    %v6049 = vmul.f32 %v6033, %v6033
    %v6050 = vmul.f32 %v6034, %v6034
    %v6051 = vmul.f32 %v6035, %v6035
    %v6052 = vmul.f32 %v6036, %v6036
    %v6053 = vmul.f32 %v6037, %v6037
    %6054 = vadd.xlane.f32.xlu0 %v6038
    %v6055 = vpop.xlane.xlu0 %6054
    %6056 = vadd.xlane.f32.xlu0 %v6039
    %v6057 = vpop.xlane.xlu0 %6056
    %6058 = vadd.xlane.f32.xlu0 %v6040
    %v6059 = vpop.xlane.xlu0 %6058
    %6060 = vadd.xlane.f32.xlu0 %v6041
    %v6061 = vpop.xlane.xlu0 %6060
    %6062 = vadd.xlane.f32.xlu0 %v6042
    %v6063 = vpop.xlane.xlu0 %6062
    %6064 = vadd.xlane.f32.xlu0 %v6043
    %v6065 = vpop.xlane.xlu0 %6064
    %6066 = vadd.xlane.f32.xlu0 %v6044
    %v6067 = vpop.xlane.xlu0 %6066
    %6068 = vadd.xlane.f32.xlu0 %v6045
    %v6069 = vpop.xlane.xlu0 %6068
    %6070 = vadd.xlane.f32.xlu0 %v6046
    %v6071 = vpop.xlane.xlu0 %6070
    %6072 = vadd.xlane.f32.xlu0 %v6047
    %v6073 = vpop.xlane.xlu0 %6072
    %6074 = vadd.xlane.f32.xlu0 %v6048
    %v6075 = vpop.xlane.xlu0 %6074
    %6076 = vadd.xlane.f32.xlu0 %v6049
    %v6077 = vpop.xlane.xlu0 %6076
    %6078 = vadd.xlane.f32.xlu0 %v6050
    %v6079 = vpop.xlane.xlu0 %6078
    %6080 = vadd.xlane.f32.xlu0 %v6051
    %v6081 = vpop.xlane.xlu0 %6080
    %6082 = vadd.xlane.f32.xlu0 %v6052
    %v6083 = vpop.xlane.xlu0 %6082
    %6084 = vadd.xlane.f32.xlu0 %v6053
    %v6085 = vpop.xlane.xlu0 %6084
    %v6086 = vmul.f32 %v6055, %v2163
    %v6087 = vmul.f32 %v6057, %v2163
    %v6088 = vmul.f32 %v6059, %v2163
    %v6089 = vmul.f32 %v6061, %v2163
    %v6090 = vmul.f32 %v6063, %v2163
    %v6091 = vmul.f32 %v6065, %v2163
    %v6092 = vmul.f32 %v6067, %v2163
    %v6093 = vmul.f32 %v6069, %v2163
    %v6094 = vmul.f32 %v6071, %v2163
    %v6095 = vmul.f32 %v6073, %v2163
    %v6096 = vmul.f32 %v6075, %v2163
    %v6097 = vmul.f32 %v6077, %v2163
    %v6098 = vmul.f32 %v6079, %v2163
    %v6099 = vmul.f32 %v6081, %v2163
    %v6100 = vmul.f32 %v6083, %v2163
    %v6101 = vmul.f32 %v6085, %v2163
    %v6102 = vadd.f32 %v6086, 1e-12
    %v6103 = vadd.f32 %v6087, 1e-12
    %v6104 = vadd.f32 %v6088, 1e-12
    %v6105 = vadd.f32 %v6089, 1e-12
    %v6106 = vadd.f32 %v6090, 1e-12
    %v6107 = vadd.f32 %v6091, 1e-12
    %v6108 = vadd.f32 %v6092, 1e-12
    %v6109 = vadd.f32 %v6093, 1e-12
    %v6110 = vadd.f32 %v6094, 1e-12
    %v6111 = vadd.f32 %v6095, 1e-12
    %v6112 = vadd.f32 %v6096, 1e-12
    %v6113 = vadd.f32 %v6097, 1e-12
    %v6114 = vadd.f32 %v6098, 1e-12
    %v6115 = vadd.f32 %v6099, 1e-12
    %v6116 = vadd.f32 %v6100, 1e-12
    %v6117 = vadd.f32 %v6101, 1e-12
    %v6118 = vrsqrt.pop %v6102
    %v6119 = vrsqrt.pop %v6103
    %v6120 = vrsqrt.pop %v6104
    %v6121 = vrsqrt.pop %v6105
    %v6122 = vrsqrt.pop %v6106
    %v6123 = vrsqrt.pop %v6107
    %v6124 = vrsqrt.pop %v6108
    %v6125 = vrsqrt.pop %v6109
    %v6126 = vrsqrt.pop %v6110
    %v6127 = vrsqrt.pop %v6111
    %v6128 = vrsqrt.pop %v6112
    %v6129 = vrsqrt.pop %v6113
    %v6130 = vrsqrt.pop %v6114
    %v6131 = vrsqrt.pop %v6115
    %v6132 = vrsqrt.pop %v6116
    %v6133 = vrsqrt.pop %v6117
    %v6134 = vmul.f32 %v6022, %v6118
    %v6135 = vmul.f32 %v6023, %v6119
    %v6136 = vmul.f32 %v6024, %v6120
    %v6137 = vmul.f32 %v6025, %v6121
    %v6138 = vmul.f32 %v6026, %v6122
    %v6139 = vmul.f32 %v6027, %v6123
    %v6140 = vmul.f32 %v6028, %v6124
    %v6141 = vmul.f32 %v6029, %v6125
    %v6142 = vmul.f32 %v6030, %v6126
    %v6143 = vmul.f32 %v6031, %v6127
    %v6144 = vmul.f32 %v6032, %v6128
    %v6145 = vmul.f32 %v6033, %v6129
    %v6146 = vmul.f32 %v6034, %v6130
    %v6147 = vmul.f32 %v6035, %v6131
    %v6148 = vmul.f32 %v6036, %v6132
    %v6149 = vmul.f32 %v6037, %v6133
    %v6151 = vlaneseq
    %v6152 = vshrl.u32 %v6151, 7
    %v6153 = vsub.s32 0, %v6152
    %v6154 = vrot.slane %v5971, %v6153
    %v6156 = vmul.f32 %v6134, %v6154
    %v6157 = vmul.f32 %v6135, %v6154
    %v6158 = vmul.f32 %v6136, %v6154
    %v6159 = vmul.f32 %v6137, %v6154
    %v6160 = vmul.f32 %v6138, %v6154
    %v6161 = vmul.f32 %v6139, %v6154
    %v6162 = vmul.f32 %v6140, %v6154
    %v6163 = vmul.f32 %v6141, %v6154
    %v6164 = vmul.f32 %v6142, %v6154
    %v6165 = vmul.f32 %v6143, %v6154
    %v6166 = vmul.f32 %v6144, %v6154
    %v6167 = vmul.f32 %v6145, %v6154
    %v6168 = vmul.f32 %v6146, %v6154
    %v6169 = vmul.f32 %v6147, %v6154
    %v6170 = vmul.f32 %v6148, %v6154
    %v6171 = vmul.f32 %v6149, %v6154
    %v6173 = vlaneseq
    %v6174 = vshrl.u32 %v6173, 7
    %v6175 = vsub.s32 0, %v6174
    %v6176 = vrot.slane %v5973, %v6175
    %v6178 = vadd.f32 %v6156, %v6176
    %v6179 = vadd.f32 %v6157, %v6176
    %v6180 = vadd.f32 %v6158, %v6176
    %v6181 = vadd.f32 %v6159, %v6176
    %v6182 = vadd.f32 %v6160, %v6176
    %v6183 = vadd.f32 %v6161, %v6176
    %v6184 = vadd.f32 %v6162, %v6176
    %v6185 = vadd.f32 %v6163, %v6176
    %v6186 = vadd.f32 %v6164, %v6176
    %v6187 = vadd.f32 %v6165, %v6176
    %v6188 = vadd.f32 %v6166, %v6176
    %v6189 = vadd.f32 %v6167, %v6176
    %v6190 = vadd.f32 %v6168, %v6176
    %v6191 = vadd.f32 %v6169, %v6176
    %v6192 = vadd.f32 %v6170, %v6176
    %v6193 = vadd.f32 %v6171, %v6176
    %v6194 = vpack.c.bf16 %v6179, %v6178
    %v6195 = vpack.c.bf16 %v6181, %v6180
    %v6196 = vpack.c.bf16 %v6183, %v6182
    %v6197 = vpack.c.bf16 %v6185, %v6184
    %v6198 = vpack.c.bf16 %v6187, %v6186
    %v6199 = vpack.c.bf16 %v6189, %v6188
    %v6200 = vpack.c.bf16 %v6191, %v6190
    %v6201 = vpack.c.bf16 %v6193, %v6192
    %s6202 = scalar_lea.vmem [#allocation16], 256
    %v6203 = vld [vmem:[%s6202] sm:$0xff]
    %v6204 = vld [vmem:[%s6202 + $0x8] sm:$0xff]
    %v6205 = vld [vmem:[%s6202 + $0x10] sm:$0xff]
    %v6206 = vld [vmem:[%s6202 + $0x18] sm:$0xff]
    %v6207 = vld [vmem:[%s6202 + $0x20] sm:$0xff]
    %v6208 = vld [vmem:[%s6202 + $0x28] sm:$0xff]
    %v6209 = vld [vmem:[%s6202 + $0x30] sm:$0xff]
    %v6210 = vld [vmem:[%s6202 + $0x38] sm:$0xff]
    %v6211 = vld [vmem:[%s6202 + $0x40] sm:$0xff]
    %v6212 = vld [vmem:[%s6202 + $0x48] sm:$0xff]
    %v6213 = vld [vmem:[%s6202 + $0x50] sm:$0xff]
    %v6214 = vld [vmem:[%s6202 + $0x58] sm:$0xff]
    %v6215 = vld [vmem:[%s6202 + $0x60] sm:$0xff]
    %v6216 = vld [vmem:[%s6202 + $0x68] sm:$0xff]
    %v6217 = vld [vmem:[%s6202 + $0x70] sm:$0xff]
    %v6218 = vld [vmem:[%s6202 + $0x78] sm:$0xff]
    %v6219 = vld [vmem:[%s6202 + $0x80] sm:$0xff]
    %v6220 = vld [vmem:[%s6202 + $0x88] sm:$0xff]
    %v6221 = vld [vmem:[%s6202 + $0x90] sm:$0xff]
    %v6222 = vld [vmem:[%s6202 + $0x98] sm:$0xff]
    %v6223 = vld [vmem:[%s6202 + $0xa0] sm:$0xff]
    %v6224 = vld [vmem:[%s6202 + $0xa8] sm:$0xff]
    %v6225 = vld [vmem:[%s6202 + $0xb0] sm:$0xff]
    %v6226 = vld [vmem:[%s6202 + $0xb8] sm:$0xff]
    %v6227 = vld [vmem:[%s6202 + $0xc0] sm:$0xff]
    %v6228 = vld [vmem:[%s6202 + $0xc8] sm:$0xff]
    %v6229 = vld [vmem:[%s6202 + $0xd0] sm:$0xff]
    %v6230 = vld [vmem:[%s6202 + $0xd8] sm:$0xff]
    %v6231 = vld [vmem:[%s6202 + $0xe0] sm:$0xff]
    %v6232 = vld [vmem:[%s6202 + $0xe8] sm:$0xff]
    %v6233 = vld [vmem:[%s6202 + $0xf0] sm:$0xff]
    %v6234 = vld [vmem:[%s6202 + $0xf8] sm:$0xff]
    %s6235 = scalar_lea.vmem %s9, 4
    %v6236 = vld [vmem:[%s6235] sm:$0xf]
    %v6238 = vlaneseq
    %v6239 = vshrl.u32 %v6238, 7
    %v6240 = vsub.s32 0, %v6239
    %v6241 = vrot.slane %v6236, %v6240
    %v6242 = vlaneseq
    %v6243 = vshrl.u32 %v6242, 7
    %v6244 = vsub.s32 1, %v6243
    %v6245 = vrot.slane %v6236, %v6244
    %v6246 = vlaneseq
    %v6247 = vshrl.u32 %v6246, 7
    %v6248 = vsub.s32 2, %v6247
    %v6249 = vrot.slane %v6236, %v6248
    %v6250 = vlaneseq
    %v6251 = vshrl.u32 %v6250, 7
    %v6252 = vsub.s32 3, %v6251
    %v6253 = vrot.slane %v6236, %v6252
    %v6290 = vunpack.c.l.b16 %v6203
    %v6291 = vunpack.c.h.b16 %v6203
    %v6292 = vunpack.c.l.b16 %v6204
    %v6293 = vunpack.c.h.b16 %v6204
    %v6294 = vunpack.c.l.b16 %v6205
    %v6295 = vunpack.c.h.b16 %v6205
    %v6296 = vunpack.c.l.b16 %v6206
    %v6297 = vunpack.c.h.b16 %v6206
    %v6298 = vunpack.c.l.b16 %v6207
    %v6299 = vunpack.c.h.b16 %v6207
    %v6300 = vunpack.c.l.b16 %v6208
    %v6301 = vunpack.c.h.b16 %v6208
    %v6302 = vunpack.c.l.b16 %v6209
    %v6303 = vunpack.c.h.b16 %v6209
    %v6304 = vunpack.c.l.b16 %v6210
    %v6305 = vunpack.c.h.b16 %v6210
    %v6306 = vunpack.c.l.b16 %v6211
    %v6307 = vunpack.c.h.b16 %v6211
    %v6308 = vunpack.c.l.b16 %v6212
    %v6309 = vunpack.c.h.b16 %v6212
    %v6310 = vunpack.c.l.b16 %v6213
    %v6311 = vunpack.c.h.b16 %v6213
    %v6312 = vunpack.c.l.b16 %v6214
    %v6313 = vunpack.c.h.b16 %v6214
    %v6314 = vunpack.c.l.b16 %v6215
    %v6315 = vunpack.c.h.b16 %v6215
    %v6316 = vunpack.c.l.b16 %v6216
    %v6317 = vunpack.c.h.b16 %v6216
    %v6318 = vunpack.c.l.b16 %v6217
    %v6319 = vunpack.c.h.b16 %v6217
    %v6320 = vunpack.c.l.b16 %v6218
    %v6321 = vunpack.c.h.b16 %v6218
    %v6322 = vunpack.c.l.b16 %v6219
    %v6323 = vunpack.c.h.b16 %v6219
    %v6324 = vunpack.c.l.b16 %v6220
    %v6325 = vunpack.c.h.b16 %v6220
    %v6326 = vunpack.c.l.b16 %v6221
    %v6327 = vunpack.c.h.b16 %v6221
    %v6328 = vunpack.c.l.b16 %v6222
    %v6329 = vunpack.c.h.b16 %v6222
    %v6330 = vunpack.c.l.b16 %v6223
    %v6331 = vunpack.c.h.b16 %v6223
    %v6332 = vunpack.c.l.b16 %v6224
    %v6333 = vunpack.c.h.b16 %v6224
    %v6334 = vunpack.c.l.b16 %v6225
    %v6335 = vunpack.c.h.b16 %v6225
    %v6336 = vunpack.c.l.b16 %v6226
    %v6337 = vunpack.c.h.b16 %v6226
    %v6338 = vunpack.c.l.b16 %v6227
    %v6339 = vunpack.c.h.b16 %v6227
    %v6340 = vunpack.c.l.b16 %v6228
    %v6341 = vunpack.c.h.b16 %v6228
    %v6342 = vunpack.c.l.b16 %v6229
    %v6343 = vunpack.c.h.b16 %v6229
    %v6344 = vunpack.c.l.b16 %v6230
    %v6345 = vunpack.c.h.b16 %v6230
    %v6346 = vunpack.c.l.b16 %v6231
    %v6347 = vunpack.c.h.b16 %v6231
    %v6348 = vunpack.c.l.b16 %v6232
    %v6349 = vunpack.c.h.b16 %v6232
    %v6350 = vunpack.c.l.b16 %v6233
    %v6351 = vunpack.c.h.b16 %v6233
    %v6352 = vunpack.c.l.b16 %v6234
    %v6353 = vunpack.c.h.b16 %v6234
    %v6354 = vpack.c.b16 %v6294, %v6290
    %v6355 = vpack.c.b16 %v6295, %v6291
    %v6356 = vpack.c.b16 %v6296, %v6292
    %v6357 = vpack.c.b16 %v6297, %v6293
    %v6358 = vpack.c.b16 %v6302, %v6298
    %v6359 = vpack.c.b16 %v6303, %v6299
    %v6360 = vpack.c.b16 %v6304, %v6300
    %v6361 = vpack.c.b16 %v6305, %v6301
    %v6362 = vpack.c.b16 %v6310, %v6306
    %v6363 = vpack.c.b16 %v6311, %v6307
    %v6364 = vpack.c.b16 %v6312, %v6308
    %v6365 = vpack.c.b16 %v6313, %v6309
    %v6366 = vpack.c.b16 %v6318, %v6314
    %v6367 = vpack.c.b16 %v6319, %v6315
    %v6368 = vpack.c.b16 %v6320, %v6316
    %v6369 = vpack.c.b16 %v6321, %v6317
    %v6370 = vpack.c.b16 %v6326, %v6322
    %v6371 = vpack.c.b16 %v6327, %v6323
    %v6372 = vpack.c.b16 %v6328, %v6324
    %v6373 = vpack.c.b16 %v6329, %v6325
    %v6374 = vpack.c.b16 %v6334, %v6330
    %v6375 = vpack.c.b16 %v6335, %v6331
    %v6376 = vpack.c.b16 %v6336, %v6332
    %v6377 = vpack.c.b16 %v6337, %v6333
    %v6378 = vpack.c.b16 %v6342, %v6338
    %v6379 = vpack.c.b16 %v6343, %v6339
    %v6380 = vpack.c.b16 %v6344, %v6340
    %v6381 = vpack.c.b16 %v6345, %v6341
    %v6382 = vpack.c.b16 %v6350, %v6346
    %v6383 = vpack.c.b16 %v6351, %v6347
    %v6384 = vpack.c.b16 %v6352, %v6348
    %v6385 = vpack.c.b16 %v6353, %v6349
    %6418 = vmatprep.subr.bf16.mxu0 %v6383
    %6419 = vmatpush1.bf16.msra.mxu0 %v6382
    %6420 = vmatprep.subr.bf16.mxu0 %v6379
    %6421 = vmatpush1.bf16.msra.mxu0 %v6378
    %6422 = vmatprep.subr.bf16.mxu0 %v6375
    %6423 = vmatpush1.bf16.msra.mxu0 %v6374
    %6424 = vmatprep.subr.bf16.mxu0 %v6371
    %6425 = vmatpush1.bf16.msra.mxu0 %v6370
    %6426 = vmatprep.subr.bf16.mxu0 %v6367
    %6427 = vmatpush1.bf16.msra.mxu0 %v6366
    %6428 = vmatprep.subr.bf16.mxu0 %v6363
    %6429 = vmatpush1.bf16.msra.mxu0 %v6362
    %6430 = vmatprep.subr.bf16.mxu0 %v6359
    %6431 = vmatpush1.bf16.msra.mxu0 %v6358
    %6432 = vmatprep.subr.bf16.mxu0 %v6355
    %6433 = vmatpush1.bf16.msra.mxu0 %v6354
    %6434 = vmatprep.subr.bf16.mxu0 0
    %6435 = vmatpush2.bf16.msra.mxu0 0
    %6436 = vmatprep.subr.bf16.mxu0 0
    %6437 = vmatpush2.bf16.msra.mxu0 0
    %6438 = vmatprep.subr.bf16.mxu0 0
    %6439 = vmatpush2.bf16.msra.mxu0 0
    %6440 = vmatprep.subr.bf16.mxu0 0
    %6441 = vmatpush2.bf16.msra.mxu0 0
    %6442 = vmatprep.subr.bf16.mxu0 0
    %6443 = vmatpush2.bf16.msra.mxu0 0
    %6444 = vmatprep.subr.bf16.mxu0 0
    %6445 = vmatpush2.bf16.msra.mxu0 0
    %6446 = vmatprep.subr.bf16.mxu0 0
    %6447 = vmatpush2.bf16.msra.mxu0 0
    %6448 = vmatprep.subr.bf16.mxu0 0
    %6449 = vmatpush2.bf16.msra.mxu0 0
    %6450 = vmatprep.mubr.bf16.mxu0 0
    %6451 = vmatmul.mubr.bf16.gmra.mxu0 %v6194
    %v6452 = vpop.f32.mrf.mxu0
    %v6453 = vadd.f32 %v6241, %v6452
    %v6454 = vpop.f32.mrf.mxu0
    %v6455 = vadd.f32 %v6245, %v6454
    %v6456 = vpop.f32.mrf.mxu0
    %v6457 = vadd.f32 %v6241, %v6456
    %v6458 = vpop.f32.mrf.mxu0
    %v6459 = vadd.f32 %v6245, %v6458
    %6460 = vmatprep.mubr.bf16.mxu0 0
    %6461 = vmatmul.mubr.bf16.gmra.mxu0 %v6195
    %v6462 = vpop.f32.mrf.mxu0
    %v6463 = vadd.f32 %v6241, %v6462
    %v6464 = vpop.f32.mrf.mxu0
    %v6465 = vadd.f32 %v6245, %v6464
    %v6466 = vpop.f32.mrf.mxu0
    %v6467 = vadd.f32 %v6241, %v6466
    %v6468 = vpop.f32.mrf.mxu0
    %v6469 = vadd.f32 %v6245, %v6468
    %6470 = vmatprep.mubr.bf16.mxu0 0
    %6471 = vmatmul.mubr.bf16.gmra.mxu0 %v6196
    %v6472 = vpop.f32.mrf.mxu0
    %v6473 = vadd.f32 %v6241, %v6472
    %v6474 = vpop.f32.mrf.mxu0
    %v6475 = vadd.f32 %v6245, %v6474
    %v6476 = vpop.f32.mrf.mxu0
    %v6477 = vadd.f32 %v6241, %v6476
    %v6478 = vpop.f32.mrf.mxu0
    %v6479 = vadd.f32 %v6245, %v6478
    %6480 = vmatprep.mubr.bf16.mxu0 0
    %6481 = vmatmul.mubr.bf16.gmra.mxu0 %v6197
    %v6482 = vpop.f32.mrf.mxu0
    %v6483 = vadd.f32 %v6241, %v6482
    %v6484 = vpop.f32.mrf.mxu0
    %v6485 = vadd.f32 %v6245, %v6484
    %v6486 = vpop.f32.mrf.mxu0
    %v6487 = vadd.f32 %v6241, %v6486
    %v6488 = vpop.f32.mrf.mxu0
    %v6489 = vadd.f32 %v6245, %v6488
    %6490 = vmatprep.mubr.bf16.mxu0 0
    %6491 = vmatmul.mubr.bf16.gmra.mxu0 %v6198
    %v6492 = vpop.f32.mrf.mxu0
    %v6493 = vadd.f32 %v6241, %v6492
    %v6494 = vpop.f32.mrf.mxu0
    %v6495 = vadd.f32 %v6245, %v6494
    %v6496 = vpop.f32.mrf.mxu0
    %v6497 = vadd.f32 %v6241, %v6496
    %v6498 = vpop.f32.mrf.mxu0
    %v6499 = vadd.f32 %v6245, %v6498
    %6500 = vmatprep.mubr.bf16.mxu0 0
    %6501 = vmatmul.mubr.bf16.gmra.mxu0 %v6199
    %v6502 = vpop.f32.mrf.mxu0
    %v6503 = vadd.f32 %v6241, %v6502
    %v6504 = vpop.f32.mrf.mxu0
    %v6505 = vadd.f32 %v6245, %v6504
    %v6506 = vpop.f32.mrf.mxu0
    %v6507 = vadd.f32 %v6241, %v6506
    %v6508 = vpop.f32.mrf.mxu0
    %v6509 = vadd.f32 %v6245, %v6508
    %6510 = vmatprep.mubr.bf16.mxu0 0
    %6511 = vmatmul.mubr.bf16.gmra.mxu0 %v6200
    %v6512 = vpop.f32.mrf.mxu0
    %v6513 = vadd.f32 %v6241, %v6512
    %v6514 = vpop.f32.mrf.mxu0
    %v6515 = vadd.f32 %v6245, %v6514
    %v6516 = vpop.f32.mrf.mxu0
    %v6517 = vadd.f32 %v6241, %v6516
    %v6518 = vpop.f32.mrf.mxu0
    %v6519 = vadd.f32 %v6245, %v6518
    %6520 = vmatprep.mubr.bf16.mxu0 0
    %6521 = vmatmul.mubr.bf16.gmra.mxu0 %v6201
    %v6522 = vpop.f32.mrf.mxu0
    %v6523 = vadd.f32 %v6241, %v6522
    %v6524 = vpop.f32.mrf.mxu0
    %v6525 = vadd.f32 %v6245, %v6524
    %v6526 = vpop.f32.mrf.mxu0
    %v6527 = vadd.f32 %v6241, %v6526
    %v6528 = vpop.f32.mrf.mxu0
    %v6529 = vadd.f32 %v6245, %v6528
    %6530 = vdwg.mxu0
    %6531 = vmatprep.subr.bf16.mxu0 %v6385
    %6532 = vmatpush1.bf16.msra.mxu0 %v6384
    %6533 = vmatprep.subr.bf16.mxu0 %v6381
    %6534 = vmatpush1.bf16.msra.mxu0 %v6380
    %6535 = vmatprep.subr.bf16.mxu0 %v6377
    %6536 = vmatpush1.bf16.msra.mxu0 %v6376
    %6537 = vmatprep.subr.bf16.mxu0 %v6373
    %6538 = vmatpush1.bf16.msra.mxu0 %v6372
    %6539 = vmatprep.subr.bf16.mxu0 %v6369
    %6540 = vmatpush1.bf16.msra.mxu0 %v6368
    %6541 = vmatprep.subr.bf16.mxu0 %v6365
    %6542 = vmatpush1.bf16.msra.mxu0 %v6364
    %6543 = vmatprep.subr.bf16.mxu0 %v6361
    %6544 = vmatpush1.bf16.msra.mxu0 %v6360
    %6545 = vmatprep.subr.bf16.mxu0 %v6357
    %6546 = vmatpush1.bf16.msra.mxu0 %v6356
    %6547 = vmatprep.subr.bf16.mxu0 0
    %6548 = vmatpush2.bf16.msra.mxu0 0
    %6549 = vmatprep.subr.bf16.mxu0 0
    %6550 = vmatpush2.bf16.msra.mxu0 0
    %6551 = vmatprep.subr.bf16.mxu0 0
    %6552 = vmatpush2.bf16.msra.mxu0 0
    %6553 = vmatprep.subr.bf16.mxu0 0
    %6554 = vmatpush2.bf16.msra.mxu0 0
    %6555 = vmatprep.subr.bf16.mxu0 0
    %6556 = vmatpush2.bf16.msra.mxu0 0
    %6557 = vmatprep.subr.bf16.mxu0 0
    %6558 = vmatpush2.bf16.msra.mxu0 0
    %6559 = vmatprep.subr.bf16.mxu0 0
    %6560 = vmatpush2.bf16.msra.mxu0 0
    %6561 = vmatprep.subr.bf16.mxu0 0
    %6562 = vmatpush2.bf16.msra.mxu0 0
    %6563 = vmatprep.mubr.bf16.mxu0 0
    %6564 = vmatmul.mubr.bf16.gmra.mxu0 %v6194
    %v6565 = vpop.f32.mrf.mxu0
    %v6566 = vadd.f32 %v6249, %v6565
    %v6567 = vpop.f32.mrf.mxu0
    %v6568 = vadd.f32 %v6253, %v6567
    %v6569 = vpop.f32.mrf.mxu0
    %v6570 = vadd.f32 %v6249, %v6569
    %v6571 = vpop.f32.mrf.mxu0
    %v6572 = vadd.f32 %v6253, %v6571
    %6573 = vmatprep.mubr.bf16.mxu0 0
    %6574 = vmatmul.mubr.bf16.gmra.mxu0 %v6195
    %v6575 = vpop.f32.mrf.mxu0
    %v6576 = vadd.f32 %v6249, %v6575
    %v6577 = vpop.f32.mrf.mxu0
    %v6578 = vadd.f32 %v6253, %v6577
    %v6579 = vpop.f32.mrf.mxu0
    %v6580 = vadd.f32 %v6249, %v6579
    %v6581 = vpop.f32.mrf.mxu0
    %v6582 = vadd.f32 %v6253, %v6581
    %6583 = vmatprep.mubr.bf16.mxu0 0
    %6584 = vmatmul.mubr.bf16.gmra.mxu0 %v6196
    %v6585 = vpop.f32.mrf.mxu0
    %v6586 = vadd.f32 %v6249, %v6585
    %v6587 = vpop.f32.mrf.mxu0
    %v6588 = vadd.f32 %v6253, %v6587
    %v6589 = vpop.f32.mrf.mxu0
    %v6590 = vadd.f32 %v6249, %v6589
    %v6591 = vpop.f32.mrf.mxu0
    %v6592 = vadd.f32 %v6253, %v6591
    %6593 = vmatprep.mubr.bf16.mxu0 0
    %6594 = vmatmul.mubr.bf16.gmra.mxu0 %v6197
    %v6595 = vpop.f32.mrf.mxu0
    %v6596 = vadd.f32 %v6249, %v6595
    %v6597 = vpop.f32.mrf.mxu0
    %v6598 = vadd.f32 %v6253, %v6597
    %v6599 = vpop.f32.mrf.mxu0
    %v6600 = vadd.f32 %v6249, %v6599
    %v6601 = vpop.f32.mrf.mxu0
    %v6602 = vadd.f32 %v6253, %v6601
    %6603 = vmatprep.mubr.bf16.mxu0 0
    %6604 = vmatmul.mubr.bf16.gmra.mxu0 %v6198
    %v6605 = vpop.f32.mrf.mxu0
    %v6606 = vadd.f32 %v6249, %v6605
    %v6607 = vpop.f32.mrf.mxu0
    %v6608 = vadd.f32 %v6253, %v6607
    %v6609 = vpop.f32.mrf.mxu0
    %v6610 = vadd.f32 %v6249, %v6609
    %v6611 = vpop.f32.mrf.mxu0
    %v6612 = vadd.f32 %v6253, %v6611
    %6613 = vmatprep.mubr.bf16.mxu0 0
    %6614 = vmatmul.mubr.bf16.gmra.mxu0 %v6199
    %v6615 = vpop.f32.mrf.mxu0
    %v6616 = vadd.f32 %v6249, %v6615
    %v6617 = vpop.f32.mrf.mxu0
    %v6618 = vadd.f32 %v6253, %v6617
    %v6619 = vpop.f32.mrf.mxu0
    %v6620 = vadd.f32 %v6249, %v6619
    %v6621 = vpop.f32.mrf.mxu0
    %v6622 = vadd.f32 %v6253, %v6621
    %6623 = vmatprep.mubr.bf16.mxu0 0
    %6624 = vmatmul.mubr.bf16.gmra.mxu0 %v6200
    %v6625 = vpop.f32.mrf.mxu0
    %v6626 = vadd.f32 %v6249, %v6625
    %v6627 = vpop.f32.mrf.mxu0
    %v6628 = vadd.f32 %v6253, %v6627
    %v6629 = vpop.f32.mrf.mxu0
    %v6630 = vadd.f32 %v6249, %v6629
    %v6631 = vpop.f32.mrf.mxu0
    %v6632 = vadd.f32 %v6253, %v6631
    %6633 = vmatprep.mubr.bf16.mxu0 0
    %6634 = vmatmul.mubr.bf16.gmra.mxu0 %v6201
    %v6635 = vpop.f32.mrf.mxu0
    %v6636 = vadd.f32 %v6249, %v6635
    %v6637 = vpop.f32.mrf.mxu0
    %v6638 = vadd.f32 %v6253, %v6637
    %v6639 = vpop.f32.mrf.mxu0
    %v6640 = vadd.f32 %v6249, %v6639
    %v6641 = vpop.f32.mrf.mxu0
    %v6642 = vadd.f32 %v6253, %v6641
    %6643 = vdwg.mxu0
    %v6644 = vmul.f32 %v6453, 0.5
    %v6645 = vmul.f32 %v6455, 0.5
    %v6646 = vmul.f32 %v6566, 0.5
    %v6647 = vmul.f32 %v6568, 0.5
    %v6648 = vmul.f32 %v6457, 0.5
    %v6649 = vmul.f32 %v6459, 0.5
    %v6650 = vmul.f32 %v6570, 0.5
    %v6651 = vmul.f32 %v6572, 0.5
    %v6652 = vmul.f32 %v6463, 0.5
    %v6653 = vmul.f32 %v6465, 0.5
    %v6654 = vmul.f32 %v6576, 0.5
    %v6655 = vmul.f32 %v6578, 0.5
    %v6656 = vmul.f32 %v6467, 0.5
    %v6657 = vmul.f32 %v6469, 0.5
    %v6658 = vmul.f32 %v6580, 0.5
    %v6659 = vmul.f32 %v6582, 0.5
    %v6660 = vmul.f32 %v6473, 0.5
    %v6661 = vmul.f32 %v6475, 0.5
    %v6662 = vmul.f32 %v6586, 0.5
    %v6663 = vmul.f32 %v6588, 0.5
    %v6664 = vmul.f32 %v6477, 0.5
    %v6665 = vmul.f32 %v6479, 0.5
    %v6666 = vmul.f32 %v6590, 0.5
    %v6667 = vmul.f32 %v6592, 0.5
    %v6668 = vmul.f32 %v6483, 0.5
    %v6669 = vmul.f32 %v6485, 0.5
    %v6670 = vmul.f32 %v6596, 0.5
    %v6671 = vmul.f32 %v6598, 0.5
    %v6672 = vmul.f32 %v6487, 0.5
    %v6673 = vmul.f32 %v6489, 0.5
    %v6674 = vmul.f32 %v6600, 0.5
    %v6675 = vmul.f32 %v6602, 0.5
    %v6676 = vmul.f32 %v6493, 0.5
    %v6677 = vmul.f32 %v6495, 0.5
    %v6678 = vmul.f32 %v6606, 0.5
    %v6679 = vmul.f32 %v6608, 0.5
    %v6680 = vmul.f32 %v6497, 0.5
    %v6681 = vmul.f32 %v6499, 0.5
    %v6682 = vmul.f32 %v6610, 0.5
    %v6683 = vmul.f32 %v6612, 0.5
    %v6684 = vmul.f32 %v6503, 0.5
    %v6685 = vmul.f32 %v6505, 0.5
    %v6686 = vmul.f32 %v6616, 0.5
    %v6687 = vmul.f32 %v6618, 0.5
    %v6688 = vmul.f32 %v6507, 0.5
    %v6689 = vmul.f32 %v6509, 0.5
    %v6690 = vmul.f32 %v6620, 0.5
    %v6691 = vmul.f32 %v6622, 0.5
    %v6692 = vmul.f32 %v6513, 0.5
    %v6693 = vmul.f32 %v6515, 0.5
    %v6694 = vmul.f32 %v6626, 0.5
    %v6695 = vmul.f32 %v6628, 0.5
    %v6696 = vmul.f32 %v6517, 0.5
    %v6697 = vmul.f32 %v6519, 0.5
    %v6698 = vmul.f32 %v6630, 0.5
    %v6699 = vmul.f32 %v6632, 0.5
    %v6700 = vmul.f32 %v6523, 0.5
    %v6701 = vmul.f32 %v6525, 0.5
    %v6702 = vmul.f32 %v6636, 0.5
    %v6703 = vmul.f32 %v6638, 0.5
    %v6704 = vmul.f32 %v6527, 0.5
    %v6705 = vmul.f32 %v6529, 0.5
    %v6706 = vmul.f32 %v6640, 0.5
    %v6707 = vmul.f32 %v6642, 0.5
    %v6708 = vmul.f32 %v6453, 0.044715
    %v6709 = vmul.f32 %v6455, 0.044715
    %v6710 = vmul.f32 %v6566, 0.044715
    %v6711 = vmul.f32 %v6568, 0.044715
    %v6712 = vmul.f32 %v6457, 0.044715
    %v6713 = vmul.f32 %v6459, 0.044715
    %v6714 = vmul.f32 %v6570, 0.044715
    %v6715 = vmul.f32 %v6572, 0.044715
    %v6716 = vmul.f32 %v6463, 0.044715
    %v6717 = vmul.f32 %v6465, 0.044715
    %v6718 = vmul.f32 %v6576, 0.044715
    %v6719 = vmul.f32 %v6578, 0.044715
    %v6720 = vmul.f32 %v6467, 0.044715
    %v6721 = vmul.f32 %v6469, 0.044715
    %v6722 = vmul.f32 %v6580, 0.044715
    %v6723 = vmul.f32 %v6582, 0.044715
    %v6724 = vmul.f32 %v6473, 0.044715
    %v6725 = vmul.f32 %v6475, 0.044715
    %v6726 = vmul.f32 %v6586, 0.044715
    %v6727 = vmul.f32 %v6588, 0.044715
    %v6728 = vmul.f32 %v6477, 0.044715
    %v6729 = vmul.f32 %v6479, 0.044715
    %v6730 = vmul.f32 %v6590, 0.044715
    %v6731 = vmul.f32 %v6592, 0.044715
    %v6732 = vmul.f32 %v6483, 0.044715
    %v6733 = vmul.f32 %v6485, 0.044715
    %v6734 = vmul.f32 %v6596, 0.044715
    %v6735 = vmul.f32 %v6598, 0.044715
    %v6736 = vmul.f32 %v6487, 0.044715
    %v6737 = vmul.f32 %v6489, 0.044715
    %v6738 = vmul.f32 %v6600, 0.044715
    %v6739 = vmul.f32 %v6602, 0.044715
    %v6740 = vmul.f32 %v6493, 0.044715
    %v6741 = vmul.f32 %v6495, 0.044715
    %v6742 = vmul.f32 %v6606, 0.044715
    %v6743 = vmul.f32 %v6608, 0.044715
    %v6744 = vmul.f32 %v6497, 0.044715
    %v6745 = vmul.f32 %v6499, 0.044715
    %v6746 = vmul.f32 %v6610, 0.044715
    %v6747 = vmul.f32 %v6612, 0.044715
    %v6748 = vmul.f32 %v6503, 0.044715
    %v6749 = vmul.f32 %v6505, 0.044715
    %v6750 = vmul.f32 %v6616, 0.044715
    %v6751 = vmul.f32 %v6618, 0.044715
    %v6752 = vmul.f32 %v6507, 0.044715
    %v6753 = vmul.f32 %v6509, 0.044715
    %v6754 = vmul.f32 %v6620, 0.044715
    %v6755 = vmul.f32 %v6622, 0.044715
    %v6756 = vmul.f32 %v6513, 0.044715
    %v6757 = vmul.f32 %v6515, 0.044715
    %v6758 = vmul.f32 %v6626, 0.044715
    %v6759 = vmul.f32 %v6628, 0.044715
    %v6760 = vmul.f32 %v6517, 0.044715
    %v6761 = vmul.f32 %v6519, 0.044715
    %v6762 = vmul.f32 %v6630, 0.044715
    %v6763 = vmul.f32 %v6632, 0.044715
    %v6764 = vmul.f32 %v6523, 0.044715
    %v6765 = vmul.f32 %v6525, 0.044715
    %v6766 = vmul.f32 %v6636, 0.044715
    %v6767 = vmul.f32 %v6638, 0.044715
    %v6768 = vmul.f32 %v6527, 0.044715
    %v6769 = vmul.f32 %v6529, 0.044715
    %v6770 = vmul.f32 %v6640, 0.044715
    %v6771 = vmul.f32 %v6642, 0.044715
    %v6772 = vmul.f32 %v6708, %v6453
    %v6773 = vmul.f32 %v6709, %v6455
    %v6774 = vmul.f32 %v6710, %v6566
    %v6775 = vmul.f32 %v6711, %v6568
    %v6776 = vmul.f32 %v6712, %v6457
    %v6777 = vmul.f32 %v6713, %v6459
    %v6778 = vmul.f32 %v6714, %v6570
    %v6779 = vmul.f32 %v6715, %v6572
    %v6780 = vmul.f32 %v6716, %v6463
    %v6781 = vmul.f32 %v6717, %v6465
    %v6782 = vmul.f32 %v6718, %v6576
    %v6783 = vmul.f32 %v6719, %v6578
    %v6784 = vmul.f32 %v6720, %v6467
    %v6785 = vmul.f32 %v6721, %v6469
    %v6786 = vmul.f32 %v6722, %v6580
    %v6787 = vmul.f32 %v6723, %v6582
    %v6788 = vmul.f32 %v6724, %v6473
    %v6789 = vmul.f32 %v6725, %v6475
    %v6790 = vmul.f32 %v6726, %v6586
    %v6791 = vmul.f32 %v6727, %v6588
    %v6792 = vmul.f32 %v6728, %v6477
    %v6793 = vmul.f32 %v6729, %v6479
    %v6794 = vmul.f32 %v6730, %v6590
    %v6795 = vmul.f32 %v6731, %v6592
    %v6796 = vmul.f32 %v6732, %v6483
    %v6797 = vmul.f32 %v6733, %v6485
    %v6798 = vmul.f32 %v6734, %v6596
    %v6799 = vmul.f32 %v6735, %v6598
    %v6800 = vmul.f32 %v6736, %v6487
    %v6801 = vmul.f32 %v6737, %v6489
    %v6802 = vmul.f32 %v6738, %v6600
    %v6803 = vmul.f32 %v6739, %v6602
    %v6804 = vmul.f32 %v6740, %v6493
    %v6805 = vmul.f32 %v6741, %v6495
    %v6806 = vmul.f32 %v6742, %v6606
    %v6807 = vmul.f32 %v6743, %v6608
    %v6808 = vmul.f32 %v6744, %v6497
    %v6809 = vmul.f32 %v6745, %v6499
    %v6810 = vmul.f32 %v6746, %v6610
    %v6811 = vmul.f32 %v6747, %v6612
    %v6812 = vmul.f32 %v6748, %v6503
    %v6813 = vmul.f32 %v6749, %v6505
    %v6814 = vmul.f32 %v6750, %v6616
    %v6815 = vmul.f32 %v6751, %v6618
    %v6816 = vmul.f32 %v6752, %v6507
    %v6817 = vmul.f32 %v6753, %v6509
    %v6818 = vmul.f32 %v6754, %v6620
    %v6819 = vmul.f32 %v6755, %v6622
    %v6820 = vmul.f32 %v6756, %v6513
    %v6821 = vmul.f32 %v6757, %v6515
    %v6822 = vmul.f32 %v6758, %v6626
    %v6823 = vmul.f32 %v6759, %v6628
    %v6824 = vmul.f32 %v6760, %v6517
    %v6825 = vmul.f32 %v6761, %v6519
    %v6826 = vmul.f32 %v6762, %v6630
    %v6827 = vmul.f32 %v6763, %v6632
    %v6828 = vmul.f32 %v6764, %v6523
    %v6829 = vmul.f32 %v6765, %v6525
    %v6830 = vmul.f32 %v6766, %v6636
    %v6831 = vmul.f32 %v6767, %v6638
    %v6832 = vmul.f32 %v6768, %v6527
    %v6833 = vmul.f32 %v6769, %v6529
    %v6834 = vmul.f32 %v6770, %v6640
    %v6835 = vmul.f32 %v6771, %v6642
    %v6836 = vmul.f32 %v6772, %v6453
    %v6837 = vmul.f32 %v6773, %v6455
    %v6838 = vmul.f32 %v6774, %v6566
    %v6839 = vmul.f32 %v6775, %v6568
    %v6840 = vmul.f32 %v6776, %v6457
    %v6841 = vmul.f32 %v6777, %v6459
    %v6842 = vmul.f32 %v6778, %v6570
    %v6843 = vmul.f32 %v6779, %v6572
    %v6844 = vmul.f32 %v6780, %v6463
    %v6845 = vmul.f32 %v6781, %v6465
    %v6846 = vmul.f32 %v6782, %v6576
    %v6847 = vmul.f32 %v6783, %v6578
    %v6848 = vmul.f32 %v6784, %v6467
    %v6849 = vmul.f32 %v6785, %v6469
    %v6850 = vmul.f32 %v6786, %v6580
    %v6851 = vmul.f32 %v6787, %v6582
    %v6852 = vmul.f32 %v6788, %v6473
    %v6853 = vmul.f32 %v6789, %v6475
    %v6854 = vmul.f32 %v6790, %v6586
    %v6855 = vmul.f32 %v6791, %v6588
    %v6856 = vmul.f32 %v6792, %v6477
    %v6857 = vmul.f32 %v6793, %v6479
    %v6858 = vmul.f32 %v6794, %v6590
    %v6859 = vmul.f32 %v6795, %v6592
    %v6860 = vmul.f32 %v6796, %v6483
    %v6861 = vmul.f32 %v6797, %v6485
    %v6862 = vmul.f32 %v6798, %v6596
    %v6863 = vmul.f32 %v6799, %v6598
    %v6864 = vmul.f32 %v6800, %v6487
    %v6865 = vmul.f32 %v6801, %v6489
    %v6866 = vmul.f32 %v6802, %v6600
    %v6867 = vmul.f32 %v6803, %v6602
    %v6868 = vmul.f32 %v6804, %v6493
    %v6869 = vmul.f32 %v6805, %v6495
    %v6870 = vmul.f32 %v6806, %v6606
    %v6871 = vmul.f32 %v6807, %v6608
    %v6872 = vmul.f32 %v6808, %v6497
    %v6873 = vmul.f32 %v6809, %v6499
    %v6874 = vmul.f32 %v6810, %v6610
    %v6875 = vmul.f32 %v6811, %v6612
    %v6876 = vmul.f32 %v6812, %v6503
    %v6877 = vmul.f32 %v6813, %v6505
    %v6878 = vmul.f32 %v6814, %v6616
    %v6879 = vmul.f32 %v6815, %v6618
    %v6880 = vmul.f32 %v6816, %v6507
    %v6881 = vmul.f32 %v6817, %v6509
    %v6882 = vmul.f32 %v6818, %v6620
    %v6883 = vmul.f32 %v6819, %v6622
    %v6884 = vmul.f32 %v6820, %v6513
    %v6885 = vmul.f32 %v6821, %v6515
    %v6886 = vmul.f32 %v6822, %v6626
    %v6887 = vmul.f32 %v6823, %v6628
    %v6888 = vmul.f32 %v6824, %v6517
    %v6889 = vmul.f32 %v6825, %v6519
    %v6890 = vmul.f32 %v6826, %v6630
    %v6891 = vmul.f32 %v6827, %v6632
    %v6892 = vmul.f32 %v6828, %v6523
    %v6893 = vmul.f32 %v6829, %v6525
    %v6894 = vmul.f32 %v6830, %v6636
    %v6895 = vmul.f32 %v6831, %v6638
    %v6896 = vmul.f32 %v6832, %v6527
    %v6897 = vmul.f32 %v6833, %v6529
    %v6898 = vmul.f32 %v6834, %v6640
    %v6899 = vmul.f32 %v6835, %v6642
    %v6900 = vadd.f32 %v6453, %v6836
    %v6901 = vadd.f32 %v6455, %v6837
    %v6902 = vadd.f32 %v6566, %v6838
    %v6903 = vadd.f32 %v6568, %v6839
    %v6904 = vadd.f32 %v6457, %v6840
    %v6905 = vadd.f32 %v6459, %v6841
    %v6906 = vadd.f32 %v6570, %v6842
    %v6907 = vadd.f32 %v6572, %v6843
    %v6908 = vadd.f32 %v6463, %v6844
    %v6909 = vadd.f32 %v6465, %v6845
    %v6910 = vadd.f32 %v6576, %v6846
    %v6911 = vadd.f32 %v6578, %v6847
    %v6912 = vadd.f32 %v6467, %v6848
    %v6913 = vadd.f32 %v6469, %v6849
    %v6914 = vadd.f32 %v6580, %v6850
    %v6915 = vadd.f32 %v6582, %v6851
    %v6916 = vadd.f32 %v6473, %v6852
    %v6917 = vadd.f32 %v6475, %v6853
    %v6918 = vadd.f32 %v6586, %v6854
    %v6919 = vadd.f32 %v6588, %v6855
    %v6920 = vadd.f32 %v6477, %v6856
    %v6921 = vadd.f32 %v6479, %v6857
    %v6922 = vadd.f32 %v6590, %v6858
    %v6923 = vadd.f32 %v6592, %v6859
    %v6924 = vadd.f32 %v6483, %v6860
    %v6925 = vadd.f32 %v6485, %v6861
    %v6926 = vadd.f32 %v6596, %v6862
    %v6927 = vadd.f32 %v6598, %v6863
    %v6928 = vadd.f32 %v6487, %v6864
    %v6929 = vadd.f32 %v6489, %v6865
    %v6930 = vadd.f32 %v6600, %v6866
    %v6931 = vadd.f32 %v6602, %v6867
    %v6932 = vadd.f32 %v6493, %v6868
    %v6933 = vadd.f32 %v6495, %v6869
    %v6934 = vadd.f32 %v6606, %v6870
    %v6935 = vadd.f32 %v6608, %v6871
    %v6936 = vadd.f32 %v6497, %v6872
    %v6937 = vadd.f32 %v6499, %v6873
    %v6938 = vadd.f32 %v6610, %v6874
    %v6939 = vadd.f32 %v6612, %v6875
    %v6940 = vadd.f32 %v6503, %v6876
    %v6941 = vadd.f32 %v6505, %v6877
    %v6942 = vadd.f32 %v6616, %v6878
    %v6943 = vadd.f32 %v6618, %v6879
    %v6944 = vadd.f32 %v6507, %v6880
    %v6945 = vadd.f32 %v6509, %v6881
    %v6946 = vadd.f32 %v6620, %v6882
    %v6947 = vadd.f32 %v6622, %v6883
    %v6948 = vadd.f32 %v6513, %v6884
    %v6949 = vadd.f32 %v6515, %v6885
    %v6950 = vadd.f32 %v6626, %v6886
    %v6951 = vadd.f32 %v6628, %v6887
    %v6952 = vadd.f32 %v6517, %v6888
    %v6953 = vadd.f32 %v6519, %v6889
    %v6954 = vadd.f32 %v6630, %v6890
    %v6955 = vadd.f32 %v6632, %v6891
    %v6956 = vadd.f32 %v6523, %v6892
    %v6957 = vadd.f32 %v6525, %v6893
    %v6958 = vadd.f32 %v6636, %v6894
    %v6959 = vadd.f32 %v6638, %v6895
    %v6960 = vadd.f32 %v6527, %v6896
    %v6961 = vadd.f32 %v6529, %v6897
    %v6962 = vadd.f32 %v6640, %v6898
    %v6963 = vadd.f32 %v6642, %v6899
    %v6964 = vmul.f32 %v6900, 0.7978846
    %v6965 = vmul.f32 %v6901, 0.7978846
    %v6966 = vmul.f32 %v6902, 0.7978846
    %v6967 = vmul.f32 %v6903, 0.7978846
    %v6968 = vmul.f32 %v6904, 0.7978846
    %v6969 = vmul.f32 %v6905, 0.7978846
    %v6970 = vmul.f32 %v6906, 0.7978846
    %v6971 = vmul.f32 %v6907, 0.7978846
    %v6972 = vmul.f32 %v6908, 0.7978846
    %v6973 = vmul.f32 %v6909, 0.7978846
    %v6974 = vmul.f32 %v6910, 0.7978846
    %v6975 = vmul.f32 %v6911, 0.7978846
    %v6976 = vmul.f32 %v6912, 0.7978846
    %v6977 = vmul.f32 %v6913, 0.7978846
    %v6978 = vmul.f32 %v6914, 0.7978846
    %v6979 = vmul.f32 %v6915, 0.7978846
    %v6980 = vmul.f32 %v6916, 0.7978846
    %v6981 = vmul.f32 %v6917, 0.7978846
    %v6982 = vmul.f32 %v6918, 0.7978846
    %v6983 = vmul.f32 %v6919, 0.7978846
    %v6984 = vmul.f32 %v6920, 0.7978846
    %v6985 = vmul.f32 %v6921, 0.7978846
    %v6986 = vmul.f32 %v6922, 0.7978846
    %v6987 = vmul.f32 %v6923, 0.7978846
    %v6988 = vmul.f32 %v6924, 0.7978846
    %v6989 = vmul.f32 %v6925, 0.7978846
    %v6990 = vmul.f32 %v6926, 0.7978846
    %v6991 = vmul.f32 %v6927, 0.7978846
    %v6992 = vmul.f32 %v6928, 0.7978846
    %v6993 = vmul.f32 %v6929, 0.7978846
    %v6994 = vmul.f32 %v6930, 0.7978846
    %v6995 = vmul.f32 %v6931, 0.7978846
    %v6996 = vmul.f32 %v6932, 0.7978846
    %v6997 = vmul.f32 %v6933, 0.7978846
    %v6998 = vmul.f32 %v6934, 0.7978846
    %v6999 = vmul.f32 %v6935, 0.7978846
    %v7000 = vmul.f32 %v6936, 0.7978846
    %v7001 = vmul.f32 %v6937, 0.7978846
    %v7002 = vmul.f32 %v6938, 0.7978846
    %v7003 = vmul.f32 %v6939, 0.7978846
    %v7004 = vmul.f32 %v6940, 0.7978846
    %v7005 = vmul.f32 %v6941, 0.7978846
    %v7006 = vmul.f32 %v6942, 0.7978846
    %v7007 = vmul.f32 %v6943, 0.7978846
    %v7008 = vmul.f32 %v6944, 0.7978846
    %v7009 = vmul.f32 %v6945, 0.7978846
    %v7010 = vmul.f32 %v6946, 0.7978846
    %v7011 = vmul.f32 %v6947, 0.7978846
    %v7012 = vmul.f32 %v6948, 0.7978846
    %v7013 = vmul.f32 %v6949, 0.7978846
    %v7014 = vmul.f32 %v6950, 0.7978846
    %v7015 = vmul.f32 %v6951, 0.7978846
    %v7016 = vmul.f32 %v6952, 0.7978846
    %v7017 = vmul.f32 %v6953, 0.7978846
    %v7018 = vmul.f32 %v6954, 0.7978846
    %v7019 = vmul.f32 %v6955, 0.7978846
    %v7020 = vmul.f32 %v6956, 0.7978846
    %v7021 = vmul.f32 %v6957, 0.7978846
    %v7022 = vmul.f32 %v6958, 0.7978846
    %v7023 = vmul.f32 %v6959, 0.7978846
    %v7024 = vmul.f32 %v6960, 0.7978846
    %v7025 = vmul.f32 %v6961, 0.7978846
    %v7026 = vmul.f32 %v6962, 0.7978846
    %v7027 = vmul.f32 %v6963, 0.7978846
    %v7028 = vtanh.pop %v6964
    %v7029 = vtanh.pop %v6965
    %v7030 = vtanh.pop %v6966
    %v7031 = vtanh.pop %v6967
    %v7032 = vtanh.pop %v6968
    %v7033 = vtanh.pop %v6969
    %v7034 = vtanh.pop %v6970
    %v7035 = vtanh.pop %v6971
    %v7036 = vtanh.pop %v6972
    %v7037 = vtanh.pop %v6973
    %v7038 = vtanh.pop %v6974
    %v7039 = vtanh.pop %v6975
    %v7040 = vtanh.pop %v6976
    %v7041 = vtanh.pop %v6977
    %v7042 = vtanh.pop %v6978
    %v7043 = vtanh.pop %v6979
    %v7044 = vtanh.pop %v6980
    %v7045 = vtanh.pop %v6981
    %v7046 = vtanh.pop %v6982
    %v7047 = vtanh.pop %v6983
    %v7048 = vtanh.pop %v6984
    %v7049 = vtanh.pop %v6985
    %v7050 = vtanh.pop %v6986
    %v7051 = vtanh.pop %v6987
    %v7052 = vtanh.pop %v6988
    %v7053 = vtanh.pop %v6989
    %v7054 = vtanh.pop %v6990
    %v7055 = vtanh.pop %v6991
    %v7056 = vtanh.pop %v6992
    %v7057 = vtanh.pop %v6993
    %v7058 = vtanh.pop %v6994
    %v7059 = vtanh.pop %v6995
    %v7060 = vtanh.pop %v6996
    %v7061 = vtanh.pop %v6997
    %v7062 = vtanh.pop %v6998
    %v7063 = vtanh.pop %v6999
    %v7064 = vtanh.pop %v7000
    %v7065 = vtanh.pop %v7001
    %v7066 = vtanh.pop %v7002
    %v7067 = vtanh.pop %v7003
    %v7068 = vtanh.pop %v7004
    %v7069 = vtanh.pop %v7005
    %v7070 = vtanh.pop %v7006
    %v7071 = vtanh.pop %v7007
    %v7072 = vtanh.pop %v7008
    %v7073 = vtanh.pop %v7009
    %v7074 = vtanh.pop %v7010
    %v7075 = vtanh.pop %v7011
    %v7076 = vtanh.pop %v7012
    %v7077 = vtanh.pop %v7013
    %v7078 = vtanh.pop %v7014
    %v7079 = vtanh.pop %v7015
    %v7080 = vtanh.pop %v7016
    %v7081 = vtanh.pop %v7017
    %v7082 = vtanh.pop %v7018
    %v7083 = vtanh.pop %v7019
    %v7084 = vtanh.pop %v7020
    %v7085 = vtanh.pop %v7021
    %v7086 = vtanh.pop %v7022
    %v7087 = vtanh.pop %v7023
    %v7088 = vtanh.pop %v7024
    %v7089 = vtanh.pop %v7025
    %v7090 = vtanh.pop %v7026
    %v7091 = vtanh.pop %v7027
    %v7092 = vadd.f32 %v7028, 1.0
    %v7093 = vadd.f32 %v7029, 1.0
    %v7094 = vadd.f32 %v7030, 1.0
    %v7095 = vadd.f32 %v7031, 1.0
    %v7096 = vadd.f32 %v7032, 1.0
    %v7097 = vadd.f32 %v7033, 1.0
    %v7098 = vadd.f32 %v7034, 1.0
    %v7099 = vadd.f32 %v7035, 1.0
    %v7100 = vadd.f32 %v7036, 1.0
    %v7101 = vadd.f32 %v7037, 1.0
    %v7102 = vadd.f32 %v7038, 1.0
    %v7103 = vadd.f32 %v7039, 1.0
    %v7104 = vadd.f32 %v7040, 1.0
    %v7105 = vadd.f32 %v7041, 1.0
    %v7106 = vadd.f32 %v7042, 1.0
    %v7107 = vadd.f32 %v7043, 1.0
    %v7108 = vadd.f32 %v7044, 1.0
    %v7109 = vadd.f32 %v7045, 1.0
    %v7110 = vadd.f32 %v7046, 1.0
    %v7111 = vadd.f32 %v7047, 1.0
    %v7112 = vadd.f32 %v7048, 1.0
    %v7113 = vadd.f32 %v7049, 1.0
    %v7114 = vadd.f32 %v7050, 1.0
    %v7115 = vadd.f32 %v7051, 1.0
    %v7116 = vadd.f32 %v7052, 1.0
    %v7117 = vadd.f32 %v7053, 1.0
    %v7118 = vadd.f32 %v7054, 1.0
    %v7119 = vadd.f32 %v7055, 1.0
    %v7120 = vadd.f32 %v7056, 1.0
    %v7121 = vadd.f32 %v7057, 1.0
    %v7122 = vadd.f32 %v7058, 1.0
    %v7123 = vadd.f32 %v7059, 1.0
    %v7124 = vadd.f32 %v7060, 1.0
    %v7125 = vadd.f32 %v7061, 1.0
    %v7126 = vadd.f32 %v7062, 1.0
    %v7127 = vadd.f32 %v7063, 1.0
    %v7128 = vadd.f32 %v7064, 1.0
    %v7129 = vadd.f32 %v7065, 1.0
    %v7130 = vadd.f32 %v7066, 1.0
    %v7131 = vadd.f32 %v7067, 1.0
    %v7132 = vadd.f32 %v7068, 1.0
    %v7133 = vadd.f32 %v7069, 1.0
    %v7134 = vadd.f32 %v7070, 1.0
    %v7135 = vadd.f32 %v7071, 1.0
    %v7136 = vadd.f32 %v7072, 1.0
    %v7137 = vadd.f32 %v7073, 1.0
    %v7138 = vadd.f32 %v7074, 1.0
    %v7139 = vadd.f32 %v7075, 1.0
    %v7140 = vadd.f32 %v7076, 1.0
    %v7141 = vadd.f32 %v7077, 1.0
    %v7142 = vadd.f32 %v7078, 1.0
    %v7143 = vadd.f32 %v7079, 1.0
    %v7144 = vadd.f32 %v7080, 1.0
    %v7145 = vadd.f32 %v7081, 1.0
    %v7146 = vadd.f32 %v7082, 1.0
    %v7147 = vadd.f32 %v7083, 1.0
    %v7148 = vadd.f32 %v7084, 1.0
    %v7149 = vadd.f32 %v7085, 1.0
    %v7150 = vadd.f32 %v7086, 1.0
    %v7151 = vadd.f32 %v7087, 1.0
    %v7152 = vadd.f32 %v7088, 1.0
    %v7153 = vadd.f32 %v7089, 1.0
    %v7154 = vadd.f32 %v7090, 1.0
    %v7155 = vadd.f32 %v7091, 1.0
    %v7156 = vmul.f32 %v6644, %v7092
    %v7157 = vmul.f32 %v6645, %v7093
    %v7158 = vmul.f32 %v6646, %v7094
    %v7159 = vmul.f32 %v6647, %v7095
    %v7160 = vmul.f32 %v6648, %v7096
    %v7161 = vmul.f32 %v6649, %v7097
    %v7162 = vmul.f32 %v6650, %v7098
    %v7163 = vmul.f32 %v6651, %v7099
    %v7164 = vmul.f32 %v6652, %v7100
    %v7165 = vmul.f32 %v6653, %v7101
    %v7166 = vmul.f32 %v6654, %v7102
    %v7167 = vmul.f32 %v6655, %v7103
    %v7168 = vmul.f32 %v6656, %v7104
    %v7169 = vmul.f32 %v6657, %v7105
    %v7170 = vmul.f32 %v6658, %v7106
    %v7171 = vmul.f32 %v6659, %v7107
    %v7172 = vmul.f32 %v6660, %v7108
    %v7173 = vmul.f32 %v6661, %v7109
    %v7174 = vmul.f32 %v6662, %v7110
    %v7175 = vmul.f32 %v6663, %v7111
    %v7176 = vmul.f32 %v6664, %v7112
    %v7177 = vmul.f32 %v6665, %v7113
    %v7178 = vmul.f32 %v6666, %v7114
    %v7179 = vmul.f32 %v6667, %v7115
    %v7180 = vmul.f32 %v6668, %v7116
    %v7181 = vmul.f32 %v6669, %v7117
    %v7182 = vmul.f32 %v6670, %v7118
    %v7183 = vmul.f32 %v6671, %v7119
    %v7184 = vmul.f32 %v6672, %v7120
    %v7185 = vmul.f32 %v6673, %v7121
    %v7186 = vmul.f32 %v6674, %v7122
    %v7187 = vmul.f32 %v6675, %v7123
    %v7188 = vmul.f32 %v6676, %v7124
    %v7189 = vmul.f32 %v6677, %v7125
    %v7190 = vmul.f32 %v6678, %v7126
    %v7191 = vmul.f32 %v6679, %v7127
    %v7192 = vmul.f32 %v6680, %v7128
    %v7193 = vmul.f32 %v6681, %v7129
    %v7194 = vmul.f32 %v6682, %v7130
    %v7195 = vmul.f32 %v6683, %v7131
    %v7196 = vmul.f32 %v6684, %v7132
    %v7197 = vmul.f32 %v6685, %v7133
    %v7198 = vmul.f32 %v6686, %v7134
    %v7199 = vmul.f32 %v6687, %v7135
    %v7200 = vmul.f32 %v6688, %v7136
    %v7201 = vmul.f32 %v6689, %v7137
    %v7202 = vmul.f32 %v6690, %v7138
    %v7203 = vmul.f32 %v6691, %v7139
    %v7204 = vmul.f32 %v6692, %v7140
    %v7205 = vmul.f32 %v6693, %v7141
    %v7206 = vmul.f32 %v6694, %v7142
    %v7207 = vmul.f32 %v6695, %v7143
    %v7208 = vmul.f32 %v6696, %v7144
    %v7209 = vmul.f32 %v6697, %v7145
    %v7210 = vmul.f32 %v6698, %v7146
    %v7211 = vmul.f32 %v6699, %v7147
    %v7212 = vmul.f32 %v6700, %v7148
    %v7213 = vmul.f32 %v6701, %v7149
    %v7214 = vmul.f32 %v6702, %v7150
    %v7215 = vmul.f32 %v6703, %v7151
    %v7216 = vmul.f32 %v6704, %v7152
    %v7217 = vmul.f32 %v6705, %v7153
    %v7218 = vmul.f32 %v6706, %v7154
    %v7219 = vmul.f32 %v6707, %v7155
    %v7220 = vpack.c.bf16 %v7160, %v7156
    %v7221 = vpack.c.bf16 %v7161, %v7157
    %v7222 = vpack.c.bf16 %v7162, %v7158
    %v7223 = vpack.c.bf16 %v7163, %v7159
    %v7224 = vpack.c.bf16 %v7168, %v7164
    %v7225 = vpack.c.bf16 %v7169, %v7165
    %v7226 = vpack.c.bf16 %v7170, %v7166
    %v7227 = vpack.c.bf16 %v7171, %v7167
    %v7228 = vpack.c.bf16 %v7176, %v7172
    %v7229 = vpack.c.bf16 %v7177, %v7173
    %v7230 = vpack.c.bf16 %v7178, %v7174
    %v7231 = vpack.c.bf16 %v7179, %v7175
    %v7232 = vpack.c.bf16 %v7184, %v7180
    %v7233 = vpack.c.bf16 %v7185, %v7181
    %v7234 = vpack.c.bf16 %v7186, %v7182
    %v7235 = vpack.c.bf16 %v7187, %v7183
    %v7236 = vpack.c.bf16 %v7192, %v7188
    %v7237 = vpack.c.bf16 %v7193, %v7189
    %v7238 = vpack.c.bf16 %v7194, %v7190
    %v7239 = vpack.c.bf16 %v7195, %v7191
    %v7240 = vpack.c.bf16 %v7200, %v7196
    %v7241 = vpack.c.bf16 %v7201, %v7197
    %v7242 = vpack.c.bf16 %v7202, %v7198
    %v7243 = vpack.c.bf16 %v7203, %v7199
    %v7244 = vpack.c.bf16 %v7208, %v7204
    %v7245 = vpack.c.bf16 %v7209, %v7205
    %v7246 = vpack.c.bf16 %v7210, %v7206
    %v7247 = vpack.c.bf16 %v7211, %v7207
    %v7248 = vpack.c.bf16 %v7216, %v7212
    %v7249 = vpack.c.bf16 %v7217, %v7213
    %v7250 = vpack.c.bf16 %v7218, %v7214
    %v7251 = vpack.c.bf16 %v7219, %v7215
    %s7252 = scalar_lea.vmem [#allocation18], 256
    %v7253 = vld [vmem:[%s7252] sm:$0xf]
    %v7254 = vld [vmem:[%s7252 + $0x4] sm:$0xf]
    %v7255 = vld [vmem:[%s7252 + $0x8] sm:$0xf]
    %v7256 = vld [vmem:[%s7252 + $0xc] sm:$0xf]
    %v7257 = vld [vmem:[%s7252 + $0x10] sm:$0xf]
    %v7258 = vld [vmem:[%s7252 + $0x14] sm:$0xf]
    %v7259 = vld [vmem:[%s7252 + $0x18] sm:$0xf]
    %v7260 = vld [vmem:[%s7252 + $0x1c] sm:$0xf]
    %v7261 = vld [vmem:[%s7252 + $0x20] sm:$0xf]
    %v7262 = vld [vmem:[%s7252 + $0x24] sm:$0xf]
    %v7263 = vld [vmem:[%s7252 + $0x28] sm:$0xf]
    %v7264 = vld [vmem:[%s7252 + $0x2c] sm:$0xf]
    %v7265 = vld [vmem:[%s7252 + $0x30] sm:$0xf]
    %v7266 = vld [vmem:[%s7252 + $0x34] sm:$0xf]
    %v7267 = vld [vmem:[%s7252 + $0x38] sm:$0xf]
    %v7268 = vld [vmem:[%s7252 + $0x3c] sm:$0xf]
    %v7269 = vld [vmem:[%s7252 + $0x40] sm:$0xf]
    %v7270 = vld [vmem:[%s7252 + $0x44] sm:$0xf]
    %v7271 = vld [vmem:[%s7252 + $0x48] sm:$0xf]
    %v7272 = vld [vmem:[%s7252 + $0x4c] sm:$0xf]
    %v7273 = vld [vmem:[%s7252 + $0x50] sm:$0xf]
    %v7274 = vld [vmem:[%s7252 + $0x54] sm:$0xf]
    %v7275 = vld [vmem:[%s7252 + $0x58] sm:$0xf]
    %v7276 = vld [vmem:[%s7252 + $0x5c] sm:$0xf]
    %v7277 = vld [vmem:[%s7252 + $0x60] sm:$0xf]
    %v7278 = vld [vmem:[%s7252 + $0x64] sm:$0xf]
    %v7279 = vld [vmem:[%s7252 + $0x68] sm:$0xf]
    %v7280 = vld [vmem:[%s7252 + $0x6c] sm:$0xf]
    %v7281 = vld [vmem:[%s7252 + $0x70] sm:$0xf]
    %v7282 = vld [vmem:[%s7252 + $0x74] sm:$0xf]
    %v7283 = vld [vmem:[%s7252 + $0x78] sm:$0xf]
    %v7284 = vld [vmem:[%s7252 + $0x7c] sm:$0xf]
    %v7285 = vld [vmem:[%s7252 + $0x80] sm:$0xf]
    %v7286 = vld [vmem:[%s7252 + $0x84] sm:$0xf]
    %v7287 = vld [vmem:[%s7252 + $0x88] sm:$0xf]
    %v7288 = vld [vmem:[%s7252 + $0x8c] sm:$0xf]
    %v7289 = vld [vmem:[%s7252 + $0x90] sm:$0xf]
    %v7290 = vld [vmem:[%s7252 + $0x94] sm:$0xf]
    %v7291 = vld [vmem:[%s7252 + $0x98] sm:$0xf]
    %v7292 = vld [vmem:[%s7252 + $0x9c] sm:$0xf]
    %v7293 = vld [vmem:[%s7252 + $0xa0] sm:$0xf]
    %v7294 = vld [vmem:[%s7252 + $0xa4] sm:$0xf]
    %v7295 = vld [vmem:[%s7252 + $0xa8] sm:$0xf]
    %v7296 = vld [vmem:[%s7252 + $0xac] sm:$0xf]
    %v7297 = vld [vmem:[%s7252 + $0xb0] sm:$0xf]
    %v7298 = vld [vmem:[%s7252 + $0xb4] sm:$0xf]
    %v7299 = vld [vmem:[%s7252 + $0xb8] sm:$0xf]
    %v7300 = vld [vmem:[%s7252 + $0xbc] sm:$0xf]
    %v7301 = vld [vmem:[%s7252 + $0xc0] sm:$0xf]
    %v7302 = vld [vmem:[%s7252 + $0xc4] sm:$0xf]
    %v7303 = vld [vmem:[%s7252 + $0xc8] sm:$0xf]
    %v7304 = vld [vmem:[%s7252 + $0xcc] sm:$0xf]
    %v7305 = vld [vmem:[%s7252 + $0xd0] sm:$0xf]
    %v7306 = vld [vmem:[%s7252 + $0xd4] sm:$0xf]
    %v7307 = vld [vmem:[%s7252 + $0xd8] sm:$0xf]
    %v7308 = vld [vmem:[%s7252 + $0xdc] sm:$0xf]
    %v7309 = vld [vmem:[%s7252 + $0xe0] sm:$0xf]
    %v7310 = vld [vmem:[%s7252 + $0xe4] sm:$0xf]
    %v7311 = vld [vmem:[%s7252 + $0xe8] sm:$0xf]
    %v7312 = vld [vmem:[%s7252 + $0xec] sm:$0xf]
    %v7313 = vld [vmem:[%s7252 + $0xf0] sm:$0xf]
    %v7314 = vld [vmem:[%s7252 + $0xf4] sm:$0xf]
    %v7315 = vld [vmem:[%s7252 + $0xf8] sm:$0xf]
    %v7316 = vld [vmem:[%s7252 + $0xfc] sm:$0xf]
    %s7317 = scalar_lea.vmem [#allocation19], 1
    %v7318 = vld [vmem:[%s7317] sm:$0x1]
    %v7320 = vlaneseq
    %v7321 = vshrl.u32 %v7320, 7
    %v7322 = vsub.s32 0, %v7321
    %v7323 = vrot.slane %v7318, %v7322
    %v7389 = vunpack.c.l.b16 %v7253
    %v7390 = vunpack.c.l.b16 %v7254
    %v7391 = vunpack.c.l.b16 %v7255
    %v7392 = vunpack.c.l.b16 %v7256
    %v7393 = vunpack.c.l.b16 %v7257
    %v7394 = vunpack.c.l.b16 %v7258
    %v7395 = vunpack.c.l.b16 %v7259
    %v7396 = vunpack.c.l.b16 %v7260
    %v7397 = vunpack.c.l.b16 %v7261
    %v7398 = vunpack.c.l.b16 %v7262
    %v7399 = vunpack.c.l.b16 %v7263
    %v7400 = vunpack.c.l.b16 %v7264
    %v7401 = vunpack.c.l.b16 %v7265
    %v7402 = vunpack.c.l.b16 %v7266
    %v7403 = vunpack.c.l.b16 %v7267
    %v7404 = vunpack.c.l.b16 %v7268
    %v7405 = vunpack.c.l.b16 %v7269
    %v7406 = vunpack.c.l.b16 %v7270
    %v7407 = vunpack.c.l.b16 %v7271
    %v7408 = vunpack.c.l.b16 %v7272
    %v7409 = vunpack.c.l.b16 %v7273
    %v7410 = vunpack.c.l.b16 %v7274
    %v7411 = vunpack.c.l.b16 %v7275
    %v7412 = vunpack.c.l.b16 %v7276
    %v7413 = vunpack.c.l.b16 %v7277
    %v7414 = vunpack.c.l.b16 %v7278
    %v7415 = vunpack.c.l.b16 %v7279
    %v7416 = vunpack.c.l.b16 %v7280
    %v7417 = vunpack.c.l.b16 %v7281
    %v7418 = vunpack.c.l.b16 %v7282
    %v7419 = vunpack.c.l.b16 %v7283
    %v7420 = vunpack.c.l.b16 %v7284
    %v7421 = vunpack.c.l.b16 %v7285
    %v7422 = vunpack.c.l.b16 %v7286
    %v7423 = vunpack.c.l.b16 %v7287
    %v7424 = vunpack.c.l.b16 %v7288
    %v7425 = vunpack.c.l.b16 %v7289
    %v7426 = vunpack.c.l.b16 %v7290
    %v7427 = vunpack.c.l.b16 %v7291
    %v7428 = vunpack.c.l.b16 %v7292
    %v7429 = vunpack.c.l.b16 %v7293
    %v7430 = vunpack.c.l.b16 %v7294
    %v7431 = vunpack.c.l.b16 %v7295
    %v7432 = vunpack.c.l.b16 %v7296
    %v7433 = vunpack.c.l.b16 %v7297
    %v7434 = vunpack.c.l.b16 %v7298
    %v7435 = vunpack.c.l.b16 %v7299
    %v7436 = vunpack.c.l.b16 %v7300
    %v7437 = vunpack.c.l.b16 %v7301
    %v7438 = vunpack.c.l.b16 %v7302
    %v7439 = vunpack.c.l.b16 %v7303
    %v7440 = vunpack.c.l.b16 %v7304
    %v7441 = vunpack.c.l.b16 %v7305
    %v7442 = vunpack.c.l.b16 %v7306
    %v7443 = vunpack.c.l.b16 %v7307
    %v7444 = vunpack.c.l.b16 %v7308
    %v7445 = vunpack.c.l.b16 %v7309
    %v7446 = vunpack.c.l.b16 %v7310
    %v7447 = vunpack.c.l.b16 %v7311
    %v7448 = vunpack.c.l.b16 %v7312
    %v7449 = vunpack.c.l.b16 %v7313
    %v7450 = vunpack.c.l.b16 %v7314
    %v7451 = vunpack.c.l.b16 %v7315
    %v7452 = vunpack.c.l.b16 %v7316
    %v7453 = vpack.c.b16 %v7390, %v7389
    %v7454 = vpack.c.b16 %v7392, %v7391
    %v7455 = vpack.c.b16 %v7394, %v7393
    %v7456 = vpack.c.b16 %v7396, %v7395
    %v7457 = vpack.c.b16 %v7398, %v7397
    %v7458 = vpack.c.b16 %v7400, %v7399
    %v7459 = vpack.c.b16 %v7402, %v7401
    %v7460 = vpack.c.b16 %v7404, %v7403
    %v7461 = vpack.c.b16 %v7406, %v7405
    %v7462 = vpack.c.b16 %v7408, %v7407
    %v7463 = vpack.c.b16 %v7410, %v7409
    %v7464 = vpack.c.b16 %v7412, %v7411
    %v7465 = vpack.c.b16 %v7414, %v7413
    %v7466 = vpack.c.b16 %v7416, %v7415
    %v7467 = vpack.c.b16 %v7418, %v7417
    %v7468 = vpack.c.b16 %v7420, %v7419
    %v7469 = vpack.c.b16 %v7422, %v7421
    %v7470 = vpack.c.b16 %v7424, %v7423
    %v7471 = vpack.c.b16 %v7426, %v7425
    %v7472 = vpack.c.b16 %v7428, %v7427
    %v7473 = vpack.c.b16 %v7430, %v7429
    %v7474 = vpack.c.b16 %v7432, %v7431
    %v7475 = vpack.c.b16 %v7434, %v7433
    %v7476 = vpack.c.b16 %v7436, %v7435
    %v7477 = vpack.c.b16 %v7438, %v7437
    %v7478 = vpack.c.b16 %v7440, %v7439
    %v7479 = vpack.c.b16 %v7442, %v7441
    %v7480 = vpack.c.b16 %v7444, %v7443
    %v7481 = vpack.c.b16 %v7446, %v7445
    %v7482 = vpack.c.b16 %v7448, %v7447
    %v7483 = vpack.c.b16 %v7450, %v7449
    %v7484 = vpack.c.b16 %v7452, %v7451
    %7517 = vmatprep.subr.bf16.mxu0 0
    %7518 = vmatpush1.bf16.msra.mxu0 %v7460
    %7519 = vmatprep.subr.bf16.mxu0 0
    %7520 = vmatpush1.bf16.msra.mxu0 %v7459
    %7521 = vmatprep.subr.bf16.mxu0 0
    %7522 = vmatpush1.bf16.msra.mxu0 %v7458
    %7523 = vmatprep.subr.bf16.mxu0 0
    %7524 = vmatpush1.bf16.msra.mxu0 %v7457
    %7525 = vmatprep.subr.bf16.mxu0 0
    %7526 = vmatpush1.bf16.msra.mxu0 %v7456
    %7527 = vmatprep.subr.bf16.mxu0 0
    %7528 = vmatpush1.bf16.msra.mxu0 %v7455
    %7529 = vmatprep.subr.bf16.mxu0 0
    %7530 = vmatpush1.bf16.msra.mxu0 %v7454
    %7531 = vmatprep.subr.bf16.mxu0 0
    %7532 = vmatpush1.bf16.msra.mxu0 %v7453
    %7533 = vmatprep.subr.bf16.mxu0 0
    %7534 = vmatpush2.bf16.msra.mxu0 %v7468
    %7535 = vmatprep.subr.bf16.mxu0 0
    %7536 = vmatpush2.bf16.msra.mxu0 %v7467
    %7537 = vmatprep.subr.bf16.mxu0 0
    %7538 = vmatpush2.bf16.msra.mxu0 %v7466
    %7539 = vmatprep.subr.bf16.mxu0 0
    %7540 = vmatpush2.bf16.msra.mxu0 %v7465
    %7541 = vmatprep.subr.bf16.mxu0 0
    %7542 = vmatpush2.bf16.msra.mxu0 %v7464
    %7543 = vmatprep.subr.bf16.mxu0 0
    %7544 = vmatpush2.bf16.msra.mxu0 %v7463
    %7545 = vmatprep.subr.bf16.mxu0 0
    %7546 = vmatpush2.bf16.msra.mxu0 %v7462
    %7547 = vmatprep.subr.bf16.mxu0 0
    %7548 = vmatpush2.bf16.msra.mxu0 %v7461
    %7549 = vmatprep.mubr.bf16.mxu0 %v7221
    %7550 = vmatmul.mubr.bf16.gmra.mxu0 %v7220
    %v7551 = vpop.f32.mrf.mxu0
    %v7552 = vadd.f32 %v7323, %v7551
    %v7553 = vpop.f32.mrf.mxu0
    %v7554 = vpop.f32.mrf.mxu0
    %v7555 = vadd.f32 %v7323, %v7554
    %v7556 = vpop.f32.mrf.mxu0
    %7557 = vmatprep.mubr.bf16.mxu0 %v7225
    %7558 = vmatmul.mubr.bf16.gmra.mxu0 %v7224
    %v7559 = vpop.f32.mrf.mxu0
    %v7560 = vadd.f32 %v7323, %v7559
    %v7561 = vpop.f32.mrf.mxu0
    %v7562 = vpop.f32.mrf.mxu0
    %v7563 = vadd.f32 %v7323, %v7562
    %v7564 = vpop.f32.mrf.mxu0
    %7565 = vmatprep.mubr.bf16.mxu0 %v7229
    %7566 = vmatmul.mubr.bf16.gmra.mxu0 %v7228
    %v7567 = vpop.f32.mrf.mxu0
    %v7568 = vadd.f32 %v7323, %v7567
    %v7569 = vpop.f32.mrf.mxu0
    %v7570 = vpop.f32.mrf.mxu0
    %v7571 = vadd.f32 %v7323, %v7570
    %v7572 = vpop.f32.mrf.mxu0
    %7573 = vmatprep.mubr.bf16.mxu0 %v7233
    %7574 = vmatmul.mubr.bf16.gmra.mxu0 %v7232
    %v7575 = vpop.f32.mrf.mxu0
    %v7576 = vadd.f32 %v7323, %v7575
    %v7577 = vpop.f32.mrf.mxu0
    %v7578 = vpop.f32.mrf.mxu0
    %v7579 = vadd.f32 %v7323, %v7578
    %v7580 = vpop.f32.mrf.mxu0
    %7581 = vmatprep.mubr.bf16.mxu0 %v7237
    %7582 = vmatmul.mubr.bf16.gmra.mxu0 %v7236
    %v7583 = vpop.f32.mrf.mxu0
    %v7584 = vadd.f32 %v7323, %v7583
    %v7585 = vpop.f32.mrf.mxu0
    %v7586 = vpop.f32.mrf.mxu0
    %v7587 = vadd.f32 %v7323, %v7586
    %v7588 = vpop.f32.mrf.mxu0
    %7589 = vmatprep.mubr.bf16.mxu0 %v7241
    %7590 = vmatmul.mubr.bf16.gmra.mxu0 %v7240
    %v7591 = vpop.f32.mrf.mxu0
    %v7592 = vadd.f32 %v7323, %v7591
    %v7593 = vpop.f32.mrf.mxu0
    %v7594 = vpop.f32.mrf.mxu0
    %v7595 = vadd.f32 %v7323, %v7594
    %v7596 = vpop.f32.mrf.mxu0
    %7597 = vmatprep.mubr.bf16.mxu0 %v7245
    %7598 = vmatmul.mubr.bf16.gmra.mxu0 %v7244
    %v7599 = vpop.f32.mrf.mxu0
    %v7600 = vadd.f32 %v7323, %v7599
    %v7601 = vpop.f32.mrf.mxu0
    %v7602 = vpop.f32.mrf.mxu0
    %v7603 = vadd.f32 %v7323, %v7602
    %v7604 = vpop.f32.mrf.mxu0
    %7605 = vmatprep.mubr.bf16.mxu0 %v7249
    %7606 = vmatmul.mubr.bf16.gmra.mxu0 %v7248
    %v7607 = vpop.f32.mrf.mxu0
    %v7608 = vadd.f32 %v7323, %v7607
    %v7609 = vpop.f32.mrf.mxu0
    %v7610 = vpop.f32.mrf.mxu0
    %v7611 = vadd.f32 %v7323, %v7610
    %v7612 = vpop.f32.mrf.mxu0
    %7613 = vdwg.mxu0
    %7614 = vmatprep.subr.bf16.mxu0 0
    %7615 = vmatpush1.bf16.msra.mxu0 %v7476
    %7616 = vmatprep.subr.bf16.mxu0 0
    %7617 = vmatpush1.bf16.msra.mxu0 %v7475
    %7618 = vmatprep.subr.bf16.mxu0 0
    %7619 = vmatpush1.bf16.msra.mxu0 %v7474
    %7620 = vmatprep.subr.bf16.mxu0 0
    %7621 = vmatpush1.bf16.msra.mxu0 %v7473
    %7622 = vmatprep.subr.bf16.mxu0 0
    %7623 = vmatpush1.bf16.msra.mxu0 %v7472
    %7624 = vmatprep.subr.bf16.mxu0 0
    %7625 = vmatpush1.bf16.msra.mxu0 %v7471
    %7626 = vmatprep.subr.bf16.mxu0 0
    %7627 = vmatpush1.bf16.msra.mxu0 %v7470
    %7628 = vmatprep.subr.bf16.mxu0 0
    %7629 = vmatpush1.bf16.msra.mxu0 %v7469
    %7630 = vmatprep.subr.bf16.mxu0 0
    %7631 = vmatpush2.bf16.msra.mxu0 %v7484
    %7632 = vmatprep.subr.bf16.mxu0 0
    %7633 = vmatpush2.bf16.msra.mxu0 %v7483
    %7634 = vmatprep.subr.bf16.mxu0 0
    %7635 = vmatpush2.bf16.msra.mxu0 %v7482
    %7636 = vmatprep.subr.bf16.mxu0 0
    %7637 = vmatpush2.bf16.msra.mxu0 %v7481
    %7638 = vmatprep.subr.bf16.mxu0 0
    %7639 = vmatpush2.bf16.msra.mxu0 %v7480
    %7640 = vmatprep.subr.bf16.mxu0 0
    %7641 = vmatpush2.bf16.msra.mxu0 %v7479
    %7642 = vmatprep.subr.bf16.mxu0 0
    %7643 = vmatpush2.bf16.msra.mxu0 %v7478
    %7644 = vmatprep.subr.bf16.mxu0 0
    %7645 = vmatpush2.bf16.msra.mxu0 %v7477
    %7646 = vmatprep.mubr.bf16.mxu0 %v7223
    %7647 = vmatmul.mubr.bf16.gmra.mxu0 %v7222
    %v7648 = vpop.f32.mrf.mxu0
    %v7649 = vadd.f32 %v7552, %v7648
    %v7650 = vpop.f32.mrf.mxu0
    %v7651 = vpop.f32.mrf.mxu0
    %v7652 = vadd.f32 %v7555, %v7651
    %v7653 = vpop.f32.mrf.mxu0
    %7654 = vmatprep.mubr.bf16.mxu0 %v7227
    %7655 = vmatmul.mubr.bf16.gmra.mxu0 %v7226
    %v7656 = vpop.f32.mrf.mxu0
    %v7657 = vadd.f32 %v7560, %v7656
    %v7658 = vpop.f32.mrf.mxu0
    %v7659 = vpop.f32.mrf.mxu0
    %v7660 = vadd.f32 %v7563, %v7659
    %v7661 = vpop.f32.mrf.mxu0
    %7662 = vmatprep.mubr.bf16.mxu0 %v7231
    %7663 = vmatmul.mubr.bf16.gmra.mxu0 %v7230
    %v7664 = vpop.f32.mrf.mxu0
    %v7665 = vadd.f32 %v7568, %v7664
    %v7666 = vpop.f32.mrf.mxu0
    %v7667 = vpop.f32.mrf.mxu0
    %v7668 = vadd.f32 %v7571, %v7667
    %v7669 = vpop.f32.mrf.mxu0
    %7670 = vmatprep.mubr.bf16.mxu0 %v7235
    %7671 = vmatmul.mubr.bf16.gmra.mxu0 %v7234
    %v7672 = vpop.f32.mrf.mxu0
    %v7673 = vadd.f32 %v7576, %v7672
    %v7674 = vpop.f32.mrf.mxu0
    %v7675 = vpop.f32.mrf.mxu0
    %v7676 = vadd.f32 %v7579, %v7675
    %v7677 = vpop.f32.mrf.mxu0
    %7678 = vmatprep.mubr.bf16.mxu0 %v7239
    %7679 = vmatmul.mubr.bf16.gmra.mxu0 %v7238
    %v7680 = vpop.f32.mrf.mxu0
    %v7681 = vadd.f32 %v7584, %v7680
    %v7682 = vpop.f32.mrf.mxu0
    %v7683 = vpop.f32.mrf.mxu0
    %v7684 = vadd.f32 %v7587, %v7683
    %v7685 = vpop.f32.mrf.mxu0
    %7686 = vmatprep.mubr.bf16.mxu0 %v7243
    %7687 = vmatmul.mubr.bf16.gmra.mxu0 %v7242
    %v7688 = vpop.f32.mrf.mxu0
    %v7689 = vadd.f32 %v7592, %v7688
    %v7690 = vpop.f32.mrf.mxu0
    %v7691 = vpop.f32.mrf.mxu0
    %v7692 = vadd.f32 %v7595, %v7691
    %v7693 = vpop.f32.mrf.mxu0
    %7694 = vmatprep.mubr.bf16.mxu0 %v7247
    %7695 = vmatmul.mubr.bf16.gmra.mxu0 %v7246
    %v7696 = vpop.f32.mrf.mxu0
    %v7697 = vadd.f32 %v7600, %v7696
    %v7698 = vpop.f32.mrf.mxu0
    %v7699 = vpop.f32.mrf.mxu0
    %v7700 = vadd.f32 %v7603, %v7699
    %v7701 = vpop.f32.mrf.mxu0
    %7702 = vmatprep.mubr.bf16.mxu0 %v7251
    %7703 = vmatmul.mubr.bf16.gmra.mxu0 %v7250
    %v7704 = vpop.f32.mrf.mxu0
    %v7705 = vadd.f32 %v7608, %v7704
    %v7706 = vpop.f32.mrf.mxu0
    %v7707 = vpop.f32.mrf.mxu0
    %v7708 = vadd.f32 %v7611, %v7707
    %v7709 = vpop.f32.mrf.mxu0
    %7710 = vdwg.mxu0
    %v7711 = vadd.f32 %v6178, %v7649
    %v7712 = vadd.f32 %v6179, %v7652
    %v7713 = vadd.f32 %v6180, %v7657
    %v7714 = vadd.f32 %v6181, %v7660
    %v7715 = vadd.f32 %v6182, %v7665
    %v7716 = vadd.f32 %v6183, %v7668
    %v7717 = vadd.f32 %v6184, %v7673
    %v7718 = vadd.f32 %v6185, %v7676
    %v7719 = vadd.f32 %v6186, %v7681
    %v7720 = vadd.f32 %v6187, %v7684
    %v7721 = vadd.f32 %v6188, %v7689
    %v7722 = vadd.f32 %v6189, %v7692
    %v7723 = vadd.f32 %v6190, %v7697
    %v7724 = vadd.f32 %v6191, %v7700
    %v7725 = vadd.f32 %v6192, %v7705
    %v7726 = vadd.f32 %v6193, %v7708
    %s7727 = scalar_lea.vmem [#allocation21], 1
    %v7728 = vld [vmem:[%s7727] sm:$0x1]
    %s7729 = scalar_lea.vmem [#allocation22], 1
    %v7730 = vld [vmem:[%s7729] sm:$0x1]
    %7731 = vadd.xlane.f32.xlu0 %v7711
    %v7732 = vpop.xlane.xlu0 %7731
    %7733 = vadd.xlane.f32.xlu0 %v7712
    %v7734 = vpop.xlane.xlu0 %7733
    %7735 = vadd.xlane.f32.xlu0 %v7713
    %v7736 = vpop.xlane.xlu0 %7735
    %7737 = vadd.xlane.f32.xlu0 %v7714
    %v7738 = vpop.xlane.xlu0 %7737
    %7739 = vadd.xlane.f32.xlu0 %v7715
    %v7740 = vpop.xlane.xlu0 %7739
    %7741 = vadd.xlane.f32.xlu0 %v7716
    %v7742 = vpop.xlane.xlu0 %7741
    %7743 = vadd.xlane.f32.xlu0 %v7717
    %v7744 = vpop.xlane.xlu0 %7743
    %7745 = vadd.xlane.f32.xlu0 %v7718
    %v7746 = vpop.xlane.xlu0 %7745
    %7747 = vadd.xlane.f32.xlu0 %v7719
    %v7748 = vpop.xlane.xlu0 %7747
    %7749 = vadd.xlane.f32.xlu0 %v7720
    %v7750 = vpop.xlane.xlu0 %7749
    %7751 = vadd.xlane.f32.xlu0 %v7721
    %v7752 = vpop.xlane.xlu0 %7751
    %7753 = vadd.xlane.f32.xlu0 %v7722
    %v7754 = vpop.xlane.xlu0 %7753
    %7755 = vadd.xlane.f32.xlu0 %v7723
    %v7756 = vpop.xlane.xlu0 %7755
    %7757 = vadd.xlane.f32.xlu0 %v7724
    %v7758 = vpop.xlane.xlu0 %7757
    %7759 = vadd.xlane.f32.xlu0 %v7725
    %v7760 = vpop.xlane.xlu0 %7759
    %7761 = vadd.xlane.f32.xlu0 %v7726
    %v7762 = vpop.xlane.xlu0 %7761
    %v7763 = vmul.f32 %v7732, %v2163
    %v7764 = vmul.f32 %v7734, %v2163
    %v7765 = vmul.f32 %v7736, %v2163
    %v7766 = vmul.f32 %v7738, %v2163
    %v7767 = vmul.f32 %v7740, %v2163
    %v7768 = vmul.f32 %v7742, %v2163
    %v7769 = vmul.f32 %v7744, %v2163
    %v7770 = vmul.f32 %v7746, %v2163
    %v7771 = vmul.f32 %v7748, %v2163
    %v7772 = vmul.f32 %v7750, %v2163
    %v7773 = vmul.f32 %v7752, %v2163
    %v7774 = vmul.f32 %v7754, %v2163
    %v7775 = vmul.f32 %v7756, %v2163
    %v7776 = vmul.f32 %v7758, %v2163
    %v7777 = vmul.f32 %v7760, %v2163
    %v7778 = vmul.f32 %v7762, %v2163
    %v7779 = vsub.f32 %v7711, %v7763
    %v7780 = vsub.f32 %v7712, %v7764
    %v7781 = vsub.f32 %v7713, %v7765
    %v7782 = vsub.f32 %v7714, %v7766
    %v7783 = vsub.f32 %v7715, %v7767
    %v7784 = vsub.f32 %v7716, %v7768
    %v7785 = vsub.f32 %v7717, %v7769
    %v7786 = vsub.f32 %v7718, %v7770
    %v7787 = vsub.f32 %v7719, %v7771
    %v7788 = vsub.f32 %v7720, %v7772
    %v7789 = vsub.f32 %v7721, %v7773
    %v7790 = vsub.f32 %v7722, %v7774
    %v7791 = vsub.f32 %v7723, %v7775
    %v7792 = vsub.f32 %v7724, %v7776
    %v7793 = vsub.f32 %v7725, %v7777
    %v7794 = vsub.f32 %v7726, %v7778
    %v7795 = vmul.f32 %v7779, %v7779
    %v7796 = vmul.f32 %v7780, %v7780
    %v7797 = vmul.f32 %v7781, %v7781
    %v7798 = vmul.f32 %v7782, %v7782
    %v7799 = vmul.f32 %v7783, %v7783
    %v7800 = vmul.f32 %v7784, %v7784
    %v7801 = vmul.f32 %v7785, %v7785
    %v7802 = vmul.f32 %v7786, %v7786
    %v7803 = vmul.f32 %v7787, %v7787
    %v7804 = vmul.f32 %v7788, %v7788
    %v7805 = vmul.f32 %v7789, %v7789
    %v7806 = vmul.f32 %v7790, %v7790
    %v7807 = vmul.f32 %v7791, %v7791
    %v7808 = vmul.f32 %v7792, %v7792
    %v7809 = vmul.f32 %v7793, %v7793
    %v7810 = vmul.f32 %v7794, %v7794
    %7811 = vadd.xlane.f32.xlu0 %v7795
    %v7812 = vpop.xlane.xlu0 %7811
    %7813 = vadd.xlane.f32.xlu0 %v7796
    %v7814 = vpop.xlane.xlu0 %7813
    %7815 = vadd.xlane.f32.xlu0 %v7797
    %v7816 = vpop.xlane.xlu0 %7815
    %7817 = vadd.xlane.f32.xlu0 %v7798
    %v7818 = vpop.xlane.xlu0 %7817
    %7819 = vadd.xlane.f32.xlu0 %v7799
    %v7820 = vpop.xlane.xlu0 %7819
    %7821 = vadd.xlane.f32.xlu0 %v7800
    %v7822 = vpop.xlane.xlu0 %7821
    %7823 = vadd.xlane.f32.xlu0 %v7801
    %v7824 = vpop.xlane.xlu0 %7823
    %7825 = vadd.xlane.f32.xlu0 %v7802
    %v7826 = vpop.xlane.xlu0 %7825
    %7827 = vadd.xlane.f32.xlu0 %v7803
    %v7828 = vpop.xlane.xlu0 %7827
    %7829 = vadd.xlane.f32.xlu0 %v7804
    %v7830 = vpop.xlane.xlu0 %7829
    %7831 = vadd.xlane.f32.xlu0 %v7805
    %v7832 = vpop.xlane.xlu0 %7831
    %7833 = vadd.xlane.f32.xlu0 %v7806
    %v7834 = vpop.xlane.xlu0 %7833
    %7835 = vadd.xlane.f32.xlu0 %v7807
    %v7836 = vpop.xlane.xlu0 %7835
    %7837 = vadd.xlane.f32.xlu0 %v7808
    %v7838 = vpop.xlane.xlu0 %7837
    %7839 = vadd.xlane.f32.xlu0 %v7809
    %v7840 = vpop.xlane.xlu0 %7839
    %7841 = vadd.xlane.f32.xlu0 %v7810
    %v7842 = vpop.xlane.xlu0 %7841
    %v7843 = vmul.f32 %v7812, %v2163
    %v7844 = vmul.f32 %v7814, %v2163
    %v7845 = vmul.f32 %v7816, %v2163
    %v7846 = vmul.f32 %v7818, %v2163
    %v7847 = vmul.f32 %v7820, %v2163
    %v7848 = vmul.f32 %v7822, %v2163
    %v7849 = vmul.f32 %v7824, %v2163
    %v7850 = vmul.f32 %v7826, %v2163
    %v7851 = vmul.f32 %v7828, %v2163
    %v7852 = vmul.f32 %v7830, %v2163
    %v7853 = vmul.f32 %v7832, %v2163
    %v7854 = vmul.f32 %v7834, %v2163
    %v7855 = vmul.f32 %v7836, %v2163
    %v7856 = vmul.f32 %v7838, %v2163
    %v7857 = vmul.f32 %v7840, %v2163
    %v7858 = vmul.f32 %v7842, %v2163
    %v7859 = vadd.f32 %v7843, 1e-12
    %v7860 = vadd.f32 %v7844, 1e-12
    %v7861 = vadd.f32 %v7845, 1e-12
    %v7862 = vadd.f32 %v7846, 1e-12
    %v7863 = vadd.f32 %v7847, 1e-12
    %v7864 = vadd.f32 %v7848, 1e-12
    %v7865 = vadd.f32 %v7849, 1e-12
    %v7866 = vadd.f32 %v7850, 1e-12
    %v7867 = vadd.f32 %v7851, 1e-12
    %v7868 = vadd.f32 %v7852, 1e-12
    %v7869 = vadd.f32 %v7853, 1e-12
    %v7870 = vadd.f32 %v7854, 1e-12
    %v7871 = vadd.f32 %v7855, 1e-12
    %v7872 = vadd.f32 %v7856, 1e-12
    %v7873 = vadd.f32 %v7857, 1e-12
    %v7874 = vadd.f32 %v7858, 1e-12
    %v7875 = vrsqrt.pop %v7859
    %v7876 = vrsqrt.pop %v7860
    %v7877 = vrsqrt.pop %v7861
    %v7878 = vrsqrt.pop %v7862
    %v7879 = vrsqrt.pop %v7863
    %v7880 = vrsqrt.pop %v7864
    %v7881 = vrsqrt.pop %v7865
    %v7882 = vrsqrt.pop %v7866
    %v7883 = vrsqrt.pop %v7867
    %v7884 = vrsqrt.pop %v7868
    %v7885 = vrsqrt.pop %v7869
    %v7886 = vrsqrt.pop %v7870
    %v7887 = vrsqrt.pop %v7871
    %v7888 = vrsqrt.pop %v7872
    %v7889 = vrsqrt.pop %v7873
    %v7890 = vrsqrt.pop %v7874
    %v7891 = vmul.f32 %v7779, %v7875
    %v7892 = vmul.f32 %v7780, %v7876
    %v7893 = vmul.f32 %v7781, %v7877
    %v7894 = vmul.f32 %v7782, %v7878
    %v7895 = vmul.f32 %v7783, %v7879
    %v7896 = vmul.f32 %v7784, %v7880
    %v7897 = vmul.f32 %v7785, %v7881
    %v7898 = vmul.f32 %v7786, %v7882
    %v7899 = vmul.f32 %v7787, %v7883
    %v7900 = vmul.f32 %v7788, %v7884
    %v7901 = vmul.f32 %v7789, %v7885
    %v7902 = vmul.f32 %v7790, %v7886
    %v7903 = vmul.f32 %v7791, %v7887
    %v7904 = vmul.f32 %v7792, %v7888
    %v7905 = vmul.f32 %v7793, %v7889
    %v7906 = vmul.f32 %v7794, %v7890
    %v7908 = vlaneseq
    %v7909 = vshrl.u32 %v7908, 7
    %v7910 = vsub.s32 0, %v7909
    %v7911 = vrot.slane %v7728, %v7910
    %v7913 = vmul.f32 %v7891, %v7911
    %v7914 = vmul.f32 %v7892, %v7911
    %v7915 = vmul.f32 %v7893, %v7911
    %v7916 = vmul.f32 %v7894, %v7911
    %v7917 = vmul.f32 %v7895, %v7911
    %v7918 = vmul.f32 %v7896, %v7911
    %v7919 = vmul.f32 %v7897, %v7911
    %v7920 = vmul.f32 %v7898, %v7911
    %v7921 = vmul.f32 %v7899, %v7911
    %v7922 = vmul.f32 %v7900, %v7911
    %v7923 = vmul.f32 %v7901, %v7911
    %v7924 = vmul.f32 %v7902, %v7911
    %v7925 = vmul.f32 %v7903, %v7911
    %v7926 = vmul.f32 %v7904, %v7911
    %v7927 = vmul.f32 %v7905, %v7911
    %v7928 = vmul.f32 %v7906, %v7911
    %v7930 = vlaneseq
    %v7931 = vshrl.u32 %v7930, 7
    %v7932 = vsub.s32 0, %v7931
    %v7933 = vrot.slane %v7730, %v7932
    %v7935 = vadd.f32 %v7913, %v7933
    %v7936 = vadd.f32 %v7914, %v7933
    %v7937 = vadd.f32 %v7915, %v7933
    %v7938 = vadd.f32 %v7916, %v7933
    %v7939 = vadd.f32 %v7917, %v7933
    %v7940 = vadd.f32 %v7918, %v7933
    %v7941 = vadd.f32 %v7919, %v7933
    %v7942 = vadd.f32 %v7920, %v7933
    %v7943 = vadd.f32 %v7921, %v7933
    %v7944 = vadd.f32 %v7922, %v7933
    %v7945 = vadd.f32 %v7923, %v7933
    %v7946 = vadd.f32 %v7924, %v7933
    %v7947 = vadd.f32 %v7925, %v7933
    %v7948 = vadd.f32 %v7926, %v7933
    %v7949 = vadd.f32 %v7927, %v7933
    %v7950 = vadd.f32 %v7928, %v7933
    %v7951 = vld [vmem:[%s14] sm:$0xff]
    %v7952 = vld [vmem:[%s14 + $0x8] sm:$0xff]
    %v7953 = vmul.f32 %v7935, %v7951
    %v7954 = vmul.f32 %v7936, %v7952
    %v7955 = vmul.f32 %v7937, %v7951
    %v7956 = vmul.f32 %v7938, %v7952
    %v7957 = vmul.f32 %v7939, %v7951
    %v7958 = vmul.f32 %v7940, %v7952
    %v7959 = vmul.f32 %v7941, %v7951
    %v7960 = vmul.f32 %v7942, %v7952
    %v7961 = vmul.f32 %v7943, %v7951
    %v7962 = vmul.f32 %v7944, %v7952
    %v7963 = vmul.f32 %v7945, %v7951
    %v7964 = vmul.f32 %v7946, %v7952
    %v7965 = vmul.f32 %v7947, %v7951
    %v7966 = vmul.f32 %v7948, %v7952
    %v7967 = vmul.f32 %v7949, %v7951
    %v7968 = vmul.f32 %v7950, %v7952
    %7969 = vadd.xlane.f32.xlu0 %v7953
    %v7970 = vpop.xlane.xlu0 %7969
    %7971 = vadd.xlane.f32.xlu0 %v7954
    %v7972 = vpop.xlane.xlu0 %7971
    %7973 = vadd.xlane.f32.xlu0 %v7955
    %v7974 = vpop.xlane.xlu0 %7973
    %7975 = vadd.xlane.f32.xlu0 %v7956
    %v7976 = vpop.xlane.xlu0 %7975
    %7977 = vadd.xlane.f32.xlu0 %v7957
    %v7978 = vpop.xlane.xlu0 %7977
    %7979 = vadd.xlane.f32.xlu0 %v7958
    %v7980 = vpop.xlane.xlu0 %7979
    %7981 = vadd.xlane.f32.xlu0 %v7959
    %v7982 = vpop.xlane.xlu0 %7981
    %7983 = vadd.xlane.f32.xlu0 %v7960
    %v7984 = vpop.xlane.xlu0 %7983
    %7985 = vadd.xlane.f32.xlu0 %v7961
    %v7986 = vpop.xlane.xlu0 %7985
    %7987 = vadd.xlane.f32.xlu0 %v7962
    %v7988 = vpop.xlane.xlu0 %7987
    %7989 = vadd.xlane.f32.xlu0 %v7963
    %v7990 = vpop.xlane.xlu0 %7989
    %7991 = vadd.xlane.f32.xlu0 %v7964
    %v7992 = vpop.xlane.xlu0 %7991
    %7993 = vadd.xlane.f32.xlu0 %v7965
    %v7994 = vpop.xlane.xlu0 %7993
    %7995 = vadd.xlane.f32.xlu0 %v7966
    %v7996 = vpop.xlane.xlu0 %7995
    %7997 = vadd.xlane.f32.xlu0 %v7967
    %v7998 = vpop.xlane.xlu0 %7997
    %7999 = vadd.xlane.f32.xlu0 %v7968
    %v8000 = vpop.xlane.xlu0 %7999
    %v8017 = vlaneseq
    %v8018 = vand.u32 %v8017, 127
    %v8019 = vlaneseq
    %v8020 = vshrl.u32 %v8019, 7
    %v8021 = vsub.s32 %v8018, %v8020
    %v8022 = vrot.slane %v7970, %v8021
    %v8023 = vadd.s32 %v8018, 4294967288
    %v8024 = vlaneseq
    %v8025 = vshrl.u32 %v8024, 7
    %v8026 = vsub.s32 %v8023, %v8025
    %v8027 = vrot.slane %v7972, %v8026
    %vm8028 = vcmask 130112
    %v8029 = vsel %vm8028, %v8027, %v8022
    %v8030 = vlaneseq
    %v8031 = vshrl.u32 %v8030, 7
    %v8032 = vsub.s32 %v8018, %v8031
    %v8033 = vrot.slane %v7974, %v8032
    %v8034 = vlaneseq
    %v8035 = vshrl.u32 %v8034, 7
    %v8036 = vsub.s32 %v8023, %v8035
    %v8037 = vrot.slane %v7976, %v8036
    %v8038 = vsel %vm8028, %v8037, %v8033
    %v8039 = vlaneseq
    %v8040 = vshrl.u32 %v8039, 7
    %v8041 = vsub.s32 %v8018, %v8040
    %v8042 = vrot.slane %v7978, %v8041
    %v8043 = vlaneseq
    %v8044 = vshrl.u32 %v8043, 7
    %v8045 = vsub.s32 %v8023, %v8044
    %v8046 = vrot.slane %v7980, %v8045
    %v8047 = vsel %vm8028, %v8046, %v8042
    %v8048 = vlaneseq
    %v8049 = vshrl.u32 %v8048, 7
    %v8050 = vsub.s32 %v8018, %v8049
    %v8051 = vrot.slane %v7982, %v8050
    %v8052 = vlaneseq
    %v8053 = vshrl.u32 %v8052, 7
    %v8054 = vsub.s32 %v8023, %v8053
    %v8055 = vrot.slane %v7984, %v8054
    %v8056 = vsel %vm8028, %v8055, %v8051
    %v8057 = vlaneseq
    %v8058 = vshrl.u32 %v8057, 7
    %v8059 = vsub.s32 %v8018, %v8058
    %v8060 = vrot.slane %v7986, %v8059
    %v8061 = vlaneseq
    %v8062 = vshrl.u32 %v8061, 7
    %v8063 = vsub.s32 %v8023, %v8062
    %v8064 = vrot.slane %v7988, %v8063
    %v8065 = vsel %vm8028, %v8064, %v8060
    %v8066 = vlaneseq
    %v8067 = vshrl.u32 %v8066, 7
    %v8068 = vsub.s32 %v8018, %v8067
    %v8069 = vrot.slane %v7990, %v8068
    %v8070 = vlaneseq
    %v8071 = vshrl.u32 %v8070, 7
    %v8072 = vsub.s32 %v8023, %v8071
    %v8073 = vrot.slane %v7992, %v8072
    %v8074 = vsel %vm8028, %v8073, %v8069
    %v8075 = vlaneseq
    %v8076 = vshrl.u32 %v8075, 7
    %v8077 = vsub.s32 %v8018, %v8076
    %v8078 = vrot.slane %v7994, %v8077
    %v8079 = vlaneseq
    %v8080 = vshrl.u32 %v8079, 7
    %v8081 = vsub.s32 %v8023, %v8080
    %v8082 = vrot.slane %v7996, %v8081
    %v8083 = vsel %vm8028, %v8082, %v8078
    %v8084 = vlaneseq
    %v8085 = vshrl.u32 %v8084, 7
    %v8086 = vsub.s32 %v8018, %v8085
    %v8087 = vrot.slane %v7998, %v8086
    %v8088 = vlaneseq
    %v8089 = vshrl.u32 %v8088, 7
    %v8090 = vsub.s32 %v8023, %v8089
    %v8091 = vrot.slane %v8000, %v8090
    %v8092 = vsel %vm8028, %v8091, %v8087
    %vm8093 = vcmask 1041409
    %v8094 = vsel %vm8093, %v8038, %v8029
    %vm8095 = vcmask 1042434
    %v8096 = vsel %vm8095, %v8047, %v8094
    %vm8097 = vcmask 1043459
    %v8098 = vsel %vm8097, %v8056, %v8096
    %v8099 = vsel %vm8093, %v8074, %v8065
    %v8100 = vsel %vm8095, %v8083, %v8099
    %v8101 = vsel %vm8097, %v8092, %v8100
    %vm8104 = vcmask 125952
    %v8105 = vsel %vm8104, %v8098, 0.0
    %8106 = vadd.xlane.f32.xlu0 %v8105
    %v8107 = vpop.xlane.xlu0 %8106
    %v8108 = vsel %vm8104, %v8101, 0.0
    %8109 = vadd.xlane.f32.xlu0 %v8108
    %v8110 = vpop.xlane.xlu0 %8109
    %v8111 = vld [vmem:[#allocation3] sm:$0x1]
    %v8113 = vlaneseq
    %v8114 = vshrl.u32 %v8113, 7
    %v8115 = vsub.s32 0, %v8114
    %v8116 = vrot.slane %v8111, %v8115
    %8117 = vset.pattern.permute.xlu0 0
    %8118 = vperm.xlu0 %8117, %v8116
    %v8119 = vpop.permute.xlu0 %8118
    %v8121 = vadd.f32 %v8107, %v8119
    %v8122 = vadd.f32 %v8110, %v8119
    %v8123 = vld [vmem:[%s16] sm:$0x3]
    %v8124 = vld [vmem:[%s17] sm:$0x3]
    %vm8125 = vcmp.eq.f32.partialorder %v8123, -10000.0
    %v8128 = vlaneseq
    %v8129 = vshrl.u32 %v8128, 7
    %v8130 = vsub.s32 %v8018, %v8129
    %v8131 = vrot.slane %v8121, %v8130
    %v8132 = vlaneseq
    %v8133 = vshrl.u32 %v8132, 7
    %v8134 = vsub.s32 %v8018, %v8133
    %v8135 = vrot.slane %v8122, %v8134
    %v8136 = vsel %vm8093, %v8135, %v8131
    %v8138 = vsel %vm8125, -10000.0, %v8136
    %v8139 = vsub.f32 %v8138, %v8123
    %v8140 = vmul.f32 %v8139, %v8139
    %vm8141 = vcmask 25600
    %v8142 = vsel %vm8141, %v8140, 0.0
    %8143 = vadd.xlane.f32.xlu0 %v8142
    %v8144 = vpop.xlane.xlu0 %8143
    %v8145 = vrot.slane %v8144, 4
    %v8146 = vadd.f32 %v8144, %v8145
    %v8147 = vrot.slane %v8146, 2
    %v8148 = vadd.f32 %v8146, %v8147
    %v8149 = vrot.slane %v8148, 1
    %v8150 = vadd.f32 %v8148, %v8149
    %s8151 = vtos %v8150
    %v8152 = vrcp.pop 8.0
    %s8153 = vtos %v8152
    %s8154 = smul.f32 %s8151, %s8153
    %v8155 = vadd.f32 %v8124, %v8136
    %v8156 = vld [vmem:[%s18] sm:$0x3]
    %v8157 = vsel %vm8141, %v8155, -inf
    %8158 = vmax.xlane.f32.xlu0 %v8157
    %v8159 = vpop.xlane.xlu0 %8158
    %v8160 = vsub.f32 %v8155, %v8159
    %v8161 = vmul.f32 %v8160, 1.442695
    %v8162 = vpow.pop %v8161
    %v8163 = vsel %vm8141, %v8162, 0.0
    %8164 = vadd.xlane.f32.xlu0 %v8163
    %v8165 = vpop.xlane.xlu0 %8164
    %v8166 = vrcp.pop %v8165
    %v8167 = vmul.f32 %v8162, %v8166
    %v8168 = vsel %vm8141, %v8156, 0.0
    %8169 = vadd.xlane.f32.xlu0 %v8168
    %v8170 = vpop.xlane.xlu0 %8169
    %v8171 = vrcp.pop 4.0
    %v8172 = vmul.f32 %v8170, %v8171
    %v8173 = vsub.f32 %v8156, %v8172
    %v8174 = vmul.f32 %v8167, %v8173
    %v8175 = vsel %vm8141, %v8174, 0.0
    %8176 = vadd.xlane.f32.xlu0 %v8175
    %v8177 = vpop.xlane.xlu0 %8176
    %v8178 = vrot.slane %v8177, 4
    %v8179 = vadd.f32 %v8177, %v8178
    %v8180 = vrot.slane %v8179, 2
    %v8181 = vadd.f32 %v8179, %v8180
    %v8182 = vrot.slane %v8181, 1
    %v8183 = vadd.f32 %v8181, %v8182
    %s8184 = vtos %v8183
    %s8185 = smul.f32 %s8154, 0.0001
    %s8186 = sadd.f32 %s8184, %s8185
    %v8187 = vstv %s8186
    %vm8188 = vcmask 0
    %8189 = vst.msk [vmem:[#allocation24] sm:$0x1] %vm8188, %v8187
    %8190 = vst.msk [vmem:[#allocation25] sm:$0x3] %vm8141, %v8136
    %8191 = vst.msk [vmem:[#allocation27] sm:$0x3] %vm8141, %v8155
    // Predicated region
    $region126: #{tpu_custom_call.1} parent=1 // pred_check
      _
    $region127: #{tpu_custom_call.1} parent=1 // pred_check_branch
      %8193 = sbr.rel (0) target = $region129
    $region128: #{tpu_custom_call.1} parent=1 // pred_region
      %s8195 = ssub.s32 16, 16
      %8196 = vsyncadd [#allocation6], %s8195
      %s8198 = sshll.u32 [#allocation24], 4
      %s8199 = int_to_ptr.vmem [resolvable:$true] %s8198
      %8201 = dma.vmem_to_hbm [thread:$0]  %s8199, 16, %s19, [#allocation6]
    $region129: #{tpu_custom_call.1} parent=1 // pred_fallthru
      _
    // Predicated region
    $region130: #{tpu_custom_call.1} parent=1 // pred_check
      _
    $region131: #{tpu_custom_call.1} parent=1 // pred_check_branch
      %8203 = sbr.rel (0) target = $region133
    $region132: #{tpu_custom_call.1} parent=1 // pred_region
      %s8205 = ssub.s32 32, 32
      %8206 = vsyncadd [#allocation26], %s8205
      %s8208 = sshll.u32 [#allocation25], 4
      %s8209 = int_to_ptr.vmem [resolvable:$true] %s8208
      %8211 = dma.vmem_to_hbm [thread:$0]  %s8209, 32, %s20, [#allocation26]
    $region133: #{tpu_custom_call.1} parent=1 // pred_fallthru
      _
    // Predicated region
    $region134: #{tpu_custom_call.1} parent=1 // pred_check
      _
    $region135: #{tpu_custom_call.1} parent=1 // pred_check_branch
      %8213 = sbr.rel (0) target = $region137
    $region136: #{tpu_custom_call.1} parent=1 // pred_region
      %s8215 = ssub.s32 32, 32
      %8216 = vsyncadd [#allocation26], %s8215
      %s8218 = sshll.u32 [#allocation27], 4
      %s8219 = int_to_ptr.vmem [resolvable:$true] %s8218
      %8221 = dma.vmem_to_hbm [thread:$0]  %s8219, 32, %s21, [#allocation26]
    $region137: #{tpu_custom_call.1} parent=1 // pred_fallthru
      _
    // Predicated region
    $region138: #{tpu_custom_call.1} parent=1 // pred_check
      _
    $region139: #{tpu_custom_call.1} parent=1 // pred_check_branch
      %8223 = sbr.rel (0) target = $region141
    $region140: #{tpu_custom_call.1} parent=1 // pred_region
      %8224 = dma.done [#allocation6], 16
    $region141: #{tpu_custom_call.1} parent=1 // pred_fallthru
      _
    // Predicated region
    $region142: #{tpu_custom_call.1} parent=1 // pred_check
      _
    $region143: #{tpu_custom_call.1} parent=1 // pred_check_branch
      %8226 = sbr.rel (0) target = $region145
    $region144: #{tpu_custom_call.1} parent=1 // pred_region
      %8227 = dma.done [#allocation26], 32
    $region145: #{tpu_custom_call.1} parent=1 // pred_fallthru
      _
    // Predicated region
    $region146: #{tpu_custom_call.1} parent=1 // pred_check
      _
    $region147: #{tpu_custom_call.1} parent=1 // pred_check_branch
      %8229 = sbr.rel (0) target = $region149
    $region148: #{tpu_custom_call.1} parent=1 // pred_region
      %8230 = dma.done [#allocation26], 32
    $region149: #{tpu_custom_call.1} parent=1 // pred_fallthru
      _
    %8231 = vsyncpa [#allocation5], 1
    %8232 = vsyncpa [#allocation8], 1
    %8233 = vsyncpa [#allocation11], 1
    %8234 = vsyncpa [#allocation14], 1
    %8235 = vsyncpa [#allocation17], 1
    %8236 = vsyncpa [#allocation20], 1
    %8237 = vsyncpa [#allocation23], 1
    %8238 = vsyncpa [#allocation6], 1
    %8239 = vsyncpa [#allocation26], 1

</llo_original>
